<compile_context>
chip_gen: v7x
topology: tpu7x:2x2x1
jax: 0.10.0
libtpu: 0.0.40
codegen_flags: <defaults>
</compile_context>

<pallas_src>
import functools
import math

import jax
import jax.numpy as jnp
from jax.experimental import pallas as pl
from jax.experimental.pallas import tpu as pltpu

# ----------------------------- config (small) -------------------------------
PATCH = 14                    # DINOv2 patch size
IMG = 28                      # -> 2x2 = 4 patches
EMBED = 32                    # embed dim (384 in real vits14)
HEADS = 2
DEPTH = 4
MLP_HIDDEN = 4 * EMBED        # 128
NUM_REG = 4                   # register tokens ("_reg" variant)
N_LAST_BLOCKS = 4             # "_lc" head: last 4 blocks' cls tokens + avgpool
HEAD_OUT0 = 1000              # original linear_head.out_features
HEAD_OUT0_PAD = 1024          # padded once at init (multiple of 128)
HEAD_IN = EMBED * (N_LAST_BLOCKS + 1)   # 160
OUT_PAD = 128                 # final scalar logit padded to a lane-dense tile
PATCH_DIM = 3 * PATCH * PATCH           # 588 (no runtime padding)
NUM_PATCHES = (IMG // PATCH) ** 2       # 4
N_TOK = 1 + NUM_REG + NUM_PATCHES       # 9 tokens per image
VEC_W = max(MLP_HIDDEN, 3 * EMBED)      # 128 — width of the packed vector table
(R_LN1G, R_LN1B, R_BQKV, R_BO, R_LS1,
 R_LN2G, R_LN2B, R_B1, R_B2, R_LS2) = range(10)
VEC_ROWS = 10

# ----------------------------- in-kernel helpers -----------------------------

def _ln(x, g, b, eps=1e-6):
    """LayerNorm with f32 statistics (no bf16 VPU/EUP on v5e)."""
    mu = jnp.mean(x, axis=-1, keepdims=True)
    var = jnp.mean(jnp.square(x - mu), axis=-1, keepdims=True)
    return (x - mu) * jax.lax.rsqrt(var + eps) * g + b


def _mm(a, b):
    """bf16 MXU operands, f32 accumulation."""
    return jnp.dot(a.astype(jnp.bfloat16), b.astype(jnp.bfloat16),
                   preferred_element_type=jnp.float32)

# ----------------------------- the fused kernel ------------------------------

def _dinov2_kernel(patches_ref, patch_w_ref, tok_bias_ref, attn_bias_ref,
                   vecs_ref, wqkv_ref, wo_ref, w1_ref, w2_ref, fnorm_ref,
                   hw1_ref, hw2_ref, hw3_ref, hw4_ref, hvecs_ref,
                   o_ref, *, batch):
    D = EMBED
    Dh = D // HEADS
    N = N_TOK
    P = NUM_PATCHES
    scale = 1.0 / math.sqrt(Dh)

    # ---- patch embed (Conv2d k=14,s=14 == unfold + matmul), K=588 unpadded ----
    tok = _mm(patches_ref[...], patch_w_ref[...])              # [B*P, D] f32
    tok_bias = tok_bias_ref[...]                               # [N, D] (cls+pos0, reg, pos+patch_b)

    # ---- assemble [cls, reg x4, patch tokens] per batch -> x:[B*N, D] --------
    rows = []
    for bb in range(batch):
        rows.append(tok_bias[:1 + NUM_REG, :])                 # cls (+pos) and registers
        rows.append(tok_bias[1 + NUM_REG:, :] + tok[bb * P:(bb + 1) * P, :])
    x = jnp.concatenate(rows, axis=0)                          # [B*N, D] f32

    attn_bias = attn_bias_ref[...]                             # [B*N, B*N] block-diagonal mask

    # ---- 4 transformer blocks, statically unrolled, weights depth-stacked ----
    outs = []
    for d in range(DEPTH):
        v = vecs_ref[d]                                        # [VEC_ROWS, VEC_W] packed vectors
        ln1_g = v[R_LN1G:R_LN1G + 1, :D]
        ln1_b = v[R_LN1B:R_LN1B + 1, :D]
        bqkv = v[R_BQKV:R_BQKV + 1, :3 * D]
        bo = v[R_BO:R_BO + 1, :D]
        ls1 = v[R_LS1:R_LS1 + 1, :D]
        ln2_g = v[R_LN2G:R_LN2G + 1, :D]
        ln2_b = v[R_LN2B:R_LN2B + 1, :D]
        b1 = v[R_B1:R_B1 + 1, :MLP_HIDDEN]
        b2 = v[R_B2:R_B2 + 1, :D]
        ls2 = v[R_LS2:R_LS2 + 1, :D]

        # --- attention branch: one fused QKV matmul, block-diag masked attn ---
        h = _ln(x, ln1_g, ln1_b)
        h16 = h.astype(jnp.bfloat16)
        qkv = jnp.dot(h16, wqkv_ref[d],
                      preferred_element_type=jnp.float32) + bqkv   # [B*N, 3D]
        heads_out = []
        for hh in range(HEADS):
            q = qkv[:, hh * Dh:(hh + 1) * Dh]
            k = qkv[:, D + hh * Dh:D + (hh + 1) * Dh]
            vv = qkv[:, 2 * D + hh * Dh:2 * D + (hh + 1) * Dh]
            s = jax.lax.dot_general(
                q.astype(jnp.bfloat16), k.astype(jnp.bfloat16),
                dimension_numbers=(((1,), (1,)), ((), ())),
                preferred_element_type=jnp.float32) * scale + attn_bias
            s = s - jnp.max(s, axis=-1, keepdims=True)
            p = jnp.exp(s)
            p = p * pl.reciprocal(jnp.sum(p, axis=-1, keepdims=True), approx=True)
            heads_out.append(_mm(p, vv))                       # [B*N, Dh]
        a = jnp.concatenate(heads_out, axis=-1)                # [B*N, D]
        y = jnp.dot(a.astype(jnp.bfloat16), wo_ref[d],
                    preferred_element_type=jnp.float32) + bo
        x = x + ls1 * y                                        # LayerScale 1 + residual

        # --- MLP branch ---
        h = _ln(x, ln2_g, ln2_b)
        m = jnp.dot(h.astype(jnp.bfloat16), w1_ref[d],
                    preferred_element_type=jnp.float32) + b1   # [B*N, 128] lane-dense
        # TODO(synk): PyTorch nn.GELU() is exact-erf; tanh approximation used
        # here for guaranteed Mosaic lowering (tiny numeric difference).
        m = jax.nn.gelu(m, approximate=True)
        m = jnp.dot(m.astype(jnp.bfloat16), w2_ref[d],
                    preferred_element_type=jnp.float32) + b2
        x = x + ls2 * m                                        # LayerScale 2 + residual
        outs.append(x)

    # ---- get_intermediate_layers(n=4, return_class_token=True, norm=True) ----
    fg = fnorm_ref[0:1, :]
    fb = fnorm_ref[1:2, :]
    normed = [_ln(o, fg, fb) for o in outs[-N_LAST_BLOCKS:]]
    feat_chunks = []
    for xn in normed:                                          # cls token of each block
        cls_rows = jnp.concatenate(
            [xn[bb * N:bb * N + 1, :] for bb in range(batch)], axis=0)   # [B, D]
        feat_chunks.append(cls_rows)
    pooled = []
    for bb in range(batch):                                    # avgpool of last block's patches
        pr = normed[-1][bb * N + 1 + NUM_REG:(bb + 1) * N, :]  # registers stripped
        pooled.append(jnp.mean(pr, axis=0, keepdims=True))
    feat_chunks.append(jnp.concatenate(pooled, axis=0))        # [B, D]
    feat = jnp.concatenate(feat_chunks, axis=-1)               # [B, 5*D] = [B, 160]

    # ---- classifier head: Linear->ReLU x3 -> Linear (Dropout = identity) -----
    hb = hvecs_ref[...]                                        # [4, 1024] packed head biases
    h1 = jnp.maximum(_mm(feat, hw1_ref[...]) + hb[0:1, :HEAD_OUT0_PAD], 0.0)
    h2 = jnp.maximum(_mm(h1, hw2_ref[...]) + hb[1:2, :256], 0.0)
    h3 = jnp.maximum(_mm(h2, hw3_ref[...]) + hb[2:3, :64], 0.0)
    out = _mm(h3, hw4_ref[...]) + hb[3:4, :OUT_PAD]            # [B, 128] lane-dense store
    o_ref[...] = out.astype(o_ref.dtype)

# ----------------------------- parameters ------------------------------------

def init_params(key):
    keys = iter(jax.random.split(key, 64))

    def nrm(shape, scale=0.02):
        return scale * jax.random.normal(next(keys), shape, dtype=jnp.float32)

    def row(v):
        v = jnp.asarray(v, jnp.float32).reshape(-1)
        return jnp.pad(v, (0, VEC_W - v.shape[0]))

    patch_w = nrm((PATCH_DIM, EMBED))
    patch_b = jnp.zeros((EMBED,), jnp.float32)
    cls = nrm((1, EMBED))
    reg = nrm((NUM_REG, EMBED))
    pos = nrm((1 + NUM_PATCHES, EMBED))
    # token bias table: row0 = cls+pos0, rows 1..4 = registers (no pos, DINOv2-reg
    # order), rows 5.. = pos for patch tokens (+ patch-embed bias folded in).
    tok_bias = jnp.concatenate(
        [cls + pos[:1], reg, pos[1:] + patch_b[None, :]], axis=0)      # [N_TOK, D]

    vecs, wqkv, wo, w1, w2 = [], [], [], [], []
    for _ in range(DEPTH):
        wqkv.append(nrm((EMBED, 3 * EMBED)))        # [D, 3D]: q | k | v, head-major columns
        wo.append(nrm((EMBED, EMBED)))
        w1.append(nrm((EMBED, MLP_HIDDEN)))
        w2.append(nrm((MLP_HIDDEN, EMBED)))
        vecs.append(jnp.stack([
            row(jnp.ones((EMBED,))),                # ln1_g
            row(jnp.zeros((EMBED,))),               # ln1_b
            row(jnp.zeros((3 * EMBED,))),           # bqkv
            row(jnp.zeros((EMBED,))),               # bo
            row(0.1 * jnp.ones((EMBED,))),          # ls1 (real DINOv2 gamma ~1e-5; synthetic)
            row(jnp.ones((EMBED,))),                # ln2_g
            row(jnp.zeros((EMBED,))),               # ln2_b
            row(jnp.zeros((MLP_HIDDEN,))),          # b1
            row(jnp.zeros((EMBED,))),               # b2
            row(0.1 * jnp.ones((EMBED,))),          # ls2
        ], axis=0))

    pad_n = HEAD_OUT0_PAD - HEAD_OUT0
    return dict(
        patch_w=patch_w.astype(jnp.bfloat16),                         # [588, 32]
        tok_bias=tok_bias,                                            # [9, 32]
        vecs=jnp.stack(vecs, axis=0),                                 # [4, 10, 128] f32
        wqkv=jnp.stack(wqkv, axis=0).astype(jnp.bfloat16),            # [4, 32, 96]
        wo=jnp.stack(wo, axis=0).astype(jnp.bfloat16),                # [4, 32, 32]
        w1=jnp.stack(w1, axis=0).astype(jnp.bfloat16),                # [4, 32, 128]
        w2=jnp.stack(w2, axis=0).astype(jnp.bfloat16),                # [4, 128, 32]
        fnorm=jnp.stack([jnp.ones((EMBED,)), jnp.zeros((EMBED,))], 0),  # [2, 32]
        # head: 1000->1024 / 1->128 zero-padded once at init (results identical)
        hw1=jnp.pad(nrm((HEAD_IN, HEAD_OUT0)), ((0, 0), (0, pad_n))).astype(jnp.bfloat16),
        hw2=jnp.pad(nrm((HEAD_OUT0, 256)), ((0, pad_n), (0, 0))).astype(jnp.bfloat16),
        hw3=nrm((256, 64)).astype(jnp.bfloat16),
        hw4=jnp.pad(nrm((64, 1)), ((0, 0), (0, OUT_PAD - 1))).astype(jnp.bfloat16),
        hvecs=jnp.zeros((4, HEAD_OUT0_PAD), jnp.float32),             # packed head biases
    )

# ----------------------------- forward pass -----------------------------------

def patchify(x):
    """NCHW [B,3,H,W] -> [B*num_patches, 3*14*14] (same flatten order as Conv2d weight)."""
    B, C, H, W = x.shape
    gh, gw = H // PATCH, W // PATCH
    x = x.reshape(B, C, gh, PATCH, gw, PATCH)
    x = x.transpose(0, 2, 4, 1, 3, 5)                 # B, gh, gw, C, ph, pw
    return x.reshape(B * gh * gw, C * PATCH * PATCH)


def dinov2_classifier_forward(x, p):
    B = x.shape[0]
    patches = patchify(x)                                             # [B*P, 588], no runtime pad

    # block-diagonal attention mask: token i attends to token j iff same image
    seg = jnp.repeat(jnp.arange(B, dtype=jnp.int32), N_TOK)
    attn_bias = jnp.where(seg[:, None] == seg[None, :], 0.0, -1e30).astype(jnp.float32)

    tensors = (patches, p["patch_w"], p["tok_bias"], attn_bias,
               p["vecs"], p["wqkv"], p["wo"], p["w1"], p["w2"], p["fnorm"],
               p["hw1"], p["hw2"], p["hw3"], p["hw4"], p["hvecs"])

    def full_spec(t):
        return pl.BlockSpec(t.shape, lambda i, _n=t.ndim: (0,) * _n)

    out_pad = pl.pallas_call(
        functools.partial(_dinov2_kernel, batch=B),
        out_shape=jax.ShapeDtypeStruct((B, OUT_PAD), jnp.float32),
        grid=(1,),
        in_specs=[full_spec(t) for t in tensors],
        out_specs=pl.BlockSpec((B, OUT_PAD), lambda i: (0, 0)),
        compiler_params=pltpu.CompilerParams(
            dimension_semantics=("arbitrary",)),
    )(*tensors)
    return out_pad[:, :1]                                             # [B, 1] logit


if __name__ == "__main__":
    x = jax.random.normal(jax.random.PRNGKey(0), (2, 3, IMG, IMG), dtype=jnp.float32)
    params = init_params(jax.random.PRNGKey(42))
    fwd = jax.jit(dinov2_classifier_forward)
    out = jax.block_until_ready(fwd(x, params))
    assert out.shape == (2, 1) and out.dtype == jnp.float32
    assert bool(jnp.all(jnp.isfinite(out)))
    print("KERNEL_OK")
</pallas_src>

<mosaic_0001>
module attributes {stable_mosaic.version = 11 : i64} {
  func.func @_dinov2_kernel(%arg0: i32, %arg1: memref<8x588xf32, #tpu.memory_space<vmem>>, %arg2: memref<588x32xbf16, #tpu.memory_space<vmem>>, %arg3: memref<9x32xf32, #tpu.memory_space<vmem>>, %arg4: memref<18x18xf32, #tpu.memory_space<vmem>>, %arg5: memref<4x10x128xf32, #tpu.memory_space<vmem>>, %arg6: memref<4x32x96xbf16, #tpu.memory_space<vmem>>, %arg7: memref<4x32x32xbf16, #tpu.memory_space<vmem>>, %arg8: memref<4x32x128xbf16, #tpu.memory_space<vmem>>, %arg9: memref<4x128x32xbf16, #tpu.memory_space<vmem>>, %arg10: memref<2x32xf32, #tpu.memory_space<vmem>>, %arg11: memref<160x1024xbf16, #tpu.memory_space<vmem>>, %arg12: memref<1024x256xbf16, #tpu.memory_space<vmem>>, %arg13: memref<256x64xbf16, #tpu.memory_space<vmem>>, %arg14: memref<64x128xbf16, #tpu.memory_space<vmem>>, %arg15: memref<4x1024xf32, #tpu.memory_space<vmem>>, %arg16: memref<2x128xf32, #tpu.memory_space<vmem>>) attributes {dimension_semantics = [#tpu.dimension_semantics<arbitrary>], iteration_bounds = array<i64: 1>, scalar_prefetch = 0 : i64, scratch_operands = 0 : i64, tpu.core_type = #tpu.core_type<tc>, window_params = [{pipeline_mode = #tpu.pipeline_mode<synchronous>, transform_indices = @transform_0, window_bounds = array<i64: 8, 588>}, {pipeline_mode = #tpu.pipeline_mode<synchronous>, transform_indices = @transform_1, window_bounds = array<i64: 588, 32>}, {pipeline_mode = #tpu.pipeline_mode<synchronous>, transform_indices = @transform_2, window_bounds = array<i64: 9, 32>}, {pipeline_mode = #tpu.pipeline_mode<synchronous>, transform_indices = @transform_3, window_bounds = array<i64: 18, 18>}, {pipeline_mode = #tpu.pipeline_mode<synchronous>, transform_indices = @transform_4, window_bounds = array<i64: 4, 10, 128>}, {pipeline_mode = #tpu.pipeline_mode<synchronous>, transform_indices = @transform_5, window_bounds = array<i64: 4, 32, 96>}, {pipeline_mode = #tpu.pipeline_mode<synchronous>, transform_indices = @transform_6, window_bounds = array<i64: 4, 32, 32>}, {pipeline_mode = #tpu.pipeline_mode<synchronous>, transform_indices = @transform_7, window_bounds = array<i64: 4, 32, 128>}, {pipeline_mode = #tpu.pipeline_mode<synchronous>, transform_indices = @transform_8, window_bounds = array<i64: 4, 128, 32>}, {pipeline_mode = #tpu.pipeline_mode<synchronous>, transform_indices = @transform_9, window_bounds = array<i64: 2, 32>}, {pipeline_mode = #tpu.pipeline_mode<synchronous>, transform_indices = @transform_10, window_bounds = array<i64: 160, 1024>}, {pipeline_mode = #tpu.pipeline_mode<synchronous>, transform_indices = @transform_11, window_bounds = array<i64: 1024, 256>}, {pipeline_mode = #tpu.pipeline_mode<synchronous>, transform_indices = @transform_12, window_bounds = array<i64: 256, 64>}, {pipeline_mode = #tpu.pipeline_mode<synchronous>, transform_indices = @transform_13, window_bounds = array<i64: 64, 128>}, {pipeline_mode = #tpu.pipeline_mode<synchronous>, transform_indices = @transform_14, window_bounds = array<i64: 4, 1024>}, {pipeline_mode = #tpu.pipeline_mode<synchronous>, transform_indices = @transform_15, window_bounds = array<i64: 2, 128>}]} {
    %c0 = arith.constant 0 : index
    %c0_0 = arith.constant 0 : index
    %0 = vector.load %arg1[%c0, %c0_0] : memref<8x588xf32, #tpu.memory_space<vmem>>, vector<8x588xf32>
    %c0_1 = arith.constant 0 : index
    %c0_2 = arith.constant 0 : index
    %1 = vector.load %arg2[%c0_1, %c0_2] : memref<588x32xbf16, #tpu.memory_space<vmem>>, vector<588x32xbf16>
    %2 = arith.truncf %0 : vector<8x588xf32> to vector<8x588xbf16>
    %cst = arith.constant dense<0.000000e+00> : vector<8x32xf32>
    %3 = tpu.matmul %2, %1, %cst {dimension_numbers = #tpu.dot_dimension_numbers<[1], [0], [0], [1], [0, 0, 1, 1], [], []>} : vector<8x588xbf16>, vector<588x32xbf16>, vector<8x32xf32> -> vector<8x32xf32>
    %c0_3 = arith.constant 0 : index
    %c0_4 = arith.constant 0 : index
    %4 = vector.load %arg3[%c0_3, %c0_4] : memref<9x32xf32, #tpu.memory_space<vmem>>, vector<9x32xf32>
    %5 = vector.extract_strided_slice %4 {offsets = [0, 0], sizes = [5, 32], strides = [1, 1]} : vector<9x32xf32> to vector<5x32xf32>
    %6 = vector.extract_strided_slice %4 {offsets = [5, 0], sizes = [4, 32], strides = [1, 1]} : vector<9x32xf32> to vector<4x32xf32>
    %7 = vector.extract_strided_slice %3 {offsets = [0, 0], sizes = [4, 32], strides = [1, 1]} : vector<8x32xf32> to vector<4x32xf32>
    %8 = arith.addf %6, %7 : vector<4x32xf32>
    %9 = vector.extract_strided_slice %4 {offsets = [0, 0], sizes = [5, 32], strides = [1, 1]} : vector<9x32xf32> to vector<5x32xf32>
    %10 = vector.extract_strided_slice %4 {offsets = [5, 0], sizes = [4, 32], strides = [1, 1]} : vector<9x32xf32> to vector<4x32xf32>
    %11 = vector.extract_strided_slice %3 {offsets = [4, 0], sizes = [4, 32], strides = [1, 1]} : vector<8x32xf32> to vector<4x32xf32>
    %12 = arith.addf %10, %11 : vector<4x32xf32>
    %13 = tpu.concatenate %5, %8, %9, %12 in 0 : vector<5x32xf32>, vector<4x32xf32>, vector<5x32xf32>, vector<4x32xf32> -> vector<18x32xf32>
    %c0_5 = arith.constant 0 : index
    %c0_6 = arith.constant 0 : index
    %14 = vector.load %arg4[%c0_5, %c0_6] : memref<18x18xf32, #tpu.memory_space<vmem>>, vector<18x18xf32>
    %c0_7 = arith.constant 0 : index
    %c0_8 = arith.constant 0 : index
    %c0_9 = arith.constant 0 : index
    %15 = vector.load %arg5[%c0_7, %c0_8, %c0_9] : memref<4x10x128xf32, #tpu.memory_space<vmem>>, vector<1x10x128xf32>
    %16 = vector.shape_cast %15 : vector<1x10x128xf32> to vector<10x128xf32>
    %17 = vector.extract_strided_slice %16 {offsets = [0, 0], sizes = [1, 32], strides = [1, 1]} : vector<10x128xf32> to vector<1x32xf32>
    %18 = vector.extract_strided_slice %16 {offsets = [1, 0], sizes = [1, 32], strides = [1, 1]} : vector<10x128xf32> to vector<1x32xf32>
    %19 = vector.extract_strided_slice %16 {offsets = [2, 0], sizes = [1, 96], strides = [1, 1]} : vector<10x128xf32> to vector<1x96xf32>
    %20 = vector.extract_strided_slice %16 {offsets = [3, 0], sizes = [1, 32], strides = [1, 1]} : vector<10x128xf32> to vector<1x32xf32>
    %21 = vector.extract_strided_slice %16 {offsets = [4, 0], sizes = [1, 32], strides = [1, 1]} : vector<10x128xf32> to vector<1x32xf32>
    %22 = vector.extract_strided_slice %16 {offsets = [5, 0], sizes = [1, 32], strides = [1, 1]} : vector<10x128xf32> to vector<1x32xf32>
    %23 = vector.extract_strided_slice %16 {offsets = [6, 0], sizes = [1, 32], strides = [1, 1]} : vector<10x128xf32> to vector<1x32xf32>
    %24 = vector.extract_strided_slice %16 {offsets = [7, 0], sizes = [1, 128], strides = [1, 1]} : vector<10x128xf32> to vector<1x128xf32>
    %25 = vector.extract_strided_slice %16 {offsets = [8, 0], sizes = [1, 32], strides = [1, 1]} : vector<10x128xf32> to vector<1x32xf32>
    %26 = vector.extract_strided_slice %16 {offsets = [9, 0], sizes = [1, 32], strides = [1, 1]} : vector<10x128xf32> to vector<1x32xf32>
    %cst_10 = arith.constant dense<0.000000e+00> : vector<18xf32>
    %27 = vector.multi_reduction <add>, %13, %cst_10 [1] : vector<18x32xf32> to vector<18xf32>
    %28 = vector.shape_cast %27 : vector<18xf32> to vector<18x1xf32>
    %cst_11 = arith.constant 3.200000e+01 : f32
    %29 = vector.broadcast %cst_11 : f32 to vector<18x1xf32>
    %30 = arith.divf %28, %29 : vector<18x1xf32>
    %31 = vector.broadcast %30 : vector<18x1xf32> to vector<18x32xf32>
    %32 = arith.subf %13, %31 : vector<18x32xf32>
    %33 = arith.mulf %32, %32 : vector<18x32xf32>
    %cst_12 = arith.constant dense<0.000000e+00> : vector<18xf32>
    %34 = vector.multi_reduction <add>, %33, %cst_12 [1] : vector<18x32xf32> to vector<18xf32>
    %35 = vector.shape_cast %34 : vector<18xf32> to vector<18x1xf32>
    %cst_13 = arith.constant 3.200000e+01 : f32
    %36 = vector.broadcast %cst_13 : f32 to vector<18x1xf32>
    %37 = arith.divf %35, %36 : vector<18x1xf32>
    %38 = vector.broadcast %30 : vector<18x1xf32> to vector<18x32xf32>
    %39 = arith.subf %13, %38 : vector<18x32xf32>
    %cst_14 = arith.constant 9.99999997E-7 : f32
    %40 = vector.broadcast %cst_14 : f32 to vector<18x1xf32>
    %41 = arith.addf %37, %40 : vector<18x1xf32>
    %42 = math.rsqrt %41 : vector<18x1xf32>
    %43 = vector.broadcast %42 : vector<18x1xf32> to vector<18x32xf32>
    %44 = arith.mulf %39, %43 : vector<18x32xf32>
    %45 = vector.broadcast %17 : vector<1x32xf32> to vector<18x32xf32>
    %46 = arith.mulf %44, %45 : vector<18x32xf32>
    %47 = vector.broadcast %18 : vector<1x32xf32> to vector<18x32xf32>
    %48 = arith.addf %46, %47 : vector<18x32xf32>
    %49 = arith.truncf %48 : vector<18x32xf32> to vector<18x32xbf16>
    %c0_15 = arith.constant 0 : index
    %c0_16 = arith.constant 0 : index
    %c0_17 = arith.constant 0 : index
    %50 = vector.load %arg6[%c0_15, %c0_16, %c0_17] : memref<4x32x96xbf16, #tpu.memory_space<vmem>>, vector<1x32x96xbf16>
    %51 = vector.shape_cast %50 : vector<1x32x96xbf16> to vector<32x96xbf16>
    %cst_18 = arith.constant dense<0.000000e+00> : vector<18x96xf32>
    %52 = tpu.matmul %49, %51, %cst_18 {dimension_numbers = #tpu.dot_dimension_numbers<[1], [0], [0], [1], [0, 0, 1, 1], [], []>} : vector<18x32xbf16>, vector<32x96xbf16>, vector<18x96xf32> -> vector<18x96xf32>
    %53 = vector.broadcast %19 : vector<1x96xf32> to vector<18x96xf32>
    %54 = arith.addf %52, %53 : vector<18x96xf32>
    %55 = vector.extract_strided_slice %54 {offsets = [0, 0], sizes = [18, 16], strides = [1, 1]} : vector<18x96xf32> to vector<18x16xf32>
    %56 = vector.extract_strided_slice %54 {offsets = [0, 32], sizes = [18, 16], strides = [1, 1]} : vector<18x96xf32> to vector<18x16xf32>
    %57 = vector.extract_strided_slice %54 {offsets = [0, 64], sizes = [18, 16], strides = [1, 1]} : vector<18x96xf32> to vector<18x16xf32>
    %58 = arith.truncf %55 : vector<18x16xf32> to vector<18x16xbf16>
    %59 = arith.truncf %56 : vector<18x16xf32> to vector<18x16xbf16>
    %cst_19 = arith.constant dense<0.000000e+00> : vector<18x18xf32>
    %60 = tpu.matmul %58, %59, %cst_19 {dimension_numbers = #tpu.dot_dimension_numbers<[1], [1], [0], [0], [0, 0, 1, 0], [], []>} : vector<18x16xbf16>, vector<18x16xbf16>, vector<18x18xf32> -> vector<18x18xf32>
    %cst_20 = arith.constant 2.500000e-01 : f32
    %61 = vector.broadcast %cst_20 : f32 to vector<18x18xf32>
    %62 = arith.mulf %60, %61 : vector<18x18xf32>
    %63 = arith.addf %62, %14 : vector<18x18xf32>
    %cst_21 = arith.constant dense<0xFF800000> : vector<18xf32>
    %64 = vector.multi_reduction <maximumf>, %63, %cst_21 [1] : vector<18x18xf32> to vector<18xf32>
    %65 = vector.shape_cast %64 : vector<18xf32> to vector<18x1xf32>
    %66 = vector.broadcast %65 : vector<18x1xf32> to vector<18x18xf32>
    %67 = arith.subf %63, %66 : vector<18x18xf32>
    %68 = math.exp %67 : vector<18x18xf32>
    %cst_22 = arith.constant dense<0.000000e+00> : vector<18xf32>
    %69 = vector.multi_reduction <add>, %68, %cst_22 [1] : vector<18x18xf32> to vector<18xf32>
    %70 = vector.shape_cast %69 : vector<18xf32> to vector<18x1xf32>
    %71 = tpu.reciprocal %70 {approx = true} : vector<18x1xf32> -> vector<18x1xf32>
    %72 = vector.broadcast %71 : vector<18x1xf32> to vector<18x18xf32>
    %73 = arith.mulf %68, %72 : vector<18x18xf32>
    %74 = arith.truncf %73 : vector<18x18xf32> to vector<18x18xbf16>
    %75 = arith.truncf %57 : vector<18x16xf32> to vector<18x16xbf16>
    %cst_23 = arith.constant dense<0.000000e+00> : vector<18x16xf32>
    %76 = tpu.matmul %74, %75, %cst_23 {dimension_numbers = #tpu.dot_dimension_numbers<[1], [0], [0], [1], [0, 0, 1, 1], [], []>} : vector<18x18xbf16>, vector<18x16xbf16>, vector<18x16xf32> -> vector<18x16xf32>
    %77 = vector.extract_strided_slice %54 {offsets = [0, 16], sizes = [18, 16], strides = [1, 1]} : vector<18x96xf32> to vector<18x16xf32>
    %78 = vector.extract_strided_slice %54 {offsets = [0, 48], sizes = [18, 16], strides = [1, 1]} : vector<18x96xf32> to vector<18x16xf32>
    %79 = vector.extract_strided_slice %54 {offsets = [0, 80], sizes = [18, 16], strides = [1, 1]} : vector<18x96xf32> to vector<18x16xf32>
    %80 = arith.truncf %77 : vector<18x16xf32> to vector<18x16xbf16>
    %81 = arith.truncf %78 : vector<18x16xf32> to vector<18x16xbf16>
    %cst_24 = arith.constant dense<0.000000e+00> : vector<18x18xf32>
    %82 = tpu.matmul %80, %81, %cst_24 {dimension_numbers = #tpu.dot_dimension_numbers<[1], [1], [0], [0], [0, 0, 1, 0], [], []>} : vector<18x16xbf16>, vector<18x16xbf16>, vector<18x18xf32> -> vector<18x18xf32>
    %cst_25 = arith.constant 2.500000e-01 : f32
    %83 = vector.broadcast %cst_25 : f32 to vector<18x18xf32>
    %84 = arith.mulf %82, %83 : vector<18x18xf32>
    %85 = arith.addf %84, %14 : vector<18x18xf32>
    %cst_26 = arith.constant dense<0xFF800000> : vector<18xf32>
    %86 = vector.multi_reduction <maximumf>, %85, %cst_26 [1] : vector<18x18xf32> to vector<18xf32>
    %87 = vector.shape_cast %86 : vector<18xf32> to vector<18x1xf32>
    %88 = vector.broadcast %87 : vector<18x1xf32> to vector<18x18xf32>
    %89 = arith.subf %85, %88 : vector<18x18xf32>
    %90 = math.exp %89 : vector<18x18xf32>
    %cst_27 = arith.constant dense<0.000000e+00> : vector<18xf32>
    %91 = vector.multi_reduction <add>, %90, %cst_27 [1] : vector<18x18xf32> to vector<18xf32>
    %92 = vector.shape_cast %91 : vector<18xf32> to vector<18x1xf32>
    %93 = tpu.reciprocal %92 {approx = true} : vector<18x1xf32> -> vector<18x1xf32>
    %94 = vector.broadcast %93 : vector<18x1xf32> to vector<18x18xf32>
    %95 = arith.mulf %90, %94 : vector<18x18xf32>
    %96 = arith.truncf %95 : vector<18x18xf32> to vector<18x18xbf16>
    %97 = arith.truncf %79 : vector<18x16xf32> to vector<18x16xbf16>
    %cst_28 = arith.constant dense<0.000000e+00> : vector<18x16xf32>
    %98 = tpu.matmul %96, %97, %cst_28 {dimension_numbers = #tpu.dot_dimension_numbers<[1], [0], [0], [1], [0, 0, 1, 1], [], []>} : vector<18x18xbf16>, vector<18x16xbf16>, vector<18x16xf32> -> vector<18x16xf32>
    %99 = tpu.concatenate %76, %98 in 1 : vector<18x16xf32>, vector<18x16xf32> -> vector<18x32xf32>
    %100 = arith.truncf %99 : vector<18x32xf32> to vector<18x32xbf16>
    %c0_29 = arith.constant 0 : index
    %c0_30 = arith.constant 0 : index
    %c0_31 = arith.constant 0 : index
    %101 = vector.load %arg7[%c0_29, %c0_30, %c0_31] : memref<4x32x32xbf16, #tpu.memory_space<vmem>>, vector<1x32x32xbf16>
    %102 = vector.shape_cast %101 : vector<1x32x32xbf16> to vector<32x32xbf16>
    %cst_32 = arith.constant dense<0.000000e+00> : vector<18x32xf32>
    %103 = tpu.matmul %100, %102, %cst_32 {dimension_numbers = #tpu.dot_dimension_numbers<[1], [0], [0], [1], [0, 0, 1, 1], [], []>} : vector<18x32xbf16>, vector<32x32xbf16>, vector<18x32xf32> -> vector<18x32xf32>
    %104 = vector.broadcast %20 : vector<1x32xf32> to vector<18x32xf32>
    %105 = arith.addf %103, %104 : vector<18x32xf32>
    %106 = vector.broadcast %21 : vector<1x32xf32> to vector<18x32xf32>
    %107 = arith.mulf %106, %105 : vector<18x32xf32>
    %108 = arith.addf %13, %107 : vector<18x32xf32>
    %cst_33 = arith.constant dense<0.000000e+00> : vector<18xf32>
    %109 = vector.multi_reduction <add>, %108, %cst_33 [1] : vector<18x32xf32> to vector<18xf32>
    %110 = vector.shape_cast %109 : vector<18xf32> to vector<18x1xf32>
    %cst_34 = arith.constant 3.200000e+01 : f32
    %111 = vector.broadcast %cst_34 : f32 to vector<18x1xf32>
    %112 = arith.divf %110, %111 : vector<18x1xf32>
    %113 = vector.broadcast %112 : vector<18x1xf32> to vector<18x32xf32>
    %114 = arith.subf %108, %113 : vector<18x32xf32>
    %115 = arith.mulf %114, %114 : vector<18x32xf32>
    %cst_35 = arith.constant dense<0.000000e+00> : vector<18xf32>
    %116 = vector.multi_reduction <add>, %115, %cst_35 [1] : vector<18x32xf32> to vector<18xf32>
    %117 = vector.shape_cast %116 : vector<18xf32> to vector<18x1xf32>
    %cst_36 = arith.constant 3.200000e+01 : f32
    %118 = vector.broadcast %cst_36 : f32 to vector<18x1xf32>
    %119 = arith.divf %117, %118 : vector<18x1xf32>
    %120 = vector.broadcast %112 : vector<18x1xf32> to vector<18x32xf32>
    %121 = arith.subf %108, %120 : vector<18x32xf32>
    %cst_37 = arith.constant 9.99999997E-7 : f32
    %122 = vector.broadcast %cst_37 : f32 to vector<18x1xf32>
    %123 = arith.addf %119, %122 : vector<18x1xf32>
    %124 = math.rsqrt %123 : vector<18x1xf32>
    %125 = vector.broadcast %124 : vector<18x1xf32> to vector<18x32xf32>
    %126 = arith.mulf %121, %125 : vector<18x32xf32>
    %127 = vector.broadcast %22 : vector<1x32xf32> to vector<18x32xf32>
    %128 = arith.mulf %126, %127 : vector<18x32xf32>
    %129 = vector.broadcast %23 : vector<1x32xf32> to vector<18x32xf32>
    %130 = arith.addf %128, %129 : vector<18x32xf32>
    %131 = arith.truncf %130 : vector<18x32xf32> to vector<18x32xbf16>
    %c0_38 = arith.constant 0 : index
    %c0_39 = arith.constant 0 : index
    %c0_40 = arith.constant 0 : index
    %132 = vector.load %arg8[%c0_38, %c0_39, %c0_40] : memref<4x32x128xbf16, #tpu.memory_space<vmem>>, vector<1x32x128xbf16>
    %133 = vector.shape_cast %132 : vector<1x32x128xbf16> to vector<32x128xbf16>
    %cst_41 = arith.constant dense<0.000000e+00> : vector<18x128xf32>
    %134 = tpu.matmul %131, %133, %cst_41 {dimension_numbers = #tpu.dot_dimension_numbers<[1], [0], [0], [1], [0, 0, 1, 1], [], []>} : vector<18x32xbf16>, vector<32x128xbf16>, vector<18x128xf32> -> vector<18x128xf32>
    %135 = vector.broadcast %24 : vector<1x128xf32> to vector<18x128xf32>
    %136 = arith.addf %134, %135 : vector<18x128xf32>
    %137 = arith.mulf %136, %136 : vector<18x128xf32>
    %138 = arith.mulf %136, %137 : vector<18x128xf32>
    %cst_42 = arith.constant 4.471500e-02 : f32
    %139 = vector.broadcast %cst_42 : f32 to vector<18x128xf32>
    %140 = arith.mulf %139, %138 : vector<18x128xf32>
    %141 = arith.addf %136, %140 : vector<18x128xf32>
    %cst_43 = arith.constant 0.797884583 : f32
    %142 = vector.broadcast %cst_43 : f32 to vector<18x128xf32>
    %143 = arith.mulf %142, %141 : vector<18x128xf32>
    %144 = math.tanh %143 : vector<18x128xf32>
    %cst_44 = arith.constant 1.000000e+00 : f32
    %145 = vector.broadcast %cst_44 : f32 to vector<18x128xf32>
    %146 = arith.addf %145, %144 : vector<18x128xf32>
    %cst_45 = arith.constant 5.000000e-01 : f32
    %147 = vector.broadcast %cst_45 : f32 to vector<18x128xf32>
    %148 = arith.mulf %147, %146 : vector<18x128xf32>
    %149 = arith.mulf %136, %148 : vector<18x128xf32>
    %150 = arith.truncf %149 : vector<18x128xf32> to vector<18x128xbf16>
    %c0_46 = arith.constant 0 : index
    %c0_47 = arith.constant 0 : index
    %c0_48 = arith.constant 0 : index
    %151 = vector.load %arg9[%c0_46, %c0_47, %c0_48] : memref<4x128x32xbf16, #tpu.memory_space<vmem>>, vector<1x128x32xbf16>
    %152 = vector.shape_cast %151 : vector<1x128x32xbf16> to vector<128x32xbf16>
    %cst_49 = arith.constant dense<0.000000e+00> : vector<18x32xf32>
    %153 = tpu.matmul %150, %152, %cst_49 {dimension_numbers = #tpu.dot_dimension_numbers<[1], [0], [0], [1], [0, 0, 1, 1], [], []>} : vector<18x128xbf16>, vector<128x32xbf16>, vector<18x32xf32> -> vector<18x32xf32>
    %154 = vector.broadcast %25 : vector<1x32xf32> to vector<18x32xf32>
    %155 = arith.addf %153, %154 : vector<18x32xf32>
    %156 = vector.broadcast %26 : vector<1x32xf32> to vector<18x32xf32>
    %157 = arith.mulf %156, %155 : vector<18x32xf32>
    %158 = arith.addf %108, %157 : vector<18x32xf32>
    %c1 = arith.constant 1 : index
    %c0_50 = arith.constant 0 : index
    %c0_51 = arith.constant 0 : index
    %159 = vector.load %arg5[%c1, %c0_50, %c0_51] : memref<4x10x128xf32, #tpu.memory_space<vmem>>, vector<1x10x128xf32>
    %160 = vector.shape_cast %159 : vector<1x10x128xf32> to vector<10x128xf32>
    %161 = vector.extract_strided_slice %160 {offsets = [0, 0], sizes = [1, 32], strides = [1, 1]} : vector<10x128xf32> to vector<1x32xf32>
    %162 = vector.extract_strided_slice %160 {offsets = [1, 0], sizes = [1, 32], strides = [1, 1]} : vector<10x128xf32> to vector<1x32xf32>
    %163 = vector.extract_strided_slice %160 {offsets = [2, 0], sizes = [1, 96], strides = [1, 1]} : vector<10x128xf32> to vector<1x96xf32>
    %164 = vector.extract_strided_slice %160 {offsets = [3, 0], sizes = [1, 32], strides = [1, 1]} : vector<10x128xf32> to vector<1x32xf32>
    %165 = vector.extract_strided_slice %160 {offsets = [4, 0], sizes = [1, 32], strides = [1, 1]} : vector<10x128xf32> to vector<1x32xf32>
    %166 = vector.extract_strided_slice %160 {offsets = [5, 0], sizes = [1, 32], strides = [1, 1]} : vector<10x128xf32> to vector<1x32xf32>
    %167 = vector.extract_strided_slice %160 {offsets = [6, 0], sizes = [1, 32], strides = [1, 1]} : vector<10x128xf32> to vector<1x32xf32>
    %168 = vector.extract_strided_slice %160 {offsets = [7, 0], sizes = [1, 128], strides = [1, 1]} : vector<10x128xf32> to vector<1x128xf32>
    %169 = vector.extract_strided_slice %160 {offsets = [8, 0], sizes = [1, 32], strides = [1, 1]} : vector<10x128xf32> to vector<1x32xf32>
    %170 = vector.extract_strided_slice %160 {offsets = [9, 0], sizes = [1, 32], strides = [1, 1]} : vector<10x128xf32> to vector<1x32xf32>
    %cst_52 = arith.constant dense<0.000000e+00> : vector<18xf32>
    %171 = vector.multi_reduction <add>, %158, %cst_52 [1] : vector<18x32xf32> to vector<18xf32>
    %172 = vector.shape_cast %171 : vector<18xf32> to vector<18x1xf32>
    %cst_53 = arith.constant 3.200000e+01 : f32
    %173 = vector.broadcast %cst_53 : f32 to vector<18x1xf32>
    %174 = arith.divf %172, %173 : vector<18x1xf32>
    %175 = vector.broadcast %174 : vector<18x1xf32> to vector<18x32xf32>
    %176 = arith.subf %158, %175 : vector<18x32xf32>
    %177 = arith.mulf %176, %176 : vector<18x32xf32>
    %cst_54 = arith.constant dense<0.000000e+00> : vector<18xf32>
    %178 = vector.multi_reduction <add>, %177, %cst_54 [1] : vector<18x32xf32> to vector<18xf32>
    %179 = vector.shape_cast %178 : vector<18xf32> to vector<18x1xf32>
    %cst_55 = arith.constant 3.200000e+01 : f32
    %180 = vector.broadcast %cst_55 : f32 to vector<18x1xf32>
    %181 = arith.divf %179, %180 : vector<18x1xf32>
    %182 = vector.broadcast %174 : vector<18x1xf32> to vector<18x32xf32>
    %183 = arith.subf %158, %182 : vector<18x32xf32>
    %cst_56 = arith.constant 9.99999997E-7 : f32
    %184 = vector.broadcast %cst_56 : f32 to vector<18x1xf32>
    %185 = arith.addf %181, %184 : vector<18x1xf32>
    %186 = math.rsqrt %185 : vector<18x1xf32>
    %187 = vector.broadcast %186 : vector<18x1xf32> to vector<18x32xf32>
    %188 = arith.mulf %183, %187 : vector<18x32xf32>
    %189 = vector.broadcast %161 : vector<1x32xf32> to vector<18x32xf32>
    %190 = arith.mulf %188, %189 : vector<18x32xf32>
    %191 = vector.broadcast %162 : vector<1x32xf32> to vector<18x32xf32>
    %192 = arith.addf %190, %191 : vector<18x32xf32>
    %193 = arith.truncf %192 : vector<18x32xf32> to vector<18x32xbf16>
    %c1_57 = arith.constant 1 : index
    %c0_58 = arith.constant 0 : index
    %c0_59 = arith.constant 0 : index
    %194 = vector.load %arg6[%c1_57, %c0_58, %c0_59] : memref<4x32x96xbf16, #tpu.memory_space<vmem>>, vector<1x32x96xbf16>
    %195 = vector.shape_cast %194 : vector<1x32x96xbf16> to vector<32x96xbf16>
    %cst_60 = arith.constant dense<0.000000e+00> : vector<18x96xf32>
    %196 = tpu.matmul %193, %195, %cst_60 {dimension_numbers = #tpu.dot_dimension_numbers<[1], [0], [0], [1], [0, 0, 1, 1], [], []>} : vector<18x32xbf16>, vector<32x96xbf16>, vector<18x96xf32> -> vector<18x96xf32>
    %197 = vector.broadcast %163 : vector<1x96xf32> to vector<18x96xf32>
    %198 = arith.addf %196, %197 : vector<18x96xf32>
    %199 = vector.extract_strided_slice %198 {offsets = [0, 0], sizes = [18, 16], strides = [1, 1]} : vector<18x96xf32> to vector<18x16xf32>
    %200 = vector.extract_strided_slice %198 {offsets = [0, 32], sizes = [18, 16], strides = [1, 1]} : vector<18x96xf32> to vector<18x16xf32>
    %201 = vector.extract_strided_slice %198 {offsets = [0, 64], sizes = [18, 16], strides = [1, 1]} : vector<18x96xf32> to vector<18x16xf32>
    %202 = arith.truncf %199 : vector<18x16xf32> to vector<18x16xbf16>
    %203 = arith.truncf %200 : vector<18x16xf32> to vector<18x16xbf16>
    %cst_61 = arith.constant dense<0.000000e+00> : vector<18x18xf32>
    %204 = tpu.matmul %202, %203, %cst_61 {dimension_numbers = #tpu.dot_dimension_numbers<[1], [1], [0], [0], [0, 0, 1, 0], [], []>} : vector<18x16xbf16>, vector<18x16xbf16>, vector<18x18xf32> -> vector<18x18xf32>
    %cst_62 = arith.constant 2.500000e-01 : f32
    %205 = vector.broadcast %cst_62 : f32 to vector<18x18xf32>
    %206 = arith.mulf %204, %205 : vector<18x18xf32>
    %207 = arith.addf %206, %14 : vector<18x18xf32>
    %cst_63 = arith.constant dense<0xFF800000> : vector<18xf32>
    %208 = vector.multi_reduction <maximumf>, %207, %cst_63 [1] : vector<18x18xf32> to vector<18xf32>
    %209 = vector.shape_cast %208 : vector<18xf32> to vector<18x1xf32>
    %210 = vector.broadcast %209 : vector<18x1xf32> to vector<18x18xf32>
    %211 = arith.subf %207, %210 : vector<18x18xf32>
    %212 = math.exp %211 : vector<18x18xf32>
    %cst_64 = arith.constant dense<0.000000e+00> : vector<18xf32>
    %213 = vector.multi_reduction <add>, %212, %cst_64 [1] : vector<18x18xf32> to vector<18xf32>
    %214 = vector.shape_cast %213 : vector<18xf32> to vector<18x1xf32>
    %215 = tpu.reciprocal %214 {approx = true} : vector<18x1xf32> -> vector<18x1xf32>
    %216 = vector.broadcast %215 : vector<18x1xf32> to vector<18x18xf32>
    %217 = arith.mulf %212, %216 : vector<18x18xf32>
    %218 = arith.truncf %217 : vector<18x18xf32> to vector<18x18xbf16>
    %219 = arith.truncf %201 : vector<18x16xf32> to vector<18x16xbf16>
    %cst_65 = arith.constant dense<0.000000e+00> : vector<18x16xf32>
    %220 = tpu.matmul %218, %219, %cst_65 {dimension_numbers = #tpu.dot_dimension_numbers<[1], [0], [0], [1], [0, 0, 1, 1], [], []>} : vector<18x18xbf16>, vector<18x16xbf16>, vector<18x16xf32> -> vector<18x16xf32>
    %221 = vector.extract_strided_slice %198 {offsets = [0, 16], sizes = [18, 16], strides = [1, 1]} : vector<18x96xf32> to vector<18x16xf32>
    %222 = vector.extract_strided_slice %198 {offsets = [0, 48], sizes = [18, 16], strides = [1, 1]} : vector<18x96xf32> to vector<18x16xf32>
    %223 = vector.extract_strided_slice %198 {offsets = [0, 80], sizes = [18, 16], strides = [1, 1]} : vector<18x96xf32> to vector<18x16xf32>
    %224 = arith.truncf %221 : vector<18x16xf32> to vector<18x16xbf16>
    %225 = arith.truncf %222 : vector<18x16xf32> to vector<18x16xbf16>
    %cst_66 = arith.constant dense<0.000000e+00> : vector<18x18xf32>
    %226 = tpu.matmul %224, %225, %cst_66 {dimension_numbers = #tpu.dot_dimension_numbers<[1], [1], [0], [0], [0, 0, 1, 0], [], []>} : vector<18x16xbf16>, vector<18x16xbf16>, vector<18x18xf32> -> vector<18x18xf32>
    %cst_67 = arith.constant 2.500000e-01 : f32
    %227 = vector.broadcast %cst_67 : f32 to vector<18x18xf32>
    %228 = arith.mulf %226, %227 : vector<18x18xf32>
    %229 = arith.addf %228, %14 : vector<18x18xf32>
    %cst_68 = arith.constant dense<0xFF800000> : vector<18xf32>
    %230 = vector.multi_reduction <maximumf>, %229, %cst_68 [1] : vector<18x18xf32> to vector<18xf32>
    %231 = vector.shape_cast %230 : vector<18xf32> to vector<18x1xf32>
    %232 = vector.broadcast %231 : vector<18x1xf32> to vector<18x18xf32>
    %233 = arith.subf %229, %232 : vector<18x18xf32>
    %234 = math.exp %233 : vector<18x18xf32>
    %cst_69 = arith.constant dense<0.000000e+00> : vector<18xf32>
    %235 = vector.multi_reduction <add>, %234, %cst_69 [1] : vector<18x18xf32> to vector<18xf32>
    %236 = vector.shape_cast %235 : vector<18xf32> to vector<18x1xf32>
    %237 = tpu.reciprocal %236 {approx = true} : vector<18x1xf32> -> vector<18x1xf32>
    %238 = vector.broadcast %237 : vector<18x1xf32> to vector<18x18xf32>
    %239 = arith.mulf %234, %238 : vector<18x18xf32>
    %240 = arith.truncf %239 : vector<18x18xf32> to vector<18x18xbf16>
    %241 = arith.truncf %223 : vector<18x16xf32> to vector<18x16xbf16>
    %cst_70 = arith.constant dense<0.000000e+00> : vector<18x16xf32>
    %242 = tpu.matmul %240, %241, %cst_70 {dimension_numbers = #tpu.dot_dimension_numbers<[1], [0], [0], [1], [0, 0, 1, 1], [], []>} : vector<18x18xbf16>, vector<18x16xbf16>, vector<18x16xf32> -> vector<18x16xf32>
    %243 = tpu.concatenate %220, %242 in 1 : vector<18x16xf32>, vector<18x16xf32> -> vector<18x32xf32>
    %244 = arith.truncf %243 : vector<18x32xf32> to vector<18x32xbf16>
    %c1_71 = arith.constant 1 : index
    %c0_72 = arith.constant 0 : index
    %c0_73 = arith.constant 0 : index
    %245 = vector.load %arg7[%c1_71, %c0_72, %c0_73] : memref<4x32x32xbf16, #tpu.memory_space<vmem>>, vector<1x32x32xbf16>
    %246 = vector.shape_cast %245 : vector<1x32x32xbf16> to vector<32x32xbf16>
    %cst_74 = arith.constant dense<0.000000e+00> : vector<18x32xf32>
    %247 = tpu.matmul %244, %246, %cst_74 {dimension_numbers = #tpu.dot_dimension_numbers<[1], [0], [0], [1], [0, 0, 1, 1], [], []>} : vector<18x32xbf16>, vector<32x32xbf16>, vector<18x32xf32> -> vector<18x32xf32>
    %248 = vector.broadcast %164 : vector<1x32xf32> to vector<18x32xf32>
    %249 = arith.addf %247, %248 : vector<18x32xf32>
    %250 = vector.broadcast %165 : vector<1x32xf32> to vector<18x32xf32>
    %251 = arith.mulf %250, %249 : vector<18x32xf32>
    %252 = arith.addf %158, %251 : vector<18x32xf32>
    %cst_75 = arith.constant dense<0.000000e+00> : vector<18xf32>
    %253 = vector.multi_reduction <add>, %252, %cst_75 [1] : vector<18x32xf32> to vector<18xf32>
    %254 = vector.shape_cast %253 : vector<18xf32> to vector<18x1xf32>
    %cst_76 = arith.constant 3.200000e+01 : f32
    %255 = vector.broadcast %cst_76 : f32 to vector<18x1xf32>
    %256 = arith.divf %254, %255 : vector<18x1xf32>
    %257 = vector.broadcast %256 : vector<18x1xf32> to vector<18x32xf32>
    %258 = arith.subf %252, %257 : vector<18x32xf32>
    %259 = arith.mulf %258, %258 : vector<18x32xf32>
    %cst_77 = arith.constant dense<0.000000e+00> : vector<18xf32>
    %260 = vector.multi_reduction <add>, %259, %cst_77 [1] : vector<18x32xf32> to vector<18xf32>
    %261 = vector.shape_cast %260 : vector<18xf32> to vector<18x1xf32>
    %cst_78 = arith.constant 3.200000e+01 : f32
    %262 = vector.broadcast %cst_78 : f32 to vector<18x1xf32>
    %263 = arith.divf %261, %262 : vector<18x1xf32>
    %264 = vector.broadcast %256 : vector<18x1xf32> to vector<18x32xf32>
    %265 = arith.subf %252, %264 : vector<18x32xf32>
    %cst_79 = arith.constant 9.99999997E-7 : f32
    %266 = vector.broadcast %cst_79 : f32 to vector<18x1xf32>
    %267 = arith.addf %263, %266 : vector<18x1xf32>
    %268 = math.rsqrt %267 : vector<18x1xf32>
    %269 = vector.broadcast %268 : vector<18x1xf32> to vector<18x32xf32>
    %270 = arith.mulf %265, %269 : vector<18x32xf32>
    %271 = vector.broadcast %166 : vector<1x32xf32> to vector<18x32xf32>
    %272 = arith.mulf %270, %271 : vector<18x32xf32>
    %273 = vector.broadcast %167 : vector<1x32xf32> to vector<18x32xf32>
    %274 = arith.addf %272, %273 : vector<18x32xf32>
    %275 = arith.truncf %274 : vector<18x32xf32> to vector<18x32xbf16>
    %c1_80 = arith.constant 1 : index
    %c0_81 = arith.constant 0 : index
    %c0_82 = arith.constant 0 : index
    %276 = vector.load %arg8[%c1_80, %c0_81, %c0_82] : memref<4x32x128xbf16, #tpu.memory_space<vmem>>, vector<1x32x128xbf16>
    %277 = vector.shape_cast %276 : vector<1x32x128xbf16> to vector<32x128xbf16>
    %cst_83 = arith.constant dense<0.000000e+00> : vector<18x128xf32>
    %278 = tpu.matmul %275, %277, %cst_83 {dimension_numbers = #tpu.dot_dimension_numbers<[1], [0], [0], [1], [0, 0, 1, 1], [], []>} : vector<18x32xbf16>, vector<32x128xbf16>, vector<18x128xf32> -> vector<18x128xf32>
    %279 = vector.broadcast %168 : vector<1x128xf32> to vector<18x128xf32>
    %280 = arith.addf %278, %279 : vector<18x128xf32>
    %281 = arith.mulf %280, %280 : vector<18x128xf32>
    %282 = arith.mulf %280, %281 : vector<18x128xf32>
    %cst_84 = arith.constant 4.471500e-02 : f32
    %283 = vector.broadcast %cst_84 : f32 to vector<18x128xf32>
    %284 = arith.mulf %283, %282 : vector<18x128xf32>
    %285 = arith.addf %280, %284 : vector<18x128xf32>
    %cst_85 = arith.constant 0.797884583 : f32
    %286 = vector.broadcast %cst_85 : f32 to vector<18x128xf32>
    %287 = arith.mulf %286, %285 : vector<18x128xf32>
    %288 = math.tanh %287 : vector<18x128xf32>
    %cst_86 = arith.constant 1.000000e+00 : f32
    %289 = vector.broadcast %cst_86 : f32 to vector<18x128xf32>
    %290 = arith.addf %289, %288 : vector<18x128xf32>
    %cst_87 = arith.constant 5.000000e-01 : f32
    %291 = vector.broadcast %cst_87 : f32 to vector<18x128xf32>
    %292 = arith.mulf %291, %290 : vector<18x128xf32>
    %293 = arith.mulf %280, %292 : vector<18x128xf32>
    %294 = arith.truncf %293 : vector<18x128xf32> to vector<18x128xbf16>
    %c1_88 = arith.constant 1 : index
    %c0_89 = arith.constant 0 : index
    %c0_90 = arith.constant 0 : index
    %295 = vector.load %arg9[%c1_88, %c0_89, %c0_90] : memref<4x128x32xbf16, #tpu.memory_space<vmem>>, vector<1x128x32xbf16>
    %296 = vector.shape_cast %295 : vector<1x128x32xbf16> to vector<128x32xbf16>
    %cst_91 = arith.constant dense<0.000000e+00> : vector<18x32xf32>
    %297 = tpu.matmul %294, %296, %cst_91 {dimension_numbers = #tpu.dot_dimension_numbers<[1], [0], [0], [1], [0, 0, 1, 1], [], []>} : vector<18x128xbf16>, vector<128x32xbf16>, vector<18x32xf32> -> vector<18x32xf32>
    %298 = vector.broadcast %169 : vector<1x32xf32> to vector<18x32xf32>
    %299 = arith.addf %297, %298 : vector<18x32xf32>
    %300 = vector.broadcast %170 : vector<1x32xf32> to vector<18x32xf32>
    %301 = arith.mulf %300, %299 : vector<18x32xf32>
    %302 = arith.addf %252, %301 : vector<18x32xf32>
    %c2 = arith.constant 2 : index
    %c0_92 = arith.constant 0 : index
    %c0_93 = arith.constant 0 : index
    %303 = vector.load %arg5[%c2, %c0_92, %c0_93] : memref<4x10x128xf32, #tpu.memory_space<vmem>>, vector<1x10x128xf32>
    %304 = vector.shape_cast %303 : vector<1x10x128xf32> to vector<10x128xf32>
    %305 = vector.extract_strided_slice %304 {offsets = [0, 0], sizes = [1, 32], strides = [1, 1]} : vector<10x128xf32> to vector<1x32xf32>
    %306 = vector.extract_strided_slice %304 {offsets = [1, 0], sizes = [1, 32], strides = [1, 1]} : vector<10x128xf32> to vector<1x32xf32>
    %307 = vector.extract_strided_slice %304 {offsets = [2, 0], sizes = [1, 96], strides = [1, 1]} : vector<10x128xf32> to vector<1x96xf32>
    %308 = vector.extract_strided_slice %304 {offsets = [3, 0], sizes = [1, 32], strides = [1, 1]} : vector<10x128xf32> to vector<1x32xf32>
    %309 = vector.extract_strided_slice %304 {offsets = [4, 0], sizes = [1, 32], strides = [1, 1]} : vector<10x128xf32> to vector<1x32xf32>
    %310 = vector.extract_strided_slice %304 {offsets = [5, 0], sizes = [1, 32], strides = [1, 1]} : vector<10x128xf32> to vector<1x32xf32>
    %311 = vector.extract_strided_slice %304 {offsets = [6, 0], sizes = [1, 32], strides = [1, 1]} : vector<10x128xf32> to vector<1x32xf32>
    %312 = vector.extract_strided_slice %304 {offsets = [7, 0], sizes = [1, 128], strides = [1, 1]} : vector<10x128xf32> to vector<1x128xf32>
    %313 = vector.extract_strided_slice %304 {offsets = [8, 0], sizes = [1, 32], strides = [1, 1]} : vector<10x128xf32> to vector<1x32xf32>
    %314 = vector.extract_strided_slice %304 {offsets = [9, 0], sizes = [1, 32], strides = [1, 1]} : vector<10x128xf32> to vector<1x32xf32>
    %cst_94 = arith.constant dense<0.000000e+00> : vector<18xf32>
    %315 = vector.multi_reduction <add>, %302, %cst_94 [1] : vector<18x32xf32> to vector<18xf32>
    %316 = vector.shape_cast %315 : vector<18xf32> to vector<18x1xf32>
    %cst_95 = arith.constant 3.200000e+01 : f32
    %317 = vector.broadcast %cst_95 : f32 to vector<18x1xf32>
    %318 = arith.divf %316, %317 : vector<18x1xf32>
    %319 = vector.broadcast %318 : vector<18x1xf32> to vector<18x32xf32>
    %320 = arith.subf %302, %319 : vector<18x32xf32>
    %321 = arith.mulf %320, %320 : vector<18x32xf32>
    %cst_96 = arith.constant dense<0.000000e+00> : vector<18xf32>
    %322 = vector.multi_reduction <add>, %321, %cst_96 [1] : vector<18x32xf32> to vector<18xf32>
    %323 = vector.shape_cast %322 : vector<18xf32> to vector<18x1xf32>
    %cst_97 = arith.constant 3.200000e+01 : f32
    %324 = vector.broadcast %cst_97 : f32 to vector<18x1xf32>
    %325 = arith.divf %323, %324 : vector<18x1xf32>
    %326 = vector.broadcast %318 : vector<18x1xf32> to vector<18x32xf32>
    %327 = arith.subf %302, %326 : vector<18x32xf32>
    %cst_98 = arith.constant 9.99999997E-7 : f32
    %328 = vector.broadcast %cst_98 : f32 to vector<18x1xf32>
    %329 = arith.addf %325, %328 : vector<18x1xf32>
    %330 = math.rsqrt %329 : vector<18x1xf32>
    %331 = vector.broadcast %330 : vector<18x1xf32> to vector<18x32xf32>
    %332 = arith.mulf %327, %331 : vector<18x32xf32>
    %333 = vector.broadcast %305 : vector<1x32xf32> to vector<18x32xf32>
    %334 = arith.mulf %332, %333 : vector<18x32xf32>
    %335 = vector.broadcast %306 : vector<1x32xf32> to vector<18x32xf32>
    %336 = arith.addf %334, %335 : vector<18x32xf32>
    %337 = arith.truncf %336 : vector<18x32xf32> to vector<18x32xbf16>
    %c2_99 = arith.constant 2 : index
    %c0_100 = arith.constant 0 : index
    %c0_101 = arith.constant 0 : index
    %338 = vector.load %arg6[%c2_99, %c0_100, %c0_101] : memref<4x32x96xbf16, #tpu.memory_space<vmem>>, vector<1x32x96xbf16>
    %339 = vector.shape_cast %338 : vector<1x32x96xbf16> to vector<32x96xbf16>
    %cst_102 = arith.constant dense<0.000000e+00> : vector<18x96xf32>
    %340 = tpu.matmul %337, %339, %cst_102 {dimension_numbers = #tpu.dot_dimension_numbers<[1], [0], [0], [1], [0, 0, 1, 1], [], []>} : vector<18x32xbf16>, vector<32x96xbf16>, vector<18x96xf32> -> vector<18x96xf32>
    %341 = vector.broadcast %307 : vector<1x96xf32> to vector<18x96xf32>
    %342 = arith.addf %340, %341 : vector<18x96xf32>
    %343 = vector.extract_strided_slice %342 {offsets = [0, 0], sizes = [18, 16], strides = [1, 1]} : vector<18x96xf32> to vector<18x16xf32>
    %344 = vector.extract_strided_slice %342 {offsets = [0, 32], sizes = [18, 16], strides = [1, 1]} : vector<18x96xf32> to vector<18x16xf32>
    %345 = vector.extract_strided_slice %342 {offsets = [0, 64], sizes = [18, 16], strides = [1, 1]} : vector<18x96xf32> to vector<18x16xf32>
    %346 = arith.truncf %343 : vector<18x16xf32> to vector<18x16xbf16>
    %347 = arith.truncf %344 : vector<18x16xf32> to vector<18x16xbf16>
    %cst_103 = arith.constant dense<0.000000e+00> : vector<18x18xf32>
    %348 = tpu.matmul %346, %347, %cst_103 {dimension_numbers = #tpu.dot_dimension_numbers<[1], [1], [0], [0], [0, 0, 1, 0], [], []>} : vector<18x16xbf16>, vector<18x16xbf16>, vector<18x18xf32> -> vector<18x18xf32>
    %cst_104 = arith.constant 2.500000e-01 : f32
    %349 = vector.broadcast %cst_104 : f32 to vector<18x18xf32>
    %350 = arith.mulf %348, %349 : vector<18x18xf32>
    %351 = arith.addf %350, %14 : vector<18x18xf32>
    %cst_105 = arith.constant dense<0xFF800000> : vector<18xf32>
    %352 = vector.multi_reduction <maximumf>, %351, %cst_105 [1] : vector<18x18xf32> to vector<18xf32>
    %353 = vector.shape_cast %352 : vector<18xf32> to vector<18x1xf32>
    %354 = vector.broadcast %353 : vector<18x1xf32> to vector<18x18xf32>
    %355 = arith.subf %351, %354 : vector<18x18xf32>
    %356 = math.exp %355 : vector<18x18xf32>
    %cst_106 = arith.constant dense<0.000000e+00> : vector<18xf32>
    %357 = vector.multi_reduction <add>, %356, %cst_106 [1] : vector<18x18xf32> to vector<18xf32>
    %358 = vector.shape_cast %357 : vector<18xf32> to vector<18x1xf32>
    %359 = tpu.reciprocal %358 {approx = true} : vector<18x1xf32> -> vector<18x1xf32>
    %360 = vector.broadcast %359 : vector<18x1xf32> to vector<18x18xf32>
    %361 = arith.mulf %356, %360 : vector<18x18xf32>
    %362 = arith.truncf %361 : vector<18x18xf32> to vector<18x18xbf16>
    %363 = arith.truncf %345 : vector<18x16xf32> to vector<18x16xbf16>
    %cst_107 = arith.constant dense<0.000000e+00> : vector<18x16xf32>
    %364 = tpu.matmul %362, %363, %cst_107 {dimension_numbers = #tpu.dot_dimension_numbers<[1], [0], [0], [1], [0, 0, 1, 1], [], []>} : vector<18x18xbf16>, vector<18x16xbf16>, vector<18x16xf32> -> vector<18x16xf32>
    %365 = vector.extract_strided_slice %342 {offsets = [0, 16], sizes = [18, 16], strides = [1, 1]} : vector<18x96xf32> to vector<18x16xf32>
    %366 = vector.extract_strided_slice %342 {offsets = [0, 48], sizes = [18, 16], strides = [1, 1]} : vector<18x96xf32> to vector<18x16xf32>
    %367 = vector.extract_strided_slice %342 {offsets = [0, 80], sizes = [18, 16], strides = [1, 1]} : vector<18x96xf32> to vector<18x16xf32>
    %368 = arith.truncf %365 : vector<18x16xf32> to vector<18x16xbf16>
    %369 = arith.truncf %366 : vector<18x16xf32> to vector<18x16xbf16>
    %cst_108 = arith.constant dense<0.000000e+00> : vector<18x18xf32>
    %370 = tpu.matmul %368, %369, %cst_108 {dimension_numbers = #tpu.dot_dimension_numbers<[1], [1], [0], [0], [0, 0, 1, 0], [], []>} : vector<18x16xbf16>, vector<18x16xbf16>, vector<18x18xf32> -> vector<18x18xf32>
    %cst_109 = arith.constant 2.500000e-01 : f32
    %371 = vector.broadcast %cst_109 : f32 to vector<18x18xf32>
    %372 = arith.mulf %370, %371 : vector<18x18xf32>
    %373 = arith.addf %372, %14 : vector<18x18xf32>
    %cst_110 = arith.constant dense<0xFF800000> : vector<18xf32>
    %374 = vector.multi_reduction <maximumf>, %373, %cst_110 [1] : vector<18x18xf32> to vector<18xf32>
    %375 = vector.shape_cast %374 : vector<18xf32> to vector<18x1xf32>
    %376 = vector.broadcast %375 : vector<18x1xf32> to vector<18x18xf32>
    %377 = arith.subf %373, %376 : vector<18x18xf32>
    %378 = math.exp %377 : vector<18x18xf32>
    %cst_111 = arith.constant dense<0.000000e+00> : vector<18xf32>
    %379 = vector.multi_reduction <add>, %378, %cst_111 [1] : vector<18x18xf32> to vector<18xf32>
    %380 = vector.shape_cast %379 : vector<18xf32> to vector<18x1xf32>
    %381 = tpu.reciprocal %380 {approx = true} : vector<18x1xf32> -> vector<18x1xf32>
    %382 = vector.broadcast %381 : vector<18x1xf32> to vector<18x18xf32>
    %383 = arith.mulf %378, %382 : vector<18x18xf32>
    %384 = arith.truncf %383 : vector<18x18xf32> to vector<18x18xbf16>
    %385 = arith.truncf %367 : vector<18x16xf32> to vector<18x16xbf16>
    %cst_112 = arith.constant dense<0.000000e+00> : vector<18x16xf32>
    %386 = tpu.matmul %384, %385, %cst_112 {dimension_numbers = #tpu.dot_dimension_numbers<[1], [0], [0], [1], [0, 0, 1, 1], [], []>} : vector<18x18xbf16>, vector<18x16xbf16>, vector<18x16xf32> -> vector<18x16xf32>
    %387 = tpu.concatenate %364, %386 in 1 : vector<18x16xf32>, vector<18x16xf32> -> vector<18x32xf32>
    %388 = arith.truncf %387 : vector<18x32xf32> to vector<18x32xbf16>
    %c2_113 = arith.constant 2 : index
    %c0_114 = arith.constant 0 : index
    %c0_115 = arith.constant 0 : index
    %389 = vector.load %arg7[%c2_113, %c0_114, %c0_115] : memref<4x32x32xbf16, #tpu.memory_space<vmem>>, vector<1x32x32xbf16>
    %390 = vector.shape_cast %389 : vector<1x32x32xbf16> to vector<32x32xbf16>
    %cst_116 = arith.constant dense<0.000000e+00> : vector<18x32xf32>
    %391 = tpu.matmul %388, %390, %cst_116 {dimension_numbers = #tpu.dot_dimension_numbers<[1], [0], [0], [1], [0, 0, 1, 1], [], []>} : vector<18x32xbf16>, vector<32x32xbf16>, vector<18x32xf32> -> vector<18x32xf32>
    %392 = vector.broadcast %308 : vector<1x32xf32> to vector<18x32xf32>
    %393 = arith.addf %391, %392 : vector<18x32xf32>
    %394 = vector.broadcast %309 : vector<1x32xf32> to vector<18x32xf32>
    %395 = arith.mulf %394, %393 : vector<18x32xf32>
    %396 = arith.addf %302, %395 : vector<18x32xf32>
    %cst_117 = arith.constant dense<0.000000e+00> : vector<18xf32>
    %397 = vector.multi_reduction <add>, %396, %cst_117 [1] : vector<18x32xf32> to vector<18xf32>
    %398 = vector.shape_cast %397 : vector<18xf32> to vector<18x1xf32>
    %cst_118 = arith.constant 3.200000e+01 : f32
    %399 = vector.broadcast %cst_118 : f32 to vector<18x1xf32>
    %400 = arith.divf %398, %399 : vector<18x1xf32>
    %401 = vector.broadcast %400 : vector<18x1xf32> to vector<18x32xf32>
    %402 = arith.subf %396, %401 : vector<18x32xf32>
    %403 = arith.mulf %402, %402 : vector<18x32xf32>
    %cst_119 = arith.constant dense<0.000000e+00> : vector<18xf32>
    %404 = vector.multi_reduction <add>, %403, %cst_119 [1] : vector<18x32xf32> to vector<18xf32>
    %405 = vector.shape_cast %404 : vector<18xf32> to vector<18x1xf32>
    %cst_120 = arith.constant 3.200000e+01 : f32
    %406 = vector.broadcast %cst_120 : f32 to vector<18x1xf32>
    %407 = arith.divf %405, %406 : vector<18x1xf32>
    %408 = vector.broadcast %400 : vector<18x1xf32> to vector<18x32xf32>
    %409 = arith.subf %396, %408 : vector<18x32xf32>
    %cst_121 = arith.constant 9.99999997E-7 : f32
    %410 = vector.broadcast %cst_121 : f32 to vector<18x1xf32>
    %411 = arith.addf %407, %410 : vector<18x1xf32>
    %412 = math.rsqrt %411 : vector<18x1xf32>
    %413 = vector.broadcast %412 : vector<18x1xf32> to vector<18x32xf32>
    %414 = arith.mulf %409, %413 : vector<18x32xf32>
    %415 = vector.broadcast %310 : vector<1x32xf32> to vector<18x32xf32>
    %416 = arith.mulf %414, %415 : vector<18x32xf32>
    %417 = vector.broadcast %311 : vector<1x32xf32> to vector<18x32xf32>
    %418 = arith.addf %416, %417 : vector<18x32xf32>
    %419 = arith.truncf %418 : vector<18x32xf32> to vector<18x32xbf16>
    %c2_122 = arith.constant 2 : index
    %c0_123 = arith.constant 0 : index
    %c0_124 = arith.constant 0 : index
    %420 = vector.load %arg8[%c2_122, %c0_123, %c0_124] : memref<4x32x128xbf16, #tpu.memory_space<vmem>>, vector<1x32x128xbf16>
    %421 = vector.shape_cast %420 : vector<1x32x128xbf16> to vector<32x128xbf16>
    %cst_125 = arith.constant dense<0.000000e+00> : vector<18x128xf32>
    %422 = tpu.matmul %419, %421, %cst_125 {dimension_numbers = #tpu.dot_dimension_numbers<[1], [0], [0], [1], [0, 0, 1, 1], [], []>} : vector<18x32xbf16>, vector<32x128xbf16>, vector<18x128xf32> -> vector<18x128xf32>
    %423 = vector.broadcast %312 : vector<1x128xf32> to vector<18x128xf32>
    %424 = arith.addf %422, %423 : vector<18x128xf32>
    %425 = arith.mulf %424, %424 : vector<18x128xf32>
    %426 = arith.mulf %424, %425 : vector<18x128xf32>
    %cst_126 = arith.constant 4.471500e-02 : f32
    %427 = vector.broadcast %cst_126 : f32 to vector<18x128xf32>
    %428 = arith.mulf %427, %426 : vector<18x128xf32>
    %429 = arith.addf %424, %428 : vector<18x128xf32>
    %cst_127 = arith.constant 0.797884583 : f32
    %430 = vector.broadcast %cst_127 : f32 to vector<18x128xf32>
    %431 = arith.mulf %430, %429 : vector<18x128xf32>
    %432 = math.tanh %431 : vector<18x128xf32>
    %cst_128 = arith.constant 1.000000e+00 : f32
    %433 = vector.broadcast %cst_128 : f32 to vector<18x128xf32>
    %434 = arith.addf %433, %432 : vector<18x128xf32>
    %cst_129 = arith.constant 5.000000e-01 : f32
    %435 = vector.broadcast %cst_129 : f32 to vector<18x128xf32>
    %436 = arith.mulf %435, %434 : vector<18x128xf32>
    %437 = arith.mulf %424, %436 : vector<18x128xf32>
    %438 = arith.truncf %437 : vector<18x128xf32> to vector<18x128xbf16>
    %c2_130 = arith.constant 2 : index
    %c0_131 = arith.constant 0 : index
    %c0_132 = arith.constant 0 : index
    %439 = vector.load %arg9[%c2_130, %c0_131, %c0_132] : memref<4x128x32xbf16, #tpu.memory_space<vmem>>, vector<1x128x32xbf16>
    %440 = vector.shape_cast %439 : vector<1x128x32xbf16> to vector<128x32xbf16>
    %cst_133 = arith.constant dense<0.000000e+00> : vector<18x32xf32>
    %441 = tpu.matmul %438, %440, %cst_133 {dimension_numbers = #tpu.dot_dimension_numbers<[1], [0], [0], [1], [0, 0, 1, 1], [], []>} : vector<18x128xbf16>, vector<128x32xbf16>, vector<18x32xf32> -> vector<18x32xf32>
    %442 = vector.broadcast %313 : vector<1x32xf32> to vector<18x32xf32>
    %443 = arith.addf %441, %442 : vector<18x32xf32>
    %444 = vector.broadcast %314 : vector<1x32xf32> to vector<18x32xf32>
    %445 = arith.mulf %444, %443 : vector<18x32xf32>
    %446 = arith.addf %396, %445 : vector<18x32xf32>
    %c3 = arith.constant 3 : index
    %c0_134 = arith.constant 0 : index
    %c0_135 = arith.constant 0 : index
    %447 = vector.load %arg5[%c3, %c0_134, %c0_135] : memref<4x10x128xf32, #tpu.memory_space<vmem>>, vector<1x10x128xf32>
    %448 = vector.shape_cast %447 : vector<1x10x128xf32> to vector<10x128xf32>
    %449 = vector.extract_strided_slice %448 {offsets = [0, 0], sizes = [1, 32], strides = [1, 1]} : vector<10x128xf32> to vector<1x32xf32>
    %450 = vector.extract_strided_slice %448 {offsets = [1, 0], sizes = [1, 32], strides = [1, 1]} : vector<10x128xf32> to vector<1x32xf32>
    %451 = vector.extract_strided_slice %448 {offsets = [2, 0], sizes = [1, 96], strides = [1, 1]} : vector<10x128xf32> to vector<1x96xf32>
    %452 = vector.extract_strided_slice %448 {offsets = [3, 0], sizes = [1, 32], strides = [1, 1]} : vector<10x128xf32> to vector<1x32xf32>
    %453 = vector.extract_strided_slice %448 {offsets = [4, 0], sizes = [1, 32], strides = [1, 1]} : vector<10x128xf32> to vector<1x32xf32>
    %454 = vector.extract_strided_slice %448 {offsets = [5, 0], sizes = [1, 32], strides = [1, 1]} : vector<10x128xf32> to vector<1x32xf32>
    %455 = vector.extract_strided_slice %448 {offsets = [6, 0], sizes = [1, 32], strides = [1, 1]} : vector<10x128xf32> to vector<1x32xf32>
    %456 = vector.extract_strided_slice %448 {offsets = [7, 0], sizes = [1, 128], strides = [1, 1]} : vector<10x128xf32> to vector<1x128xf32>
    %457 = vector.extract_strided_slice %448 {offsets = [8, 0], sizes = [1, 32], strides = [1, 1]} : vector<10x128xf32> to vector<1x32xf32>
    %458 = vector.extract_strided_slice %448 {offsets = [9, 0], sizes = [1, 32], strides = [1, 1]} : vector<10x128xf32> to vector<1x32xf32>
    %cst_136 = arith.constant dense<0.000000e+00> : vector<18xf32>
    %459 = vector.multi_reduction <add>, %446, %cst_136 [1] : vector<18x32xf32> to vector<18xf32>
    %460 = vector.shape_cast %459 : vector<18xf32> to vector<18x1xf32>
    %cst_137 = arith.constant 3.200000e+01 : f32
    %461 = vector.broadcast %cst_137 : f32 to vector<18x1xf32>
    %462 = arith.divf %460, %461 : vector<18x1xf32>
    %463 = vector.broadcast %462 : vector<18x1xf32> to vector<18x32xf32>
    %464 = arith.subf %446, %463 : vector<18x32xf32>
    %465 = arith.mulf %464, %464 : vector<18x32xf32>
    %cst_138 = arith.constant dense<0.000000e+00> : vector<18xf32>
    %466 = vector.multi_reduction <add>, %465, %cst_138 [1] : vector<18x32xf32> to vector<18xf32>
    %467 = vector.shape_cast %466 : vector<18xf32> to vector<18x1xf32>
    %cst_139 = arith.constant 3.200000e+01 : f32
    %468 = vector.broadcast %cst_139 : f32 to vector<18x1xf32>
    %469 = arith.divf %467, %468 : vector<18x1xf32>
    %470 = vector.broadcast %462 : vector<18x1xf32> to vector<18x32xf32>
    %471 = arith.subf %446, %470 : vector<18x32xf32>
    %cst_140 = arith.constant 9.99999997E-7 : f32
    %472 = vector.broadcast %cst_140 : f32 to vector<18x1xf32>
    %473 = arith.addf %469, %472 : vector<18x1xf32>
    %474 = math.rsqrt %473 : vector<18x1xf32>
    %475 = vector.broadcast %474 : vector<18x1xf32> to vector<18x32xf32>
    %476 = arith.mulf %471, %475 : vector<18x32xf32>
    %477 = vector.broadcast %449 : vector<1x32xf32> to vector<18x32xf32>
    %478 = arith.mulf %476, %477 : vector<18x32xf32>
    %479 = vector.broadcast %450 : vector<1x32xf32> to vector<18x32xf32>
    %480 = arith.addf %478, %479 : vector<18x32xf32>
    %481 = arith.truncf %480 : vector<18x32xf32> to vector<18x32xbf16>
    %c3_141 = arith.constant 3 : index
    %c0_142 = arith.constant 0 : index
    %c0_143 = arith.constant 0 : index
    %482 = vector.load %arg6[%c3_141, %c0_142, %c0_143] : memref<4x32x96xbf16, #tpu.memory_space<vmem>>, vector<1x32x96xbf16>
    %483 = vector.shape_cast %482 : vector<1x32x96xbf16> to vector<32x96xbf16>
    %cst_144 = arith.constant dense<0.000000e+00> : vector<18x96xf32>
    %484 = tpu.matmul %481, %483, %cst_144 {dimension_numbers = #tpu.dot_dimension_numbers<[1], [0], [0], [1], [0, 0, 1, 1], [], []>} : vector<18x32xbf16>, vector<32x96xbf16>, vector<18x96xf32> -> vector<18x96xf32>
    %485 = vector.broadcast %451 : vector<1x96xf32> to vector<18x96xf32>
    %486 = arith.addf %484, %485 : vector<18x96xf32>
    %487 = vector.extract_strided_slice %486 {offsets = [0, 0], sizes = [18, 16], strides = [1, 1]} : vector<18x96xf32> to vector<18x16xf32>
    %488 = vector.extract_strided_slice %486 {offsets = [0, 32], sizes = [18, 16], strides = [1, 1]} : vector<18x96xf32> to vector<18x16xf32>
    %489 = vector.extract_strided_slice %486 {offsets = [0, 64], sizes = [18, 16], strides = [1, 1]} : vector<18x96xf32> to vector<18x16xf32>
    %490 = arith.truncf %487 : vector<18x16xf32> to vector<18x16xbf16>
    %491 = arith.truncf %488 : vector<18x16xf32> to vector<18x16xbf16>
    %cst_145 = arith.constant dense<0.000000e+00> : vector<18x18xf32>
    %492 = tpu.matmul %490, %491, %cst_145 {dimension_numbers = #tpu.dot_dimension_numbers<[1], [1], [0], [0], [0, 0, 1, 0], [], []>} : vector<18x16xbf16>, vector<18x16xbf16>, vector<18x18xf32> -> vector<18x18xf32>
    %cst_146 = arith.constant 2.500000e-01 : f32
    %493 = vector.broadcast %cst_146 : f32 to vector<18x18xf32>
    %494 = arith.mulf %492, %493 : vector<18x18xf32>
    %495 = arith.addf %494, %14 : vector<18x18xf32>
    %cst_147 = arith.constant dense<0xFF800000> : vector<18xf32>
    %496 = vector.multi_reduction <maximumf>, %495, %cst_147 [1] : vector<18x18xf32> to vector<18xf32>
    %497 = vector.shape_cast %496 : vector<18xf32> to vector<18x1xf32>
    %498 = vector.broadcast %497 : vector<18x1xf32> to vector<18x18xf32>
    %499 = arith.subf %495, %498 : vector<18x18xf32>
    %500 = math.exp %499 : vector<18x18xf32>
    %cst_148 = arith.constant dense<0.000000e+00> : vector<18xf32>
    %501 = vector.multi_reduction <add>, %500, %cst_148 [1] : vector<18x18xf32> to vector<18xf32>
    %502 = vector.shape_cast %501 : vector<18xf32> to vector<18x1xf32>
    %503 = tpu.reciprocal %502 {approx = true} : vector<18x1xf32> -> vector<18x1xf32>
    %504 = vector.broadcast %503 : vector<18x1xf32> to vector<18x18xf32>
    %505 = arith.mulf %500, %504 : vector<18x18xf32>
    %506 = arith.truncf %505 : vector<18x18xf32> to vector<18x18xbf16>
    %507 = arith.truncf %489 : vector<18x16xf32> to vector<18x16xbf16>
    %cst_149 = arith.constant dense<0.000000e+00> : vector<18x16xf32>
    %508 = tpu.matmul %506, %507, %cst_149 {dimension_numbers = #tpu.dot_dimension_numbers<[1], [0], [0], [1], [0, 0, 1, 1], [], []>} : vector<18x18xbf16>, vector<18x16xbf16>, vector<18x16xf32> -> vector<18x16xf32>
    %509 = vector.extract_strided_slice %486 {offsets = [0, 16], sizes = [18, 16], strides = [1, 1]} : vector<18x96xf32> to vector<18x16xf32>
    %510 = vector.extract_strided_slice %486 {offsets = [0, 48], sizes = [18, 16], strides = [1, 1]} : vector<18x96xf32> to vector<18x16xf32>
    %511 = vector.extract_strided_slice %486 {offsets = [0, 80], sizes = [18, 16], strides = [1, 1]} : vector<18x96xf32> to vector<18x16xf32>
    %512 = arith.truncf %509 : vector<18x16xf32> to vector<18x16xbf16>
    %513 = arith.truncf %510 : vector<18x16xf32> to vector<18x16xbf16>
    %cst_150 = arith.constant dense<0.000000e+00> : vector<18x18xf32>
    %514 = tpu.matmul %512, %513, %cst_150 {dimension_numbers = #tpu.dot_dimension_numbers<[1], [1], [0], [0], [0, 0, 1, 0], [], []>} : vector<18x16xbf16>, vector<18x16xbf16>, vector<18x18xf32> -> vector<18x18xf32>
    %cst_151 = arith.constant 2.500000e-01 : f32
    %515 = vector.broadcast %cst_151 : f32 to vector<18x18xf32>
    %516 = arith.mulf %514, %515 : vector<18x18xf32>
    %517 = arith.addf %516, %14 : vector<18x18xf32>
    %cst_152 = arith.constant dense<0xFF800000> : vector<18xf32>
    %518 = vector.multi_reduction <maximumf>, %517, %cst_152 [1] : vector<18x18xf32> to vector<18xf32>
    %519 = vector.shape_cast %518 : vector<18xf32> to vector<18x1xf32>
    %520 = vector.broadcast %519 : vector<18x1xf32> to vector<18x18xf32>
    %521 = arith.subf %517, %520 : vector<18x18xf32>
    %522 = math.exp %521 : vector<18x18xf32>
    %cst_153 = arith.constant dense<0.000000e+00> : vector<18xf32>
    %523 = vector.multi_reduction <add>, %522, %cst_153 [1] : vector<18x18xf32> to vector<18xf32>
    %524 = vector.shape_cast %523 : vector<18xf32> to vector<18x1xf32>
    %525 = tpu.reciprocal %524 {approx = true} : vector<18x1xf32> -> vector<18x1xf32>
    %526 = vector.broadcast %525 : vector<18x1xf32> to vector<18x18xf32>
    %527 = arith.mulf %522, %526 : vector<18x18xf32>
    %528 = arith.truncf %527 : vector<18x18xf32> to vector<18x18xbf16>
    %529 = arith.truncf %511 : vector<18x16xf32> to vector<18x16xbf16>
    %cst_154 = arith.constant dense<0.000000e+00> : vector<18x16xf32>
    %530 = tpu.matmul %528, %529, %cst_154 {dimension_numbers = #tpu.dot_dimension_numbers<[1], [0], [0], [1], [0, 0, 1, 1], [], []>} : vector<18x18xbf16>, vector<18x16xbf16>, vector<18x16xf32> -> vector<18x16xf32>
    %531 = tpu.concatenate %508, %530 in 1 : vector<18x16xf32>, vector<18x16xf32> -> vector<18x32xf32>
    %532 = arith.truncf %531 : vector<18x32xf32> to vector<18x32xbf16>
    %c3_155 = arith.constant 3 : index
    %c0_156 = arith.constant 0 : index
    %c0_157 = arith.constant 0 : index
    %533 = vector.load %arg7[%c3_155, %c0_156, %c0_157] : memref<4x32x32xbf16, #tpu.memory_space<vmem>>, vector<1x32x32xbf16>
    %534 = vector.shape_cast %533 : vector<1x32x32xbf16> to vector<32x32xbf16>
    %cst_158 = arith.constant dense<0.000000e+00> : vector<18x32xf32>
    %535 = tpu.matmul %532, %534, %cst_158 {dimension_numbers = #tpu.dot_dimension_numbers<[1], [0], [0], [1], [0, 0, 1, 1], [], []>} : vector<18x32xbf16>, vector<32x32xbf16>, vector<18x32xf32> -> vector<18x32xf32>
    %536 = vector.broadcast %452 : vector<1x32xf32> to vector<18x32xf32>
    %537 = arith.addf %535, %536 : vector<18x32xf32>
    %538 = vector.broadcast %453 : vector<1x32xf32> to vector<18x32xf32>
    %539 = arith.mulf %538, %537 : vector<18x32xf32>
    %540 = arith.addf %446, %539 : vector<18x32xf32>
    %cst_159 = arith.constant dense<0.000000e+00> : vector<18xf32>
    %541 = vector.multi_reduction <add>, %540, %cst_159 [1] : vector<18x32xf32> to vector<18xf32>
    %542 = vector.shape_cast %541 : vector<18xf32> to vector<18x1xf32>
    %cst_160 = arith.constant 3.200000e+01 : f32
    %543 = vector.broadcast %cst_160 : f32 to vector<18x1xf32>
    %544 = arith.divf %542, %543 : vector<18x1xf32>
    %545 = vector.broadcast %544 : vector<18x1xf32> to vector<18x32xf32>
    %546 = arith.subf %540, %545 : vector<18x32xf32>
    %547 = arith.mulf %546, %546 : vector<18x32xf32>
    %cst_161 = arith.constant dense<0.000000e+00> : vector<18xf32>
    %548 = vector.multi_reduction <add>, %547, %cst_161 [1] : vector<18x32xf32> to vector<18xf32>
    %549 = vector.shape_cast %548 : vector<18xf32> to vector<18x1xf32>
    %cst_162 = arith.constant 3.200000e+01 : f32
    %550 = vector.broadcast %cst_162 : f32 to vector<18x1xf32>
    %551 = arith.divf %549, %550 : vector<18x1xf32>
    %552 = vector.broadcast %544 : vector<18x1xf32> to vector<18x32xf32>
    %553 = arith.subf %540, %552 : vector<18x32xf32>
    %cst_163 = arith.constant 9.99999997E-7 : f32
    %554 = vector.broadcast %cst_163 : f32 to vector<18x1xf32>
    %555 = arith.addf %551, %554 : vector<18x1xf32>
    %556 = math.rsqrt %555 : vector<18x1xf32>
    %557 = vector.broadcast %556 : vector<18x1xf32> to vector<18x32xf32>
    %558 = arith.mulf %553, %557 : vector<18x32xf32>
    %559 = vector.broadcast %454 : vector<1x32xf32> to vector<18x32xf32>
    %560 = arith.mulf %558, %559 : vector<18x32xf32>
    %561 = vector.broadcast %455 : vector<1x32xf32> to vector<18x32xf32>
    %562 = arith.addf %560, %561 : vector<18x32xf32>
    %563 = arith.truncf %562 : vector<18x32xf32> to vector<18x32xbf16>
    %c3_164 = arith.constant 3 : index
    %c0_165 = arith.constant 0 : index
    %c0_166 = arith.constant 0 : index
    %564 = vector.load %arg8[%c3_164, %c0_165, %c0_166] : memref<4x32x128xbf16, #tpu.memory_space<vmem>>, vector<1x32x128xbf16>
    %565 = vector.shape_cast %564 : vector<1x32x128xbf16> to vector<32x128xbf16>
    %cst_167 = arith.constant dense<0.000000e+00> : vector<18x128xf32>
    %566 = tpu.matmul %563, %565, %cst_167 {dimension_numbers = #tpu.dot_dimension_numbers<[1], [0], [0], [1], [0, 0, 1, 1], [], []>} : vector<18x32xbf16>, vector<32x128xbf16>, vector<18x128xf32> -> vector<18x128xf32>
    %567 = vector.broadcast %456 : vector<1x128xf32> to vector<18x128xf32>
    %568 = arith.addf %566, %567 : vector<18x128xf32>
    %569 = arith.mulf %568, %568 : vector<18x128xf32>
    %570 = arith.mulf %568, %569 : vector<18x128xf32>
    %cst_168 = arith.constant 4.471500e-02 : f32
    %571 = vector.broadcast %cst_168 : f32 to vector<18x128xf32>
    %572 = arith.mulf %571, %570 : vector<18x128xf32>
    %573 = arith.addf %568, %572 : vector<18x128xf32>
    %cst_169 = arith.constant 0.797884583 : f32
    %574 = vector.broadcast %cst_169 : f32 to vector<18x128xf32>
    %575 = arith.mulf %574, %573 : vector<18x128xf32>
    %576 = math.tanh %575 : vector<18x128xf32>
    %cst_170 = arith.constant 1.000000e+00 : f32
    %577 = vector.broadcast %cst_170 : f32 to vector<18x128xf32>
    %578 = arith.addf %577, %576 : vector<18x128xf32>
    %cst_171 = arith.constant 5.000000e-01 : f32
    %579 = vector.broadcast %cst_171 : f32 to vector<18x128xf32>
    %580 = arith.mulf %579, %578 : vector<18x128xf32>
    %581 = arith.mulf %568, %580 : vector<18x128xf32>
    %582 = arith.truncf %581 : vector<18x128xf32> to vector<18x128xbf16>
    %c3_172 = arith.constant 3 : index
    %c0_173 = arith.constant 0 : index
    %c0_174 = arith.constant 0 : index
    %583 = vector.load %arg9[%c3_172, %c0_173, %c0_174] : memref<4x128x32xbf16, #tpu.memory_space<vmem>>, vector<1x128x32xbf16>
    %584 = vector.shape_cast %583 : vector<1x128x32xbf16> to vector<128x32xbf16>
    %cst_175 = arith.constant dense<0.000000e+00> : vector<18x32xf32>
    %585 = tpu.matmul %582, %584, %cst_175 {dimension_numbers = #tpu.dot_dimension_numbers<[1], [0], [0], [1], [0, 0, 1, 1], [], []>} : vector<18x128xbf16>, vector<128x32xbf16>, vector<18x32xf32> -> vector<18x32xf32>
    %586 = vector.broadcast %457 : vector<1x32xf32> to vector<18x32xf32>
    %587 = arith.addf %585, %586 : vector<18x32xf32>
    %588 = vector.broadcast %458 : vector<1x32xf32> to vector<18x32xf32>
    %589 = arith.mulf %588, %587 : vector<18x32xf32>
    %590 = arith.addf %540, %589 : vector<18x32xf32>
    %c0_176 = arith.constant 0 : index
    %c0_177 = arith.constant 0 : index
    %591 = vector.load %arg10[%c0_176, %c0_177] : memref<2x32xf32, #tpu.memory_space<vmem>>, vector<1x32xf32>
    %c1_178 = arith.constant 1 : index
    %c0_179 = arith.constant 0 : index
    %592 = vector.load %arg10[%c1_178, %c0_179] : memref<2x32xf32, #tpu.memory_space<vmem>>, vector<1x32xf32>
    %cst_180 = arith.constant dense<0.000000e+00> : vector<18xf32>
    %593 = vector.multi_reduction <add>, %158, %cst_180 [1] : vector<18x32xf32> to vector<18xf32>
    %594 = vector.shape_cast %593 : vector<18xf32> to vector<18x1xf32>
    %cst_181 = arith.constant 3.200000e+01 : f32
    %595 = vector.broadcast %cst_181 : f32 to vector<18x1xf32>
    %596 = arith.divf %594, %595 : vector<18x1xf32>
    %597 = vector.broadcast %596 : vector<18x1xf32> to vector<18x32xf32>
    %598 = arith.subf %158, %597 : vector<18x32xf32>
    %599 = arith.mulf %598, %598 : vector<18x32xf32>
    %cst_182 = arith.constant dense<0.000000e+00> : vector<18xf32>
    %600 = vector.multi_reduction <add>, %599, %cst_182 [1] : vector<18x32xf32> to vector<18xf32>
    %601 = vector.shape_cast %600 : vector<18xf32> to vector<18x1xf32>
    %cst_183 = arith.constant 3.200000e+01 : f32
    %602 = vector.broadcast %cst_183 : f32 to vector<18x1xf32>
    %603 = arith.divf %601, %602 : vector<18x1xf32>
    %604 = vector.broadcast %596 : vector<18x1xf32> to vector<18x32xf32>
    %605 = arith.subf %158, %604 : vector<18x32xf32>
    %cst_184 = arith.constant 9.99999997E-7 : f32
    %606 = vector.broadcast %cst_184 : f32 to vector<18x1xf32>
    %607 = arith.addf %603, %606 : vector<18x1xf32>
    %608 = math.rsqrt %607 : vector<18x1xf32>
    %609 = vector.broadcast %608 : vector<18x1xf32> to vector<18x32xf32>
    %610 = arith.mulf %605, %609 : vector<18x32xf32>
    %611 = vector.broadcast %591 : vector<1x32xf32> to vector<18x32xf32>
    %612 = arith.mulf %610, %611 : vector<18x32xf32>
    %613 = vector.broadcast %592 : vector<1x32xf32> to vector<18x32xf32>
    %614 = arith.addf %612, %613 : vector<18x32xf32>
    %cst_185 = arith.constant dense<0.000000e+00> : vector<18xf32>
    %615 = vector.multi_reduction <add>, %302, %cst_185 [1] : vector<18x32xf32> to vector<18xf32>
    %616 = vector.shape_cast %615 : vector<18xf32> to vector<18x1xf32>
    %cst_186 = arith.constant 3.200000e+01 : f32
    %617 = vector.broadcast %cst_186 : f32 to vector<18x1xf32>
    %618 = arith.divf %616, %617 : vector<18x1xf32>
    %619 = vector.broadcast %618 : vector<18x1xf32> to vector<18x32xf32>
    %620 = arith.subf %302, %619 : vector<18x32xf32>
    %621 = arith.mulf %620, %620 : vector<18x32xf32>
    %cst_187 = arith.constant dense<0.000000e+00> : vector<18xf32>
    %622 = vector.multi_reduction <add>, %621, %cst_187 [1] : vector<18x32xf32> to vector<18xf32>
    %623 = vector.shape_cast %622 : vector<18xf32> to vector<18x1xf32>
    %cst_188 = arith.constant 3.200000e+01 : f32
    %624 = vector.broadcast %cst_188 : f32 to vector<18x1xf32>
    %625 = arith.divf %623, %624 : vector<18x1xf32>
    %626 = vector.broadcast %618 : vector<18x1xf32> to vector<18x32xf32>
    %627 = arith.subf %302, %626 : vector<18x32xf32>
    %cst_189 = arith.constant 9.99999997E-7 : f32
    %628 = vector.broadcast %cst_189 : f32 to vector<18x1xf32>
    %629 = arith.addf %625, %628 : vector<18x1xf32>
    %630 = math.rsqrt %629 : vector<18x1xf32>
    %631 = vector.broadcast %630 : vector<18x1xf32> to vector<18x32xf32>
    %632 = arith.mulf %627, %631 : vector<18x32xf32>
    %633 = vector.broadcast %591 : vector<1x32xf32> to vector<18x32xf32>
    %634 = arith.mulf %632, %633 : vector<18x32xf32>
    %635 = vector.broadcast %592 : vector<1x32xf32> to vector<18x32xf32>
    %636 = arith.addf %634, %635 : vector<18x32xf32>
    %cst_190 = arith.constant dense<0.000000e+00> : vector<18xf32>
    %637 = vector.multi_reduction <add>, %446, %cst_190 [1] : vector<18x32xf32> to vector<18xf32>
    %638 = vector.shape_cast %637 : vector<18xf32> to vector<18x1xf32>
    %cst_191 = arith.constant 3.200000e+01 : f32
    %639 = vector.broadcast %cst_191 : f32 to vector<18x1xf32>
    %640 = arith.divf %638, %639 : vector<18x1xf32>
    %641 = vector.broadcast %640 : vector<18x1xf32> to vector<18x32xf32>
    %642 = arith.subf %446, %641 : vector<18x32xf32>
    %643 = arith.mulf %642, %642 : vector<18x32xf32>
    %cst_192 = arith.constant dense<0.000000e+00> : vector<18xf32>
    %644 = vector.multi_reduction <add>, %643, %cst_192 [1] : vector<18x32xf32> to vector<18xf32>
    %645 = vector.shape_cast %644 : vector<18xf32> to vector<18x1xf32>
    %cst_193 = arith.constant 3.200000e+01 : f32
    %646 = vector.broadcast %cst_193 : f32 to vector<18x1xf32>
    %647 = arith.divf %645, %646 : vector<18x1xf32>
    %648 = vector.broadcast %640 : vector<18x1xf32> to vector<18x32xf32>
    %649 = arith.subf %446, %648 : vector<18x32xf32>
    %cst_194 = arith.constant 9.99999997E-7 : f32
    %650 = vector.broadcast %cst_194 : f32 to vector<18x1xf32>
    %651 = arith.addf %647, %650 : vector<18x1xf32>
    %652 = math.rsqrt %651 : vector<18x1xf32>
    %653 = vector.broadcast %652 : vector<18x1xf32> to vector<18x32xf32>
    %654 = arith.mulf %649, %653 : vector<18x32xf32>
    %655 = vector.broadcast %591 : vector<1x32xf32> to vector<18x32xf32>
    %656 = arith.mulf %654, %655 : vector<18x32xf32>
    %657 = vector.broadcast %592 : vector<1x32xf32> to vector<18x32xf32>
    %658 = arith.addf %656, %657 : vector<18x32xf32>
    %cst_195 = arith.constant dense<0.000000e+00> : vector<18xf32>
    %659 = vector.multi_reduction <add>, %590, %cst_195 [1] : vector<18x32xf32> to vector<18xf32>
    %660 = vector.shape_cast %659 : vector<18xf32> to vector<18x1xf32>
    %cst_196 = arith.constant 3.200000e+01 : f32
    %661 = vector.broadcast %cst_196 : f32 to vector<18x1xf32>
    %662 = arith.divf %660, %661 : vector<18x1xf32>
    %663 = vector.broadcast %662 : vector<18x1xf32> to vector<18x32xf32>
    %664 = arith.subf %590, %663 : vector<18x32xf32>
    %665 = arith.mulf %664, %664 : vector<18x32xf32>
    %cst_197 = arith.constant dense<0.000000e+00> : vector<18xf32>
    %666 = vector.multi_reduction <add>, %665, %cst_197 [1] : vector<18x32xf32> to vector<18xf32>
    %667 = vector.shape_cast %666 : vector<18xf32> to vector<18x1xf32>
    %cst_198 = arith.constant 3.200000e+01 : f32
    %668 = vector.broadcast %cst_198 : f32 to vector<18x1xf32>
    %669 = arith.divf %667, %668 : vector<18x1xf32>
    %670 = vector.broadcast %662 : vector<18x1xf32> to vector<18x32xf32>
    %671 = arith.subf %590, %670 : vector<18x32xf32>
    %cst_199 = arith.constant 9.99999997E-7 : f32
    %672 = vector.broadcast %cst_199 : f32 to vector<18x1xf32>
    %673 = arith.addf %669, %672 : vector<18x1xf32>
    %674 = math.rsqrt %673 : vector<18x1xf32>
    %675 = vector.broadcast %674 : vector<18x1xf32> to vector<18x32xf32>
    %676 = arith.mulf %671, %675 : vector<18x32xf32>
    %677 = vector.broadcast %591 : vector<1x32xf32> to vector<18x32xf32>
    %678 = arith.mulf %676, %677 : vector<18x32xf32>
    %679 = vector.broadcast %592 : vector<1x32xf32> to vector<18x32xf32>
    %680 = arith.addf %678, %679 : vector<18x32xf32>
    %681 = vector.extract_strided_slice %614 {offsets = [0, 0], sizes = [1, 32], strides = [1, 1]} : vector<18x32xf32> to vector<1x32xf32>
    %682 = vector.extract_strided_slice %614 {offsets = [9, 0], sizes = [1, 32], strides = [1, 1]} : vector<18x32xf32> to vector<1x32xf32>
    %683 = tpu.concatenate %681, %682 in 0 : vector<1x32xf32>, vector<1x32xf32> -> vector<2x32xf32>
    %684 = vector.extract_strided_slice %636 {offsets = [0, 0], sizes = [1, 32], strides = [1, 1]} : vector<18x32xf32> to vector<1x32xf32>
    %685 = vector.extract_strided_slice %636 {offsets = [9, 0], sizes = [1, 32], strides = [1, 1]} : vector<18x32xf32> to vector<1x32xf32>
    %686 = tpu.concatenate %684, %685 in 0 : vector<1x32xf32>, vector<1x32xf32> -> vector<2x32xf32>
    %687 = vector.extract_strided_slice %658 {offsets = [0, 0], sizes = [1, 32], strides = [1, 1]} : vector<18x32xf32> to vector<1x32xf32>
    %688 = vector.extract_strided_slice %658 {offsets = [9, 0], sizes = [1, 32], strides = [1, 1]} : vector<18x32xf32> to vector<1x32xf32>
    %689 = tpu.concatenate %687, %688 in 0 : vector<1x32xf32>, vector<1x32xf32> -> vector<2x32xf32>
    %690 = vector.extract_strided_slice %680 {offsets = [0, 0], sizes = [1, 32], strides = [1, 1]} : vector<18x32xf32> to vector<1x32xf32>
    %691 = vector.extract_strided_slice %680 {offsets = [9, 0], sizes = [1, 32], strides = [1, 1]} : vector<18x32xf32> to vector<1x32xf32>
    %692 = tpu.concatenate %690, %691 in 0 : vector<1x32xf32>, vector<1x32xf32> -> vector<2x32xf32>
    %693 = vector.extract_strided_slice %680 {offsets = [5, 0], sizes = [4, 32], strides = [1, 1]} : vector<18x32xf32> to vector<4x32xf32>
    %cst_200 = arith.constant dense<0.000000e+00> : vector<32xf32>
    %694 = vector.multi_reduction <add>, %693, %cst_200 [0] : vector<4x32xf32> to vector<32xf32>
    %695 = vector.shape_cast %694 : vector<32xf32> to vector<1x32xf32>
    %cst_201 = arith.constant 4.000000e+00 : f32
    %696 = vector.broadcast %cst_201 : f32 to vector<1x32xf32>
    %697 = arith.divf %695, %696 : vector<1x32xf32>
    %698 = vector.extract_strided_slice %680 {offsets = [14, 0], sizes = [4, 32], strides = [1, 1]} : vector<18x32xf32> to vector<4x32xf32>
    %cst_202 = arith.constant dense<0.000000e+00> : vector<32xf32>
    %699 = vector.multi_reduction <add>, %698, %cst_202 [0] : vector<4x32xf32> to vector<32xf32>
    %700 = vector.shape_cast %699 : vector<32xf32> to vector<1x32xf32>
    %cst_203 = arith.constant 4.000000e+00 : f32
    %701 = vector.broadcast %cst_203 : f32 to vector<1x32xf32>
    %702 = arith.divf %700, %701 : vector<1x32xf32>
    %703 = tpu.concatenate %697, %702 in 0 : vector<1x32xf32>, vector<1x32xf32> -> vector<2x32xf32>
    %704 = tpu.concatenate %683, %686, %689, %692, %703 in 1 : vector<2x32xf32>, vector<2x32xf32>, vector<2x32xf32>, vector<2x32xf32>, vector<2x32xf32> -> vector<2x160xf32>
    %c0_204 = arith.constant 0 : index
    %c0_205 = arith.constant 0 : index
    %705 = vector.load %arg15[%c0_204, %c0_205] : memref<4x1024xf32, #tpu.memory_space<vmem>>, vector<4x1024xf32>
    %c0_206 = arith.constant 0 : index
    %c0_207 = arith.constant 0 : index
    %706 = vector.load %arg11[%c0_206, %c0_207] : memref<160x1024xbf16, #tpu.memory_space<vmem>>, vector<160x1024xbf16>
    %707 = arith.truncf %704 : vector<2x160xf32> to vector<2x160xbf16>
    %cst_208 = arith.constant dense<0.000000e+00> : vector<2x1024xf32>
    %708 = tpu.matmul %707, %706, %cst_208 {dimension_numbers = #tpu.dot_dimension_numbers<[1], [0], [0], [1], [0, 0, 1, 1], [], []>} : vector<2x160xbf16>, vector<160x1024xbf16>, vector<2x1024xf32> -> vector<2x1024xf32>
    %709 = vector.extract_strided_slice %705 {offsets = [0, 0], sizes = [1, 1024], strides = [1, 1]} : vector<4x1024xf32> to vector<1x1024xf32>
    %710 = vector.broadcast %709 : vector<1x1024xf32> to vector<2x1024xf32>
    %711 = arith.addf %708, %710 : vector<2x1024xf32>
    %cst_209 = arith.constant 0.000000e+00 : f32
    %712 = vector.broadcast %cst_209 : f32 to vector<2x1024xf32>
    %713 = arith.maximumf %711, %712 : vector<2x1024xf32>
    %c0_210 = arith.constant 0 : index
    %c0_211 = arith.constant 0 : index
    %714 = vector.load %arg12[%c0_210, %c0_211] : memref<1024x256xbf16, #tpu.memory_space<vmem>>, vector<1024x256xbf16>
    %715 = arith.truncf %713 : vector<2x1024xf32> to vector<2x1024xbf16>
    %cst_212 = arith.constant dense<0.000000e+00> : vector<2x256xf32>
    %716 = tpu.matmul %715, %714, %cst_212 {dimension_numbers = #tpu.dot_dimension_numbers<[1], [0], [0], [1], [0, 0, 1, 1], [], []>} : vector<2x1024xbf16>, vector<1024x256xbf16>, vector<2x256xf32> -> vector<2x256xf32>
    %717 = vector.extract_strided_slice %705 {offsets = [1, 0], sizes = [1, 256], strides = [1, 1]} : vector<4x1024xf32> to vector<1x256xf32>
    %718 = vector.broadcast %717 : vector<1x256xf32> to vector<2x256xf32>
    %719 = arith.addf %716, %718 : vector<2x256xf32>
    %cst_213 = arith.constant 0.000000e+00 : f32
    %720 = vector.broadcast %cst_213 : f32 to vector<2x256xf32>
    %721 = arith.maximumf %719, %720 : vector<2x256xf32>
    %c0_214 = arith.constant 0 : index
    %c0_215 = arith.constant 0 : index
    %722 = vector.load %arg13[%c0_214, %c0_215] : memref<256x64xbf16, #tpu.memory_space<vmem>>, vector<256x64xbf16>
    %723 = arith.truncf %721 : vector<2x256xf32> to vector<2x256xbf16>
    %cst_216 = arith.constant dense<0.000000e+00> : vector<2x64xf32>
    %724 = tpu.matmul %723, %722, %cst_216 {dimension_numbers = #tpu.dot_dimension_numbers<[1], [0], [0], [1], [0, 0, 1, 1], [], []>} : vector<2x256xbf16>, vector<256x64xbf16>, vector<2x64xf32> -> vector<2x64xf32>
    %725 = vector.extract_strided_slice %705 {offsets = [2, 0], sizes = [1, 64], strides = [1, 1]} : vector<4x1024xf32> to vector<1x64xf32>
    %726 = vector.broadcast %725 : vector<1x64xf32> to vector<2x64xf32>
    %727 = arith.addf %724, %726 : vector<2x64xf32>
    %cst_217 = arith.constant 0.000000e+00 : f32
    %728 = vector.broadcast %cst_217 : f32 to vector<2x64xf32>
    %729 = arith.maximumf %727, %728 : vector<2x64xf32>
    %c0_218 = arith.constant 0 : index
    %c0_219 = arith.constant 0 : index
    %730 = vector.load %arg14[%c0_218, %c0_219] : memref<64x128xbf16, #tpu.memory_space<vmem>>, vector<64x128xbf16>
    %731 = arith.truncf %729 : vector<2x64xf32> to vector<2x64xbf16>
    %cst_220 = arith.constant dense<0.000000e+00> : vector<2x128xf32>
    %732 = tpu.matmul %731, %730, %cst_220 {dimension_numbers = #tpu.dot_dimension_numbers<[1], [0], [0], [1], [0, 0, 1, 1], [], []>} : vector<2x64xbf16>, vector<64x128xbf16>, vector<2x128xf32> -> vector<2x128xf32>
    %733 = vector.extract_strided_slice %705 {offsets = [3, 0], sizes = [1, 128], strides = [1, 1]} : vector<4x1024xf32> to vector<1x128xf32>
    %734 = vector.broadcast %733 : vector<1x128xf32> to vector<2x128xf32>
    %735 = arith.addf %732, %734 : vector<2x128xf32>
    %c0_221 = arith.constant 0 : index
    %c0_222 = arith.constant 0 : index
    %736 = vector.load %arg16[%c0_221, %c0_222] : memref<2x128xf32, #tpu.memory_space<vmem>>, vector<2x128xf32>
    tpu.vector_store %arg16[%c0_221, %c0_222], %735 {strides = array<i32>} : memref<2x128xf32, #tpu.memory_space<vmem>>, vector<2x128xf32>,
    return
  }
  func.func @transform_0(%arg0: i32) -> (i32, i32) {
    %c0_i32 = arith.constant 0 : i32
    %c0_i32_0 = arith.constant 0 : i32
    %c0_i32_1 = arith.constant 0 : i32
    return %c0_i32, %c0_i32_0 : i32, i32
  }
  func.func @transform_1(%arg0: i32) -> (i32, i32) {
    %c0_i32 = arith.constant 0 : i32
    %c0_i32_0 = arith.constant 0 : i32
    %c0_i32_1 = arith.constant 0 : i32
    return %c0_i32, %c0_i32_0 : i32, i32
  }
  func.func @transform_2(%arg0: i32) -> (i32, i32) {
    %c0_i32 = arith.constant 0 : i32
    %c0_i32_0 = arith.constant 0 : i32
    %c0_i32_1 = arith.constant 0 : i32
    return %c0_i32, %c0_i32_0 : i32, i32
  }
  func.func @transform_3(%arg0: i32) -> (i32, i32) {
    %c0_i32 = arith.constant 0 : i32
    %c0_i32_0 = arith.constant 0 : i32
    %c0_i32_1 = arith.constant 0 : i32
    return %c0_i32, %c0_i32_0 : i32, i32
  }
  func.func @transform_4(%arg0: i32) -> (i32, i32, i32) {
    %c0_i32 = arith.constant 0 : i32
    %c0_i32_0 = arith.constant 0 : i32
    %c0_i32_1 = arith.constant 0 : i32
    %c0_i32_2 = arith.constant 0 : i32
    return %c0_i32, %c0_i32_0, %c0_i32_1 : i32, i32, i32
  }
  func.func @transform_5(%arg0: i32) -> (i32, i32, i32) {
    %c0_i32 = arith.constant 0 : i32
    %c0_i32_0 = arith.constant 0 : i32
    %c0_i32_1 = arith.constant 0 : i32
    %c0_i32_2 = arith.constant 0 : i32
    return %c0_i32, %c0_i32_0, %c0_i32_1 : i32, i32, i32
  }
  func.func @transform_6(%arg0: i32) -> (i32, i32, i32) {
    %c0_i32 = arith.constant 0 : i32
    %c0_i32_0 = arith.constant 0 : i32
    %c0_i32_1 = arith.constant 0 : i32
    %c0_i32_2 = arith.constant 0 : i32
    return %c0_i32, %c0_i32_0, %c0_i32_1 : i32, i32, i32
  }
  func.func @transform_7(%arg0: i32) -> (i32, i32, i32) {
    %c0_i32 = arith.constant 0 : i32
    %c0_i32_0 = arith.constant 0 : i32
    %c0_i32_1 = arith.constant 0 : i32
    %c0_i32_2 = arith.constant 0 : i32
    return %c0_i32, %c0_i32_0, %c0_i32_1 : i32, i32, i32
  }
  func.func @transform_8(%arg0: i32) -> (i32, i32, i32) {
    %c0_i32 = arith.constant 0 : i32
    %c0_i32_0 = arith.constant 0 : i32
    %c0_i32_1 = arith.constant 0 : i32
    %c0_i32_2 = arith.constant 0 : i32
    return %c0_i32, %c0_i32_0, %c0_i32_1 : i32, i32, i32
  }
  func.func @transform_9(%arg0: i32) -> (i32, i32) {
    %c0_i32 = arith.constant 0 : i32
    %c0_i32_0 = arith.constant 0 : i32
    %c0_i32_1 = arith.constant 0 : i32
    return %c0_i32, %c0_i32_0 : i32, i32
  }
  func.func @transform_10(%arg0: i32) -> (i32, i32) {
    %c0_i32 = arith.constant 0 : i32
    %c0_i32_0 = arith.constant 0 : i32
    %c0_i32_1 = arith.constant 0 : i32
    return %c0_i32, %c0_i32_0 : i32, i32
  }
  func.func @transform_11(%arg0: i32) -> (i32, i32) {
    %c0_i32 = arith.constant 0 : i32
    %c0_i32_0 = arith.constant 0 : i32
    %c0_i32_1 = arith.constant 0 : i32
    return %c0_i32, %c0_i32_0 : i32, i32
  }
  func.func @transform_12(%arg0: i32) -> (i32, i32) {
    %c0_i32 = arith.constant 0 : i32
    %c0_i32_0 = arith.constant 0 : i32
    %c0_i32_1 = arith.constant 0 : i32
    return %c0_i32, %c0_i32_0 : i32, i32
  }
  func.func @transform_13(%arg0: i32) -> (i32, i32) {
    %c0_i32 = arith.constant 0 : i32
    %c0_i32_0 = arith.constant 0 : i32
    %c0_i32_1 = arith.constant 0 : i32
    return %c0_i32, %c0_i32_0 : i32, i32
  }
  func.func @transform_14(%arg0: i32) -> (i32, i32) {
    %c0_i32 = arith.constant 0 : i32
    %c0_i32_0 = arith.constant 0 : i32
    %c0_i32_1 = arith.constant 0 : i32
    return %c0_i32, %c0_i32_0 : i32, i32
  }
  func.func @transform_15(%arg0: i32) -> (i32, i32) {
    %c0_i32 = arith.constant 0 : i32
    %c0_i32_0 = arith.constant 0 : i32
    %c0_i32_1 = arith.constant 0 : i32
    return %c0_i32, %c0_i32_0 : i32, i32
  }
}

</mosaic_0001>

<llo_original>
// kernel: eq.8
$region0: #{eq.8}
  %s0 = inlined_call_operand.vmem [shape: s32[2,9], index: 0, kind: input, shape index: {}]
  %s1 = inlined_call_operand.vmem [shape: s32[18], index: 1, kind: output, shape index: {}]
  $region1: #{eq.8} parent=0
    #allocation0 [shape = 'u8[4096]{0}', space=vmem, size = 0x1000, scoped, tag = 'scoped mem for output reshape']
    #allocation1 [shape = 'u8[4096]{0}', space=vmem, size = 0x1000, scoped, tag = 'scoped mem for input reshape']
    %s3 = sshllo.u32 0, 2
    %v4 = vld [vmem:[%s0] sm:%s3]
    %5 = vst [vmem:[#allocation1] sm:%s3] %v4
    %v6 = vld [vmem:[#allocation1] sm:$0x1]
    %vm7 = vcmask 72704
    %8 = vst.msk [vmem:[#allocation0] sm:$0x1] %vm7, %v6
    %s9 = scalar_lea.vmem [#allocation1], 1
    %v10 = vld [vmem:[%s9] sm:$0x1]
    %11 = vrot.lane.b32.xlu0 %v10, 9
    %v12 = vpop.permute.xlu0 %11
    %vm13 = vcmask 146504
    %14 = vst.msk [vmem:[#allocation0] sm:$0x1] %vm13, %v12
    %s16 = sshllo.u32 0, 1
    %v18 = vld [vmem:[#allocation0] sm:%s16]
    %s19 = sshllo.u32 0, 1
    %20 = vst [vmem:[%s1] sm:%s19] %v18

// kernel: dinov2_classifier_forward.1
$region0: #{dinov2_classifier_forward.1}
  #allocation0 [shape = 'u32[]', space=smem, size = 0x4, offset = 0x4, fixed_abs, tag = 'smem constant byte address 0x4 - core index']
  #allocation1 [shape = 'u32[144,128]{1,0:T(1,128)}', space=vmem, size = 0x12000, scoped, tag = 'internal scratch']
  %s0 = inlined_call_operand.vmem [shape: f32[8,588], index: 0, kind: input, shape index: {}]
  %s1 = inlined_call_operand.vmem [shape: bf16[588,32], index: 1, kind: input, shape index: {}]
  %s2 = inlined_call_operand.vmem [shape: f32[9,32], index: 2, kind: input, shape index: {}]
  %s3 = inlined_call_operand.vmem [shape: f32[18,18], index: 3, kind: input, shape index: {}]
  %s4 = inlined_call_operand.vmem [shape: f32[4,10,128], index: 4, kind: input, shape index: {}]
  %s5 = inlined_call_operand.vmem [shape: bf16[4,32,96], index: 5, kind: input, shape index: {}]
  %s6 = inlined_call_operand.vmem [shape: bf16[4,32,32], index: 6, kind: input, shape index: {}]
  %s7 = inlined_call_operand.vmem [shape: bf16[4,32,128], index: 7, kind: input, shape index: {}]
  %s8 = inlined_call_operand.vmem [shape: bf16[4,128,32], index: 8, kind: input, shape index: {}]
  %s9 = inlined_call_operand.vmem [shape: f32[2,32], index: 9, kind: input, shape index: {}]
  %s10 = inlined_call_operand.vmem [shape: bf16[160,1024], index: 10, kind: input, shape index: {}]
  %s11 = inlined_call_operand.vmem [shape: bf16[1024,256], index: 11, kind: input, shape index: {}]
  %s12 = inlined_call_operand.vmem [shape: bf16[256,64], index: 12, kind: input, shape index: {}]
  %s13 = inlined_call_operand.vmem [shape: bf16[64,128], index: 13, kind: input, shape index: {}]
  %s14 = inlined_call_operand.vmem [shape: f32[4,1024], index: 14, kind: input, shape index: {}]
  %s15 = inlined_call_operand.vmem [shape: f32[2,128], index: 15, kind: output, shape index: {}]
  %s16 = sld [smem:[#allocation0]]
  $region70: #{dinov2_classifier_forward.1} parent=0
    _
  %s18 = ssub.s32 1, %s16
  %s19 = scalar_select 0, %s18, %s16
  // Predicated region
  $region2: #{dinov2_classifier_forward.1} parent=0 // pred_check
    _
  $region3: #{dinov2_classifier_forward.1} parent=0 // pred_check_branch
    %21 = sbr.rel (0) target = $region5
  $region4: #{dinov2_classifier_forward.1} parent=0 // pred_region
    _
  $region5: #{dinov2_classifier_forward.1} parent=0 // pred_fallthru
    _
  // Predicated region
  $region6: #{dinov2_classifier_forward.1} parent=0 // pred_check
    _
  $region7: #{dinov2_classifier_forward.1} parent=0 // pred_check_branch
    %23 = sbr.rel (0) target = $region9
  $region8: #{dinov2_classifier_forward.1} parent=0 // pred_region
    _
  $region9: #{dinov2_classifier_forward.1} parent=0 // pred_fallthru
    _
  // Predicated region
  $region10: #{dinov2_classifier_forward.1} parent=0 // pred_check
    _
  $region11: #{dinov2_classifier_forward.1} parent=0 // pred_check_branch
    %25 = sbr.rel (0) target = $region13
  $region12: #{dinov2_classifier_forward.1} parent=0 // pred_region
    _
  $region13: #{dinov2_classifier_forward.1} parent=0 // pred_fallthru
    _
  // Predicated region
  $region14: #{dinov2_classifier_forward.1} parent=0 // pred_check
    _
  $region15: #{dinov2_classifier_forward.1} parent=0 // pred_check_branch
    %27 = sbr.rel (0) target = $region17
  $region16: #{dinov2_classifier_forward.1} parent=0 // pred_region
    _
  $region17: #{dinov2_classifier_forward.1} parent=0 // pred_fallthru
    _
  // Predicated region
  $region18: #{dinov2_classifier_forward.1} parent=0 // pred_check
    _
  $region19: #{dinov2_classifier_forward.1} parent=0 // pred_check_branch
    %29 = sbr.rel (0) target = $region21
  $region20: #{dinov2_classifier_forward.1} parent=0 // pred_region
    _
  $region21: #{dinov2_classifier_forward.1} parent=0 // pred_fallthru
    _
  // Predicated region
  $region22: #{dinov2_classifier_forward.1} parent=0 // pred_check
    _
  $region23: #{dinov2_classifier_forward.1} parent=0 // pred_check_branch
    %31 = sbr.rel (0) target = $region25
  $region24: #{dinov2_classifier_forward.1} parent=0 // pred_region
    _
  $region25: #{dinov2_classifier_forward.1} parent=0 // pred_fallthru
    _
  // Predicated region
  $region26: #{dinov2_classifier_forward.1} parent=0 // pred_check
    _
  $region27: #{dinov2_classifier_forward.1} parent=0 // pred_check_branch
    %33 = sbr.rel (0) target = $region29
  $region28: #{dinov2_classifier_forward.1} parent=0 // pred_region
    _
  $region29: #{dinov2_classifier_forward.1} parent=0 // pred_fallthru
    _
  // Predicated region
  $region30: #{dinov2_classifier_forward.1} parent=0 // pred_check
    _
  $region31: #{dinov2_classifier_forward.1} parent=0 // pred_check_branch
    %35 = sbr.rel (0) target = $region33
  $region32: #{dinov2_classifier_forward.1} parent=0 // pred_region
    _
  $region33: #{dinov2_classifier_forward.1} parent=0 // pred_fallthru
    _
  // Predicated region
  $region34: #{dinov2_classifier_forward.1} parent=0 // pred_check
    _
  $region35: #{dinov2_classifier_forward.1} parent=0 // pred_check_branch
    %37 = sbr.rel (0) target = $region37
  $region36: #{dinov2_classifier_forward.1} parent=0 // pred_region
    _
  $region37: #{dinov2_classifier_forward.1} parent=0 // pred_fallthru
    _
  // Predicated region
  $region38: #{dinov2_classifier_forward.1} parent=0 // pred_check
    _
  $region39: #{dinov2_classifier_forward.1} parent=0 // pred_check_branch
    %39 = sbr.rel (0) target = $region41
  $region40: #{dinov2_classifier_forward.1} parent=0 // pred_region
    _
  $region41: #{dinov2_classifier_forward.1} parent=0 // pred_fallthru
    _
  // Predicated region
  $region42: #{dinov2_classifier_forward.1} parent=0 // pred_check
    _
  $region43: #{dinov2_classifier_forward.1} parent=0 // pred_check_branch
    %41 = sbr.rel (0) target = $region45
  $region44: #{dinov2_classifier_forward.1} parent=0 // pred_region
    _
  $region45: #{dinov2_classifier_forward.1} parent=0 // pred_fallthru
    _
  // Predicated region
  $region46: #{dinov2_classifier_forward.1} parent=0 // pred_check
    _
  $region47: #{dinov2_classifier_forward.1} parent=0 // pred_check_branch
    %43 = sbr.rel (0) target = $region49
  $region48: #{dinov2_classifier_forward.1} parent=0 // pred_region
    _
  $region49: #{dinov2_classifier_forward.1} parent=0 // pred_fallthru
    _
  // Predicated region
  $region50: #{dinov2_classifier_forward.1} parent=0 // pred_check
    _
  $region51: #{dinov2_classifier_forward.1} parent=0 // pred_check_branch
    %45 = sbr.rel (0) target = $region53
  $region52: #{dinov2_classifier_forward.1} parent=0 // pred_region
    _
  $region53: #{dinov2_classifier_forward.1} parent=0 // pred_fallthru
    _
  // Predicated region
  $region54: #{dinov2_classifier_forward.1} parent=0 // pred_check
    _
  $region55: #{dinov2_classifier_forward.1} parent=0 // pred_check_branch
    %47 = sbr.rel (0) target = $region57
  $region56: #{dinov2_classifier_forward.1} parent=0 // pred_region
    _
  $region57: #{dinov2_classifier_forward.1} parent=0 // pred_fallthru
    _
  // Predicated region
  $region58: #{dinov2_classifier_forward.1} parent=0 // pred_check
    _
  $region59: #{dinov2_classifier_forward.1} parent=0 // pred_check_branch
    %49 = sbr.rel (0) target = $region61
  $region60: #{dinov2_classifier_forward.1} parent=0 // pred_region
    _
  $region61: #{dinov2_classifier_forward.1} parent=0 // pred_fallthru
    _
  %v51 = vld [vmem:[%s0] sm:$0xff]
  %v52 = vld [vmem:[%s0 + $0x8] sm:$0xff]
  %v53 = vld [vmem:[%s0 + $0x10] sm:$0xff]
  %v54 = vld [vmem:[%s0 + $0x18] sm:$0xff]
  %v55 = vld [vmem:[%s0 + $0x20] sm:$0xff]
  %v56 = vld [vmem:[%s1] sm:$0xf]
  %v57 = vld [vmem:[%s1 + $0x4] sm:$0xf]
  %v58 = vld [vmem:[%s1 + $0x8] sm:$0xf]
  %v59 = vld [vmem:[%s1 + $0xc] sm:$0xf]
  %v60 = vld [vmem:[%s1 + $0x10] sm:$0xf]
  %v61 = vld [vmem:[%s1 + $0x14] sm:$0xf]
  %v62 = vld [vmem:[%s1 + $0x18] sm:$0xf]
  %v63 = vld [vmem:[%s1 + $0x1c] sm:$0xf]
  %v64 = vld [vmem:[%s1 + $0x20] sm:$0xf]
  %v65 = vld [vmem:[%s1 + $0x24] sm:$0xf]
  %v66 = vld [vmem:[%s1 + $0x28] sm:$0xf]
  %v67 = vld [vmem:[%s1 + $0x2c] sm:$0xf]
  %v68 = vld [vmem:[%s1 + $0x30] sm:$0xf]
  %v69 = vld [vmem:[%s1 + $0x34] sm:$0xf]
  %v70 = vld [vmem:[%s1 + $0x38] sm:$0xf]
  %v71 = vld [vmem:[%s1 + $0x3c] sm:$0xf]
  %v72 = vld [vmem:[%s1 + $0x40] sm:$0xf]
  %v73 = vld [vmem:[%s1 + $0x44] sm:$0xf]
  %v74 = vld [vmem:[%s1 + $0x48] sm:$0xf]
  %v75 = vld [vmem:[%s1 + $0x4c] sm:$0xf]
  %v76 = vld [vmem:[%s1 + $0x50] sm:$0xf]
  %v77 = vld [vmem:[%s1 + $0x54] sm:$0xf]
  %v78 = vld [vmem:[%s1 + $0x58] sm:$0xf]
  %v79 = vld [vmem:[%s1 + $0x5c] sm:$0xf]
  %v80 = vld [vmem:[%s1 + $0x60] sm:$0xf]
  %v81 = vld [vmem:[%s1 + $0x64] sm:$0xf]
  %v82 = vld [vmem:[%s1 + $0x68] sm:$0xf]
  %v83 = vld [vmem:[%s1 + $0x6c] sm:$0xf]
  %v84 = vld [vmem:[%s1 + $0x70] sm:$0xf]
  %v85 = vld [vmem:[%s1 + $0x74] sm:$0xf]
  %v86 = vld [vmem:[%s1 + $0x78] sm:$0xf]
  %v87 = vld [vmem:[%s1 + $0x7c] sm:$0xf]
  %v88 = vld [vmem:[%s1 + $0x80] sm:$0xf]
  %v89 = vld [vmem:[%s1 + $0x84] sm:$0xf]
  %v90 = vld [vmem:[%s1 + $0x88] sm:$0xf]
  %v91 = vld [vmem:[%s1 + $0x8c] sm:$0xf]
  %v92 = vld [vmem:[%s1 + $0x90] sm:$0xf]
  %v93 = vld [vmem:[%s1 + $0x94] sm:$0xf]
  %v94 = vld [vmem:[%s1 + $0x98] sm:$0xf]
  %v95 = vld [vmem:[%s1 + $0x9c] sm:$0xf]
  %v96 = vld [vmem:[%s1 + $0xa0] sm:$0xf]
  %v97 = vld [vmem:[%s1 + $0xa4] sm:$0xf]
  %v98 = vld [vmem:[%s1 + $0xa8] sm:$0xf]
  %v99 = vld [vmem:[%s1 + $0xac] sm:$0xf]
  %v100 = vld [vmem:[%s1 + $0xb0] sm:$0xf]
  %v101 = vld [vmem:[%s1 + $0xb4] sm:$0xf]
  %v102 = vld [vmem:[%s1 + $0xb8] sm:$0xf]
  %v103 = vld [vmem:[%s1 + $0xbc] sm:$0xf]
  %v104 = vld [vmem:[%s1 + $0xc0] sm:$0xf]
  %v105 = vld [vmem:[%s1 + $0xc4] sm:$0xf]
  %v106 = vld [vmem:[%s1 + $0xc8] sm:$0xf]
  %v107 = vld [vmem:[%s1 + $0xcc] sm:$0xf]
  %v108 = vld [vmem:[%s1 + $0xd0] sm:$0xf]
  %v109 = vld [vmem:[%s1 + $0xd4] sm:$0xf]
  %v110 = vld [vmem:[%s1 + $0xd8] sm:$0xf]
  %v111 = vld [vmem:[%s1 + $0xdc] sm:$0xf]
  %v112 = vld [vmem:[%s1 + $0xe0] sm:$0xf]
  %v113 = vld [vmem:[%s1 + $0xe4] sm:$0xf]
  %v114 = vld [vmem:[%s1 + $0xe8] sm:$0xf]
  %v115 = vld [vmem:[%s1 + $0xec] sm:$0xf]
  %v116 = vld [vmem:[%s1 + $0xf0] sm:$0xf]
  %v117 = vld [vmem:[%s1 + $0xf4] sm:$0xf]
  %v118 = vld [vmem:[%s1 + $0xf8] sm:$0xf]
  %v119 = vld [vmem:[%s1 + $0xfc] sm:$0xf]
  %v120 = vld [vmem:[%s1 + $0x100] sm:$0xf]
  %v121 = vld [vmem:[%s1 + $0x104] sm:$0xf]
  %v122 = vld [vmem:[%s1 + $0x108] sm:$0xf]
  %v123 = vld [vmem:[%s1 + $0x10c] sm:$0xf]
  %v124 = vld [vmem:[%s1 + $0x110] sm:$0xf]
  %v125 = vld [vmem:[%s1 + $0x114] sm:$0xf]
  %v126 = vld [vmem:[%s1 + $0x118] sm:$0xf]
  %v127 = vld [vmem:[%s1 + $0x11c] sm:$0xf]
  %v128 = vld [vmem:[%s1 + $0x120] sm:$0xf]
  %v129 = vld [vmem:[%s1 + $0x124] sm:$0x3]
  %v130 = vpack.c.bf16 %v51, %v51
  %v131 = vpack.c.bf16 %v52, %v52
  %v132 = vpack.c.bf16 %v53, %v53
  %v133 = vpack.c.bf16 %v54, %v54
  %v134 = vpack.c.bf16 %v55, %v55
  %v209 = vunpack.c.l.b16 %v56
  %v210 = vunpack.c.l.b16 %v57
  %v211 = vunpack.c.l.b16 %v58
  %v212 = vunpack.c.l.b16 %v59
  %v213 = vunpack.c.l.b16 %v60
  %v214 = vunpack.c.l.b16 %v61
  %v215 = vunpack.c.l.b16 %v62
  %v216 = vunpack.c.l.b16 %v63
  %v217 = vunpack.c.l.b16 %v64
  %v218 = vunpack.c.l.b16 %v65
  %v219 = vunpack.c.l.b16 %v66
  %v220 = vunpack.c.l.b16 %v67
  %v221 = vunpack.c.l.b16 %v68
  %v222 = vunpack.c.l.b16 %v69
  %v223 = vunpack.c.l.b16 %v70
  %v224 = vunpack.c.l.b16 %v71
  %v225 = vunpack.c.l.b16 %v72
  %v226 = vunpack.c.l.b16 %v73
  %v227 = vunpack.c.l.b16 %v74
  %v228 = vunpack.c.l.b16 %v75
  %v229 = vunpack.c.l.b16 %v76
  %v230 = vunpack.c.l.b16 %v77
  %v231 = vunpack.c.l.b16 %v78
  %v232 = vunpack.c.l.b16 %v79
  %v233 = vunpack.c.l.b16 %v80
  %v234 = vunpack.c.l.b16 %v81
  %v235 = vunpack.c.l.b16 %v82
  %v236 = vunpack.c.l.b16 %v83
  %v237 = vunpack.c.l.b16 %v84
  %v238 = vunpack.c.l.b16 %v85
  %v239 = vunpack.c.l.b16 %v86
  %v240 = vunpack.c.l.b16 %v87
  %v241 = vunpack.c.l.b16 %v88
  %v242 = vunpack.c.l.b16 %v89
  %v243 = vunpack.c.l.b16 %v90
  %v244 = vunpack.c.l.b16 %v91
  %v245 = vunpack.c.l.b16 %v92
  %v246 = vunpack.c.l.b16 %v93
  %v247 = vunpack.c.l.b16 %v94
  %v248 = vunpack.c.l.b16 %v95
  %v249 = vunpack.c.l.b16 %v96
  %v250 = vunpack.c.l.b16 %v97
  %v251 = vunpack.c.l.b16 %v98
  %v252 = vunpack.c.l.b16 %v99
  %v253 = vunpack.c.l.b16 %v100
  %v254 = vunpack.c.l.b16 %v101
  %v255 = vunpack.c.l.b16 %v102
  %v256 = vunpack.c.l.b16 %v103
  %v257 = vunpack.c.l.b16 %v104
  %v258 = vunpack.c.l.b16 %v105
  %v259 = vunpack.c.l.b16 %v106
  %v260 = vunpack.c.l.b16 %v107
  %v261 = vunpack.c.l.b16 %v108
  %v262 = vunpack.c.l.b16 %v109
  %v263 = vunpack.c.l.b16 %v110
  %v264 = vunpack.c.l.b16 %v111
  %v265 = vunpack.c.l.b16 %v112
  %v266 = vunpack.c.l.b16 %v113
  %v267 = vunpack.c.l.b16 %v114
  %v268 = vunpack.c.l.b16 %v115
  %v269 = vunpack.c.l.b16 %v116
  %v270 = vunpack.c.l.b16 %v117
  %v271 = vunpack.c.l.b16 %v118
  %v272 = vunpack.c.l.b16 %v119
  %v273 = vunpack.c.l.b16 %v120
  %v274 = vunpack.c.l.b16 %v121
  %v275 = vunpack.c.l.b16 %v122
  %v276 = vunpack.c.l.b16 %v123
  %v277 = vunpack.c.l.b16 %v124
  %v278 = vunpack.c.l.b16 %v125
  %v279 = vunpack.c.l.b16 %v126
  %v280 = vunpack.c.l.b16 %v127
  %v281 = vunpack.c.l.b16 %v128
  %v282 = vunpack.c.l.b16 %v129
  %v283 = vpack.c.b16 %v210, %v209
  %v284 = vpack.c.b16 %v212, %v211
  %v285 = vpack.c.b16 %v214, %v213
  %v286 = vpack.c.b16 %v216, %v215
  %v287 = vpack.c.b16 %v218, %v217
  %v288 = vpack.c.b16 %v220, %v219
  %v289 = vpack.c.b16 %v222, %v221
  %v290 = vpack.c.b16 %v224, %v223
  %v291 = vpack.c.b16 %v226, %v225
  %v292 = vpack.c.b16 %v228, %v227
  %v293 = vpack.c.b16 %v230, %v229
  %v294 = vpack.c.b16 %v232, %v231
  %v295 = vpack.c.b16 %v234, %v233
  %v296 = vpack.c.b16 %v236, %v235
  %v297 = vpack.c.b16 %v238, %v237
  %v298 = vpack.c.b16 %v240, %v239
  %v299 = vpack.c.b16 %v242, %v241
  %v300 = vpack.c.b16 %v244, %v243
  %v301 = vpack.c.b16 %v246, %v245
  %v302 = vpack.c.b16 %v248, %v247
  %v303 = vpack.c.b16 %v250, %v249
  %v304 = vpack.c.b16 %v252, %v251
  %v305 = vpack.c.b16 %v254, %v253
  %v306 = vpack.c.b16 %v256, %v255
  %v307 = vpack.c.b16 %v258, %v257
  %v308 = vpack.c.b16 %v260, %v259
  %v309 = vpack.c.b16 %v262, %v261
  %v310 = vpack.c.b16 %v264, %v263
  %v311 = vpack.c.b16 %v266, %v265
  %v312 = vpack.c.b16 %v268, %v267
  %v313 = vpack.c.b16 %v270, %v269
  %v314 = vpack.c.b16 %v272, %v271
  %v315 = vpack.c.b16 %v274, %v273
  %v316 = vpack.c.b16 %v276, %v275
  %v317 = vpack.c.b16 %v278, %v277
  %v318 = vpack.c.b16 %v280, %v279
  %v319 = vpack.c.b16 %v282, %v281
  %vm356 = vcmask 621568
  %v358 = vsel %vm356, %v134, 0
  %vm360 = vcmask 1045504
  %v362 = vsel %vm360, %v319, 0
  %364 = vmatprep.subr.bf16.mxu0 0
  %365 = vmatpush1.bf16.msra.mxu0 %v283
  %366 = vmatprep.subr.bf16.mxu0 0
  %367 = vmatpush1.bf16.msra.mxu0 %v284
  %368 = vmatprep.subr.bf16.mxu0 0
  %369 = vmatpush1.bf16.msra.mxu0 %v285
  %370 = vmatprep.subr.bf16.mxu0 0
  %371 = vmatpush1.bf16.msra.mxu0 %v286
  %372 = vmatprep.subr.bf16.mxu0 0
  %373 = vmatpush1.bf16.msra.mxu0 %v287
  %374 = vmatprep.subr.bf16.mxu0 0
  %375 = vmatpush1.bf16.msra.mxu0 %v288
  %376 = vmatprep.subr.bf16.mxu0 0
  %377 = vmatpush1.bf16.msra.mxu0 %v289
  %378 = vmatprep.subr.bf16.mxu0 0
  %379 = vmatpush1.bf16.msra.mxu0 %v290
  %380 = vmatprep.subr.bf16.mxu0 0
  %381 = vmatpush1.bf16.msra.mxu0 %v291
  %382 = vmatprep.subr.bf16.mxu0 0
  %383 = vmatpush1.bf16.msra.mxu0 %v292
  %384 = vmatprep.subr.bf16.mxu0 0
  %385 = vmatpush1.bf16.msra.mxu0 %v293
  %386 = vmatprep.subr.bf16.mxu0 0
  %387 = vmatpush1.bf16.msra.mxu0 %v294
  %388 = vmatprep.subr.bf16.mxu0 0
  %389 = vmatpush1.bf16.msra.mxu0 %v295
  %390 = vmatprep.subr.bf16.mxu0 0
  %391 = vmatpush1.bf16.msra.mxu0 %v296
  %392 = vmatprep.subr.bf16.mxu0 0
  %393 = vmatpush1.bf16.msra.mxu0 %v297
  %394 = vmatprep.subr.bf16.mxu0 0
  %395 = vmatpush1.bf16.msra.mxu0 %v298
  %396 = vmatprep.mubr.bf16.mxu0 %v131
  %397 = vmatmul.mubr.bf16.gmra.mrb[0].mxu0 %v130
  %v398 = vpop.f32.mrb[0].mxu0
  %v399 = vadd.f32 0.0, %v398
  %v400 = vpop.f32.mrb[0].mxu0
  %v401 = vpop.f32.mrb[0].mxu0
  %v402 = vpop.f32.mrb[0].mxu0
  %403 = vdwg.mxu0
  %404 = vmatprep.subr.bf16.mxu0 0
  %405 = vmatpush1.bf16.msra.mxu0 %v299
  %406 = vmatprep.subr.bf16.mxu0 0
  %407 = vmatpush1.bf16.msra.mxu0 %v300
  %408 = vmatprep.subr.bf16.mxu0 0
  %409 = vmatpush1.bf16.msra.mxu0 %v301
  %410 = vmatprep.subr.bf16.mxu0 0
  %411 = vmatpush1.bf16.msra.mxu0 %v302
  %412 = vmatprep.subr.bf16.mxu0 0
  %413 = vmatpush1.bf16.msra.mxu0 %v303
  %414 = vmatprep.subr.bf16.mxu0 0
  %415 = vmatpush1.bf16.msra.mxu0 %v304
  %416 = vmatprep.subr.bf16.mxu0 0
  %417 = vmatpush1.bf16.msra.mxu0 %v305
  %418 = vmatprep.subr.bf16.mxu0 0
  %419 = vmatpush1.bf16.msra.mxu0 %v306
  %420 = vmatprep.subr.bf16.mxu0 0
  %421 = vmatpush1.bf16.msra.mxu0 %v307
  %422 = vmatprep.subr.bf16.mxu0 0
  %423 = vmatpush1.bf16.msra.mxu0 %v308
  %424 = vmatprep.subr.bf16.mxu0 0
  %425 = vmatpush1.bf16.msra.mxu0 %v309
  %426 = vmatprep.subr.bf16.mxu0 0
  %427 = vmatpush1.bf16.msra.mxu0 %v310
  %428 = vmatprep.subr.bf16.mxu0 0
  %429 = vmatpush1.bf16.msra.mxu0 %v311
  %430 = vmatprep.subr.bf16.mxu0 0
  %431 = vmatpush1.bf16.msra.mxu0 %v312
  %432 = vmatprep.subr.bf16.mxu0 0
  %433 = vmatpush1.bf16.msra.mxu0 %v313
  %434 = vmatprep.subr.bf16.mxu0 0
  %435 = vmatpush1.bf16.msra.mxu0 %v314
  %436 = vmatprep.mubr.bf16.mxu0 %v133
  %437 = vmatmul.mubr.bf16.gmra.mrb[0].mxu0 %v132
  %v438 = vpop.f32.mrb[0].mxu0
  %v439 = vadd.f32 %v399, %v438
  %v440 = vpop.f32.mrb[0].mxu0
  %v441 = vpop.f32.mrb[0].mxu0
  %v442 = vpop.f32.mrb[0].mxu0
  %443 = vdwg.mxu0
  %444 = vmatprep.subr.bf16.mxu0 0
  %445 = vmatpush1.bf16.msra.mxu0 %v315
  %446 = vmatprep.subr.bf16.mxu0 0
  %447 = vmatpush1.bf16.msra.mxu0 %v316
  %448 = vmatprep.subr.bf16.mxu0 0
  %449 = vmatpush1.bf16.msra.mxu0 %v317
  %450 = vmatprep.subr.bf16.mxu0 0
  %451 = vmatpush1.bf16.msra.mxu0 %v318
  %452 = vmatprep.subr.bf16.mxu0 0
  %453 = vmatpush1.bf16.msra.mxu0 %v362
  %454 = vmatprep.subr.bf16.mxu0 0
  %455 = vmatpush1.bf16.msra.mxu0 0
  %456 = vmatprep.subr.bf16.mxu0 0
  %457 = vmatpush1.bf16.msra.mxu0 0
  %458 = vmatprep.subr.bf16.mxu0 0
  %459 = vmatpush1.bf16.msra.mxu0 0
  %460 = vmatprep.subr.bf16.mxu0 0
  %461 = vmatpush1.bf16.msra.mxu0 0
  %462 = vmatprep.subr.bf16.mxu0 0
  %463 = vmatpush1.bf16.msra.mxu0 0
  %464 = vmatprep.subr.bf16.mxu0 0
  %465 = vmatpush1.bf16.msra.mxu0 0
  %466 = vmatprep.subr.bf16.mxu0 0
  %467 = vmatpush1.bf16.msra.mxu0 0
  %468 = vmatprep.subr.bf16.mxu0 0
  %469 = vmatpush1.bf16.msra.mxu0 0
  %470 = vmatprep.subr.bf16.mxu0 0
  %471 = vmatpush1.bf16.msra.mxu0 0
  %472 = vmatprep.subr.bf16.mxu0 0
  %473 = vmatpush1.bf16.msra.mxu0 0
  %474 = vmatprep.subr.bf16.mxu0 0
  %475 = vmatpush1.bf16.msra.mxu0 0
  %476 = vmatprep.mubr.bf16.mxu0 0
  %477 = vmatmul.mubr.bf16.gmra.mrb[0].mxu0 %v358
  %v478 = vpop.f32.mrb[0].mxu0
  %v479 = vadd.f32 %v439, %v478
  %v480 = vpop.f32.mrb[0].mxu0
  %v481 = vpop.f32.mrb[0].mxu0
  %v482 = vpop.f32.mrb[0].mxu0
  %483 = vdwg.mxu0
  %v484 = vld [vmem:[%s2] sm:$0xff]
  %v485 = vld [vmem:[%s2 + $0x8] sm:$0x1]
  %v487 = vrot.slane %v479, 3
  %v489 = vadd.f32 %v484, %v487
  %v490 = vadd.f32 %v485, %v487
  %v491 = vrot.slane %v479, 7
  %v493 = vadd.f32 %v484, %v491
  %v494 = vadd.f32 %v485, %v491
  %v496 = vrot.slane %v484, 7
  %vm500 = vcmask 1040384
  %v501 = vrot.slane %v493, 7
  %v502 = vrot.slane %v494, 7
  %v503 = vsel %vm500, %v501, %v502
  %vm506 = vcmask 1044480
  %v507 = vsel %vm506, %v484, %v489
  %v508 = vsel %vm500, %v490, %v496
  %v509 = vsel %vm360, %v508, %v501
  %v510 = vld [vmem:[%s3] sm:$0xff]
  %v511 = vld [vmem:[%s3 + $0x8] sm:$0xff]
  %v512 = vld [vmem:[%s3 + $0x10] sm:$0x3]
  %v513 = vld [vmem:[%s4] sm:$0xff]
  %v514 = vld [vmem:[%s4 + $0x8] sm:$0x3]
  %vm515 = vcmask 261120
  %v516 = vsel %vm515, %v507, 0.0
  %517 = vadd.xlane.f32.xlu0 %v516
  %v518 = vpop.xlane.xlu0 %517
  %v519 = vsel %vm515, %v509, 0.0
  %520 = vadd.xlane.f32.xlu0 %v519
  %v521 = vpop.xlane.xlu0 %520
  %vm522 = vcmask 254976
  %v523 = vsel %vm522, %v503, 0.0
  %524 = vadd.xlane.f32.xlu0 %v523
  %v525 = vpop.xlane.xlu0 %524
  %v526 = vrcp.pop 32.0
  %v527 = vmul.f32 %v518, %v526
  %v528 = vmul.f32 %v521, %v526
  %v529 = vmul.f32 %v525, %v526
  %v530 = vsub.f32 %v507, %v527
  %v531 = vsub.f32 %v509, %v528
  %v532 = vsub.f32 %v503, %v529
  %v533 = vmul.f32 %v530, %v530
  %v534 = vmul.f32 %v531, %v531
  %v535 = vmul.f32 %v532, %v532
  %v536 = vsel %vm515, %v533, 0.0
  %537 = vadd.xlane.f32.xlu0 %v536
  %v538 = vpop.xlane.xlu0 %537
  %v539 = vsel %vm515, %v534, 0.0
  %540 = vadd.xlane.f32.xlu0 %v539
  %v541 = vpop.xlane.xlu0 %540
  %v542 = vsel %vm522, %v535, 0.0
  %543 = vadd.xlane.f32.xlu0 %v542
  %v544 = vpop.xlane.xlu0 %543
  %v545 = vmul.f32 %v538, %v526
  %v546 = vmul.f32 %v541, %v526
  %v547 = vmul.f32 %v544, %v526
  %v548 = vadd.f32 %v545, 1e-06
  %v549 = vadd.f32 %v546, 1e-06
  %v550 = vadd.f32 %v547, 1e-06
  %v551 = vrsqrt.pop %v548
  %v552 = vrsqrt.pop %v549
  %v553 = vrsqrt.pop %v550
  %v554 = vmul.f32 %v530, %v551
  %v555 = vmul.f32 %v531, %v552
  %v556 = vmul.f32 %v532, %v553
  %v557 = vlaneseq
  %v558 = vshrl.u32 %v557, 7
  %v559 = vsub.s32 0, %v558
  %v560 = vrot.slane %v513, %v559
  %v561 = vmul.f32 %v554, %v560
  %v562 = vmul.f32 %v555, %v560
  %v563 = vmul.f32 %v556, %v560
  %v564 = vlaneseq
  %v565 = vshrl.u32 %v564, 7
  %v566 = vsub.s32 1, %v565
  %v567 = vrot.slane %v513, %v566
  %v568 = vadd.f32 %v561, %v567
  %v569 = vadd.f32 %v562, %v567
  %v570 = vadd.f32 %v563, %v567
  %v571 = vpack.c.bf16 %v569, %v568
  %v572 = vpack.c.bf16 %v570, %v570
  %v573 = vld [vmem:[%s5] sm:$0xf]
  %v574 = vld [vmem:[%s5 + $0x4] sm:$0xf]
  %v575 = vld [vmem:[%s5 + $0x8] sm:$0xf]
  %v576 = vld [vmem:[%s5 + $0xc] sm:$0xf]
  %v577 = vlaneseq
  %v578 = vshrl.u32 %v577, 7
  %v579 = vsub.s32 2, %v578
  %v580 = vrot.slane %v513, %v579
  %v585 = vunpack.c.l.b16 %v573
  %v586 = vunpack.c.l.b16 %v574
  %v587 = vunpack.c.l.b16 %v575
  %v588 = vunpack.c.l.b16 %v576
  %v589 = vpack.c.b16 %v586, %v585
  %v590 = vpack.c.b16 %v588, %v587
  %v594 = vsel %vm515, %v571, 0
  %v597 = vsel %vm515, %v572, 0
  %599 = vmatprep.subr.bf16.mxu0 0
  %600 = vmatpush1.bf16.msra.mxu0 %v589
  %601 = vmatprep.subr.bf16.mxu0 0
  %602 = vmatpush1.bf16.msra.mxu0 %v590
  %603 = vmatprep.subr.bf16.mxu0 0
  %604 = vmatpush1.bf16.msra.mxu0 0
  %605 = vmatprep.subr.bf16.mxu0 0
  %606 = vmatpush1.bf16.msra.mxu0 0
  %607 = vmatprep.subr.bf16.mxu0 0
  %608 = vmatpush1.bf16.msra.mxu0 0
  %609 = vmatprep.subr.bf16.mxu0 0
  %610 = vmatpush1.bf16.msra.mxu0 0
  %611 = vmatprep.subr.bf16.mxu0 0
  %612 = vmatpush1.bf16.msra.mxu0 0
  %613 = vmatprep.subr.bf16.mxu0 0
  %614 = vmatpush1.bf16.msra.mxu0 0
  %615 = vmatprep.subr.bf16.mxu0 0
  %616 = vmatpush1.bf16.msra.mxu0 0
  %617 = vmatprep.subr.bf16.mxu0 0
  %618 = vmatpush1.bf16.msra.mxu0 0
  %619 = vmatprep.subr.bf16.mxu0 0
  %620 = vmatpush1.bf16.msra.mxu0 0
  %621 = vmatprep.subr.bf16.mxu0 0
  %622 = vmatpush1.bf16.msra.mxu0 0
  %623 = vmatprep.subr.bf16.mxu0 0
  %624 = vmatpush1.bf16.msra.mxu0 0
  %625 = vmatprep.subr.bf16.mxu0 0
  %626 = vmatpush1.bf16.msra.mxu0 0
  %627 = vmatprep.subr.bf16.mxu0 0
  %628 = vmatpush1.bf16.msra.mxu0 0
  %629 = vmatprep.subr.bf16.mxu0 0
  %630 = vmatpush1.bf16.msra.mxu0 0
  %631 = vmatprep.mubr.bf16.mxu0 0
  %632 = vmatmul.mubr.bf16.gmra.mrb[0].mxu0 %v594
  %v633 = vpop.f32.mrb[0].mxu0
  %v634 = vadd.f32 %v580, %v633
  %v635 = vpop.f32.mrb[0].mxu0
  %v636 = vpop.f32.mrb[0].mxu0
  %v637 = vadd.f32 %v580, %v636
  %v638 = vpop.f32.mrb[0].mxu0
  %639 = vmatprep.mubr.bf16.mxu0 0
  %640 = vmatmul.mubr.bf16.gmra.mrb[0].mxu0 %v597
  %v641 = vpop.f32.mrb[0].mxu0
  %v642 = vadd.f32 %v580, %v641
  %v643 = vpop.f32.mrb[0].mxu0
  %v644 = vpop.f32.mrb[0].mxu0
  %v645 = vpop.f32.mrb[0].mxu0
  %646 = vdwg.mxu0
  %v647 = vpack.c.bf16 %v637, %v634
  %v648 = vpack.c.bf16 %v642, %v642
  %651 = vrot.lane.b32.xlu0 %v647, 96
  %v652 = vpop.permute.xlu0 %651
  %653 = vrot.lane.b32.xlu0 %v648, 96
  %v654 = vpop.permute.xlu0 %653
  %vm655 = vcmask 130048
  %v657 = vsel %vm655, %v647, 0
  %v660 = vsel %vm655, %v648, 0
  %v663 = vsel %vm655, %v652, 0
  %v666 = vsel %vm655, %v654, 0
  %668 = vmatprep.subr.bf16.mxu0 0
  %669 = vmatpush1.bf16.xpose.msra.mxu0 %v663
  %670 = vmatprep.subr.bf16.mxu0 0
  %671 = vmatpush1.bf16.xpose.msra.mxu0 %v666
  %672 = vmatprep.subr.bf16.mxu0 0
  %673 = vmatpush1.bf16.xpose.msra.mxu0 0
  %674 = vmatprep.subr.bf16.mxu0 0
  %675 = vmatpush1.bf16.xpose.msra.mxu0 0
  %676 = vmatprep.subr.bf16.mxu0 0
  %677 = vmatpush1.bf16.xpose.msra.mxu0 0
  %678 = vmatprep.subr.bf16.mxu0 0
  %679 = vmatpush1.bf16.xpose.msra.mxu0 0
  %680 = vmatprep.subr.bf16.mxu0 0
  %681 = vmatpush1.bf16.xpose.msra.mxu0 0
  %682 = vmatprep.subr.bf16.mxu0 0
  %683 = vmatpush1.bf16.xpose.msra.mxu0 0
  %684 = vmatprep.subr.bf16.mxu0 0
  %685 = vmatpush1.bf16.xpose.msra.mxu0 0
  %686 = vmatprep.subr.bf16.mxu0 0
  %687 = vmatpush1.bf16.xpose.msra.mxu0 0
  %688 = vmatprep.subr.bf16.mxu0 0
  %689 = vmatpush1.bf16.xpose.msra.mxu0 0
  %690 = vmatprep.subr.bf16.mxu0 0
  %691 = vmatpush1.bf16.xpose.msra.mxu0 0
  %692 = vmatprep.subr.bf16.mxu0 0
  %693 = vmatpush1.bf16.xpose.msra.mxu0 0
  %694 = vmatprep.subr.bf16.mxu0 0
  %695 = vmatpush1.bf16.xpose.msra.mxu0 0
  %696 = vmatprep.subr.bf16.mxu0 0
  %697 = vmatpush1.bf16.xpose.msra.mxu0 0
  %698 = vmatprep.subr.bf16.mxu0 0
  %699 = vmatpush1.bf16.xpose.msra.mxu0 0
  %700 = vmatprep.mubr.bf16.mxu0 0
  %701 = vmatmul.mubr.bf16.gmra.mrb[0].mxu0 %v657
  %v702 = vpop.f32.mrb[0].mxu0
  %v703 = vadd.f32 0.0, %v702
  %v704 = vpop.f32.mrb[0].mxu0
  %v705 = vpop.f32.mrb[0].mxu0
  %v706 = vadd.f32 0.0, %v705
  %v707 = vpop.f32.mrb[0].mxu0
  %708 = vmatprep.mubr.bf16.mxu0 0
  %709 = vmatmul.mubr.bf16.gmra.mrb[0].mxu0 %v660
  %v710 = vpop.f32.mrb[0].mxu0
  %v711 = vadd.f32 0.0, %v710
  %v712 = vpop.f32.mrb[0].mxu0
  %v713 = vpop.f32.mrb[0].mxu0
  %v714 = vpop.f32.mrb[0].mxu0
  %715 = vdwg.mxu0
  %v716 = vmul.f32 %v703, 0.25
  %v717 = vmul.f32 %v706, 0.25
  %v718 = vmul.f32 %v711, 0.25
  %v719 = vadd.f32 %v716, %v510
  %v720 = vadd.f32 %v717, %v511
  %v721 = vadd.f32 %v718, %v512
  %vm722 = vcmask 146432
  %v723 = vsel %vm722, %v719, -inf
  %724 = vmax.xlane.f32.xlu0 %v723
  %v725 = vpop.xlane.xlu0 %724
  %v726 = vsel %vm722, %v720, -inf
  %727 = vmax.xlane.f32.xlu0 %v726
  %v728 = vpop.xlane.xlu0 %727
  %vm729 = vcmask 140288
  %v730 = vsel %vm729, %v721, -inf
  %731 = vmax.xlane.f32.xlu0 %v730
  %v732 = vpop.xlane.xlu0 %731
  %v733 = vsub.f32 %v719, %v725
  %v734 = vsub.f32 %v720, %v728
  %v735 = vsub.f32 %v721, %v732
  %v736 = vmul.f32 %v733, 1.442695
  %v737 = vpow.pop %v736
  %v738 = vmul.f32 %v734, 1.442695
  %v739 = vpow.pop %v738
  %v740 = vmul.f32 %v735, 1.442695
  %v741 = vpow.pop %v740
  %v742 = vsel %vm722, %v737, 0.0
  %743 = vadd.xlane.f32.xlu0 %v742
  %v744 = vpop.xlane.xlu0 %743
  %v745 = vsel %vm722, %v739, 0.0
  %746 = vadd.xlane.f32.xlu0 %v745
  %v747 = vpop.xlane.xlu0 %746
  %v748 = vsel %vm729, %v741, 0.0
  %749 = vadd.xlane.f32.xlu0 %v748
  %v750 = vpop.xlane.xlu0 %749
  %v751 = vrcp.pop %v744
  %v752 = vrcp.pop %v747
  %v753 = vrcp.pop %v750
  %v754 = vmul.f32 %v737, %v751
  %v755 = vmul.f32 %v739, %v752
  %v756 = vmul.f32 %v741, %v753
  %v757 = vpack.c.bf16 %v755, %v754
  %v758 = vpack.c.bf16 %v756, %v756
  %759 = vrot.lane.b32.xlu0 %v647, 64
  %v760 = vpop.permute.xlu0 %759
  %761 = vrot.lane.b32.xlu0 %v648, 64
  %v762 = vpop.permute.xlu0 %761
  %v765 = vsel %vm722, %v757, 0
  %v768 = vsel %vm722, %v758, 0
  %v771 = vsel %vm500, %v762, 0
  %773 = vmatprep.subr.bf16.mxu0 0
  %774 = vmatpush1.bf16.msra.mxu0 %v760
  %775 = vmatprep.subr.bf16.mxu0 0
  %776 = vmatpush1.bf16.msra.mxu0 %v771
  %777 = vmatprep.subr.bf16.mxu0 0
  %778 = vmatpush1.bf16.msra.mxu0 0
  %779 = vmatprep.subr.bf16.mxu0 0
  %780 = vmatpush1.bf16.msra.mxu0 0
  %781 = vmatprep.subr.bf16.mxu0 0
  %782 = vmatpush1.bf16.msra.mxu0 0
  %783 = vmatprep.subr.bf16.mxu0 0
  %784 = vmatpush1.bf16.msra.mxu0 0
  %785 = vmatprep.subr.bf16.mxu0 0
  %786 = vmatpush1.bf16.msra.mxu0 0
  %787 = vmatprep.subr.bf16.mxu0 0
  %788 = vmatpush1.bf16.msra.mxu0 0
  %789 = vmatprep.subr.bf16.mxu0 0
  %790 = vmatpush1.bf16.msra.mxu0 0
  %791 = vmatprep.subr.bf16.mxu0 0
  %792 = vmatpush1.bf16.msra.mxu0 0
  %793 = vmatprep.subr.bf16.mxu0 0
  %794 = vmatpush1.bf16.msra.mxu0 0
  %795 = vmatprep.subr.bf16.mxu0 0
  %796 = vmatpush1.bf16.msra.mxu0 0
  %797 = vmatprep.subr.bf16.mxu0 0
  %798 = vmatpush1.bf16.msra.mxu0 0
  %799 = vmatprep.subr.bf16.mxu0 0
  %800 = vmatpush1.bf16.msra.mxu0 0
  %801 = vmatprep.subr.bf16.mxu0 0
  %802 = vmatpush1.bf16.msra.mxu0 0
  %803 = vmatprep.subr.bf16.mxu0 0
  %804 = vmatpush1.bf16.msra.mxu0 0
  %805 = vmatprep.mubr.bf16.mxu0 0
  %806 = vmatmul.mubr.bf16.gmra.mrb[0].mxu0 %v765
  %v807 = vpop.f32.mrb[0].mxu0
  %v808 = vadd.f32 0.0, %v807
  %v809 = vpop.f32.mrb[0].mxu0
  %v810 = vpop.f32.mrb[0].mxu0
  %v811 = vadd.f32 0.0, %v810
  %v812 = vpop.f32.mrb[0].mxu0
  %813 = vmatprep.mubr.bf16.mxu0 0
  %814 = vmatmul.mubr.bf16.gmra.mrb[0].mxu0 %v768
  %v815 = vpop.f32.mrb[0].mxu0
  %v816 = vadd.f32 0.0, %v815
  %v817 = vpop.f32.mrb[0].mxu0
  %v818 = vpop.f32.mrb[0].mxu0
  %v819 = vpop.f32.mrb[0].mxu0
  %820 = vdwg.mxu0
  %821 = vrot.lane.b32.xlu0 %v647, 112
  %v822 = vpop.permute.xlu0 %821
  %823 = vrot.lane.b32.xlu0 %v648, 112
  %v824 = vpop.permute.xlu0 %823
  %825 = vrot.lane.b32.xlu0 %v647, 80
  %v826 = vpop.permute.xlu0 %825
  %827 = vrot.lane.b32.xlu0 %v648, 80
  %v828 = vpop.permute.xlu0 %827
  %v830 = vsel %vm655, %v822, 0
  %v833 = vsel %vm655, %v824, 0
  %v836 = vsel %vm655, %v826, 0
  %v839 = vsel %vm655, %v828, 0
  %841 = vmatprep.subr.bf16.mxu0 0
  %842 = vmatpush1.bf16.xpose.msra.mxu0 %v836
  %843 = vmatprep.subr.bf16.mxu0 0
  %844 = vmatpush1.bf16.xpose.msra.mxu0 %v839
  %845 = vmatprep.subr.bf16.mxu0 0
  %846 = vmatpush1.bf16.xpose.msra.mxu0 0
  %847 = vmatprep.subr.bf16.mxu0 0
  %848 = vmatpush1.bf16.xpose.msra.mxu0 0
  %849 = vmatprep.subr.bf16.mxu0 0
  %850 = vmatpush1.bf16.xpose.msra.mxu0 0
  %851 = vmatprep.subr.bf16.mxu0 0
  %852 = vmatpush1.bf16.xpose.msra.mxu0 0
  %853 = vmatprep.subr.bf16.mxu0 0
  %854 = vmatpush1.bf16.xpose.msra.mxu0 0
  %855 = vmatprep.subr.bf16.mxu0 0
  %856 = vmatpush1.bf16.xpose.msra.mxu0 0
  %857 = vmatprep.subr.bf16.mxu0 0
  %858 = vmatpush1.bf16.xpose.msra.mxu0 0
  %859 = vmatprep.subr.bf16.mxu0 0
  %860 = vmatpush1.bf16.xpose.msra.mxu0 0
  %861 = vmatprep.subr.bf16.mxu0 0
  %862 = vmatpush1.bf16.xpose.msra.mxu0 0
  %863 = vmatprep.subr.bf16.mxu0 0
  %864 = vmatpush1.bf16.xpose.msra.mxu0 0
  %865 = vmatprep.subr.bf16.mxu0 0
  %866 = vmatpush1.bf16.xpose.msra.mxu0 0
  %867 = vmatprep.subr.bf16.mxu0 0
  %868 = vmatpush1.bf16.xpose.msra.mxu0 0
  %869 = vmatprep.subr.bf16.mxu0 0
  %870 = vmatpush1.bf16.xpose.msra.mxu0 0
  %871 = vmatprep.subr.bf16.mxu0 0
  %872 = vmatpush1.bf16.xpose.msra.mxu0 0
  %873 = vmatprep.mubr.bf16.mxu0 0
  %874 = vmatmul.mubr.bf16.gmra.mrb[0].mxu0 %v830
  %v875 = vpop.f32.mrb[0].mxu0
  %v876 = vadd.f32 0.0, %v875
  %v877 = vpop.f32.mrb[0].mxu0
  %v878 = vpop.f32.mrb[0].mxu0
  %v879 = vadd.f32 0.0, %v878
  %v880 = vpop.f32.mrb[0].mxu0
  %881 = vmatprep.mubr.bf16.mxu0 0
  %882 = vmatmul.mubr.bf16.gmra.mrb[0].mxu0 %v833
  %v883 = vpop.f32.mrb[0].mxu0
  %v884 = vadd.f32 0.0, %v883
  %v885 = vpop.f32.mrb[0].mxu0
  %v886 = vpop.f32.mrb[0].mxu0
  %v887 = vpop.f32.mrb[0].mxu0
  %888 = vdwg.mxu0
  %v889 = vmul.f32 %v876, 0.25
  %v890 = vmul.f32 %v879, 0.25
  %v891 = vmul.f32 %v884, 0.25
  %v892 = vadd.f32 %v889, %v510
  %v893 = vadd.f32 %v890, %v511
  %v894 = vadd.f32 %v891, %v512
  %v895 = vsel %vm722, %v892, -inf
  %896 = vmax.xlane.f32.xlu0 %v895
  %v897 = vpop.xlane.xlu0 %896
  %v898 = vsel %vm722, %v893, -inf
  %899 = vmax.xlane.f32.xlu0 %v898
  %v900 = vpop.xlane.xlu0 %899
  %v901 = vsel %vm729, %v894, -inf
  %902 = vmax.xlane.f32.xlu0 %v901
  %v903 = vpop.xlane.xlu0 %902
  %v904 = vsub.f32 %v892, %v897
  %v905 = vsub.f32 %v893, %v900
  %v906 = vsub.f32 %v894, %v903
  %v907 = vmul.f32 %v904, 1.442695
  %v908 = vpow.pop %v907
  %v909 = vmul.f32 %v905, 1.442695
  %v910 = vpow.pop %v909
  %v911 = vmul.f32 %v906, 1.442695
  %v912 = vpow.pop %v911
  %v913 = vsel %vm722, %v908, 0.0
  %914 = vadd.xlane.f32.xlu0 %v913
  %v915 = vpop.xlane.xlu0 %914
  %v916 = vsel %vm722, %v910, 0.0
  %917 = vadd.xlane.f32.xlu0 %v916
  %v918 = vpop.xlane.xlu0 %917
  %v919 = vsel %vm729, %v912, 0.0
  %920 = vadd.xlane.f32.xlu0 %v919
  %v921 = vpop.xlane.xlu0 %920
  %v922 = vrcp.pop %v915
  %v923 = vrcp.pop %v918
  %v924 = vrcp.pop %v921
  %v925 = vmul.f32 %v908, %v922
  %v926 = vmul.f32 %v910, %v923
  %v927 = vmul.f32 %v912, %v924
  %v928 = vpack.c.bf16 %v926, %v925
  %v929 = vpack.c.bf16 %v927, %v927
  %930 = vrot.lane.b32.xlu0 %v647, 48
  %v931 = vpop.permute.xlu0 %930
  %932 = vrot.lane.b32.xlu0 %v648, 48
  %v933 = vpop.permute.xlu0 %932
  %v936 = vsel %vm722, %v928, 0
  %v939 = vsel %vm722, %v929, 0
  %v942 = vsel %vm500, %v933, 0
  %944 = vmatprep.subr.bf16.mxu0 0
  %945 = vmatpush1.bf16.msra.mxu0 %v931
  %946 = vmatprep.subr.bf16.mxu0 0
  %947 = vmatpush1.bf16.msra.mxu0 %v942
  %948 = vmatprep.subr.bf16.mxu0 0
  %949 = vmatpush1.bf16.msra.mxu0 0
  %950 = vmatprep.subr.bf16.mxu0 0
  %951 = vmatpush1.bf16.msra.mxu0 0
  %952 = vmatprep.subr.bf16.mxu0 0
  %953 = vmatpush1.bf16.msra.mxu0 0
  %954 = vmatprep.subr.bf16.mxu0 0
  %955 = vmatpush1.bf16.msra.mxu0 0
  %956 = vmatprep.subr.bf16.mxu0 0
  %957 = vmatpush1.bf16.msra.mxu0 0
  %958 = vmatprep.subr.bf16.mxu0 0
  %959 = vmatpush1.bf16.msra.mxu0 0
  %960 = vmatprep.subr.bf16.mxu0 0
  %961 = vmatpush1.bf16.msra.mxu0 0
  %962 = vmatprep.subr.bf16.mxu0 0
  %963 = vmatpush1.bf16.msra.mxu0 0
  %964 = vmatprep.subr.bf16.mxu0 0
  %965 = vmatpush1.bf16.msra.mxu0 0
  %966 = vmatprep.subr.bf16.mxu0 0
  %967 = vmatpush1.bf16.msra.mxu0 0
  %968 = vmatprep.subr.bf16.mxu0 0
  %969 = vmatpush1.bf16.msra.mxu0 0
  %970 = vmatprep.subr.bf16.mxu0 0
  %971 = vmatpush1.bf16.msra.mxu0 0
  %972 = vmatprep.subr.bf16.mxu0 0
  %973 = vmatpush1.bf16.msra.mxu0 0
  %974 = vmatprep.subr.bf16.mxu0 0
  %975 = vmatpush1.bf16.msra.mxu0 0
  %976 = vmatprep.mubr.bf16.mxu0 0
  %977 = vmatmul.mubr.bf16.gmra.mrb[0].mxu0 %v936
  %v978 = vpop.f32.mrb[0].mxu0
  %v979 = vadd.f32 0.0, %v978
  %v980 = vpop.f32.mrb[0].mxu0
  %v981 = vpop.f32.mrb[0].mxu0
  %v982 = vadd.f32 0.0, %v981
  %v983 = vpop.f32.mrb[0].mxu0
  %984 = vmatprep.mubr.bf16.mxu0 0
  %985 = vmatmul.mubr.bf16.gmra.mrb[0].mxu0 %v939
  %v986 = vpop.f32.mrb[0].mxu0
  %v987 = vadd.f32 0.0, %v986
  %v988 = vpop.f32.mrb[0].mxu0
  %v989 = vpop.f32.mrb[0].mxu0
  %v990 = vpop.f32.mrb[0].mxu0
  %991 = vdwg.mxu0
  %995 = vrot.lane.b32.xlu0 %v979, 16
  %v996 = vpop.permute.xlu0 %995
  %997 = vrot.lane.b32.xlu0 %v982, 16
  %v998 = vpop.permute.xlu0 %997
  %999 = vrot.lane.b32.xlu0 %v987, 16
  %v1000 = vpop.permute.xlu0 %999
  %v1004 = vsel %vm655, %v808, %v996
  %v1005 = vsel %vm655, %v811, %v998
  %v1006 = vsel %vm655, %v816, %v1000
  %v1007 = vpack.c.bf16 %v1005, %v1004
  %v1008 = vpack.c.bf16 %v1006, %v1006
  %v1009 = vld [vmem:[%s6] sm:$0xf]
  %v1010 = vld [vmem:[%s6 + $0x4] sm:$0xf]
  %v1011 = vld [vmem:[%s6 + $0x8] sm:$0xf]
  %v1012 = vld [vmem:[%s6 + $0xc] sm:$0xf]
  %v1013 = vlaneseq
  %v1014 = vshrl.u32 %v1013, 7
  %v1015 = vsub.s32 3, %v1014
  %v1016 = vrot.slane %v513, %v1015
  %v1021 = vunpack.c.l.b16 %v1009
  %v1022 = vunpack.c.l.b16 %v1010
  %v1023 = vunpack.c.l.b16 %v1011
  %v1024 = vunpack.c.l.b16 %v1012
  %v1025 = vpack.c.b16 %v1022, %v1021
  %v1026 = vpack.c.b16 %v1024, %v1023
  %v1030 = vsel %vm515, %v1007, 0
  %v1033 = vsel %vm515, %v1008, 0
  %1035 = vmatprep.subr.bf16.mxu0 0
  %1036 = vmatpush1.bf16.msra.mxu0 %v1025
  %1037 = vmatprep.subr.bf16.mxu0 0
  %1038 = vmatpush1.bf16.msra.mxu0 %v1026
  %1039 = vmatprep.subr.bf16.mxu0 0
  %1040 = vmatpush1.bf16.msra.mxu0 0
  %1041 = vmatprep.subr.bf16.mxu0 0
  %1042 = vmatpush1.bf16.msra.mxu0 0
  %1043 = vmatprep.subr.bf16.mxu0 0
  %1044 = vmatpush1.bf16.msra.mxu0 0
  %1045 = vmatprep.subr.bf16.mxu0 0
  %1046 = vmatpush1.bf16.msra.mxu0 0
  %1047 = vmatprep.subr.bf16.mxu0 0
  %1048 = vmatpush1.bf16.msra.mxu0 0
  %1049 = vmatprep.subr.bf16.mxu0 0
  %1050 = vmatpush1.bf16.msra.mxu0 0
  %1051 = vmatprep.subr.bf16.mxu0 0
  %1052 = vmatpush1.bf16.msra.mxu0 0
  %1053 = vmatprep.subr.bf16.mxu0 0
  %1054 = vmatpush1.bf16.msra.mxu0 0
  %1055 = vmatprep.subr.bf16.mxu0 0
  %1056 = vmatpush1.bf16.msra.mxu0 0
  %1057 = vmatprep.subr.bf16.mxu0 0
  %1058 = vmatpush1.bf16.msra.mxu0 0
  %1059 = vmatprep.subr.bf16.mxu0 0
  %1060 = vmatpush1.bf16.msra.mxu0 0
  %1061 = vmatprep.subr.bf16.mxu0 0
  %1062 = vmatpush1.bf16.msra.mxu0 0
  %1063 = vmatprep.subr.bf16.mxu0 0
  %1064 = vmatpush1.bf16.msra.mxu0 0
  %1065 = vmatprep.subr.bf16.mxu0 0
  %1066 = vmatpush1.bf16.msra.mxu0 0
  %1067 = vmatprep.mubr.bf16.mxu0 0
  %1068 = vmatmul.mubr.bf16.gmra.mrb[0].mxu0 %v1030
  %v1069 = vpop.f32.mrb[0].mxu0
  %v1070 = vadd.f32 %v1016, %v1069
  %v1071 = vpop.f32.mrb[0].mxu0
  %v1072 = vpop.f32.mrb[0].mxu0
  %v1073 = vadd.f32 %v1016, %v1072
  %v1074 = vpop.f32.mrb[0].mxu0
  %1075 = vmatprep.mubr.bf16.mxu0 0
  %1076 = vmatmul.mubr.bf16.gmra.mrb[0].mxu0 %v1033
  %v1077 = vpop.f32.mrb[0].mxu0
  %v1078 = vadd.f32 %v1016, %v1077
  %v1079 = vpop.f32.mrb[0].mxu0
  %v1080 = vpop.f32.mrb[0].mxu0
  %v1081 = vpop.f32.mrb[0].mxu0
  %1082 = vdwg.mxu0
  %v1083 = vlaneseq
  %v1084 = vshrl.u32 %v1083, 7
  %v1085 = vsub.s32 4, %v1084
  %v1086 = vrot.slane %v513, %v1085
  %v1087 = vmul.f32 %v1086, %v1070
  %v1088 = vmul.f32 %v1086, %v1073
  %v1089 = vmul.f32 %v1086, %v1078
  %v1090 = vadd.f32 %v507, %v1087
  %v1091 = vadd.f32 %v509, %v1088
  %v1092 = vadd.f32 %v503, %v1089
  %v1093 = vsel %vm515, %v1090, 0.0
  %1094 = vadd.xlane.f32.xlu0 %v1093
  %v1095 = vpop.xlane.xlu0 %1094
  %v1096 = vsel %vm515, %v1091, 0.0
  %1097 = vadd.xlane.f32.xlu0 %v1096
  %v1098 = vpop.xlane.xlu0 %1097
  %v1099 = vsel %vm522, %v1092, 0.0
  %1100 = vadd.xlane.f32.xlu0 %v1099
  %v1101 = vpop.xlane.xlu0 %1100
  %v1102 = vmul.f32 %v1095, %v526
  %v1103 = vmul.f32 %v1098, %v526
  %v1104 = vmul.f32 %v1101, %v526
  %v1105 = vsub.f32 %v1090, %v1102
  %v1106 = vsub.f32 %v1091, %v1103
  %v1107 = vsub.f32 %v1092, %v1104
  %v1108 = vmul.f32 %v1105, %v1105
  %v1109 = vmul.f32 %v1106, %v1106
  %v1110 = vmul.f32 %v1107, %v1107
  %v1111 = vsel %vm515, %v1108, 0.0
  %1112 = vadd.xlane.f32.xlu0 %v1111
  %v1113 = vpop.xlane.xlu0 %1112
  %v1114 = vsel %vm515, %v1109, 0.0
  %1115 = vadd.xlane.f32.xlu0 %v1114
  %v1116 = vpop.xlane.xlu0 %1115
  %v1117 = vsel %vm522, %v1110, 0.0
  %1118 = vadd.xlane.f32.xlu0 %v1117
  %v1119 = vpop.xlane.xlu0 %1118
  %v1120 = vmul.f32 %v1113, %v526
  %v1121 = vmul.f32 %v1116, %v526
  %v1122 = vmul.f32 %v1119, %v526
  %v1123 = vadd.f32 %v1120, 1e-06
  %v1124 = vadd.f32 %v1121, 1e-06
  %v1125 = vadd.f32 %v1122, 1e-06
  %v1126 = vrsqrt.pop %v1123
  %v1127 = vrsqrt.pop %v1124
  %v1128 = vrsqrt.pop %v1125
  %v1129 = vmul.f32 %v1105, %v1126
  %v1130 = vmul.f32 %v1106, %v1127
  %v1131 = vmul.f32 %v1107, %v1128
  %v1132 = vlaneseq
  %v1133 = vshrl.u32 %v1132, 7
  %v1134 = vsub.s32 5, %v1133
  %v1135 = vrot.slane %v513, %v1134
  %v1136 = vmul.f32 %v1129, %v1135
  %v1137 = vmul.f32 %v1130, %v1135
  %v1138 = vmul.f32 %v1131, %v1135
  %v1139 = vlaneseq
  %v1140 = vshrl.u32 %v1139, 7
  %v1141 = vsub.s32 6, %v1140
  %v1142 = vrot.slane %v513, %v1141
  %v1143 = vadd.f32 %v1136, %v1142
  %v1144 = vadd.f32 %v1137, %v1142
  %v1145 = vadd.f32 %v1138, %v1142
  %v1146 = vpack.c.bf16 %v1144, %v1143
  %v1147 = vpack.c.bf16 %v1145, %v1145
  %v1148 = vld [vmem:[%s7] sm:$0xf]
  %v1149 = vld [vmem:[%s7 + $0x4] sm:$0xf]
  %v1150 = vld [vmem:[%s7 + $0x8] sm:$0xf]
  %v1151 = vld [vmem:[%s7 + $0xc] sm:$0xf]
  %v1152 = vlaneseq
  %v1153 = vshrl.u32 %v1152, 7
  %v1154 = vsub.s32 7, %v1153
  %v1155 = vrot.slane %v513, %v1154
  %v1160 = vunpack.c.l.b16 %v1148
  %v1161 = vunpack.c.l.b16 %v1149
  %v1162 = vunpack.c.l.b16 %v1150
  %v1163 = vunpack.c.l.b16 %v1151
  %v1164 = vpack.c.b16 %v1161, %v1160
  %v1165 = vpack.c.b16 %v1163, %v1162
  %v1169 = vsel %vm515, %v1146, 0
  %v1172 = vsel %vm515, %v1147, 0
  %1174 = vmatprep.subr.bf16.mxu0 0
  %1175 = vmatpush1.bf16.msra.mxu0 %v1164
  %1176 = vmatprep.subr.bf16.mxu0 0
  %1177 = vmatpush1.bf16.msra.mxu0 %v1165
  %1178 = vmatprep.subr.bf16.mxu0 0
  %1179 = vmatpush1.bf16.msra.mxu0 0
  %1180 = vmatprep.subr.bf16.mxu0 0
  %1181 = vmatpush1.bf16.msra.mxu0 0
  %1182 = vmatprep.subr.bf16.mxu0 0
  %1183 = vmatpush1.bf16.msra.mxu0 0
  %1184 = vmatprep.subr.bf16.mxu0 0
  %1185 = vmatpush1.bf16.msra.mxu0 0
  %1186 = vmatprep.subr.bf16.mxu0 0
  %1187 = vmatpush1.bf16.msra.mxu0 0
  %1188 = vmatprep.subr.bf16.mxu0 0
  %1189 = vmatpush1.bf16.msra.mxu0 0
  %1190 = vmatprep.subr.bf16.mxu0 0
  %1191 = vmatpush1.bf16.msra.mxu0 0
  %1192 = vmatprep.subr.bf16.mxu0 0
  %1193 = vmatpush1.bf16.msra.mxu0 0
  %1194 = vmatprep.subr.bf16.mxu0 0
  %1195 = vmatpush1.bf16.msra.mxu0 0
  %1196 = vmatprep.subr.bf16.mxu0 0
  %1197 = vmatpush1.bf16.msra.mxu0 0
  %1198 = vmatprep.subr.bf16.mxu0 0
  %1199 = vmatpush1.bf16.msra.mxu0 0
  %1200 = vmatprep.subr.bf16.mxu0 0
  %1201 = vmatpush1.bf16.msra.mxu0 0
  %1202 = vmatprep.subr.bf16.mxu0 0
  %1203 = vmatpush1.bf16.msra.mxu0 0
  %1204 = vmatprep.subr.bf16.mxu0 0
  %1205 = vmatpush1.bf16.msra.mxu0 0
  %1206 = vmatprep.mubr.bf16.mxu0 0
  %1207 = vmatmul.mubr.bf16.gmra.mrb[0].mxu0 %v1169
  %v1208 = vpop.f32.mrb[0].mxu0
  %v1209 = vadd.f32 %v1155, %v1208
  %v1210 = vpop.f32.mrb[0].mxu0
  %v1211 = vpop.f32.mrb[0].mxu0
  %v1212 = vadd.f32 %v1155, %v1211
  %v1213 = vpop.f32.mrb[0].mxu0
  %1214 = vmatprep.mubr.bf16.mxu0 0
  %1215 = vmatmul.mubr.bf16.gmra.mrb[0].mxu0 %v1172
  %v1216 = vpop.f32.mrb[0].mxu0
  %v1217 = vadd.f32 %v1155, %v1216
  %v1218 = vpop.f32.mrb[0].mxu0
  %v1219 = vpop.f32.mrb[0].mxu0
  %v1220 = vpop.f32.mrb[0].mxu0
  %1221 = vdwg.mxu0
  %v1222 = vmul.f32 %v1209, %v1209
  %v1223 = vmul.f32 %v1212, %v1212
  %v1224 = vmul.f32 %v1217, %v1217
  %v1225 = vmul.f32 %v1209, %v1222
  %v1226 = vmul.f32 %v1212, %v1223
  %v1227 = vmul.f32 %v1217, %v1224
  %v1228 = vmul.f32 %v1225, 0.044715
  %v1229 = vmul.f32 %v1226, 0.044715
  %v1230 = vmul.f32 %v1227, 0.044715
  %v1231 = vadd.f32 %v1209, %v1228
  %v1232 = vadd.f32 %v1212, %v1229
  %v1233 = vadd.f32 %v1217, %v1230
  %v1234 = vmul.f32 %v1231, 0.7978846
  %v1235 = vmul.f32 %v1232, 0.7978846
  %v1236 = vmul.f32 %v1233, 0.7978846
  %v1237 = vtanh.pop %v1234
  %v1238 = vtanh.pop %v1235
  %v1239 = vtanh.pop %v1236
  %v1240 = vadd.f32 %v1237, 1.0
  %v1241 = vadd.f32 %v1238, 1.0
  %v1242 = vadd.f32 %v1239, 1.0
  %v1243 = vmul.f32 %v1240, 0.5
  %v1244 = vmul.f32 %v1241, 0.5
  %v1245 = vmul.f32 %v1242, 0.5
  %v1246 = vmul.f32 %v1209, %v1243
  %v1247 = vmul.f32 %v1212, %v1244
  %v1248 = vmul.f32 %v1217, %v1245
  %v1249 = vpack.c.bf16 %v1247, %v1246
  %v1250 = vpack.c.bf16 %v1248, %v1248
  %v1251 = vld [vmem:[%s8] sm:$0xf]
  %v1252 = vld [vmem:[%s8 + $0x4] sm:$0xf]
  %v1253 = vld [vmem:[%s8 + $0x8] sm:$0xf]
  %v1254 = vld [vmem:[%s8 + $0xc] sm:$0xf]
  %v1255 = vld [vmem:[%s8 + $0x10] sm:$0xf]
  %v1256 = vld [vmem:[%s8 + $0x14] sm:$0xf]
  %v1257 = vld [vmem:[%s8 + $0x18] sm:$0xf]
  %v1258 = vld [vmem:[%s8 + $0x1c] sm:$0xf]
  %v1259 = vld [vmem:[%s8 + $0x20] sm:$0xf]
  %v1260 = vld [vmem:[%s8 + $0x24] sm:$0xf]
  %v1261 = vld [vmem:[%s8 + $0x28] sm:$0xf]
  %v1262 = vld [vmem:[%s8 + $0x2c] sm:$0xf]
  %v1263 = vld [vmem:[%s8 + $0x30] sm:$0xf]
  %v1264 = vld [vmem:[%s8 + $0x34] sm:$0xf]
  %v1265 = vld [vmem:[%s8 + $0x38] sm:$0xf]
  %v1266 = vld [vmem:[%s8 + $0x3c] sm:$0xf]
  %v1267 = vlaneseq
  %v1268 = vshrl.u32 %v1267, 7
  %v1269 = vsub.s32 0, %v1268
  %v1270 = vrot.slane %v514, %v1269
  %v1287 = vunpack.c.l.b16 %v1251
  %v1288 = vunpack.c.l.b16 %v1252
  %v1289 = vunpack.c.l.b16 %v1253
  %v1290 = vunpack.c.l.b16 %v1254
  %v1291 = vunpack.c.l.b16 %v1255
  %v1292 = vunpack.c.l.b16 %v1256
  %v1293 = vunpack.c.l.b16 %v1257
  %v1294 = vunpack.c.l.b16 %v1258
  %v1295 = vunpack.c.l.b16 %v1259
  %v1296 = vunpack.c.l.b16 %v1260
  %v1297 = vunpack.c.l.b16 %v1261
  %v1298 = vunpack.c.l.b16 %v1262
  %v1299 = vunpack.c.l.b16 %v1263
  %v1300 = vunpack.c.l.b16 %v1264
  %v1301 = vunpack.c.l.b16 %v1265
  %v1302 = vunpack.c.l.b16 %v1266
  %v1303 = vpack.c.b16 %v1288, %v1287
  %v1304 = vpack.c.b16 %v1290, %v1289
  %v1305 = vpack.c.b16 %v1292, %v1291
  %v1306 = vpack.c.b16 %v1294, %v1293
  %v1307 = vpack.c.b16 %v1296, %v1295
  %v1308 = vpack.c.b16 %v1298, %v1297
  %v1309 = vpack.c.b16 %v1300, %v1299
  %v1310 = vpack.c.b16 %v1302, %v1301
  %1319 = vmatprep.subr.bf16.mxu0 0
  %1320 = vmatpush1.bf16.msra.mxu0 %v1303
  %1321 = vmatprep.subr.bf16.mxu0 0
  %1322 = vmatpush1.bf16.msra.mxu0 %v1304
  %1323 = vmatprep.subr.bf16.mxu0 0
  %1324 = vmatpush1.bf16.msra.mxu0 %v1305
  %1325 = vmatprep.subr.bf16.mxu0 0
  %1326 = vmatpush1.bf16.msra.mxu0 %v1306
  %1327 = vmatprep.subr.bf16.mxu0 0
  %1328 = vmatpush1.bf16.msra.mxu0 %v1307
  %1329 = vmatprep.subr.bf16.mxu0 0
  %1330 = vmatpush1.bf16.msra.mxu0 %v1308
  %1331 = vmatprep.subr.bf16.mxu0 0
  %1332 = vmatpush1.bf16.msra.mxu0 %v1309
  %1333 = vmatprep.subr.bf16.mxu0 0
  %1334 = vmatpush1.bf16.msra.mxu0 %v1310
  %1335 = vmatprep.subr.bf16.mxu0 0
  %1336 = vmatpush1.bf16.msra.mxu0 0
  %1337 = vmatprep.subr.bf16.mxu0 0
  %1338 = vmatpush1.bf16.msra.mxu0 0
  %1339 = vmatprep.subr.bf16.mxu0 0
  %1340 = vmatpush1.bf16.msra.mxu0 0
  %1341 = vmatprep.subr.bf16.mxu0 0
  %1342 = vmatpush1.bf16.msra.mxu0 0
  %1343 = vmatprep.subr.bf16.mxu0 0
  %1344 = vmatpush1.bf16.msra.mxu0 0
  %1345 = vmatprep.subr.bf16.mxu0 0
  %1346 = vmatpush1.bf16.msra.mxu0 0
  %1347 = vmatprep.subr.bf16.mxu0 0
  %1348 = vmatpush1.bf16.msra.mxu0 0
  %1349 = vmatprep.subr.bf16.mxu0 0
  %1350 = vmatpush1.bf16.msra.mxu0 0
  %1351 = vmatprep.mubr.bf16.mxu0 0
  %1352 = vmatmul.mubr.bf16.gmra.mrb[0].mxu0 %v1249
  %v1353 = vpop.f32.mrb[0].mxu0
  %v1354 = vadd.f32 %v1270, %v1353
  %v1355 = vpop.f32.mrb[0].mxu0
  %v1356 = vpop.f32.mrb[0].mxu0
  %v1357 = vadd.f32 %v1270, %v1356
  %v1358 = vpop.f32.mrb[0].mxu0
  %1359 = vmatprep.mubr.bf16.mxu0 0
  %1360 = vmatmul.mubr.bf16.gmra.mrb[0].mxu0 %v1250
  %v1361 = vpop.f32.mrb[0].mxu0
  %v1362 = vadd.f32 %v1270, %v1361
  %v1363 = vpop.f32.mrb[0].mxu0
  %v1364 = vpop.f32.mrb[0].mxu0
  %v1365 = vpop.f32.mrb[0].mxu0
  %1366 = vdwg.mxu0
  %v1367 = vlaneseq
  %v1368 = vshrl.u32 %v1367, 7
  %v1369 = vsub.s32 1, %v1368
  %v1370 = vrot.slane %v514, %v1369
  %v1371 = vmul.f32 %v1370, %v1354
  %v1372 = vmul.f32 %v1370, %v1357
  %v1373 = vmul.f32 %v1370, %v1362
  %v1374 = vadd.f32 %v1090, %v1371
  %v1375 = vadd.f32 %v1091, %v1372
  %v1376 = vadd.f32 %v1092, %v1373
  %s1377 = scalar_lea.vmem %s4, 16
  %v1378 = vld [vmem:[%s1377] sm:$0xff]
  %v1379 = vld [vmem:[%s1377 + $0x8] sm:$0x3]
  %v1380 = vsel %vm515, %v1374, 0.0
  %1381 = vadd.xlane.f32.xlu0 %v1380
  %v1382 = vpop.xlane.xlu0 %1381
  %v1383 = vsel %vm515, %v1375, 0.0
  %1384 = vadd.xlane.f32.xlu0 %v1383
  %v1385 = vpop.xlane.xlu0 %1384
  %v1386 = vsel %vm522, %v1376, 0.0
  %1387 = vadd.xlane.f32.xlu0 %v1386
  %v1388 = vpop.xlane.xlu0 %1387
  %v1389 = vmul.f32 %v1382, %v526
  %v1390 = vmul.f32 %v1385, %v526
  %v1391 = vmul.f32 %v1388, %v526
  %v1392 = vsub.f32 %v1374, %v1389
  %v1393 = vsub.f32 %v1375, %v1390
  %v1394 = vsub.f32 %v1376, %v1391
  %v1395 = vmul.f32 %v1392, %v1392
  %v1396 = vmul.f32 %v1393, %v1393
  %v1397 = vmul.f32 %v1394, %v1394
  %v1398 = vsel %vm515, %v1395, 0.0
  %1399 = vadd.xlane.f32.xlu0 %v1398
  %v1400 = vpop.xlane.xlu0 %1399
  %v1401 = vsel %vm515, %v1396, 0.0
  %1402 = vadd.xlane.f32.xlu0 %v1401
  %v1403 = vpop.xlane.xlu0 %1402
  %v1404 = vsel %vm522, %v1397, 0.0
  %1405 = vadd.xlane.f32.xlu0 %v1404
  %v1406 = vpop.xlane.xlu0 %1405
  %v1407 = vmul.f32 %v1400, %v526
  %v1408 = vmul.f32 %v1403, %v526
  %v1409 = vmul.f32 %v1406, %v526
  %v1410 = vadd.f32 %v1407, 1e-06
  %v1411 = vadd.f32 %v1408, 1e-06
  %v1412 = vadd.f32 %v1409, 1e-06
  %v1413 = vrsqrt.pop %v1410
  %v1414 = vrsqrt.pop %v1411
  %v1415 = vrsqrt.pop %v1412
  %v1416 = vmul.f32 %v1392, %v1413
  %v1417 = vmul.f32 %v1393, %v1414
  %v1418 = vmul.f32 %v1394, %v1415
  %v1419 = vlaneseq
  %v1420 = vshrl.u32 %v1419, 7
  %v1421 = vsub.s32 0, %v1420
  %v1422 = vrot.slane %v1378, %v1421
  %v1423 = vmul.f32 %v1416, %v1422
  %v1424 = vmul.f32 %v1417, %v1422
  %v1425 = vmul.f32 %v1418, %v1422
  %v1426 = vlaneseq
  %v1427 = vshrl.u32 %v1426, 7
  %v1428 = vsub.s32 1, %v1427
  %v1429 = vrot.slane %v1378, %v1428
  %v1430 = vadd.f32 %v1423, %v1429
  %v1431 = vadd.f32 %v1424, %v1429
  %v1432 = vadd.f32 %v1425, %v1429
  %v1433 = vpack.c.bf16 %v1431, %v1430
  %v1434 = vpack.c.bf16 %v1432, %v1432
  %s1435 = scalar_lea.vmem %s5, 16
  %v1436 = vld [vmem:[%s1435] sm:$0xf]
  %v1437 = vld [vmem:[%s1435 + $0x4] sm:$0xf]
  %v1438 = vld [vmem:[%s1435 + $0x8] sm:$0xf]
  %v1439 = vld [vmem:[%s1435 + $0xc] sm:$0xf]
  %v1440 = vlaneseq
  %v1441 = vshrl.u32 %v1440, 7
  %v1442 = vsub.s32 2, %v1441
  %v1443 = vrot.slane %v1378, %v1442
  %v1448 = vunpack.c.l.b16 %v1436
  %v1449 = vunpack.c.l.b16 %v1437
  %v1450 = vunpack.c.l.b16 %v1438
  %v1451 = vunpack.c.l.b16 %v1439
  %v1452 = vpack.c.b16 %v1449, %v1448
  %v1453 = vpack.c.b16 %v1451, %v1450
  %v1457 = vsel %vm515, %v1433, 0
  %v1460 = vsel %vm515, %v1434, 0
  %1462 = vmatprep.subr.bf16.mxu0 0
  %1463 = vmatpush1.bf16.msra.mxu0 %v1452
  %1464 = vmatprep.subr.bf16.mxu0 0
  %1465 = vmatpush1.bf16.msra.mxu0 %v1453
  %1466 = vmatprep.subr.bf16.mxu0 0
  %1467 = vmatpush1.bf16.msra.mxu0 0
  %1468 = vmatprep.subr.bf16.mxu0 0
  %1469 = vmatpush1.bf16.msra.mxu0 0
  %1470 = vmatprep.subr.bf16.mxu0 0
  %1471 = vmatpush1.bf16.msra.mxu0 0
  %1472 = vmatprep.subr.bf16.mxu0 0
  %1473 = vmatpush1.bf16.msra.mxu0 0
  %1474 = vmatprep.subr.bf16.mxu0 0
  %1475 = vmatpush1.bf16.msra.mxu0 0
  %1476 = vmatprep.subr.bf16.mxu0 0
  %1477 = vmatpush1.bf16.msra.mxu0 0
  %1478 = vmatprep.subr.bf16.mxu0 0
  %1479 = vmatpush1.bf16.msra.mxu0 0
  %1480 = vmatprep.subr.bf16.mxu0 0
  %1481 = vmatpush1.bf16.msra.mxu0 0
  %1482 = vmatprep.subr.bf16.mxu0 0
  %1483 = vmatpush1.bf16.msra.mxu0 0
  %1484 = vmatprep.subr.bf16.mxu0 0
  %1485 = vmatpush1.bf16.msra.mxu0 0
  %1486 = vmatprep.subr.bf16.mxu0 0
  %1487 = vmatpush1.bf16.msra.mxu0 0
  %1488 = vmatprep.subr.bf16.mxu0 0
  %1489 = vmatpush1.bf16.msra.mxu0 0
  %1490 = vmatprep.subr.bf16.mxu0 0
  %1491 = vmatpush1.bf16.msra.mxu0 0
  %1492 = vmatprep.subr.bf16.mxu0 0
  %1493 = vmatpush1.bf16.msra.mxu0 0
  %1494 = vmatprep.mubr.bf16.mxu0 0
  %1495 = vmatmul.mubr.bf16.gmra.mrb[0].mxu0 %v1457
  %v1496 = vpop.f32.mrb[0].mxu0
  %v1497 = vadd.f32 %v1443, %v1496
  %v1498 = vpop.f32.mrb[0].mxu0
  %v1499 = vpop.f32.mrb[0].mxu0
  %v1500 = vadd.f32 %v1443, %v1499
  %v1501 = vpop.f32.mrb[0].mxu0
  %1502 = vmatprep.mubr.bf16.mxu0 0
  %1503 = vmatmul.mubr.bf16.gmra.mrb[0].mxu0 %v1460
  %v1504 = vpop.f32.mrb[0].mxu0
  %v1505 = vadd.f32 %v1443, %v1504
  %v1506 = vpop.f32.mrb[0].mxu0
  %v1507 = vpop.f32.mrb[0].mxu0
  %v1508 = vpop.f32.mrb[0].mxu0
  %1509 = vdwg.mxu0
  %v1510 = vpack.c.bf16 %v1500, %v1497
  %v1511 = vpack.c.bf16 %v1505, %v1505
  %1514 = vrot.lane.b32.xlu0 %v1510, 96
  %v1515 = vpop.permute.xlu0 %1514
  %1516 = vrot.lane.b32.xlu0 %v1511, 96
  %v1517 = vpop.permute.xlu0 %1516
  %v1519 = vsel %vm655, %v1510, 0
  %v1522 = vsel %vm655, %v1511, 0
  %v1525 = vsel %vm655, %v1515, 0
  %v1528 = vsel %vm655, %v1517, 0
  %1530 = vmatprep.subr.bf16.mxu0 0
  %1531 = vmatpush1.bf16.xpose.msra.mxu0 %v1525
  %1532 = vmatprep.subr.bf16.mxu0 0
  %1533 = vmatpush1.bf16.xpose.msra.mxu0 %v1528
  %1534 = vmatprep.subr.bf16.mxu0 0
  %1535 = vmatpush1.bf16.xpose.msra.mxu0 0
  %1536 = vmatprep.subr.bf16.mxu0 0
  %1537 = vmatpush1.bf16.xpose.msra.mxu0 0
  %1538 = vmatprep.subr.bf16.mxu0 0
  %1539 = vmatpush1.bf16.xpose.msra.mxu0 0
  %1540 = vmatprep.subr.bf16.mxu0 0
  %1541 = vmatpush1.bf16.xpose.msra.mxu0 0
  %1542 = vmatprep.subr.bf16.mxu0 0
  %1543 = vmatpush1.bf16.xpose.msra.mxu0 0
  %1544 = vmatprep.subr.bf16.mxu0 0
  %1545 = vmatpush1.bf16.xpose.msra.mxu0 0
  %1546 = vmatprep.subr.bf16.mxu0 0
  %1547 = vmatpush1.bf16.xpose.msra.mxu0 0
  %1548 = vmatprep.subr.bf16.mxu0 0
  %1549 = vmatpush1.bf16.xpose.msra.mxu0 0
  %1550 = vmatprep.subr.bf16.mxu0 0
  %1551 = vmatpush1.bf16.xpose.msra.mxu0 0
  %1552 = vmatprep.subr.bf16.mxu0 0
  %1553 = vmatpush1.bf16.xpose.msra.mxu0 0
  %1554 = vmatprep.subr.bf16.mxu0 0
  %1555 = vmatpush1.bf16.xpose.msra.mxu0 0
  %1556 = vmatprep.subr.bf16.mxu0 0
  %1557 = vmatpush1.bf16.xpose.msra.mxu0 0
  %1558 = vmatprep.subr.bf16.mxu0 0
  %1559 = vmatpush1.bf16.xpose.msra.mxu0 0
  %1560 = vmatprep.subr.bf16.mxu0 0
  %1561 = vmatpush1.bf16.xpose.msra.mxu0 0
  %1562 = vmatprep.mubr.bf16.mxu0 0
  %1563 = vmatmul.mubr.bf16.gmra.mrb[0].mxu0 %v1519
  %v1564 = vpop.f32.mrb[0].mxu0
  %v1565 = vadd.f32 0.0, %v1564
  %v1566 = vpop.f32.mrb[0].mxu0
  %v1567 = vpop.f32.mrb[0].mxu0
  %v1568 = vadd.f32 0.0, %v1567
  %v1569 = vpop.f32.mrb[0].mxu0
  %1570 = vmatprep.mubr.bf16.mxu0 0
  %1571 = vmatmul.mubr.bf16.gmra.mrb[0].mxu0 %v1522
  %v1572 = vpop.f32.mrb[0].mxu0
  %v1573 = vadd.f32 0.0, %v1572
  %v1574 = vpop.f32.mrb[0].mxu0
  %v1575 = vpop.f32.mrb[0].mxu0
  %v1576 = vpop.f32.mrb[0].mxu0
  %1577 = vdwg.mxu0
  %v1578 = vmul.f32 %v1565, 0.25
  %v1579 = vmul.f32 %v1568, 0.25
  %v1580 = vmul.f32 %v1573, 0.25
  %v1581 = vadd.f32 %v1578, %v510
  %v1582 = vadd.f32 %v1579, %v511
  %v1583 = vadd.f32 %v1580, %v512
  %v1584 = vsel %vm722, %v1581, -inf
  %1585 = vmax.xlane.f32.xlu0 %v1584
  %v1586 = vpop.xlane.xlu0 %1585
  %v1587 = vsel %vm722, %v1582, -inf
  %1588 = vmax.xlane.f32.xlu0 %v1587
  %v1589 = vpop.xlane.xlu0 %1588
  %v1590 = vsel %vm729, %v1583, -inf
  %1591 = vmax.xlane.f32.xlu0 %v1590
  %v1592 = vpop.xlane.xlu0 %1591
  %v1593 = vsub.f32 %v1581, %v1586
  %v1594 = vsub.f32 %v1582, %v1589
  %v1595 = vsub.f32 %v1583, %v1592
  %v1596 = vmul.f32 %v1593, 1.442695
  %v1597 = vpow.pop %v1596
  %v1598 = vmul.f32 %v1594, 1.442695
  %v1599 = vpow.pop %v1598
  %v1600 = vmul.f32 %v1595, 1.442695
  %v1601 = vpow.pop %v1600
  %v1602 = vsel %vm722, %v1597, 0.0
  %1603 = vadd.xlane.f32.xlu0 %v1602
  %v1604 = vpop.xlane.xlu0 %1603
  %v1605 = vsel %vm722, %v1599, 0.0
  %1606 = vadd.xlane.f32.xlu0 %v1605
  %v1607 = vpop.xlane.xlu0 %1606
  %v1608 = vsel %vm729, %v1601, 0.0
  %1609 = vadd.xlane.f32.xlu0 %v1608
  %v1610 = vpop.xlane.xlu0 %1609
  %v1611 = vrcp.pop %v1604
  %v1612 = vrcp.pop %v1607
  %v1613 = vrcp.pop %v1610
  %v1614 = vmul.f32 %v1597, %v1611
  %v1615 = vmul.f32 %v1599, %v1612
  %v1616 = vmul.f32 %v1601, %v1613
  %v1617 = vpack.c.bf16 %v1615, %v1614
  %v1618 = vpack.c.bf16 %v1616, %v1616
  %1619 = vrot.lane.b32.xlu0 %v1510, 64
  %v1620 = vpop.permute.xlu0 %1619
  %1621 = vrot.lane.b32.xlu0 %v1511, 64
  %v1622 = vpop.permute.xlu0 %1621
  %v1625 = vsel %vm722, %v1617, 0
  %v1628 = vsel %vm722, %v1618, 0
  %v1631 = vsel %vm500, %v1622, 0
  %1633 = vmatprep.subr.bf16.mxu0 0
  %1634 = vmatpush1.bf16.msra.mxu0 %v1620
  %1635 = vmatprep.subr.bf16.mxu0 0
  %1636 = vmatpush1.bf16.msra.mxu0 %v1631
  %1637 = vmatprep.subr.bf16.mxu0 0
  %1638 = vmatpush1.bf16.msra.mxu0 0
  %1639 = vmatprep.subr.bf16.mxu0 0
  %1640 = vmatpush1.bf16.msra.mxu0 0
  %1641 = vmatprep.subr.bf16.mxu0 0
  %1642 = vmatpush1.bf16.msra.mxu0 0
  %1643 = vmatprep.subr.bf16.mxu0 0
  %1644 = vmatpush1.bf16.msra.mxu0 0
  %1645 = vmatprep.subr.bf16.mxu0 0
  %1646 = vmatpush1.bf16.msra.mxu0 0
  %1647 = vmatprep.subr.bf16.mxu0 0
  %1648 = vmatpush1.bf16.msra.mxu0 0
  %1649 = vmatprep.subr.bf16.mxu0 0
  %1650 = vmatpush1.bf16.msra.mxu0 0
  %1651 = vmatprep.subr.bf16.mxu0 0
  %1652 = vmatpush1.bf16.msra.mxu0 0
  %1653 = vmatprep.subr.bf16.mxu0 0
  %1654 = vmatpush1.bf16.msra.mxu0 0
  %1655 = vmatprep.subr.bf16.mxu0 0
  %1656 = vmatpush1.bf16.msra.mxu0 0
  %1657 = vmatprep.subr.bf16.mxu0 0
  %1658 = vmatpush1.bf16.msra.mxu0 0
  %1659 = vmatprep.subr.bf16.mxu0 0
  %1660 = vmatpush1.bf16.msra.mxu0 0
  %1661 = vmatprep.subr.bf16.mxu0 0
  %1662 = vmatpush1.bf16.msra.mxu0 0
  %1663 = vmatprep.subr.bf16.mxu0 0
  %1664 = vmatpush1.bf16.msra.mxu0 0
  %1665 = vmatprep.mubr.bf16.mxu0 0
  %1666 = vmatmul.mubr.bf16.gmra.mrb[0].mxu0 %v1625
  %v1667 = vpop.f32.mrb[0].mxu0
  %v1668 = vadd.f32 0.0, %v1667
  %v1669 = vpop.f32.mrb[0].mxu0
  %v1670 = vpop.f32.mrb[0].mxu0
  %v1671 = vadd.f32 0.0, %v1670
  %v1672 = vpop.f32.mrb[0].mxu0
  %1673 = vmatprep.mubr.bf16.mxu0 0
  %1674 = vmatmul.mubr.bf16.gmra.mrb[0].mxu0 %v1628
  %v1675 = vpop.f32.mrb[0].mxu0
  %v1676 = vadd.f32 0.0, %v1675
  %v1677 = vpop.f32.mrb[0].mxu0
  %v1678 = vpop.f32.mrb[0].mxu0
  %v1679 = vpop.f32.mrb[0].mxu0
  %1680 = vdwg.mxu0
  %1681 = vrot.lane.b32.xlu0 %v1510, 112
  %v1682 = vpop.permute.xlu0 %1681
  %1683 = vrot.lane.b32.xlu0 %v1511, 112
  %v1684 = vpop.permute.xlu0 %1683
  %1685 = vrot.lane.b32.xlu0 %v1510, 80
  %v1686 = vpop.permute.xlu0 %1685
  %1687 = vrot.lane.b32.xlu0 %v1511, 80
  %v1688 = vpop.permute.xlu0 %1687
  %v1690 = vsel %vm655, %v1682, 0
  %v1693 = vsel %vm655, %v1684, 0
  %v1696 = vsel %vm655, %v1686, 0
  %v1699 = vsel %vm655, %v1688, 0
  %1701 = vmatprep.subr.bf16.mxu0 0
  %1702 = vmatpush1.bf16.xpose.msra.mxu0 %v1696
  %1703 = vmatprep.subr.bf16.mxu0 0
  %1704 = vmatpush1.bf16.xpose.msra.mxu0 %v1699
  %1705 = vmatprep.subr.bf16.mxu0 0
  %1706 = vmatpush1.bf16.xpose.msra.mxu0 0
  %1707 = vmatprep.subr.bf16.mxu0 0
  %1708 = vmatpush1.bf16.xpose.msra.mxu0 0
  %1709 = vmatprep.subr.bf16.mxu0 0
  %1710 = vmatpush1.bf16.xpose.msra.mxu0 0
  %1711 = vmatprep.subr.bf16.mxu0 0
  %1712 = vmatpush1.bf16.xpose.msra.mxu0 0
  %1713 = vmatprep.subr.bf16.mxu0 0
  %1714 = vmatpush1.bf16.xpose.msra.mxu0 0
  %1715 = vmatprep.subr.bf16.mxu0 0
  %1716 = vmatpush1.bf16.xpose.msra.mxu0 0
  %1717 = vmatprep.subr.bf16.mxu0 0
  %1718 = vmatpush1.bf16.xpose.msra.mxu0 0
  %1719 = vmatprep.subr.bf16.mxu0 0
  %1720 = vmatpush1.bf16.xpose.msra.mxu0 0
  %1721 = vmatprep.subr.bf16.mxu0 0
  %1722 = vmatpush1.bf16.xpose.msra.mxu0 0
  %1723 = vmatprep.subr.bf16.mxu0 0
  %1724 = vmatpush1.bf16.xpose.msra.mxu0 0
  %1725 = vmatprep.subr.bf16.mxu0 0
  %1726 = vmatpush1.bf16.xpose.msra.mxu0 0
  %1727 = vmatprep.subr.bf16.mxu0 0
  %1728 = vmatpush1.bf16.xpose.msra.mxu0 0
  %1729 = vmatprep.subr.bf16.mxu0 0
  %1730 = vmatpush1.bf16.xpose.msra.mxu0 0
  %1731 = vmatprep.subr.bf16.mxu0 0
  %1732 = vmatpush1.bf16.xpose.msra.mxu0 0
  %1733 = vmatprep.mubr.bf16.mxu0 0
  %1734 = vmatmul.mubr.bf16.gmra.mrb[0].mxu0 %v1690
  %v1735 = vpop.f32.mrb[0].mxu0
  %v1736 = vadd.f32 0.0, %v1735
  %v1737 = vpop.f32.mrb[0].mxu0
  %v1738 = vpop.f32.mrb[0].mxu0
  %v1739 = vadd.f32 0.0, %v1738
  %v1740 = vpop.f32.mrb[0].mxu0
  %1741 = vmatprep.mubr.bf16.mxu0 0
  %1742 = vmatmul.mubr.bf16.gmra.mrb[0].mxu0 %v1693
  %v1743 = vpop.f32.mrb[0].mxu0
  %v1744 = vadd.f32 0.0, %v1743
  %v1745 = vpop.f32.mrb[0].mxu0
  %v1746 = vpop.f32.mrb[0].mxu0
  %v1747 = vpop.f32.mrb[0].mxu0
  %1748 = vdwg.mxu0
  %v1749 = vmul.f32 %v1736, 0.25
  %v1750 = vmul.f32 %v1739, 0.25
  %v1751 = vmul.f32 %v1744, 0.25
  %v1752 = vadd.f32 %v1749, %v510
  %v1753 = vadd.f32 %v1750, %v511
  %v1754 = vadd.f32 %v1751, %v512
  %v1755 = vsel %vm722, %v1752, -inf
  %1756 = vmax.xlane.f32.xlu0 %v1755
  %v1757 = vpop.xlane.xlu0 %1756
  %v1758 = vsel %vm722, %v1753, -inf
  %1759 = vmax.xlane.f32.xlu0 %v1758
  %v1760 = vpop.xlane.xlu0 %1759
  %v1761 = vsel %vm729, %v1754, -inf
  %1762 = vmax.xlane.f32.xlu0 %v1761
  %v1763 = vpop.xlane.xlu0 %1762
  %v1764 = vsub.f32 %v1752, %v1757
  %v1765 = vsub.f32 %v1753, %v1760
  %v1766 = vsub.f32 %v1754, %v1763
  %v1767 = vmul.f32 %v1764, 1.442695
  %v1768 = vpow.pop %v1767
  %v1769 = vmul.f32 %v1765, 1.442695
  %v1770 = vpow.pop %v1769
  %v1771 = vmul.f32 %v1766, 1.442695
  %v1772 = vpow.pop %v1771
  %v1773 = vsel %vm722, %v1768, 0.0
  %1774 = vadd.xlane.f32.xlu0 %v1773
  %v1775 = vpop.xlane.xlu0 %1774
  %v1776 = vsel %vm722, %v1770, 0.0
  %1777 = vadd.xlane.f32.xlu0 %v1776
  %v1778 = vpop.xlane.xlu0 %1777
  %v1779 = vsel %vm729, %v1772, 0.0
  %1780 = vadd.xlane.f32.xlu0 %v1779
  %v1781 = vpop.xlane.xlu0 %1780
  %v1782 = vrcp.pop %v1775
  %v1783 = vrcp.pop %v1778
  %v1784 = vrcp.pop %v1781
  %v1785 = vmul.f32 %v1768, %v1782
  %v1786 = vmul.f32 %v1770, %v1783
  %v1787 = vmul.f32 %v1772, %v1784
  %v1788 = vpack.c.bf16 %v1786, %v1785
  %v1789 = vpack.c.bf16 %v1787, %v1787
  %1790 = vrot.lane.b32.xlu0 %v1510, 48
  %v1791 = vpop.permute.xlu0 %1790
  %1792 = vrot.lane.b32.xlu0 %v1511, 48
  %v1793 = vpop.permute.xlu0 %1792
  %v1796 = vsel %vm722, %v1788, 0
  %v1799 = vsel %vm722, %v1789, 0
  %v1802 = vsel %vm500, %v1793, 0
  %1804 = vmatprep.subr.bf16.mxu0 0
  %1805 = vmatpush1.bf16.msra.mxu0 %v1791
  %1806 = vmatprep.subr.bf16.mxu0 0
  %1807 = vmatpush1.bf16.msra.mxu0 %v1802
  %1808 = vmatprep.subr.bf16.mxu0 0
  %1809 = vmatpush1.bf16.msra.mxu0 0
  %1810 = vmatprep.subr.bf16.mxu0 0
  %1811 = vmatpush1.bf16.msra.mxu0 0
  %1812 = vmatprep.subr.bf16.mxu0 0
  %1813 = vmatpush1.bf16.msra.mxu0 0
  %1814 = vmatprep.subr.bf16.mxu0 0
  %1815 = vmatpush1.bf16.msra.mxu0 0
  %1816 = vmatprep.subr.bf16.mxu0 0
  %1817 = vmatpush1.bf16.msra.mxu0 0
  %1818 = vmatprep.subr.bf16.mxu0 0
  %1819 = vmatpush1.bf16.msra.mxu0 0
  %1820 = vmatprep.subr.bf16.mxu0 0
  %1821 = vmatpush1.bf16.msra.mxu0 0
  %1822 = vmatprep.subr.bf16.mxu0 0
  %1823 = vmatpush1.bf16.msra.mxu0 0
  %1824 = vmatprep.subr.bf16.mxu0 0
  %1825 = vmatpush1.bf16.msra.mxu0 0
  %1826 = vmatprep.subr.bf16.mxu0 0
  %1827 = vmatpush1.bf16.msra.mxu0 0
  %1828 = vmatprep.subr.bf16.mxu0 0
  %1829 = vmatpush1.bf16.msra.mxu0 0
  %1830 = vmatprep.subr.bf16.mxu0 0
  %1831 = vmatpush1.bf16.msra.mxu0 0
  %1832 = vmatprep.subr.bf16.mxu0 0
  %1833 = vmatpush1.bf16.msra.mxu0 0
  %1834 = vmatprep.subr.bf16.mxu0 0
  %1835 = vmatpush1.bf16.msra.mxu0 0
  %1836 = vmatprep.mubr.bf16.mxu0 0
  %1837 = vmatmul.mubr.bf16.gmra.mrb[0].mxu0 %v1796
  %v1838 = vpop.f32.mrb[0].mxu0
  %v1839 = vadd.f32 0.0, %v1838
  %v1840 = vpop.f32.mrb[0].mxu0
  %v1841 = vpop.f32.mrb[0].mxu0
  %v1842 = vadd.f32 0.0, %v1841
  %v1843 = vpop.f32.mrb[0].mxu0
  %1844 = vmatprep.mubr.bf16.mxu0 0
  %1845 = vmatmul.mubr.bf16.gmra.mrb[0].mxu0 %v1799
  %v1846 = vpop.f32.mrb[0].mxu0
  %v1847 = vadd.f32 0.0, %v1846
  %v1848 = vpop.f32.mrb[0].mxu0
  %v1849 = vpop.f32.mrb[0].mxu0
  %v1850 = vpop.f32.mrb[0].mxu0
  %1851 = vdwg.mxu0
  %1855 = vrot.lane.b32.xlu0 %v1839, 16
  %v1856 = vpop.permute.xlu0 %1855
  %1857 = vrot.lane.b32.xlu0 %v1842, 16
  %v1858 = vpop.permute.xlu0 %1857
  %1859 = vrot.lane.b32.xlu0 %v1847, 16
  %v1860 = vpop.permute.xlu0 %1859
  %v1864 = vsel %vm655, %v1668, %v1856
  %v1865 = vsel %vm655, %v1671, %v1858
  %v1866 = vsel %vm655, %v1676, %v1860
  %v1867 = vpack.c.bf16 %v1865, %v1864
  %v1868 = vpack.c.bf16 %v1866, %v1866
  %s1869 = scalar_lea.vmem %s6, 16
  %v1870 = vld [vmem:[%s1869] sm:$0xf]
  %v1871 = vld [vmem:[%s1869 + $0x4] sm:$0xf]
  %v1872 = vld [vmem:[%s1869 + $0x8] sm:$0xf]
  %v1873 = vld [vmem:[%s1869 + $0xc] sm:$0xf]
  %v1874 = vlaneseq
  %v1875 = vshrl.u32 %v1874, 7
  %v1876 = vsub.s32 3, %v1875
  %v1877 = vrot.slane %v1378, %v1876
  %v1882 = vunpack.c.l.b16 %v1870
  %v1883 = vunpack.c.l.b16 %v1871
  %v1884 = vunpack.c.l.b16 %v1872
  %v1885 = vunpack.c.l.b16 %v1873
  %v1886 = vpack.c.b16 %v1883, %v1882
  %v1887 = vpack.c.b16 %v1885, %v1884
  %v1891 = vsel %vm515, %v1867, 0
  %v1894 = vsel %vm515, %v1868, 0
  %1896 = vmatprep.subr.bf16.mxu0 0
  %1897 = vmatpush1.bf16.msra.mxu0 %v1886
  %1898 = vmatprep.subr.bf16.mxu0 0
  %1899 = vmatpush1.bf16.msra.mxu0 %v1887
  %1900 = vmatprep.subr.bf16.mxu0 0
  %1901 = vmatpush1.bf16.msra.mxu0 0
  %1902 = vmatprep.subr.bf16.mxu0 0
  %1903 = vmatpush1.bf16.msra.mxu0 0
  %1904 = vmatprep.subr.bf16.mxu0 0
  %1905 = vmatpush1.bf16.msra.mxu0 0
  %1906 = vmatprep.subr.bf16.mxu0 0
  %1907 = vmatpush1.bf16.msra.mxu0 0
  %1908 = vmatprep.subr.bf16.mxu0 0
  %1909 = vmatpush1.bf16.msra.mxu0 0
  %1910 = vmatprep.subr.bf16.mxu0 0
  %1911 = vmatpush1.bf16.msra.mxu0 0
  %1912 = vmatprep.subr.bf16.mxu0 0
  %1913 = vmatpush1.bf16.msra.mxu0 0
  %1914 = vmatprep.subr.bf16.mxu0 0
  %1915 = vmatpush1.bf16.msra.mxu0 0
  %1916 = vmatprep.subr.bf16.mxu0 0
  %1917 = vmatpush1.bf16.msra.mxu0 0
  %1918 = vmatprep.subr.bf16.mxu0 0
  %1919 = vmatpush1.bf16.msra.mxu0 0
  %1920 = vmatprep.subr.bf16.mxu0 0
  %1921 = vmatpush1.bf16.msra.mxu0 0
  %1922 = vmatprep.subr.bf16.mxu0 0
  %1923 = vmatpush1.bf16.msra.mxu0 0
  %1924 = vmatprep.subr.bf16.mxu0 0
  %1925 = vmatpush1.bf16.msra.mxu0 0
  %1926 = vmatprep.subr.bf16.mxu0 0
  %1927 = vmatpush1.bf16.msra.mxu0 0
  %1928 = vmatprep.mubr.bf16.mxu0 0
  %1929 = vmatmul.mubr.bf16.gmra.mrb[0].mxu0 %v1891
  %v1930 = vpop.f32.mrb[0].mxu0
  %v1931 = vadd.f32 %v1877, %v1930
  %v1932 = vpop.f32.mrb[0].mxu0
  %v1933 = vpop.f32.mrb[0].mxu0
  %v1934 = vadd.f32 %v1877, %v1933
  %v1935 = vpop.f32.mrb[0].mxu0
  %1936 = vmatprep.mubr.bf16.mxu0 0
  %1937 = vmatmul.mubr.bf16.gmra.mrb[0].mxu0 %v1894
  %v1938 = vpop.f32.mrb[0].mxu0
  %v1939 = vadd.f32 %v1877, %v1938
  %v1940 = vpop.f32.mrb[0].mxu0
  %v1941 = vpop.f32.mrb[0].mxu0
  %v1942 = vpop.f32.mrb[0].mxu0
  %1943 = vdwg.mxu0
  %v1944 = vlaneseq
  %v1945 = vshrl.u32 %v1944, 7
  %v1946 = vsub.s32 4, %v1945
  %v1947 = vrot.slane %v1378, %v1946
  %v1948 = vmul.f32 %v1947, %v1931
  %v1949 = vmul.f32 %v1947, %v1934
  %v1950 = vmul.f32 %v1947, %v1939
  %v1951 = vadd.f32 %v1374, %v1948
  %v1952 = vadd.f32 %v1375, %v1949
  %v1953 = vadd.f32 %v1376, %v1950
  %v1954 = vsel %vm515, %v1951, 0.0
  %1955 = vadd.xlane.f32.xlu0 %v1954
  %v1956 = vpop.xlane.xlu0 %1955
  %v1957 = vsel %vm515, %v1952, 0.0
  %1958 = vadd.xlane.f32.xlu0 %v1957
  %v1959 = vpop.xlane.xlu0 %1958
  %v1960 = vsel %vm522, %v1953, 0.0
  %1961 = vadd.xlane.f32.xlu0 %v1960
  %v1962 = vpop.xlane.xlu0 %1961
  %v1963 = vmul.f32 %v1956, %v526
  %v1964 = vmul.f32 %v1959, %v526
  %v1965 = vmul.f32 %v1962, %v526
  %v1966 = vsub.f32 %v1951, %v1963
  %v1967 = vsub.f32 %v1952, %v1964
  %v1968 = vsub.f32 %v1953, %v1965
  %v1969 = vmul.f32 %v1966, %v1966
  %v1970 = vmul.f32 %v1967, %v1967
  %v1971 = vmul.f32 %v1968, %v1968
  %v1972 = vsel %vm515, %v1969, 0.0
  %1973 = vadd.xlane.f32.xlu0 %v1972
  %v1974 = vpop.xlane.xlu0 %1973
  %v1975 = vsel %vm515, %v1970, 0.0
  %1976 = vadd.xlane.f32.xlu0 %v1975
  %v1977 = vpop.xlane.xlu0 %1976
  %v1978 = vsel %vm522, %v1971, 0.0
  %1979 = vadd.xlane.f32.xlu0 %v1978
  %v1980 = vpop.xlane.xlu0 %1979
  %v1981 = vmul.f32 %v1974, %v526
  %v1982 = vmul.f32 %v1977, %v526
  %v1983 = vmul.f32 %v1980, %v526
  %v1984 = vadd.f32 %v1981, 1e-06
  %v1985 = vadd.f32 %v1982, 1e-06
  %v1986 = vadd.f32 %v1983, 1e-06
  %v1987 = vrsqrt.pop %v1984
  %v1988 = vrsqrt.pop %v1985
  %v1989 = vrsqrt.pop %v1986
  %v1990 = vmul.f32 %v1966, %v1987
  %v1991 = vmul.f32 %v1967, %v1988
  %v1992 = vmul.f32 %v1968, %v1989
  %v1993 = vlaneseq
  %v1994 = vshrl.u32 %v1993, 7
  %v1995 = vsub.s32 5, %v1994
  %v1996 = vrot.slane %v1378, %v1995
  %v1997 = vmul.f32 %v1990, %v1996
  %v1998 = vmul.f32 %v1991, %v1996
  %v1999 = vmul.f32 %v1992, %v1996
  %v2000 = vlaneseq
  %v2001 = vshrl.u32 %v2000, 7
  %v2002 = vsub.s32 6, %v2001
  %v2003 = vrot.slane %v1378, %v2002
  %v2004 = vadd.f32 %v1997, %v2003
  %v2005 = vadd.f32 %v1998, %v2003
  %v2006 = vadd.f32 %v1999, %v2003
  %v2007 = vpack.c.bf16 %v2005, %v2004
  %v2008 = vpack.c.bf16 %v2006, %v2006
  %s2009 = scalar_lea.vmem %s7, 16
  %v2010 = vld [vmem:[%s2009] sm:$0xf]
  %v2011 = vld [vmem:[%s2009 + $0x4] sm:$0xf]
  %v2012 = vld [vmem:[%s2009 + $0x8] sm:$0xf]
  %v2013 = vld [vmem:[%s2009 + $0xc] sm:$0xf]
  %v2014 = vlaneseq
  %v2015 = vshrl.u32 %v2014, 7
  %v2016 = vsub.s32 7, %v2015
  %v2017 = vrot.slane %v1378, %v2016
  %v2022 = vunpack.c.l.b16 %v2010
  %v2023 = vunpack.c.l.b16 %v2011
  %v2024 = vunpack.c.l.b16 %v2012
  %v2025 = vunpack.c.l.b16 %v2013
  %v2026 = vpack.c.b16 %v2023, %v2022
  %v2027 = vpack.c.b16 %v2025, %v2024
  %v2031 = vsel %vm515, %v2007, 0
  %v2034 = vsel %vm515, %v2008, 0
  %2036 = vmatprep.subr.bf16.mxu0 0
  %2037 = vmatpush1.bf16.msra.mxu0 %v2026
  %2038 = vmatprep.subr.bf16.mxu0 0
  %2039 = vmatpush1.bf16.msra.mxu0 %v2027
  %2040 = vmatprep.subr.bf16.mxu0 0
  %2041 = vmatpush1.bf16.msra.mxu0 0
  %2042 = vmatprep.subr.bf16.mxu0 0
  %2043 = vmatpush1.bf16.msra.mxu0 0
  %2044 = vmatprep.subr.bf16.mxu0 0
  %2045 = vmatpush1.bf16.msra.mxu0 0
  %2046 = vmatprep.subr.bf16.mxu0 0
  %2047 = vmatpush1.bf16.msra.mxu0 0
  %2048 = vmatprep.subr.bf16.mxu0 0
  %2049 = vmatpush1.bf16.msra.mxu0 0
  %2050 = vmatprep.subr.bf16.mxu0 0
  %2051 = vmatpush1.bf16.msra.mxu0 0
  %2052 = vmatprep.subr.bf16.mxu0 0
  %2053 = vmatpush1.bf16.msra.mxu0 0
  %2054 = vmatprep.subr.bf16.mxu0 0
  %2055 = vmatpush1.bf16.msra.mxu0 0
  %2056 = vmatprep.subr.bf16.mxu0 0
  %2057 = vmatpush1.bf16.msra.mxu0 0
  %2058 = vmatprep.subr.bf16.mxu0 0
  %2059 = vmatpush1.bf16.msra.mxu0 0
  %2060 = vmatprep.subr.bf16.mxu0 0
  %2061 = vmatpush1.bf16.msra.mxu0 0
  %2062 = vmatprep.subr.bf16.mxu0 0
  %2063 = vmatpush1.bf16.msra.mxu0 0
  %2064 = vmatprep.subr.bf16.mxu0 0
  %2065 = vmatpush1.bf16.msra.mxu0 0
  %2066 = vmatprep.subr.bf16.mxu0 0
  %2067 = vmatpush1.bf16.msra.mxu0 0
  %2068 = vmatprep.mubr.bf16.mxu0 0
  %2069 = vmatmul.mubr.bf16.gmra.mrb[0].mxu0 %v2031
  %v2070 = vpop.f32.mrb[0].mxu0
  %v2071 = vadd.f32 %v2017, %v2070
  %v2072 = vpop.f32.mrb[0].mxu0
  %v2073 = vpop.f32.mrb[0].mxu0
  %v2074 = vadd.f32 %v2017, %v2073
  %v2075 = vpop.f32.mrb[0].mxu0
  %2076 = vmatprep.mubr.bf16.mxu0 0
  %2077 = vmatmul.mubr.bf16.gmra.mrb[0].mxu0 %v2034
  %v2078 = vpop.f32.mrb[0].mxu0
  %v2079 = vadd.f32 %v2017, %v2078
  %v2080 = vpop.f32.mrb[0].mxu0
  %v2081 = vpop.f32.mrb[0].mxu0
  %v2082 = vpop.f32.mrb[0].mxu0
  %2083 = vdwg.mxu0
  %v2084 = vmul.f32 %v2071, %v2071
  %v2085 = vmul.f32 %v2074, %v2074
  %v2086 = vmul.f32 %v2079, %v2079
  %v2087 = vmul.f32 %v2071, %v2084
  %v2088 = vmul.f32 %v2074, %v2085
  %v2089 = vmul.f32 %v2079, %v2086
  %v2090 = vmul.f32 %v2087, 0.044715
  %v2091 = vmul.f32 %v2088, 0.044715
  %v2092 = vmul.f32 %v2089, 0.044715
  %v2093 = vadd.f32 %v2071, %v2090
  %v2094 = vadd.f32 %v2074, %v2091
  %v2095 = vadd.f32 %v2079, %v2092
  %v2096 = vmul.f32 %v2093, 0.7978846
  %v2097 = vmul.f32 %v2094, 0.7978846
  %v2098 = vmul.f32 %v2095, 0.7978846
  %v2099 = vtanh.pop %v2096
  %v2100 = vtanh.pop %v2097
  %v2101 = vtanh.pop %v2098
  %v2102 = vadd.f32 %v2099, 1.0
  %v2103 = vadd.f32 %v2100, 1.0
  %v2104 = vadd.f32 %v2101, 1.0
  %v2105 = vmul.f32 %v2102, 0.5
  %v2106 = vmul.f32 %v2103, 0.5
  %v2107 = vmul.f32 %v2104, 0.5
  %v2108 = vmul.f32 %v2071, %v2105
  %v2109 = vmul.f32 %v2074, %v2106
  %v2110 = vmul.f32 %v2079, %v2107
  %v2111 = vpack.c.bf16 %v2109, %v2108
  %v2112 = vpack.c.bf16 %v2110, %v2110
  %s2113 = scalar_lea.vmem %s8, 64
  %v2114 = vld [vmem:[%s2113] sm:$0xf]
  %v2115 = vld [vmem:[%s2113 + $0x4] sm:$0xf]
  %v2116 = vld [vmem:[%s2113 + $0x8] sm:$0xf]
  %v2117 = vld [vmem:[%s2113 + $0xc] sm:$0xf]
  %v2118 = vld [vmem:[%s2113 + $0x10] sm:$0xf]
  %v2119 = vld [vmem:[%s2113 + $0x14] sm:$0xf]
  %v2120 = vld [vmem:[%s2113 + $0x18] sm:$0xf]
  %v2121 = vld [vmem:[%s2113 + $0x1c] sm:$0xf]
  %v2122 = vld [vmem:[%s2113 + $0x20] sm:$0xf]
  %v2123 = vld [vmem:[%s2113 + $0x24] sm:$0xf]
  %v2124 = vld [vmem:[%s2113 + $0x28] sm:$0xf]
  %v2125 = vld [vmem:[%s2113 + $0x2c] sm:$0xf]
  %v2126 = vld [vmem:[%s2113 + $0x30] sm:$0xf]
  %v2127 = vld [vmem:[%s2113 + $0x34] sm:$0xf]
  %v2128 = vld [vmem:[%s2113 + $0x38] sm:$0xf]
  %v2129 = vld [vmem:[%s2113 + $0x3c] sm:$0xf]
  %v2130 = vlaneseq
  %v2131 = vshrl.u32 %v2130, 7
  %v2132 = vsub.s32 0, %v2131
  %v2133 = vrot.slane %v1379, %v2132
  %v2150 = vunpack.c.l.b16 %v2114
  %v2151 = vunpack.c.l.b16 %v2115
  %v2152 = vunpack.c.l.b16 %v2116
  %v2153 = vunpack.c.l.b16 %v2117
  %v2154 = vunpack.c.l.b16 %v2118
  %v2155 = vunpack.c.l.b16 %v2119
  %v2156 = vunpack.c.l.b16 %v2120
  %v2157 = vunpack.c.l.b16 %v2121
  %v2158 = vunpack.c.l.b16 %v2122
  %v2159 = vunpack.c.l.b16 %v2123
  %v2160 = vunpack.c.l.b16 %v2124
  %v2161 = vunpack.c.l.b16 %v2125
  %v2162 = vunpack.c.l.b16 %v2126
  %v2163 = vunpack.c.l.b16 %v2127
  %v2164 = vunpack.c.l.b16 %v2128
  %v2165 = vunpack.c.l.b16 %v2129
  %v2166 = vpack.c.b16 %v2151, %v2150
  %v2167 = vpack.c.b16 %v2153, %v2152
  %v2168 = vpack.c.b16 %v2155, %v2154
  %v2169 = vpack.c.b16 %v2157, %v2156
  %v2170 = vpack.c.b16 %v2159, %v2158
  %v2171 = vpack.c.b16 %v2161, %v2160
  %v2172 = vpack.c.b16 %v2163, %v2162
  %v2173 = vpack.c.b16 %v2165, %v2164
  %2182 = vmatprep.subr.bf16.mxu0 0
  %2183 = vmatpush1.bf16.msra.mxu0 %v2166
  %2184 = vmatprep.subr.bf16.mxu0 0
  %2185 = vmatpush1.bf16.msra.mxu0 %v2167
  %2186 = vmatprep.subr.bf16.mxu0 0
  %2187 = vmatpush1.bf16.msra.mxu0 %v2168
  %2188 = vmatprep.subr.bf16.mxu0 0
  %2189 = vmatpush1.bf16.msra.mxu0 %v2169
  %2190 = vmatprep.subr.bf16.mxu0 0
  %2191 = vmatpush1.bf16.msra.mxu0 %v2170
  %2192 = vmatprep.subr.bf16.mxu0 0
  %2193 = vmatpush1.bf16.msra.mxu0 %v2171
  %2194 = vmatprep.subr.bf16.mxu0 0
  %2195 = vmatpush1.bf16.msra.mxu0 %v2172
  %2196 = vmatprep.subr.bf16.mxu0 0
  %2197 = vmatpush1.bf16.msra.mxu0 %v2173
  %2198 = vmatprep.subr.bf16.mxu0 0
  %2199 = vmatpush1.bf16.msra.mxu0 0
  %2200 = vmatprep.subr.bf16.mxu0 0
  %2201 = vmatpush1.bf16.msra.mxu0 0
  %2202 = vmatprep.subr.bf16.mxu0 0
  %2203 = vmatpush1.bf16.msra.mxu0 0
  %2204 = vmatprep.subr.bf16.mxu0 0
  %2205 = vmatpush1.bf16.msra.mxu0 0
  %2206 = vmatprep.subr.bf16.mxu0 0
  %2207 = vmatpush1.bf16.msra.mxu0 0
  %2208 = vmatprep.subr.bf16.mxu0 0
  %2209 = vmatpush1.bf16.msra.mxu0 0
  %2210 = vmatprep.subr.bf16.mxu0 0
  %2211 = vmatpush1.bf16.msra.mxu0 0
  %2212 = vmatprep.subr.bf16.mxu0 0
  %2213 = vmatpush1.bf16.msra.mxu0 0
  %2214 = vmatprep.mubr.bf16.mxu0 0
  %2215 = vmatmul.mubr.bf16.gmra.mrb[0].mxu0 %v2111
  %v2216 = vpop.f32.mrb[0].mxu0
  %v2217 = vadd.f32 %v2133, %v2216
  %v2218 = vpop.f32.mrb[0].mxu0
  %v2219 = vpop.f32.mrb[0].mxu0
  %v2220 = vadd.f32 %v2133, %v2219
  %v2221 = vpop.f32.mrb[0].mxu0
  %2222 = vmatprep.mubr.bf16.mxu0 0
  %2223 = vmatmul.mubr.bf16.gmra.mrb[0].mxu0 %v2112
  %v2224 = vpop.f32.mrb[0].mxu0
  %v2225 = vadd.f32 %v2133, %v2224
  %v2226 = vpop.f32.mrb[0].mxu0
  %v2227 = vpop.f32.mrb[0].mxu0
  %v2228 = vpop.f32.mrb[0].mxu0
  %2229 = vdwg.mxu0
  %v2230 = vlaneseq
  %v2231 = vshrl.u32 %v2230, 7
  %v2232 = vsub.s32 1, %v2231
  %v2233 = vrot.slane %v1379, %v2232
  %v2234 = vmul.f32 %v2233, %v2217
  %v2235 = vmul.f32 %v2233, %v2220
  %v2236 = vmul.f32 %v2233, %v2225
  %v2237 = vadd.f32 %v1951, %v2234
  %v2238 = vadd.f32 %v1952, %v2235
  %v2239 = vadd.f32 %v1953, %v2236
  %s2240 = scalar_lea.vmem %s4, 32
  %v2241 = vld [vmem:[%s2240] sm:$0xff]
  %v2242 = vld [vmem:[%s2240 + $0x8] sm:$0x3]
  %v2243 = vsel %vm515, %v2237, 0.0
  %2244 = vadd.xlane.f32.xlu0 %v2243
  %v2245 = vpop.xlane.xlu0 %2244
  %v2246 = vsel %vm515, %v2238, 0.0
  %2247 = vadd.xlane.f32.xlu0 %v2246
  %v2248 = vpop.xlane.xlu0 %2247
  %v2249 = vsel %vm522, %v2239, 0.0
  %2250 = vadd.xlane.f32.xlu0 %v2249
  %v2251 = vpop.xlane.xlu0 %2250
  %v2252 = vmul.f32 %v2245, %v526
  %v2253 = vmul.f32 %v2248, %v526
  %v2254 = vmul.f32 %v2251, %v526
  %v2255 = vsub.f32 %v2237, %v2252
  %v2256 = vsub.f32 %v2238, %v2253
  %v2257 = vsub.f32 %v2239, %v2254
  %v2258 = vmul.f32 %v2255, %v2255
  %v2259 = vmul.f32 %v2256, %v2256
  %v2260 = vmul.f32 %v2257, %v2257
  %v2261 = vsel %vm515, %v2258, 0.0
  %2262 = vadd.xlane.f32.xlu0 %v2261
  %v2263 = vpop.xlane.xlu0 %2262
  %v2264 = vsel %vm515, %v2259, 0.0
  %2265 = vadd.xlane.f32.xlu0 %v2264
  %v2266 = vpop.xlane.xlu0 %2265
  %v2267 = vsel %vm522, %v2260, 0.0
  %2268 = vadd.xlane.f32.xlu0 %v2267
  %v2269 = vpop.xlane.xlu0 %2268
  %v2270 = vmul.f32 %v2263, %v526
  %v2271 = vmul.f32 %v2266, %v526
  %v2272 = vmul.f32 %v2269, %v526
  %v2273 = vadd.f32 %v2270, 1e-06
  %v2274 = vadd.f32 %v2271, 1e-06
  %v2275 = vadd.f32 %v2272, 1e-06
  %v2276 = vrsqrt.pop %v2273
  %v2277 = vrsqrt.pop %v2274
  %v2278 = vrsqrt.pop %v2275
  %v2279 = vmul.f32 %v2255, %v2276
  %v2280 = vmul.f32 %v2256, %v2277
  %v2281 = vmul.f32 %v2257, %v2278
  %v2282 = vlaneseq
  %v2283 = vshrl.u32 %v2282, 7
  %v2284 = vsub.s32 0, %v2283
  %v2285 = vrot.slane %v2241, %v2284
  %v2286 = vmul.f32 %v2279, %v2285
  %v2287 = vmul.f32 %v2280, %v2285
  %v2288 = vmul.f32 %v2281, %v2285
  %v2289 = vlaneseq
  %v2290 = vshrl.u32 %v2289, 7
  %v2291 = vsub.s32 1, %v2290
  %v2292 = vrot.slane %v2241, %v2291
  %v2293 = vadd.f32 %v2286, %v2292
  %v2294 = vadd.f32 %v2287, %v2292
  %v2295 = vadd.f32 %v2288, %v2292
  %v2296 = vpack.c.bf16 %v2294, %v2293
  %v2297 = vpack.c.bf16 %v2295, %v2295
  %s2298 = scalar_lea.vmem %s5, 32
  %v2299 = vld [vmem:[%s2298] sm:$0xf]
  %v2300 = vld [vmem:[%s2298 + $0x4] sm:$0xf]
  %v2301 = vld [vmem:[%s2298 + $0x8] sm:$0xf]
  %v2302 = vld [vmem:[%s2298 + $0xc] sm:$0xf]
  %v2303 = vlaneseq
  %v2304 = vshrl.u32 %v2303, 7
  %v2305 = vsub.s32 2, %v2304
  %v2306 = vrot.slane %v2241, %v2305
  %v2311 = vunpack.c.l.b16 %v2299
  %v2312 = vunpack.c.l.b16 %v2300
  %v2313 = vunpack.c.l.b16 %v2301
  %v2314 = vunpack.c.l.b16 %v2302
  %v2315 = vpack.c.b16 %v2312, %v2311
  %v2316 = vpack.c.b16 %v2314, %v2313
  %v2320 = vsel %vm515, %v2296, 0
  %v2323 = vsel %vm515, %v2297, 0
  %2325 = vmatprep.subr.bf16.mxu0 0
  %2326 = vmatpush1.bf16.msra.mxu0 %v2315
  %2327 = vmatprep.subr.bf16.mxu0 0
  %2328 = vmatpush1.bf16.msra.mxu0 %v2316
  %2329 = vmatprep.subr.bf16.mxu0 0
  %2330 = vmatpush1.bf16.msra.mxu0 0
  %2331 = vmatprep.subr.bf16.mxu0 0
  %2332 = vmatpush1.bf16.msra.mxu0 0
  %2333 = vmatprep.subr.bf16.mxu0 0
  %2334 = vmatpush1.bf16.msra.mxu0 0
  %2335 = vmatprep.subr.bf16.mxu0 0
  %2336 = vmatpush1.bf16.msra.mxu0 0
  %2337 = vmatprep.subr.bf16.mxu0 0
  %2338 = vmatpush1.bf16.msra.mxu0 0
  %2339 = vmatprep.subr.bf16.mxu0 0
  %2340 = vmatpush1.bf16.msra.mxu0 0
  %2341 = vmatprep.subr.bf16.mxu0 0
  %2342 = vmatpush1.bf16.msra.mxu0 0
  %2343 = vmatprep.subr.bf16.mxu0 0
  %2344 = vmatpush1.bf16.msra.mxu0 0
  %2345 = vmatprep.subr.bf16.mxu0 0
  %2346 = vmatpush1.bf16.msra.mxu0 0
  %2347 = vmatprep.subr.bf16.mxu0 0
  %2348 = vmatpush1.bf16.msra.mxu0 0
  %2349 = vmatprep.subr.bf16.mxu0 0
  %2350 = vmatpush1.bf16.msra.mxu0 0
  %2351 = vmatprep.subr.bf16.mxu0 0
  %2352 = vmatpush1.bf16.msra.mxu0 0
  %2353 = vmatprep.subr.bf16.mxu0 0
  %2354 = vmatpush1.bf16.msra.mxu0 0
  %2355 = vmatprep.subr.bf16.mxu0 0
  %2356 = vmatpush1.bf16.msra.mxu0 0
  %2357 = vmatprep.mubr.bf16.mxu0 0
  %2358 = vmatmul.mubr.bf16.gmra.mrb[0].mxu0 %v2320
  %v2359 = vpop.f32.mrb[0].mxu0
  %v2360 = vadd.f32 %v2306, %v2359
  %v2361 = vpop.f32.mrb[0].mxu0
  %v2362 = vpop.f32.mrb[0].mxu0
  %v2363 = vadd.f32 %v2306, %v2362
  %v2364 = vpop.f32.mrb[0].mxu0
  %2365 = vmatprep.mubr.bf16.mxu0 0
  %2366 = vmatmul.mubr.bf16.gmra.mrb[0].mxu0 %v2323
  %v2367 = vpop.f32.mrb[0].mxu0
  %v2368 = vadd.f32 %v2306, %v2367
  %v2369 = vpop.f32.mrb[0].mxu0
  %v2370 = vpop.f32.mrb[0].mxu0
  %v2371 = vpop.f32.mrb[0].mxu0
  %2372 = vdwg.mxu0
  %v2373 = vpack.c.bf16 %v2363, %v2360
  %v2374 = vpack.c.bf16 %v2368, %v2368
  %2377 = vrot.lane.b32.xlu0 %v2373, 96
  %v2378 = vpop.permute.xlu0 %2377
  %2379 = vrot.lane.b32.xlu0 %v2374, 96
  %v2380 = vpop.permute.xlu0 %2379
  %v2382 = vsel %vm655, %v2373, 0
  %v2385 = vsel %vm655, %v2374, 0
  %v2388 = vsel %vm655, %v2378, 0
  %v2391 = vsel %vm655, %v2380, 0
  %2393 = vmatprep.subr.bf16.mxu0 0
  %2394 = vmatpush1.bf16.xpose.msra.mxu0 %v2388
  %2395 = vmatprep.subr.bf16.mxu0 0
  %2396 = vmatpush1.bf16.xpose.msra.mxu0 %v2391
  %2397 = vmatprep.subr.bf16.mxu0 0
  %2398 = vmatpush1.bf16.xpose.msra.mxu0 0
  %2399 = vmatprep.subr.bf16.mxu0 0
  %2400 = vmatpush1.bf16.xpose.msra.mxu0 0
  %2401 = vmatprep.subr.bf16.mxu0 0
  %2402 = vmatpush1.bf16.xpose.msra.mxu0 0
  %2403 = vmatprep.subr.bf16.mxu0 0
  %2404 = vmatpush1.bf16.xpose.msra.mxu0 0
  %2405 = vmatprep.subr.bf16.mxu0 0
  %2406 = vmatpush1.bf16.xpose.msra.mxu0 0
  %2407 = vmatprep.subr.bf16.mxu0 0
  %2408 = vmatpush1.bf16.xpose.msra.mxu0 0
  %2409 = vmatprep.subr.bf16.mxu0 0
  %2410 = vmatpush1.bf16.xpose.msra.mxu0 0
  %2411 = vmatprep.subr.bf16.mxu0 0
  %2412 = vmatpush1.bf16.xpose.msra.mxu0 0
  %2413 = vmatprep.subr.bf16.mxu0 0
  %2414 = vmatpush1.bf16.xpose.msra.mxu0 0
  %2415 = vmatprep.subr.bf16.mxu0 0
  %2416 = vmatpush1.bf16.xpose.msra.mxu0 0
  %2417 = vmatprep.subr.bf16.mxu0 0
  %2418 = vmatpush1.bf16.xpose.msra.mxu0 0
  %2419 = vmatprep.subr.bf16.mxu0 0
  %2420 = vmatpush1.bf16.xpose.msra.mxu0 0
  %2421 = vmatprep.subr.bf16.mxu0 0
  %2422 = vmatpush1.bf16.xpose.msra.mxu0 0
  %2423 = vmatprep.subr.bf16.mxu0 0
  %2424 = vmatpush1.bf16.xpose.msra.mxu0 0
  %2425 = vmatprep.mubr.bf16.mxu0 0
  %2426 = vmatmul.mubr.bf16.gmra.mrb[0].mxu0 %v2382
  %v2427 = vpop.f32.mrb[0].mxu0
  %v2428 = vadd.f32 0.0, %v2427
  %v2429 = vpop.f32.mrb[0].mxu0
  %v2430 = vpop.f32.mrb[0].mxu0
  %v2431 = vadd.f32 0.0, %v2430
  %v2432 = vpop.f32.mrb[0].mxu0
  %2433 = vmatprep.mubr.bf16.mxu0 0
  %2434 = vmatmul.mubr.bf16.gmra.mrb[0].mxu0 %v2385
  %v2435 = vpop.f32.mrb[0].mxu0
  %v2436 = vadd.f32 0.0, %v2435
  %v2437 = vpop.f32.mrb[0].mxu0
  %v2438 = vpop.f32.mrb[0].mxu0
  %v2439 = vpop.f32.mrb[0].mxu0
  %2440 = vdwg.mxu0
  %v2441 = vmul.f32 %v2428, 0.25
  %v2442 = vmul.f32 %v2431, 0.25
  %v2443 = vmul.f32 %v2436, 0.25
  %v2444 = vadd.f32 %v2441, %v510
  %v2445 = vadd.f32 %v2442, %v511
  %v2446 = vadd.f32 %v2443, %v512
  %v2447 = vsel %vm722, %v2444, -inf
  %2448 = vmax.xlane.f32.xlu0 %v2447
  %v2449 = vpop.xlane.xlu0 %2448
  %v2450 = vsel %vm722, %v2445, -inf
  %2451 = vmax.xlane.f32.xlu0 %v2450
  %v2452 = vpop.xlane.xlu0 %2451
  %v2453 = vsel %vm729, %v2446, -inf
  %2454 = vmax.xlane.f32.xlu0 %v2453
  %v2455 = vpop.xlane.xlu0 %2454
  %v2456 = vsub.f32 %v2444, %v2449
  %v2457 = vsub.f32 %v2445, %v2452
  %v2458 = vsub.f32 %v2446, %v2455
  %v2459 = vmul.f32 %v2456, 1.442695
  %v2460 = vpow.pop %v2459
  %v2461 = vmul.f32 %v2457, 1.442695
  %v2462 = vpow.pop %v2461
  %v2463 = vmul.f32 %v2458, 1.442695
  %v2464 = vpow.pop %v2463
  %v2465 = vsel %vm722, %v2460, 0.0
  %2466 = vadd.xlane.f32.xlu0 %v2465
  %v2467 = vpop.xlane.xlu0 %2466
  %v2468 = vsel %vm722, %v2462, 0.0
  %2469 = vadd.xlane.f32.xlu0 %v2468
  %v2470 = vpop.xlane.xlu0 %2469
  %v2471 = vsel %vm729, %v2464, 0.0
  %2472 = vadd.xlane.f32.xlu0 %v2471
  %v2473 = vpop.xlane.xlu0 %2472
  %v2474 = vrcp.pop %v2467
  %v2475 = vrcp.pop %v2470
  %v2476 = vrcp.pop %v2473
  %v2477 = vmul.f32 %v2460, %v2474
  %v2478 = vmul.f32 %v2462, %v2475
  %v2479 = vmul.f32 %v2464, %v2476
  %v2480 = vpack.c.bf16 %v2478, %v2477
  %v2481 = vpack.c.bf16 %v2479, %v2479
  %2482 = vrot.lane.b32.xlu0 %v2373, 64
  %v2483 = vpop.permute.xlu0 %2482
  %2484 = vrot.lane.b32.xlu0 %v2374, 64
  %v2485 = vpop.permute.xlu0 %2484
  %v2488 = vsel %vm722, %v2480, 0
  %v2491 = vsel %vm722, %v2481, 0
  %v2494 = vsel %vm500, %v2485, 0
  %2496 = vmatprep.subr.bf16.mxu0 0
  %2497 = vmatpush1.bf16.msra.mxu0 %v2483
  %2498 = vmatprep.subr.bf16.mxu0 0
  %2499 = vmatpush1.bf16.msra.mxu0 %v2494
  %2500 = vmatprep.subr.bf16.mxu0 0
  %2501 = vmatpush1.bf16.msra.mxu0 0
  %2502 = vmatprep.subr.bf16.mxu0 0
  %2503 = vmatpush1.bf16.msra.mxu0 0
  %2504 = vmatprep.subr.bf16.mxu0 0
  %2505 = vmatpush1.bf16.msra.mxu0 0
  %2506 = vmatprep.subr.bf16.mxu0 0
  %2507 = vmatpush1.bf16.msra.mxu0 0
  %2508 = vmatprep.subr.bf16.mxu0 0
  %2509 = vmatpush1.bf16.msra.mxu0 0
  %2510 = vmatprep.subr.bf16.mxu0 0
  %2511 = vmatpush1.bf16.msra.mxu0 0
  %2512 = vmatprep.subr.bf16.mxu0 0
  %2513 = vmatpush1.bf16.msra.mxu0 0
  %2514 = vmatprep.subr.bf16.mxu0 0
  %2515 = vmatpush1.bf16.msra.mxu0 0
  %2516 = vmatprep.subr.bf16.mxu0 0
  %2517 = vmatpush1.bf16.msra.mxu0 0
  %2518 = vmatprep.subr.bf16.mxu0 0
  %2519 = vmatpush1.bf16.msra.mxu0 0
  %2520 = vmatprep.subr.bf16.mxu0 0
  %2521 = vmatpush1.bf16.msra.mxu0 0
  %2522 = vmatprep.subr.bf16.mxu0 0
  %2523 = vmatpush1.bf16.msra.mxu0 0
  %2524 = vmatprep.subr.bf16.mxu0 0
  %2525 = vmatpush1.bf16.msra.mxu0 0
  %2526 = vmatprep.subr.bf16.mxu0 0
  %2527 = vmatpush1.bf16.msra.mxu0 0
  %2528 = vmatprep.mubr.bf16.mxu0 0
  %2529 = vmatmul.mubr.bf16.gmra.mrb[0].mxu0 %v2488
  %v2530 = vpop.f32.mrb[0].mxu0
  %v2531 = vadd.f32 0.0, %v2530
  %v2532 = vpop.f32.mrb[0].mxu0
  %v2533 = vpop.f32.mrb[0].mxu0
  %v2534 = vadd.f32 0.0, %v2533
  %v2535 = vpop.f32.mrb[0].mxu0
  %2536 = vmatprep.mubr.bf16.mxu0 0
  %2537 = vmatmul.mubr.bf16.gmra.mrb[0].mxu0 %v2491
  %v2538 = vpop.f32.mrb[0].mxu0
  %v2539 = vadd.f32 0.0, %v2538
  %v2540 = vpop.f32.mrb[0].mxu0
  %v2541 = vpop.f32.mrb[0].mxu0
  %v2542 = vpop.f32.mrb[0].mxu0
  %2543 = vdwg.mxu0
  %2544 = vrot.lane.b32.xlu0 %v2373, 112
  %v2545 = vpop.permute.xlu0 %2544
  %2546 = vrot.lane.b32.xlu0 %v2374, 112
  %v2547 = vpop.permute.xlu0 %2546
  %2548 = vrot.lane.b32.xlu0 %v2373, 80
  %v2549 = vpop.permute.xlu0 %2548
  %2550 = vrot.lane.b32.xlu0 %v2374, 80
  %v2551 = vpop.permute.xlu0 %2550
  %v2553 = vsel %vm655, %v2545, 0
  %v2556 = vsel %vm655, %v2547, 0
  %v2559 = vsel %vm655, %v2549, 0
  %v2562 = vsel %vm655, %v2551, 0
  %2564 = vmatprep.subr.bf16.mxu0 0
  %2565 = vmatpush1.bf16.xpose.msra.mxu0 %v2559
  %2566 = vmatprep.subr.bf16.mxu0 0
  %2567 = vmatpush1.bf16.xpose.msra.mxu0 %v2562
  %2568 = vmatprep.subr.bf16.mxu0 0
  %2569 = vmatpush1.bf16.xpose.msra.mxu0 0
  %2570 = vmatprep.subr.bf16.mxu0 0
  %2571 = vmatpush1.bf16.xpose.msra.mxu0 0
  %2572 = vmatprep.subr.bf16.mxu0 0
  %2573 = vmatpush1.bf16.xpose.msra.mxu0 0
  %2574 = vmatprep.subr.bf16.mxu0 0
  %2575 = vmatpush1.bf16.xpose.msra.mxu0 0
  %2576 = vmatprep.subr.bf16.mxu0 0
  %2577 = vmatpush1.bf16.xpose.msra.mxu0 0
  %2578 = vmatprep.subr.bf16.mxu0 0
  %2579 = vmatpush1.bf16.xpose.msra.mxu0 0
  %2580 = vmatprep.subr.bf16.mxu0 0
  %2581 = vmatpush1.bf16.xpose.msra.mxu0 0
  %2582 = vmatprep.subr.bf16.mxu0 0
  %2583 = vmatpush1.bf16.xpose.msra.mxu0 0
  %2584 = vmatprep.subr.bf16.mxu0 0
  %2585 = vmatpush1.bf16.xpose.msra.mxu0 0
  %2586 = vmatprep.subr.bf16.mxu0 0
  %2587 = vmatpush1.bf16.xpose.msra.mxu0 0
  %2588 = vmatprep.subr.bf16.mxu0 0
  %2589 = vmatpush1.bf16.xpose.msra.mxu0 0
  %2590 = vmatprep.subr.bf16.mxu0 0
  %2591 = vmatpush1.bf16.xpose.msra.mxu0 0
  %2592 = vmatprep.subr.bf16.mxu0 0
  %2593 = vmatpush1.bf16.xpose.msra.mxu0 0
  %2594 = vmatprep.subr.bf16.mxu0 0
  %2595 = vmatpush1.bf16.xpose.msra.mxu0 0
  %2596 = vmatprep.mubr.bf16.mxu0 0
  %2597 = vmatmul.mubr.bf16.gmra.mrb[0].mxu0 %v2553
  %v2598 = vpop.f32.mrb[0].mxu0
  %v2599 = vadd.f32 0.0, %v2598
  %v2600 = vpop.f32.mrb[0].mxu0
  %v2601 = vpop.f32.mrb[0].mxu0
  %v2602 = vadd.f32 0.0, %v2601
  %v2603 = vpop.f32.mrb[0].mxu0
  %2604 = vmatprep.mubr.bf16.mxu0 0
  %2605 = vmatmul.mubr.bf16.gmra.mrb[0].mxu0 %v2556
  %v2606 = vpop.f32.mrb[0].mxu0
  %v2607 = vadd.f32 0.0, %v2606
  %v2608 = vpop.f32.mrb[0].mxu0
  %v2609 = vpop.f32.mrb[0].mxu0
  %v2610 = vpop.f32.mrb[0].mxu0
  %2611 = vdwg.mxu0
  %v2612 = vmul.f32 %v2599, 0.25
  %v2613 = vmul.f32 %v2602, 0.25
  %v2614 = vmul.f32 %v2607, 0.25
  %v2615 = vadd.f32 %v2612, %v510
  %v2616 = vadd.f32 %v2613, %v511
  %v2617 = vadd.f32 %v2614, %v512
  %v2618 = vsel %vm722, %v2615, -inf
  %2619 = vmax.xlane.f32.xlu0 %v2618
  %v2620 = vpop.xlane.xlu0 %2619
  %v2621 = vsel %vm722, %v2616, -inf
  %2622 = vmax.xlane.f32.xlu0 %v2621
  %v2623 = vpop.xlane.xlu0 %2622
  %v2624 = vsel %vm729, %v2617, -inf
  %2625 = vmax.xlane.f32.xlu0 %v2624
  %v2626 = vpop.xlane.xlu0 %2625
  %v2627 = vsub.f32 %v2615, %v2620
  %v2628 = vsub.f32 %v2616, %v2623
  %v2629 = vsub.f32 %v2617, %v2626
  %v2630 = vmul.f32 %v2627, 1.442695
  %v2631 = vpow.pop %v2630
  %v2632 = vmul.f32 %v2628, 1.442695
  %v2633 = vpow.pop %v2632
  %v2634 = vmul.f32 %v2629, 1.442695
  %v2635 = vpow.pop %v2634
  %v2636 = vsel %vm722, %v2631, 0.0
  %2637 = vadd.xlane.f32.xlu0 %v2636
  %v2638 = vpop.xlane.xlu0 %2637
  %v2639 = vsel %vm722, %v2633, 0.0
  %2640 = vadd.xlane.f32.xlu0 %v2639
  %v2641 = vpop.xlane.xlu0 %2640
  %v2642 = vsel %vm729, %v2635, 0.0
  %2643 = vadd.xlane.f32.xlu0 %v2642
  %v2644 = vpop.xlane.xlu0 %2643
  %v2645 = vrcp.pop %v2638
  %v2646 = vrcp.pop %v2641
  %v2647 = vrcp.pop %v2644
  %v2648 = vmul.f32 %v2631, %v2645
  %v2649 = vmul.f32 %v2633, %v2646
  %v2650 = vmul.f32 %v2635, %v2647
  %v2651 = vpack.c.bf16 %v2649, %v2648
  %v2652 = vpack.c.bf16 %v2650, %v2650
  %2653 = vrot.lane.b32.xlu0 %v2373, 48
  %v2654 = vpop.permute.xlu0 %2653
  %2655 = vrot.lane.b32.xlu0 %v2374, 48
  %v2656 = vpop.permute.xlu0 %2655
  %v2659 = vsel %vm722, %v2651, 0
  %v2662 = vsel %vm722, %v2652, 0
  %v2665 = vsel %vm500, %v2656, 0
  %2667 = vmatprep.subr.bf16.mxu0 0
  %2668 = vmatpush1.bf16.msra.mxu0 %v2654
  %2669 = vmatprep.subr.bf16.mxu0 0
  %2670 = vmatpush1.bf16.msra.mxu0 %v2665
  %2671 = vmatprep.subr.bf16.mxu0 0
  %2672 = vmatpush1.bf16.msra.mxu0 0
  %2673 = vmatprep.subr.bf16.mxu0 0
  %2674 = vmatpush1.bf16.msra.mxu0 0
  %2675 = vmatprep.subr.bf16.mxu0 0
  %2676 = vmatpush1.bf16.msra.mxu0 0
  %2677 = vmatprep.subr.bf16.mxu0 0
  %2678 = vmatpush1.bf16.msra.mxu0 0
  %2679 = vmatprep.subr.bf16.mxu0 0
  %2680 = vmatpush1.bf16.msra.mxu0 0
  %2681 = vmatprep.subr.bf16.mxu0 0
  %2682 = vmatpush1.bf16.msra.mxu0 0
  %2683 = vmatprep.subr.bf16.mxu0 0
  %2684 = vmatpush1.bf16.msra.mxu0 0
  %2685 = vmatprep.subr.bf16.mxu0 0
  %2686 = vmatpush1.bf16.msra.mxu0 0
  %2687 = vmatprep.subr.bf16.mxu0 0
  %2688 = vmatpush1.bf16.msra.mxu0 0
  %2689 = vmatprep.subr.bf16.mxu0 0
  %2690 = vmatpush1.bf16.msra.mxu0 0
  %2691 = vmatprep.subr.bf16.mxu0 0
  %2692 = vmatpush1.bf16.msra.mxu0 0
  %2693 = vmatprep.subr.bf16.mxu0 0
  %2694 = vmatpush1.bf16.msra.mxu0 0
  %2695 = vmatprep.subr.bf16.mxu0 0
  %2696 = vmatpush1.bf16.msra.mxu0 0
  %2697 = vmatprep.subr.bf16.mxu0 0
  %2698 = vmatpush1.bf16.msra.mxu0 0
  %2699 = vmatprep.mubr.bf16.mxu0 0
  %2700 = vmatmul.mubr.bf16.gmra.mrb[0].mxu0 %v2659
  %v2701 = vpop.f32.mrb[0].mxu0
  %v2702 = vadd.f32 0.0, %v2701
  %v2703 = vpop.f32.mrb[0].mxu0
  %v2704 = vpop.f32.mrb[0].mxu0
  %v2705 = vadd.f32 0.0, %v2704
  %v2706 = vpop.f32.mrb[0].mxu0
  %2707 = vmatprep.mubr.bf16.mxu0 0
  %2708 = vmatmul.mubr.bf16.gmra.mrb[0].mxu0 %v2662
  %v2709 = vpop.f32.mrb[0].mxu0
  %v2710 = vadd.f32 0.0, %v2709
  %v2711 = vpop.f32.mrb[0].mxu0
  %v2712 = vpop.f32.mrb[0].mxu0
  %v2713 = vpop.f32.mrb[0].mxu0
  %2714 = vdwg.mxu0
  %2718 = vrot.lane.b32.xlu0 %v2702, 16
  %v2719 = vpop.permute.xlu0 %2718
  %2720 = vrot.lane.b32.xlu0 %v2705, 16
  %v2721 = vpop.permute.xlu0 %2720
  %2722 = vrot.lane.b32.xlu0 %v2710, 16
  %v2723 = vpop.permute.xlu0 %2722
  %v2727 = vsel %vm655, %v2531, %v2719
  %v2728 = vsel %vm655, %v2534, %v2721
  %v2729 = vsel %vm655, %v2539, %v2723
  %v2730 = vpack.c.bf16 %v2728, %v2727
  %v2731 = vpack.c.bf16 %v2729, %v2729
  %s2732 = scalar_lea.vmem %s6, 32
  %v2733 = vld [vmem:[%s2732] sm:$0xf]
  %v2734 = vld [vmem:[%s2732 + $0x4] sm:$0xf]
  %v2735 = vld [vmem:[%s2732 + $0x8] sm:$0xf]
  %v2736 = vld [vmem:[%s2732 + $0xc] sm:$0xf]
  %v2737 = vlaneseq
  %v2738 = vshrl.u32 %v2737, 7
  %v2739 = vsub.s32 3, %v2738
  %v2740 = vrot.slane %v2241, %v2739
  %v2745 = vunpack.c.l.b16 %v2733
  %v2746 = vunpack.c.l.b16 %v2734
  %v2747 = vunpack.c.l.b16 %v2735
  %v2748 = vunpack.c.l.b16 %v2736
  %v2749 = vpack.c.b16 %v2746, %v2745
  %v2750 = vpack.c.b16 %v2748, %v2747
  %v2754 = vsel %vm515, %v2730, 0
  %v2757 = vsel %vm515, %v2731, 0
  %2759 = vmatprep.subr.bf16.mxu0 0
  %2760 = vmatpush1.bf16.msra.mxu0 %v2749
  %2761 = vmatprep.subr.bf16.mxu0 0
  %2762 = vmatpush1.bf16.msra.mxu0 %v2750
  %2763 = vmatprep.subr.bf16.mxu0 0
  %2764 = vmatpush1.bf16.msra.mxu0 0
  %2765 = vmatprep.subr.bf16.mxu0 0
  %2766 = vmatpush1.bf16.msra.mxu0 0
  %2767 = vmatprep.subr.bf16.mxu0 0
  %2768 = vmatpush1.bf16.msra.mxu0 0
  %2769 = vmatprep.subr.bf16.mxu0 0
  %2770 = vmatpush1.bf16.msra.mxu0 0
  %2771 = vmatprep.subr.bf16.mxu0 0
  %2772 = vmatpush1.bf16.msra.mxu0 0
  %2773 = vmatprep.subr.bf16.mxu0 0
  %2774 = vmatpush1.bf16.msra.mxu0 0
  %2775 = vmatprep.subr.bf16.mxu0 0
  %2776 = vmatpush1.bf16.msra.mxu0 0
  %2777 = vmatprep.subr.bf16.mxu0 0
  %2778 = vmatpush1.bf16.msra.mxu0 0
  %2779 = vmatprep.subr.bf16.mxu0 0
  %2780 = vmatpush1.bf16.msra.mxu0 0
  %2781 = vmatprep.subr.bf16.mxu0 0
  %2782 = vmatpush1.bf16.msra.mxu0 0
  %2783 = vmatprep.subr.bf16.mxu0 0
  %2784 = vmatpush1.bf16.msra.mxu0 0
  %2785 = vmatprep.subr.bf16.mxu0 0
  %2786 = vmatpush1.bf16.msra.mxu0 0
  %2787 = vmatprep.subr.bf16.mxu0 0
  %2788 = vmatpush1.bf16.msra.mxu0 0
  %2789 = vmatprep.subr.bf16.mxu0 0
  %2790 = vmatpush1.bf16.msra.mxu0 0
  %2791 = vmatprep.mubr.bf16.mxu0 0
  %2792 = vmatmul.mubr.bf16.gmra.mrb[0].mxu0 %v2754
  %v2793 = vpop.f32.mrb[0].mxu0
  %v2794 = vadd.f32 %v2740, %v2793
  %v2795 = vpop.f32.mrb[0].mxu0
  %v2796 = vpop.f32.mrb[0].mxu0
  %v2797 = vadd.f32 %v2740, %v2796
  %v2798 = vpop.f32.mrb[0].mxu0
  %2799 = vmatprep.mubr.bf16.mxu0 0
  %2800 = vmatmul.mubr.bf16.gmra.mrb[0].mxu0 %v2757
  %v2801 = vpop.f32.mrb[0].mxu0
  %v2802 = vadd.f32 %v2740, %v2801
  %v2803 = vpop.f32.mrb[0].mxu0
  %v2804 = vpop.f32.mrb[0].mxu0
  %v2805 = vpop.f32.mrb[0].mxu0
  %2806 = vdwg.mxu0
  %v2807 = vlaneseq
  %v2808 = vshrl.u32 %v2807, 7
  %v2809 = vsub.s32 4, %v2808
  %v2810 = vrot.slane %v2241, %v2809
  %v2811 = vmul.f32 %v2810, %v2794
  %v2812 = vmul.f32 %v2810, %v2797
  %v2813 = vmul.f32 %v2810, %v2802
  %v2814 = vadd.f32 %v2237, %v2811
  %v2815 = vadd.f32 %v2238, %v2812
  %v2816 = vadd.f32 %v2239, %v2813
  %v2817 = vsel %vm515, %v2814, 0.0
  %2818 = vadd.xlane.f32.xlu0 %v2817
  %v2819 = vpop.xlane.xlu0 %2818
  %v2820 = vsel %vm515, %v2815, 0.0
  %2821 = vadd.xlane.f32.xlu0 %v2820
  %v2822 = vpop.xlane.xlu0 %2821
  %v2823 = vsel %vm522, %v2816, 0.0
  %2824 = vadd.xlane.f32.xlu0 %v2823
  %v2825 = vpop.xlane.xlu0 %2824
  %v2826 = vmul.f32 %v2819, %v526
  %v2827 = vmul.f32 %v2822, %v526
  %v2828 = vmul.f32 %v2825, %v526
  %v2829 = vsub.f32 %v2814, %v2826
  %v2830 = vsub.f32 %v2815, %v2827
  %v2831 = vsub.f32 %v2816, %v2828
  %v2832 = vmul.f32 %v2829, %v2829
  %v2833 = vmul.f32 %v2830, %v2830
  %v2834 = vmul.f32 %v2831, %v2831
  %v2835 = vsel %vm515, %v2832, 0.0
  %2836 = vadd.xlane.f32.xlu0 %v2835
  %v2837 = vpop.xlane.xlu0 %2836
  %v2838 = vsel %vm515, %v2833, 0.0
  %2839 = vadd.xlane.f32.xlu0 %v2838
  %v2840 = vpop.xlane.xlu0 %2839
  %v2841 = vsel %vm522, %v2834, 0.0
  %2842 = vadd.xlane.f32.xlu0 %v2841
  %v2843 = vpop.xlane.xlu0 %2842
  %v2844 = vmul.f32 %v2837, %v526
  %v2845 = vmul.f32 %v2840, %v526
  %v2846 = vmul.f32 %v2843, %v526
  %v2847 = vadd.f32 %v2844, 1e-06
  %v2848 = vadd.f32 %v2845, 1e-06
  %v2849 = vadd.f32 %v2846, 1e-06
  %v2850 = vrsqrt.pop %v2847
  %v2851 = vrsqrt.pop %v2848
  %v2852 = vrsqrt.pop %v2849
  %v2853 = vmul.f32 %v2829, %v2850
  %v2854 = vmul.f32 %v2830, %v2851
  %v2855 = vmul.f32 %v2831, %v2852
  %v2856 = vlaneseq
  %v2857 = vshrl.u32 %v2856, 7
  %v2858 = vsub.s32 5, %v2857
  %v2859 = vrot.slane %v2241, %v2858
  %v2860 = vmul.f32 %v2853, %v2859
  %v2861 = vmul.f32 %v2854, %v2859
  %v2862 = vmul.f32 %v2855, %v2859
  %v2863 = vlaneseq
  %v2864 = vshrl.u32 %v2863, 7
  %v2865 = vsub.s32 6, %v2864
  %v2866 = vrot.slane %v2241, %v2865
  %v2867 = vadd.f32 %v2860, %v2866
  %v2868 = vadd.f32 %v2861, %v2866
  %v2869 = vadd.f32 %v2862, %v2866
  %v2870 = vpack.c.bf16 %v2868, %v2867
  %v2871 = vpack.c.bf16 %v2869, %v2869
  %s2872 = scalar_lea.vmem %s7, 32
  %v2873 = vld [vmem:[%s2872] sm:$0xf]
  %v2874 = vld [vmem:[%s2872 + $0x4] sm:$0xf]
  %v2875 = vld [vmem:[%s2872 + $0x8] sm:$0xf]
  %v2876 = vld [vmem:[%s2872 + $0xc] sm:$0xf]
  %v2877 = vlaneseq
  %v2878 = vshrl.u32 %v2877, 7
  %v2879 = vsub.s32 7, %v2878
  %v2880 = vrot.slane %v2241, %v2879
  %v2885 = vunpack.c.l.b16 %v2873
  %v2886 = vunpack.c.l.b16 %v2874
  %v2887 = vunpack.c.l.b16 %v2875
  %v2888 = vunpack.c.l.b16 %v2876
  %v2889 = vpack.c.b16 %v2886, %v2885
  %v2890 = vpack.c.b16 %v2888, %v2887
  %v2894 = vsel %vm515, %v2870, 0
  %v2897 = vsel %vm515, %v2871, 0
  %2899 = vmatprep.subr.bf16.mxu0 0
  %2900 = vmatpush1.bf16.msra.mxu0 %v2889
  %2901 = vmatprep.subr.bf16.mxu0 0
  %2902 = vmatpush1.bf16.msra.mxu0 %v2890
  %2903 = vmatprep.subr.bf16.mxu0 0
  %2904 = vmatpush1.bf16.msra.mxu0 0
  %2905 = vmatprep.subr.bf16.mxu0 0
  %2906 = vmatpush1.bf16.msra.mxu0 0
  %2907 = vmatprep.subr.bf16.mxu0 0
  %2908 = vmatpush1.bf16.msra.mxu0 0
  %2909 = vmatprep.subr.bf16.mxu0 0
  %2910 = vmatpush1.bf16.msra.mxu0 0
  %2911 = vmatprep.subr.bf16.mxu0 0
  %2912 = vmatpush1.bf16.msra.mxu0 0
  %2913 = vmatprep.subr.bf16.mxu0 0
  %2914 = vmatpush1.bf16.msra.mxu0 0
  %2915 = vmatprep.subr.bf16.mxu0 0
  %2916 = vmatpush1.bf16.msra.mxu0 0
  %2917 = vmatprep.subr.bf16.mxu0 0
  %2918 = vmatpush1.bf16.msra.mxu0 0
  %2919 = vmatprep.subr.bf16.mxu0 0
  %2920 = vmatpush1.bf16.msra.mxu0 0
  %2921 = vmatprep.subr.bf16.mxu0 0
  %2922 = vmatpush1.bf16.msra.mxu0 0
  %2923 = vmatprep.subr.bf16.mxu0 0
  %2924 = vmatpush1.bf16.msra.mxu0 0
  %2925 = vmatprep.subr.bf16.mxu0 0
  %2926 = vmatpush1.bf16.msra.mxu0 0
  %2927 = vmatprep.subr.bf16.mxu0 0
  %2928 = vmatpush1.bf16.msra.mxu0 0
  %2929 = vmatprep.subr.bf16.mxu0 0
  %2930 = vmatpush1.bf16.msra.mxu0 0
  %2931 = vmatprep.mubr.bf16.mxu0 0
  %2932 = vmatmul.mubr.bf16.gmra.mrb[0].mxu0 %v2894
  %v2933 = vpop.f32.mrb[0].mxu0
  %v2934 = vadd.f32 %v2880, %v2933
  %v2935 = vpop.f32.mrb[0].mxu0
  %v2936 = vpop.f32.mrb[0].mxu0
  %v2937 = vadd.f32 %v2880, %v2936
  %v2938 = vpop.f32.mrb[0].mxu0
  %2939 = vmatprep.mubr.bf16.mxu0 0
  %2940 = vmatmul.mubr.bf16.gmra.mrb[0].mxu0 %v2897
  %v2941 = vpop.f32.mrb[0].mxu0
  %v2942 = vadd.f32 %v2880, %v2941
  %v2943 = vpop.f32.mrb[0].mxu0
  %v2944 = vpop.f32.mrb[0].mxu0
  %v2945 = vpop.f32.mrb[0].mxu0
  %2946 = vdwg.mxu0
  %v2947 = vmul.f32 %v2934, %v2934
  %v2948 = vmul.f32 %v2937, %v2937
  %v2949 = vmul.f32 %v2942, %v2942
  %v2950 = vmul.f32 %v2934, %v2947
  %v2951 = vmul.f32 %v2937, %v2948
  %v2952 = vmul.f32 %v2942, %v2949
  %v2953 = vmul.f32 %v2950, 0.044715
  %v2954 = vmul.f32 %v2951, 0.044715
  %v2955 = vmul.f32 %v2952, 0.044715
  %v2956 = vadd.f32 %v2934, %v2953
  %v2957 = vadd.f32 %v2937, %v2954
  %v2958 = vadd.f32 %v2942, %v2955
  %v2959 = vmul.f32 %v2956, 0.7978846
  %v2960 = vmul.f32 %v2957, 0.7978846
  %v2961 = vmul.f32 %v2958, 0.7978846
  %v2962 = vtanh.pop %v2959
  %v2963 = vtanh.pop %v2960
  %v2964 = vtanh.pop %v2961
  %v2965 = vadd.f32 %v2962, 1.0
  %v2966 = vadd.f32 %v2963, 1.0
  %v2967 = vadd.f32 %v2964, 1.0
  %v2968 = vmul.f32 %v2965, 0.5
  %v2969 = vmul.f32 %v2966, 0.5
  %v2970 = vmul.f32 %v2967, 0.5
  %v2971 = vmul.f32 %v2934, %v2968
  %v2972 = vmul.f32 %v2937, %v2969
  %v2973 = vmul.f32 %v2942, %v2970
  %v2974 = vpack.c.bf16 %v2972, %v2971
  %v2975 = vpack.c.bf16 %v2973, %v2973
  %s2976 = scalar_lea.vmem %s8, 128
  %v2977 = vld [vmem:[%s2976] sm:$0xf]
  %v2978 = vld [vmem:[%s2976 + $0x4] sm:$0xf]
  %v2979 = vld [vmem:[%s2976 + $0x8] sm:$0xf]
  %v2980 = vld [vmem:[%s2976 + $0xc] sm:$0xf]
  %v2981 = vld [vmem:[%s2976 + $0x10] sm:$0xf]
  %v2982 = vld [vmem:[%s2976 + $0x14] sm:$0xf]
  %v2983 = vld [vmem:[%s2976 + $0x18] sm:$0xf]
  %v2984 = vld [vmem:[%s2976 + $0x1c] sm:$0xf]
  %v2985 = vld [vmem:[%s2976 + $0x20] sm:$0xf]
  %v2986 = vld [vmem:[%s2976 + $0x24] sm:$0xf]
  %v2987 = vld [vmem:[%s2976 + $0x28] sm:$0xf]
  %v2988 = vld [vmem:[%s2976 + $0x2c] sm:$0xf]
  %v2989 = vld [vmem:[%s2976 + $0x30] sm:$0xf]
  %v2990 = vld [vmem:[%s2976 + $0x34] sm:$0xf]
  %v2991 = vld [vmem:[%s2976 + $0x38] sm:$0xf]
  %v2992 = vld [vmem:[%s2976 + $0x3c] sm:$0xf]
  %v2993 = vlaneseq
  %v2994 = vshrl.u32 %v2993, 7
  %v2995 = vsub.s32 0, %v2994
  %v2996 = vrot.slane %v2242, %v2995
  %v3013 = vunpack.c.l.b16 %v2977
  %v3014 = vunpack.c.l.b16 %v2978
  %v3015 = vunpack.c.l.b16 %v2979
  %v3016 = vunpack.c.l.b16 %v2980
  %v3017 = vunpack.c.l.b16 %v2981
  %v3018 = vunpack.c.l.b16 %v2982
  %v3019 = vunpack.c.l.b16 %v2983
  %v3020 = vunpack.c.l.b16 %v2984
  %v3021 = vunpack.c.l.b16 %v2985
  %v3022 = vunpack.c.l.b16 %v2986
  %v3023 = vunpack.c.l.b16 %v2987
  %v3024 = vunpack.c.l.b16 %v2988
  %v3025 = vunpack.c.l.b16 %v2989
  %v3026 = vunpack.c.l.b16 %v2990
  %v3027 = vunpack.c.l.b16 %v2991
  %v3028 = vunpack.c.l.b16 %v2992
  %v3029 = vpack.c.b16 %v3014, %v3013
  %v3030 = vpack.c.b16 %v3016, %v3015
  %v3031 = vpack.c.b16 %v3018, %v3017
  %v3032 = vpack.c.b16 %v3020, %v3019
  %v3033 = vpack.c.b16 %v3022, %v3021
  %v3034 = vpack.c.b16 %v3024, %v3023
  %v3035 = vpack.c.b16 %v3026, %v3025
  %v3036 = vpack.c.b16 %v3028, %v3027
  %3045 = vmatprep.subr.bf16.mxu0 0
  %3046 = vmatpush1.bf16.msra.mxu0 %v3029
  %3047 = vmatprep.subr.bf16.mxu0 0
  %3048 = vmatpush1.bf16.msra.mxu0 %v3030
  %3049 = vmatprep.subr.bf16.mxu0 0
  %3050 = vmatpush1.bf16.msra.mxu0 %v3031
  %3051 = vmatprep.subr.bf16.mxu0 0
  %3052 = vmatpush1.bf16.msra.mxu0 %v3032
  %3053 = vmatprep.subr.bf16.mxu0 0
  %3054 = vmatpush1.bf16.msra.mxu0 %v3033
  %3055 = vmatprep.subr.bf16.mxu0 0
  %3056 = vmatpush1.bf16.msra.mxu0 %v3034
  %3057 = vmatprep.subr.bf16.mxu0 0
  %3058 = vmatpush1.bf16.msra.mxu0 %v3035
  %3059 = vmatprep.subr.bf16.mxu0 0
  %3060 = vmatpush1.bf16.msra.mxu0 %v3036
  %3061 = vmatprep.subr.bf16.mxu0 0
  %3062 = vmatpush1.bf16.msra.mxu0 0
  %3063 = vmatprep.subr.bf16.mxu0 0
  %3064 = vmatpush1.bf16.msra.mxu0 0
  %3065 = vmatprep.subr.bf16.mxu0 0
  %3066 = vmatpush1.bf16.msra.mxu0 0
  %3067 = vmatprep.subr.bf16.mxu0 0
  %3068 = vmatpush1.bf16.msra.mxu0 0
  %3069 = vmatprep.subr.bf16.mxu0 0
  %3070 = vmatpush1.bf16.msra.mxu0 0
  %3071 = vmatprep.subr.bf16.mxu0 0
  %3072 = vmatpush1.bf16.msra.mxu0 0
  %3073 = vmatprep.subr.bf16.mxu0 0
  %3074 = vmatpush1.bf16.msra.mxu0 0
  %3075 = vmatprep.subr.bf16.mxu0 0
  %3076 = vmatpush1.bf16.msra.mxu0 0
  %3077 = vmatprep.mubr.bf16.mxu0 0
  %3078 = vmatmul.mubr.bf16.gmra.mrb[0].mxu0 %v2974
  %v3079 = vpop.f32.mrb[0].mxu0
  %v3080 = vadd.f32 %v2996, %v3079
  %v3081 = vpop.f32.mrb[0].mxu0
  %v3082 = vpop.f32.mrb[0].mxu0
  %v3083 = vadd.f32 %v2996, %v3082
  %v3084 = vpop.f32.mrb[0].mxu0
  %3085 = vmatprep.mubr.bf16.mxu0 0
  %3086 = vmatmul.mubr.bf16.gmra.mrb[0].mxu0 %v2975
  %v3087 = vpop.f32.mrb[0].mxu0
  %v3088 = vadd.f32 %v2996, %v3087
  %v3089 = vpop.f32.mrb[0].mxu0
  %v3090 = vpop.f32.mrb[0].mxu0
  %v3091 = vpop.f32.mrb[0].mxu0
  %3092 = vdwg.mxu0
  %v3093 = vlaneseq
  %v3094 = vshrl.u32 %v3093, 7
  %v3095 = vsub.s32 1, %v3094
  %v3096 = vrot.slane %v2242, %v3095
  %v3097 = vmul.f32 %v3096, %v3080
  %v3098 = vmul.f32 %v3096, %v3083
  %v3099 = vmul.f32 %v3096, %v3088
  %v3100 = vadd.f32 %v2814, %v3097
  %v3101 = vadd.f32 %v2815, %v3098
  %v3102 = vadd.f32 %v2816, %v3099
  %s3103 = scalar_lea.vmem %s4, 48
  %v3104 = vld [vmem:[%s3103] sm:$0xff]
  %v3105 = vld [vmem:[%s3103 + $0x8] sm:$0x3]
  %v3106 = vsel %vm515, %v3100, 0.0
  %3107 = vadd.xlane.f32.xlu0 %v3106
  %v3108 = vpop.xlane.xlu0 %3107
  %v3109 = vsel %vm515, %v3101, 0.0
  %3110 = vadd.xlane.f32.xlu0 %v3109
  %v3111 = vpop.xlane.xlu0 %3110
  %v3112 = vsel %vm522, %v3102, 0.0
  %3113 = vadd.xlane.f32.xlu0 %v3112
  %v3114 = vpop.xlane.xlu0 %3113
  %v3115 = vmul.f32 %v3108, %v526
  %v3116 = vmul.f32 %v3111, %v526
  %v3117 = vmul.f32 %v3114, %v526
  %v3118 = vsub.f32 %v3100, %v3115
  %v3119 = vsub.f32 %v3101, %v3116
  %v3120 = vsub.f32 %v3102, %v3117
  %v3121 = vmul.f32 %v3118, %v3118
  %v3122 = vmul.f32 %v3119, %v3119
  %v3123 = vmul.f32 %v3120, %v3120
  %v3124 = vsel %vm515, %v3121, 0.0
  %3125 = vadd.xlane.f32.xlu0 %v3124
  %v3126 = vpop.xlane.xlu0 %3125
  %v3127 = vsel %vm515, %v3122, 0.0
  %3128 = vadd.xlane.f32.xlu0 %v3127
  %v3129 = vpop.xlane.xlu0 %3128
  %v3130 = vsel %vm522, %v3123, 0.0
  %3131 = vadd.xlane.f32.xlu0 %v3130
  %v3132 = vpop.xlane.xlu0 %3131
  %v3133 = vmul.f32 %v3126, %v526
  %v3134 = vmul.f32 %v3129, %v526
  %v3135 = vmul.f32 %v3132, %v526
  %v3136 = vadd.f32 %v3133, 1e-06
  %v3137 = vadd.f32 %v3134, 1e-06
  %v3138 = vadd.f32 %v3135, 1e-06
  %v3139 = vrsqrt.pop %v3136
  %v3140 = vrsqrt.pop %v3137
  %v3141 = vrsqrt.pop %v3138
  %v3142 = vmul.f32 %v3118, %v3139
  %v3143 = vmul.f32 %v3119, %v3140
  %v3144 = vmul.f32 %v3120, %v3141
  %v3145 = vlaneseq
  %v3146 = vshrl.u32 %v3145, 7
  %v3147 = vsub.s32 0, %v3146
  %v3148 = vrot.slane %v3104, %v3147
  %v3149 = vmul.f32 %v3142, %v3148
  %v3150 = vmul.f32 %v3143, %v3148
  %v3151 = vmul.f32 %v3144, %v3148
  %v3152 = vlaneseq
  %v3153 = vshrl.u32 %v3152, 7
  %v3154 = vsub.s32 1, %v3153
  %v3155 = vrot.slane %v3104, %v3154
  %v3156 = vadd.f32 %v3149, %v3155
  %v3157 = vadd.f32 %v3150, %v3155
  %v3158 = vadd.f32 %v3151, %v3155
  %v3159 = vpack.c.bf16 %v3157, %v3156
  %v3160 = vpack.c.bf16 %v3158, %v3158
  %s3161 = scalar_lea.vmem %s5, 48
  %v3162 = vld [vmem:[%s3161] sm:$0xf]
  %v3163 = vld [vmem:[%s3161 + $0x4] sm:$0xf]
  %v3164 = vld [vmem:[%s3161 + $0x8] sm:$0xf]
  %v3165 = vld [vmem:[%s3161 + $0xc] sm:$0xf]
  %v3166 = vlaneseq
  %v3167 = vshrl.u32 %v3166, 7
  %v3168 = vsub.s32 2, %v3167
  %v3169 = vrot.slane %v3104, %v3168
  %v3174 = vunpack.c.l.b16 %v3162
  %v3175 = vunpack.c.l.b16 %v3163
  %v3176 = vunpack.c.l.b16 %v3164
  %v3177 = vunpack.c.l.b16 %v3165
  %v3178 = vpack.c.b16 %v3175, %v3174
  %v3179 = vpack.c.b16 %v3177, %v3176
  %v3183 = vsel %vm515, %v3159, 0
  %v3186 = vsel %vm515, %v3160, 0
  %3188 = vmatprep.subr.bf16.mxu0 0
  %3189 = vmatpush1.bf16.msra.mxu0 %v3178
  %3190 = vmatprep.subr.bf16.mxu0 0
  %3191 = vmatpush1.bf16.msra.mxu0 %v3179
  %3192 = vmatprep.subr.bf16.mxu0 0
  %3193 = vmatpush1.bf16.msra.mxu0 0
  %3194 = vmatprep.subr.bf16.mxu0 0
  %3195 = vmatpush1.bf16.msra.mxu0 0
  %3196 = vmatprep.subr.bf16.mxu0 0
  %3197 = vmatpush1.bf16.msra.mxu0 0
  %3198 = vmatprep.subr.bf16.mxu0 0
  %3199 = vmatpush1.bf16.msra.mxu0 0
  %3200 = vmatprep.subr.bf16.mxu0 0
  %3201 = vmatpush1.bf16.msra.mxu0 0
  %3202 = vmatprep.subr.bf16.mxu0 0
  %3203 = vmatpush1.bf16.msra.mxu0 0
  %3204 = vmatprep.subr.bf16.mxu0 0
  %3205 = vmatpush1.bf16.msra.mxu0 0
  %3206 = vmatprep.subr.bf16.mxu0 0
  %3207 = vmatpush1.bf16.msra.mxu0 0
  %3208 = vmatprep.subr.bf16.mxu0 0
  %3209 = vmatpush1.bf16.msra.mxu0 0
  %3210 = vmatprep.subr.bf16.mxu0 0
  %3211 = vmatpush1.bf16.msra.mxu0 0
  %3212 = vmatprep.subr.bf16.mxu0 0
  %3213 = vmatpush1.bf16.msra.mxu0 0
  %3214 = vmatprep.subr.bf16.mxu0 0
  %3215 = vmatpush1.bf16.msra.mxu0 0
  %3216 = vmatprep.subr.bf16.mxu0 0
  %3217 = vmatpush1.bf16.msra.mxu0 0
  %3218 = vmatprep.subr.bf16.mxu0 0
  %3219 = vmatpush1.bf16.msra.mxu0 0
  %3220 = vmatprep.mubr.bf16.mxu0 0
  %3221 = vmatmul.mubr.bf16.gmra.mrb[0].mxu0 %v3183
  %v3222 = vpop.f32.mrb[0].mxu0
  %v3223 = vadd.f32 %v3169, %v3222
  %v3224 = vpop.f32.mrb[0].mxu0
  %v3225 = vpop.f32.mrb[0].mxu0
  %v3226 = vadd.f32 %v3169, %v3225
  %v3227 = vpop.f32.mrb[0].mxu0
  %3228 = vmatprep.mubr.bf16.mxu0 0
  %3229 = vmatmul.mubr.bf16.gmra.mrb[0].mxu0 %v3186
  %v3230 = vpop.f32.mrb[0].mxu0
  %v3231 = vadd.f32 %v3169, %v3230
  %v3232 = vpop.f32.mrb[0].mxu0
  %v3233 = vpop.f32.mrb[0].mxu0
  %v3234 = vpop.f32.mrb[0].mxu0
  %3235 = vdwg.mxu0
  %v3236 = vpack.c.bf16 %v3226, %v3223
  %v3237 = vpack.c.bf16 %v3231, %v3231
  %3240 = vrot.lane.b32.xlu0 %v3236, 96
  %v3241 = vpop.permute.xlu0 %3240
  %3242 = vrot.lane.b32.xlu0 %v3237, 96
  %v3243 = vpop.permute.xlu0 %3242
  %v3245 = vsel %vm655, %v3236, 0
  %v3248 = vsel %vm655, %v3237, 0
  %v3251 = vsel %vm655, %v3241, 0
  %v3254 = vsel %vm655, %v3243, 0
  %3256 = vmatprep.subr.bf16.mxu0 0
  %3257 = vmatpush1.bf16.xpose.msra.mxu0 %v3251
  %3258 = vmatprep.subr.bf16.mxu0 0
  %3259 = vmatpush1.bf16.xpose.msra.mxu0 %v3254
  %3260 = vmatprep.subr.bf16.mxu0 0
  %3261 = vmatpush1.bf16.xpose.msra.mxu0 0
  %3262 = vmatprep.subr.bf16.mxu0 0
  %3263 = vmatpush1.bf16.xpose.msra.mxu0 0
  %3264 = vmatprep.subr.bf16.mxu0 0
  %3265 = vmatpush1.bf16.xpose.msra.mxu0 0
  %3266 = vmatprep.subr.bf16.mxu0 0
  %3267 = vmatpush1.bf16.xpose.msra.mxu0 0
  %3268 = vmatprep.subr.bf16.mxu0 0
  %3269 = vmatpush1.bf16.xpose.msra.mxu0 0
  %3270 = vmatprep.subr.bf16.mxu0 0
  %3271 = vmatpush1.bf16.xpose.msra.mxu0 0
  %3272 = vmatprep.subr.bf16.mxu0 0
  %3273 = vmatpush1.bf16.xpose.msra.mxu0 0
  %3274 = vmatprep.subr.bf16.mxu0 0
  %3275 = vmatpush1.bf16.xpose.msra.mxu0 0
  %3276 = vmatprep.subr.bf16.mxu0 0
  %3277 = vmatpush1.bf16.xpose.msra.mxu0 0
  %3278 = vmatprep.subr.bf16.mxu0 0
  %3279 = vmatpush1.bf16.xpose.msra.mxu0 0
  %3280 = vmatprep.subr.bf16.mxu0 0
  %3281 = vmatpush1.bf16.xpose.msra.mxu0 0
  %3282 = vmatprep.subr.bf16.mxu0 0
  %3283 = vmatpush1.bf16.xpose.msra.mxu0 0
  %3284 = vmatprep.subr.bf16.mxu0 0
  %3285 = vmatpush1.bf16.xpose.msra.mxu0 0
  %3286 = vmatprep.subr.bf16.mxu0 0
  %3287 = vmatpush1.bf16.xpose.msra.mxu0 0
  %3288 = vmatprep.mubr.bf16.mxu0 0
  %3289 = vmatmul.mubr.bf16.gmra.mrb[0].mxu0 %v3245
  %v3290 = vpop.f32.mrb[0].mxu0
  %v3291 = vadd.f32 0.0, %v3290
  %v3292 = vpop.f32.mrb[0].mxu0
  %v3293 = vpop.f32.mrb[0].mxu0
  %v3294 = vadd.f32 0.0, %v3293
  %v3295 = vpop.f32.mrb[0].mxu0
  %3296 = vmatprep.mubr.bf16.mxu0 0
  %3297 = vmatmul.mubr.bf16.gmra.mrb[0].mxu0 %v3248
  %v3298 = vpop.f32.mrb[0].mxu0
  %v3299 = vadd.f32 0.0, %v3298
  %v3300 = vpop.f32.mrb[0].mxu0
  %v3301 = vpop.f32.mrb[0].mxu0
  %v3302 = vpop.f32.mrb[0].mxu0
  %3303 = vdwg.mxu0
  %v3304 = vmul.f32 %v3291, 0.25
  %v3305 = vmul.f32 %v3294, 0.25
  %v3306 = vmul.f32 %v3299, 0.25
  %v3307 = vadd.f32 %v3304, %v510
  %v3308 = vadd.f32 %v3305, %v511
  %v3309 = vadd.f32 %v3306, %v512
  %v3310 = vsel %vm722, %v3307, -inf
  %3311 = vmax.xlane.f32.xlu0 %v3310
  %v3312 = vpop.xlane.xlu0 %3311
  %v3313 = vsel %vm722, %v3308, -inf
  %3314 = vmax.xlane.f32.xlu0 %v3313
  %v3315 = vpop.xlane.xlu0 %3314
  %v3316 = vsel %vm729, %v3309, -inf
  %3317 = vmax.xlane.f32.xlu0 %v3316
  %v3318 = vpop.xlane.xlu0 %3317
  %v3319 = vsub.f32 %v3307, %v3312
  %v3320 = vsub.f32 %v3308, %v3315
  %v3321 = vsub.f32 %v3309, %v3318
  %v3322 = vmul.f32 %v3319, 1.442695
  %v3323 = vpow.pop %v3322
  %v3324 = vmul.f32 %v3320, 1.442695
  %v3325 = vpow.pop %v3324
  %v3326 = vmul.f32 %v3321, 1.442695
  %v3327 = vpow.pop %v3326
  %v3328 = vsel %vm722, %v3323, 0.0
  %3329 = vadd.xlane.f32.xlu0 %v3328
  %v3330 = vpop.xlane.xlu0 %3329
  %v3331 = vsel %vm722, %v3325, 0.0
  %3332 = vadd.xlane.f32.xlu0 %v3331
  %v3333 = vpop.xlane.xlu0 %3332
  %v3334 = vsel %vm729, %v3327, 0.0
  %3335 = vadd.xlane.f32.xlu0 %v3334
  %v3336 = vpop.xlane.xlu0 %3335
  %v3337 = vrcp.pop %v3330
  %v3338 = vrcp.pop %v3333
  %v3339 = vrcp.pop %v3336
  %v3340 = vmul.f32 %v3323, %v3337
  %v3341 = vmul.f32 %v3325, %v3338
  %v3342 = vmul.f32 %v3327, %v3339
  %v3343 = vpack.c.bf16 %v3341, %v3340
  %v3344 = vpack.c.bf16 %v3342, %v3342
  %3345 = vrot.lane.b32.xlu0 %v3236, 64
  %v3346 = vpop.permute.xlu0 %3345
  %3347 = vrot.lane.b32.xlu0 %v3237, 64
  %v3348 = vpop.permute.xlu0 %3347
  %v3351 = vsel %vm722, %v3343, 0
  %v3354 = vsel %vm722, %v3344, 0
  %v3357 = vsel %vm500, %v3348, 0
  %3359 = vmatprep.subr.bf16.mxu0 0
  %3360 = vmatpush1.bf16.msra.mxu0 %v3346
  %3361 = vmatprep.subr.bf16.mxu0 0
  %3362 = vmatpush1.bf16.msra.mxu0 %v3357
  %3363 = vmatprep.subr.bf16.mxu0 0
  %3364 = vmatpush1.bf16.msra.mxu0 0
  %3365 = vmatprep.subr.bf16.mxu0 0
  %3366 = vmatpush1.bf16.msra.mxu0 0
  %3367 = vmatprep.subr.bf16.mxu0 0
  %3368 = vmatpush1.bf16.msra.mxu0 0
  %3369 = vmatprep.subr.bf16.mxu0 0
  %3370 = vmatpush1.bf16.msra.mxu0 0
  %3371 = vmatprep.subr.bf16.mxu0 0
  %3372 = vmatpush1.bf16.msra.mxu0 0
  %3373 = vmatprep.subr.bf16.mxu0 0
  %3374 = vmatpush1.bf16.msra.mxu0 0
  %3375 = vmatprep.subr.bf16.mxu0 0
  %3376 = vmatpush1.bf16.msra.mxu0 0
  %3377 = vmatprep.subr.bf16.mxu0 0
  %3378 = vmatpush1.bf16.msra.mxu0 0
  %3379 = vmatprep.subr.bf16.mxu0 0
  %3380 = vmatpush1.bf16.msra.mxu0 0
  %3381 = vmatprep.subr.bf16.mxu0 0
  %3382 = vmatpush1.bf16.msra.mxu0 0
  %3383 = vmatprep.subr.bf16.mxu0 0
  %3384 = vmatpush1.bf16.msra.mxu0 0
  %3385 = vmatprep.subr.bf16.mxu0 0
  %3386 = vmatpush1.bf16.msra.mxu0 0
  %3387 = vmatprep.subr.bf16.mxu0 0
  %3388 = vmatpush1.bf16.msra.mxu0 0
  %3389 = vmatprep.subr.bf16.mxu0 0
  %3390 = vmatpush1.bf16.msra.mxu0 0
  %3391 = vmatprep.mubr.bf16.mxu0 0
  %3392 = vmatmul.mubr.bf16.gmra.mrb[0].mxu0 %v3351
  %v3393 = vpop.f32.mrb[0].mxu0
  %v3394 = vadd.f32 0.0, %v3393
  %v3395 = vpop.f32.mrb[0].mxu0
  %v3396 = vpop.f32.mrb[0].mxu0
  %v3397 = vadd.f32 0.0, %v3396
  %v3398 = vpop.f32.mrb[0].mxu0
  %3399 = vmatprep.mubr.bf16.mxu0 0
  %3400 = vmatmul.mubr.bf16.gmra.mrb[0].mxu0 %v3354
  %v3401 = vpop.f32.mrb[0].mxu0
  %v3402 = vadd.f32 0.0, %v3401
  %v3403 = vpop.f32.mrb[0].mxu0
  %v3404 = vpop.f32.mrb[0].mxu0
  %v3405 = vpop.f32.mrb[0].mxu0
  %3406 = vdwg.mxu0
  %3407 = vrot.lane.b32.xlu0 %v3236, 112
  %v3408 = vpop.permute.xlu0 %3407
  %3409 = vrot.lane.b32.xlu0 %v3237, 112
  %v3410 = vpop.permute.xlu0 %3409
  %3411 = vrot.lane.b32.xlu0 %v3236, 80
  %v3412 = vpop.permute.xlu0 %3411
  %3413 = vrot.lane.b32.xlu0 %v3237, 80
  %v3414 = vpop.permute.xlu0 %3413
  %v3416 = vsel %vm655, %v3408, 0
  %v3419 = vsel %vm655, %v3410, 0
  %v3422 = vsel %vm655, %v3412, 0
  %v3425 = vsel %vm655, %v3414, 0
  %3427 = vmatprep.subr.bf16.mxu0 0
  %3428 = vmatpush1.bf16.xpose.msra.mxu0 %v3422
  %3429 = vmatprep.subr.bf16.mxu0 0
  %3430 = vmatpush1.bf16.xpose.msra.mxu0 %v3425
  %3431 = vmatprep.subr.bf16.mxu0 0
  %3432 = vmatpush1.bf16.xpose.msra.mxu0 0
  %3433 = vmatprep.subr.bf16.mxu0 0
  %3434 = vmatpush1.bf16.xpose.msra.mxu0 0
  %3435 = vmatprep.subr.bf16.mxu0 0
  %3436 = vmatpush1.bf16.xpose.msra.mxu0 0
  %3437 = vmatprep.subr.bf16.mxu0 0
  %3438 = vmatpush1.bf16.xpose.msra.mxu0 0
  %3439 = vmatprep.subr.bf16.mxu0 0
  %3440 = vmatpush1.bf16.xpose.msra.mxu0 0
  %3441 = vmatprep.subr.bf16.mxu0 0
  %3442 = vmatpush1.bf16.xpose.msra.mxu0 0
  %3443 = vmatprep.subr.bf16.mxu0 0
  %3444 = vmatpush1.bf16.xpose.msra.mxu0 0
  %3445 = vmatprep.subr.bf16.mxu0 0
  %3446 = vmatpush1.bf16.xpose.msra.mxu0 0
  %3447 = vmatprep.subr.bf16.mxu0 0
  %3448 = vmatpush1.bf16.xpose.msra.mxu0 0
  %3449 = vmatprep.subr.bf16.mxu0 0
  %3450 = vmatpush1.bf16.xpose.msra.mxu0 0
  %3451 = vmatprep.subr.bf16.mxu0 0
  %3452 = vmatpush1.bf16.xpose.msra.mxu0 0
  %3453 = vmatprep.subr.bf16.mxu0 0
  %3454 = vmatpush1.bf16.xpose.msra.mxu0 0
  %3455 = vmatprep.subr.bf16.mxu0 0
  %3456 = vmatpush1.bf16.xpose.msra.mxu0 0
  %3457 = vmatprep.subr.bf16.mxu0 0
  %3458 = vmatpush1.bf16.xpose.msra.mxu0 0
  %3459 = vmatprep.mubr.bf16.mxu0 0
  %3460 = vmatmul.mubr.bf16.gmra.mrb[0].mxu0 %v3416
  %v3461 = vpop.f32.mrb[0].mxu0
  %v3462 = vadd.f32 0.0, %v3461
  %v3463 = vpop.f32.mrb[0].mxu0
  %v3464 = vpop.f32.mrb[0].mxu0
  %v3465 = vadd.f32 0.0, %v3464
  %v3466 = vpop.f32.mrb[0].mxu0
  %3467 = vmatprep.mubr.bf16.mxu0 0
  %3468 = vmatmul.mubr.bf16.gmra.mrb[0].mxu0 %v3419
  %v3469 = vpop.f32.mrb[0].mxu0
  %v3470 = vadd.f32 0.0, %v3469
  %v3471 = vpop.f32.mrb[0].mxu0
  %v3472 = vpop.f32.mrb[0].mxu0
  %v3473 = vpop.f32.mrb[0].mxu0
  %3474 = vdwg.mxu0
  %v3475 = vmul.f32 %v3462, 0.25
  %v3476 = vmul.f32 %v3465, 0.25
  %v3477 = vmul.f32 %v3470, 0.25
  %v3478 = vadd.f32 %v3475, %v510
  %v3479 = vadd.f32 %v3476, %v511
  %v3480 = vadd.f32 %v3477, %v512
  %v3481 = vsel %vm722, %v3478, -inf
  %3482 = vmax.xlane.f32.xlu0 %v3481
  %v3483 = vpop.xlane.xlu0 %3482
  %v3484 = vsel %vm722, %v3479, -inf
  %3485 = vmax.xlane.f32.xlu0 %v3484
  %v3486 = vpop.xlane.xlu0 %3485
  %v3487 = vsel %vm729, %v3480, -inf
  %3488 = vmax.xlane.f32.xlu0 %v3487
  %v3489 = vpop.xlane.xlu0 %3488
  %v3490 = vsub.f32 %v3478, %v3483
  %v3491 = vsub.f32 %v3479, %v3486
  %v3492 = vsub.f32 %v3480, %v3489
  %v3493 = vmul.f32 %v3490, 1.442695
  %v3494 = vpow.pop %v3493
  %v3495 = vmul.f32 %v3491, 1.442695
  %v3496 = vpow.pop %v3495
  %v3497 = vmul.f32 %v3492, 1.442695
  %v3498 = vpow.pop %v3497
  %v3499 = vsel %vm722, %v3494, 0.0
  %3500 = vadd.xlane.f32.xlu0 %v3499
  %v3501 = vpop.xlane.xlu0 %3500
  %v3502 = vsel %vm722, %v3496, 0.0
  %3503 = vadd.xlane.f32.xlu0 %v3502
  %v3504 = vpop.xlane.xlu0 %3503
  %v3505 = vsel %vm729, %v3498, 0.0
  %3506 = vadd.xlane.f32.xlu0 %v3505
  %v3507 = vpop.xlane.xlu0 %3506
  %v3508 = vrcp.pop %v3501
  %v3509 = vrcp.pop %v3504
  %v3510 = vrcp.pop %v3507
  %v3511 = vmul.f32 %v3494, %v3508
  %v3512 = vmul.f32 %v3496, %v3509
  %v3513 = vmul.f32 %v3498, %v3510
  %v3514 = vpack.c.bf16 %v3512, %v3511
  %v3515 = vpack.c.bf16 %v3513, %v3513
  %3516 = vrot.lane.b32.xlu0 %v3236, 48
  %v3517 = vpop.permute.xlu0 %3516
  %3518 = vrot.lane.b32.xlu0 %v3237, 48
  %v3519 = vpop.permute.xlu0 %3518
  %v3522 = vsel %vm722, %v3514, 0
  %v3525 = vsel %vm722, %v3515, 0
  %v3528 = vsel %vm500, %v3519, 0
  %3530 = vmatprep.subr.bf16.mxu0 0
  %3531 = vmatpush1.bf16.msra.mxu0 %v3517
  %3532 = vmatprep.subr.bf16.mxu0 0
  %3533 = vmatpush1.bf16.msra.mxu0 %v3528
  %3534 = vmatprep.subr.bf16.mxu0 0
  %3535 = vmatpush1.bf16.msra.mxu0 0
  %3536 = vmatprep.subr.bf16.mxu0 0
  %3537 = vmatpush1.bf16.msra.mxu0 0
  %3538 = vmatprep.subr.bf16.mxu0 0
  %3539 = vmatpush1.bf16.msra.mxu0 0
  %3540 = vmatprep.subr.bf16.mxu0 0
  %3541 = vmatpush1.bf16.msra.mxu0 0
  %3542 = vmatprep.subr.bf16.mxu0 0
  %3543 = vmatpush1.bf16.msra.mxu0 0
  %3544 = vmatprep.subr.bf16.mxu0 0
  %3545 = vmatpush1.bf16.msra.mxu0 0
  %3546 = vmatprep.subr.bf16.mxu0 0
  %3547 = vmatpush1.bf16.msra.mxu0 0
  %3548 = vmatprep.subr.bf16.mxu0 0
  %3549 = vmatpush1.bf16.msra.mxu0 0
  %3550 = vmatprep.subr.bf16.mxu0 0
  %3551 = vmatpush1.bf16.msra.mxu0 0
  %3552 = vmatprep.subr.bf16.mxu0 0
  %3553 = vmatpush1.bf16.msra.mxu0 0
  %3554 = vmatprep.subr.bf16.mxu0 0
  %3555 = vmatpush1.bf16.msra.mxu0 0
  %3556 = vmatprep.subr.bf16.mxu0 0
  %3557 = vmatpush1.bf16.msra.mxu0 0
  %3558 = vmatprep.subr.bf16.mxu0 0
  %3559 = vmatpush1.bf16.msra.mxu0 0
  %3560 = vmatprep.subr.bf16.mxu0 0
  %3561 = vmatpush1.bf16.msra.mxu0 0
  %3562 = vmatprep.mubr.bf16.mxu0 0
  %3563 = vmatmul.mubr.bf16.gmra.mrb[0].mxu0 %v3522
  %v3564 = vpop.f32.mrb[0].mxu0
  %v3565 = vadd.f32 0.0, %v3564
  %v3566 = vpop.f32.mrb[0].mxu0
  %v3567 = vpop.f32.mrb[0].mxu0
  %v3568 = vadd.f32 0.0, %v3567
  %v3569 = vpop.f32.mrb[0].mxu0
  %3570 = vmatprep.mubr.bf16.mxu0 0
  %3571 = vmatmul.mubr.bf16.gmra.mrb[0].mxu0 %v3525
  %v3572 = vpop.f32.mrb[0].mxu0
  %v3573 = vadd.f32 0.0, %v3572
  %v3574 = vpop.f32.mrb[0].mxu0
  %v3575 = vpop.f32.mrb[0].mxu0
  %v3576 = vpop.f32.mrb[0].mxu0
  %3577 = vdwg.mxu0
  %3581 = vrot.lane.b32.xlu0 %v3565, 16
  %v3582 = vpop.permute.xlu0 %3581
  %3583 = vrot.lane.b32.xlu0 %v3568, 16
  %v3584 = vpop.permute.xlu0 %3583
  %3585 = vrot.lane.b32.xlu0 %v3573, 16
  %v3586 = vpop.permute.xlu0 %3585
  %v3590 = vsel %vm655, %v3394, %v3582
  %v3591 = vsel %vm655, %v3397, %v3584
  %v3592 = vsel %vm655, %v3402, %v3586
  %v3593 = vpack.c.bf16 %v3591, %v3590
  %v3594 = vpack.c.bf16 %v3592, %v3592
  %s3595 = scalar_lea.vmem %s6, 48
  %v3596 = vld [vmem:[%s3595] sm:$0xf]
  %v3597 = vld [vmem:[%s3595 + $0x4] sm:$0xf]
  %v3598 = vld [vmem:[%s3595 + $0x8] sm:$0xf]
  %v3599 = vld [vmem:[%s3595 + $0xc] sm:$0xf]
  %v3600 = vlaneseq
  %v3601 = vshrl.u32 %v3600, 7
  %v3602 = vsub.s32 3, %v3601
  %v3603 = vrot.slane %v3104, %v3602
  %v3608 = vunpack.c.l.b16 %v3596
  %v3609 = vunpack.c.l.b16 %v3597
  %v3610 = vunpack.c.l.b16 %v3598
  %v3611 = vunpack.c.l.b16 %v3599
  %v3612 = vpack.c.b16 %v3609, %v3608
  %v3613 = vpack.c.b16 %v3611, %v3610
  %v3617 = vsel %vm515, %v3593, 0
  %v3620 = vsel %vm515, %v3594, 0
  %3622 = vmatprep.subr.bf16.mxu0 0
  %3623 = vmatpush1.bf16.msra.mxu0 %v3612
  %3624 = vmatprep.subr.bf16.mxu0 0
  %3625 = vmatpush1.bf16.msra.mxu0 %v3613
  %3626 = vmatprep.subr.bf16.mxu0 0
  %3627 = vmatpush1.bf16.msra.mxu0 0
  %3628 = vmatprep.subr.bf16.mxu0 0
  %3629 = vmatpush1.bf16.msra.mxu0 0
  %3630 = vmatprep.subr.bf16.mxu0 0
  %3631 = vmatpush1.bf16.msra.mxu0 0
  %3632 = vmatprep.subr.bf16.mxu0 0
  %3633 = vmatpush1.bf16.msra.mxu0 0
  %3634 = vmatprep.subr.bf16.mxu0 0
  %3635 = vmatpush1.bf16.msra.mxu0 0
  %3636 = vmatprep.subr.bf16.mxu0 0
  %3637 = vmatpush1.bf16.msra.mxu0 0
  %3638 = vmatprep.subr.bf16.mxu0 0
  %3639 = vmatpush1.bf16.msra.mxu0 0
  %3640 = vmatprep.subr.bf16.mxu0 0
  %3641 = vmatpush1.bf16.msra.mxu0 0
  %3642 = vmatprep.subr.bf16.mxu0 0
  %3643 = vmatpush1.bf16.msra.mxu0 0
  %3644 = vmatprep.subr.bf16.mxu0 0
  %3645 = vmatpush1.bf16.msra.mxu0 0
  %3646 = vmatprep.subr.bf16.mxu0 0
  %3647 = vmatpush1.bf16.msra.mxu0 0
  %3648 = vmatprep.subr.bf16.mxu0 0
  %3649 = vmatpush1.bf16.msra.mxu0 0
  %3650 = vmatprep.subr.bf16.mxu0 0
  %3651 = vmatpush1.bf16.msra.mxu0 0
  %3652 = vmatprep.subr.bf16.mxu0 0
  %3653 = vmatpush1.bf16.msra.mxu0 0
  %3654 = vmatprep.mubr.bf16.mxu0 0
  %3655 = vmatmul.mubr.bf16.gmra.mrb[0].mxu0 %v3617
  %v3656 = vpop.f32.mrb[0].mxu0
  %v3657 = vadd.f32 %v3603, %v3656
  %v3658 = vpop.f32.mrb[0].mxu0
  %v3659 = vpop.f32.mrb[0].mxu0
  %v3660 = vadd.f32 %v3603, %v3659
  %v3661 = vpop.f32.mrb[0].mxu0
  %3662 = vmatprep.mubr.bf16.mxu0 0
  %3663 = vmatmul.mubr.bf16.gmra.mrb[0].mxu0 %v3620
  %v3664 = vpop.f32.mrb[0].mxu0
  %v3665 = vadd.f32 %v3603, %v3664
  %v3666 = vpop.f32.mrb[0].mxu0
  %v3667 = vpop.f32.mrb[0].mxu0
  %v3668 = vpop.f32.mrb[0].mxu0
  %3669 = vdwg.mxu0
  %v3670 = vlaneseq
  %v3671 = vshrl.u32 %v3670, 7
  %v3672 = vsub.s32 4, %v3671
  %v3673 = vrot.slane %v3104, %v3672
  %v3674 = vmul.f32 %v3673, %v3657
  %v3675 = vmul.f32 %v3673, %v3660
  %v3676 = vmul.f32 %v3673, %v3665
  %v3677 = vadd.f32 %v3100, %v3674
  %v3678 = vadd.f32 %v3101, %v3675
  %v3679 = vadd.f32 %v3102, %v3676
  %v3680 = vsel %vm515, %v3677, 0.0
  %3681 = vadd.xlane.f32.xlu0 %v3680
  %v3682 = vpop.xlane.xlu0 %3681
  %v3683 = vsel %vm515, %v3678, 0.0
  %3684 = vadd.xlane.f32.xlu0 %v3683
  %v3685 = vpop.xlane.xlu0 %3684
  %v3686 = vsel %vm522, %v3679, 0.0
  %3687 = vadd.xlane.f32.xlu0 %v3686
  %v3688 = vpop.xlane.xlu0 %3687
  %v3689 = vmul.f32 %v3682, %v526
  %v3690 = vmul.f32 %v3685, %v526
  %v3691 = vmul.f32 %v3688, %v526
  %v3692 = vsub.f32 %v3677, %v3689
  %v3693 = vsub.f32 %v3678, %v3690
  %v3694 = vsub.f32 %v3679, %v3691
  %v3695 = vmul.f32 %v3692, %v3692
  %v3696 = vmul.f32 %v3693, %v3693
  %v3697 = vmul.f32 %v3694, %v3694
  %v3698 = vsel %vm515, %v3695, 0.0
  %3699 = vadd.xlane.f32.xlu0 %v3698
  %v3700 = vpop.xlane.xlu0 %3699
  %v3701 = vsel %vm515, %v3696, 0.0
  %3702 = vadd.xlane.f32.xlu0 %v3701
  %v3703 = vpop.xlane.xlu0 %3702
  %v3704 = vsel %vm522, %v3697, 0.0
  %3705 = vadd.xlane.f32.xlu0 %v3704
  %v3706 = vpop.xlane.xlu0 %3705
  %v3707 = vmul.f32 %v3700, %v526
  %v3708 = vmul.f32 %v3703, %v526
  %v3709 = vmul.f32 %v3706, %v526
  %v3710 = vadd.f32 %v3707, 1e-06
  %v3711 = vadd.f32 %v3708, 1e-06
  %v3712 = vadd.f32 %v3709, 1e-06
  %v3713 = vrsqrt.pop %v3710
  %v3714 = vrsqrt.pop %v3711
  %v3715 = vrsqrt.pop %v3712
  %v3716 = vmul.f32 %v3692, %v3713
  %v3717 = vmul.f32 %v3693, %v3714
  %v3718 = vmul.f32 %v3694, %v3715
  %v3719 = vlaneseq
  %v3720 = vshrl.u32 %v3719, 7
  %v3721 = vsub.s32 5, %v3720
  %v3722 = vrot.slane %v3104, %v3721
  %v3723 = vmul.f32 %v3716, %v3722
  %v3724 = vmul.f32 %v3717, %v3722
  %v3725 = vmul.f32 %v3718, %v3722
  %v3726 = vlaneseq
  %v3727 = vshrl.u32 %v3726, 7
  %v3728 = vsub.s32 6, %v3727
  %v3729 = vrot.slane %v3104, %v3728
  %v3730 = vadd.f32 %v3723, %v3729
  %v3731 = vadd.f32 %v3724, %v3729
  %v3732 = vadd.f32 %v3725, %v3729
  %v3733 = vpack.c.bf16 %v3731, %v3730
  %v3734 = vpack.c.bf16 %v3732, %v3732
  %s3735 = scalar_lea.vmem %s7, 48
  %v3736 = vld [vmem:[%s3735] sm:$0xf]
  %v3737 = vld [vmem:[%s3735 + $0x4] sm:$0xf]
  %v3738 = vld [vmem:[%s3735 + $0x8] sm:$0xf]
  %v3739 = vld [vmem:[%s3735 + $0xc] sm:$0xf]
  %v3740 = vlaneseq
  %v3741 = vshrl.u32 %v3740, 7
  %v3742 = vsub.s32 7, %v3741
  %v3743 = vrot.slane %v3104, %v3742
  %v3748 = vunpack.c.l.b16 %v3736
  %v3749 = vunpack.c.l.b16 %v3737
  %v3750 = vunpack.c.l.b16 %v3738
  %v3751 = vunpack.c.l.b16 %v3739
  %v3752 = vpack.c.b16 %v3749, %v3748
  %v3753 = vpack.c.b16 %v3751, %v3750
  %v3757 = vsel %vm515, %v3733, 0
  %v3760 = vsel %vm515, %v3734, 0
  %3762 = vmatprep.subr.bf16.mxu0 0
  %3763 = vmatpush1.bf16.msra.mxu0 %v3752
  %3764 = vmatprep.subr.bf16.mxu0 0
  %3765 = vmatpush1.bf16.msra.mxu0 %v3753
  %3766 = vmatprep.subr.bf16.mxu0 0
  %3767 = vmatpush1.bf16.msra.mxu0 0
  %3768 = vmatprep.subr.bf16.mxu0 0
  %3769 = vmatpush1.bf16.msra.mxu0 0
  %3770 = vmatprep.subr.bf16.mxu0 0
  %3771 = vmatpush1.bf16.msra.mxu0 0
  %3772 = vmatprep.subr.bf16.mxu0 0
  %3773 = vmatpush1.bf16.msra.mxu0 0
  %3774 = vmatprep.subr.bf16.mxu0 0
  %3775 = vmatpush1.bf16.msra.mxu0 0
  %3776 = vmatprep.subr.bf16.mxu0 0
  %3777 = vmatpush1.bf16.msra.mxu0 0
  %3778 = vmatprep.subr.bf16.mxu0 0
  %3779 = vmatpush1.bf16.msra.mxu0 0
  %3780 = vmatprep.subr.bf16.mxu0 0
  %3781 = vmatpush1.bf16.msra.mxu0 0
  %3782 = vmatprep.subr.bf16.mxu0 0
  %3783 = vmatpush1.bf16.msra.mxu0 0
  %3784 = vmatprep.subr.bf16.mxu0 0
  %3785 = vmatpush1.bf16.msra.mxu0 0
  %3786 = vmatprep.subr.bf16.mxu0 0
  %3787 = vmatpush1.bf16.msra.mxu0 0
  %3788 = vmatprep.subr.bf16.mxu0 0
  %3789 = vmatpush1.bf16.msra.mxu0 0
  %3790 = vmatprep.subr.bf16.mxu0 0
  %3791 = vmatpush1.bf16.msra.mxu0 0
  %3792 = vmatprep.subr.bf16.mxu0 0
  %3793 = vmatpush1.bf16.msra.mxu0 0
  %3794 = vmatprep.mubr.bf16.mxu0 0
  %3795 = vmatmul.mubr.bf16.gmra.mrb[0].mxu0 %v3757
  %v3796 = vpop.f32.mrb[0].mxu0
  %v3797 = vadd.f32 %v3743, %v3796
  %v3798 = vpop.f32.mrb[0].mxu0
  %v3799 = vpop.f32.mrb[0].mxu0
  %v3800 = vadd.f32 %v3743, %v3799
  %v3801 = vpop.f32.mrb[0].mxu0
  %3802 = vmatprep.mubr.bf16.mxu0 0
  %3803 = vmatmul.mubr.bf16.gmra.mrb[0].mxu0 %v3760
  %v3804 = vpop.f32.mrb[0].mxu0
  %v3805 = vadd.f32 %v3743, %v3804
  %v3806 = vpop.f32.mrb[0].mxu0
  %v3807 = vpop.f32.mrb[0].mxu0
  %v3808 = vpop.f32.mrb[0].mxu0
  %3809 = vdwg.mxu0
  %v3810 = vmul.f32 %v3797, %v3797
  %v3811 = vmul.f32 %v3800, %v3800
  %v3812 = vmul.f32 %v3805, %v3805
  %v3813 = vmul.f32 %v3797, %v3810
  %v3814 = vmul.f32 %v3800, %v3811
  %v3815 = vmul.f32 %v3805, %v3812
  %v3816 = vmul.f32 %v3813, 0.044715
  %v3817 = vmul.f32 %v3814, 0.044715
  %v3818 = vmul.f32 %v3815, 0.044715
  %v3819 = vadd.f32 %v3797, %v3816
  %v3820 = vadd.f32 %v3800, %v3817
  %v3821 = vadd.f32 %v3805, %v3818
  %v3822 = vmul.f32 %v3819, 0.7978846
  %v3823 = vmul.f32 %v3820, 0.7978846
  %v3824 = vmul.f32 %v3821, 0.7978846
  %v3825 = vtanh.pop %v3822
  %v3826 = vtanh.pop %v3823
  %v3827 = vtanh.pop %v3824
  %v3828 = vadd.f32 %v3825, 1.0
  %v3829 = vadd.f32 %v3826, 1.0
  %v3830 = vadd.f32 %v3827, 1.0
  %v3831 = vmul.f32 %v3828, 0.5
  %v3832 = vmul.f32 %v3829, 0.5
  %v3833 = vmul.f32 %v3830, 0.5
  %v3834 = vmul.f32 %v3797, %v3831
  %v3835 = vmul.f32 %v3800, %v3832
  %v3836 = vmul.f32 %v3805, %v3833
  %v3837 = vpack.c.bf16 %v3835, %v3834
  %v3838 = vpack.c.bf16 %v3836, %v3836
  %s3839 = scalar_lea.vmem %s8, 192
  %v3840 = vld [vmem:[%s3839] sm:$0xf]
  %v3841 = vld [vmem:[%s3839 + $0x4] sm:$0xf]
  %v3842 = vld [vmem:[%s3839 + $0x8] sm:$0xf]
  %v3843 = vld [vmem:[%s3839 + $0xc] sm:$0xf]
  %v3844 = vld [vmem:[%s3839 + $0x10] sm:$0xf]
  %v3845 = vld [vmem:[%s3839 + $0x14] sm:$0xf]
  %v3846 = vld [vmem:[%s3839 + $0x18] sm:$0xf]
  %v3847 = vld [vmem:[%s3839 + $0x1c] sm:$0xf]
  %v3848 = vld [vmem:[%s3839 + $0x20] sm:$0xf]
  %v3849 = vld [vmem:[%s3839 + $0x24] sm:$0xf]
  %v3850 = vld [vmem:[%s3839 + $0x28] sm:$0xf]
  %v3851 = vld [vmem:[%s3839 + $0x2c] sm:$0xf]
  %v3852 = vld [vmem:[%s3839 + $0x30] sm:$0xf]
  %v3853 = vld [vmem:[%s3839 + $0x34] sm:$0xf]
  %v3854 = vld [vmem:[%s3839 + $0x38] sm:$0xf]
  %v3855 = vld [vmem:[%s3839 + $0x3c] sm:$0xf]
  %v3856 = vlaneseq
  %v3857 = vshrl.u32 %v3856, 7
  %v3858 = vsub.s32 0, %v3857
  %v3859 = vrot.slane %v3105, %v3858
  %v3876 = vunpack.c.l.b16 %v3840
  %v3877 = vunpack.c.l.b16 %v3841
  %v3878 = vunpack.c.l.b16 %v3842
  %v3879 = vunpack.c.l.b16 %v3843
  %v3880 = vunpack.c.l.b16 %v3844
  %v3881 = vunpack.c.l.b16 %v3845
  %v3882 = vunpack.c.l.b16 %v3846
  %v3883 = vunpack.c.l.b16 %v3847
  %v3884 = vunpack.c.l.b16 %v3848
  %v3885 = vunpack.c.l.b16 %v3849
  %v3886 = vunpack.c.l.b16 %v3850
  %v3887 = vunpack.c.l.b16 %v3851
  %v3888 = vunpack.c.l.b16 %v3852
  %v3889 = vunpack.c.l.b16 %v3853
  %v3890 = vunpack.c.l.b16 %v3854
  %v3891 = vunpack.c.l.b16 %v3855
  %v3892 = vpack.c.b16 %v3877, %v3876
  %v3893 = vpack.c.b16 %v3879, %v3878
  %v3894 = vpack.c.b16 %v3881, %v3880
  %v3895 = vpack.c.b16 %v3883, %v3882
  %v3896 = vpack.c.b16 %v3885, %v3884
  %v3897 = vpack.c.b16 %v3887, %v3886
  %v3898 = vpack.c.b16 %v3889, %v3888
  %v3899 = vpack.c.b16 %v3891, %v3890
  %3908 = vmatprep.subr.bf16.mxu0 0
  %3909 = vmatpush1.bf16.msra.mxu0 %v3892
  %3910 = vmatprep.subr.bf16.mxu0 0
  %3911 = vmatpush1.bf16.msra.mxu0 %v3893
  %3912 = vmatprep.subr.bf16.mxu0 0
  %3913 = vmatpush1.bf16.msra.mxu0 %v3894
  %3914 = vmatprep.subr.bf16.mxu0 0
  %3915 = vmatpush1.bf16.msra.mxu0 %v3895
  %3916 = vmatprep.subr.bf16.mxu0 0
  %3917 = vmatpush1.bf16.msra.mxu0 %v3896
  %3918 = vmatprep.subr.bf16.mxu0 0
  %3919 = vmatpush1.bf16.msra.mxu0 %v3897
  %3920 = vmatprep.subr.bf16.mxu0 0
  %3921 = vmatpush1.bf16.msra.mxu0 %v3898
  %3922 = vmatprep.subr.bf16.mxu0 0
  %3923 = vmatpush1.bf16.msra.mxu0 %v3899
  %3924 = vmatprep.subr.bf16.mxu0 0
  %3925 = vmatpush1.bf16.msra.mxu0 0
  %3926 = vmatprep.subr.bf16.mxu0 0
  %3927 = vmatpush1.bf16.msra.mxu0 0
  %3928 = vmatprep.subr.bf16.mxu0 0
  %3929 = vmatpush1.bf16.msra.mxu0 0
  %3930 = vmatprep.subr.bf16.mxu0 0
  %3931 = vmatpush1.bf16.msra.mxu0 0
  %3932 = vmatprep.subr.bf16.mxu0 0
  %3933 = vmatpush1.bf16.msra.mxu0 0
  %3934 = vmatprep.subr.bf16.mxu0 0
  %3935 = vmatpush1.bf16.msra.mxu0 0
  %3936 = vmatprep.subr.bf16.mxu0 0
  %3937 = vmatpush1.bf16.msra.mxu0 0
  %3938 = vmatprep.subr.bf16.mxu0 0
  %3939 = vmatpush1.bf16.msra.mxu0 0
  %3940 = vmatprep.mubr.bf16.mxu0 0
  %3941 = vmatmul.mubr.bf16.gmra.mrb[0].mxu0 %v3837
  %v3942 = vpop.f32.mrb[0].mxu0
  %v3943 = vadd.f32 %v3859, %v3942
  %v3944 = vpop.f32.mrb[0].mxu0
  %v3945 = vpop.f32.mrb[0].mxu0
  %v3946 = vadd.f32 %v3859, %v3945
  %v3947 = vpop.f32.mrb[0].mxu0
  %3948 = vmatprep.mubr.bf16.mxu0 0
  %3949 = vmatmul.mubr.bf16.gmra.mrb[0].mxu0 %v3838
  %v3950 = vpop.f32.mrb[0].mxu0
  %v3951 = vadd.f32 %v3859, %v3950
  %v3952 = vpop.f32.mrb[0].mxu0
  %v3953 = vpop.f32.mrb[0].mxu0
  %v3954 = vpop.f32.mrb[0].mxu0
  %3955 = vdwg.mxu0
  %v3956 = vlaneseq
  %v3957 = vshrl.u32 %v3956, 7
  %v3958 = vsub.s32 1, %v3957
  %v3959 = vrot.slane %v3105, %v3958
  %v3960 = vmul.f32 %v3959, %v3943
  %v3961 = vmul.f32 %v3959, %v3946
  %v3962 = vmul.f32 %v3959, %v3951
  %v3963 = vadd.f32 %v3677, %v3960
  %v3964 = vadd.f32 %v3678, %v3961
  %v3965 = vadd.f32 %v3679, %v3962
  %v3966 = vld [vmem:[%s9] sm:$0x1]
  %v3967 = vld [vmem:[%s9 + $0x1] sm:$0x1]
  %v3968 = vlaneseq
  %v3969 = vshrl.u32 %v3968, 7
  %v3970 = vsub.s32 0, %v3969
  %v3971 = vrot.slane %v3966, %v3970
  %v3972 = vmul.f32 %v1416, %v3971
  %v3973 = vmul.f32 %v1417, %v3971
  %v3974 = vlaneseq
  %v3975 = vshrl.u32 %v3974, 7
  %v3976 = vsub.s32 0, %v3975
  %v3977 = vrot.slane %v3967, %v3976
  %v3978 = vadd.f32 %v3972, %v3977
  %v3979 = vadd.f32 %v3973, %v3977
  %v3980 = vmul.f32 %v2279, %v3971
  %v3981 = vmul.f32 %v2280, %v3971
  %v3982 = vadd.f32 %v3980, %v3977
  %v3983 = vadd.f32 %v3981, %v3977
  %v3984 = vmul.f32 %v3142, %v3971
  %v3985 = vmul.f32 %v3143, %v3971
  %v3986 = vadd.f32 %v3984, %v3977
  %v3987 = vadd.f32 %v3985, %v3977
  %v3988 = vsel %vm515, %v3963, 0.0
  %3989 = vadd.xlane.f32.xlu0 %v3988
  %v3990 = vpop.xlane.xlu0 %3989
  %v3991 = vsel %vm515, %v3964, 0.0
  %3992 = vadd.xlane.f32.xlu0 %v3991
  %v3993 = vpop.xlane.xlu0 %3992
  %v3994 = vsel %vm522, %v3965, 0.0
  %3995 = vadd.xlane.f32.xlu0 %v3994
  %v3996 = vpop.xlane.xlu0 %3995
  %v3997 = vmul.f32 %v3990, %v526
  %v3998 = vmul.f32 %v3993, %v526
  %v3999 = vmul.f32 %v3996, %v526
  %v4000 = vsub.f32 %v3963, %v3997
  %v4001 = vsub.f32 %v3964, %v3998
  %v4002 = vsub.f32 %v3965, %v3999
  %v4003 = vmul.f32 %v4000, %v4000
  %v4004 = vmul.f32 %v4001, %v4001
  %v4005 = vmul.f32 %v4002, %v4002
  %v4006 = vsel %vm515, %v4003, 0.0
  %4007 = vadd.xlane.f32.xlu0 %v4006
  %v4008 = vpop.xlane.xlu0 %4007
  %v4009 = vsel %vm515, %v4004, 0.0
  %4010 = vadd.xlane.f32.xlu0 %v4009
  %v4011 = vpop.xlane.xlu0 %4010
  %v4012 = vsel %vm522, %v4005, 0.0
  %4013 = vadd.xlane.f32.xlu0 %v4012
  %v4014 = vpop.xlane.xlu0 %4013
  %v4015 = vmul.f32 %v4008, %v526
  %v4016 = vmul.f32 %v4011, %v526
  %v4017 = vmul.f32 %v4014, %v526
  %v4018 = vadd.f32 %v4015, 1e-06
  %v4019 = vadd.f32 %v4016, 1e-06
  %v4020 = vadd.f32 %v4017, 1e-06
  %v4021 = vrsqrt.pop %v4018
  %v4022 = vrsqrt.pop %v4019
  %v4023 = vrsqrt.pop %v4020
  %v4024 = vmul.f32 %v4000, %v4021
  %v4025 = vmul.f32 %v4001, %v4022
  %v4026 = vmul.f32 %v4002, %v4023
  %v4027 = vmul.f32 %v4024, %v3971
  %v4028 = vmul.f32 %v4025, %v3971
  %v4029 = vmul.f32 %v4026, %v3971
  %v4030 = vadd.f32 %v4027, %v3977
  %v4031 = vadd.f32 %v4028, %v3977
  %v4032 = vadd.f32 %v4029, %v3977
  %v4033 = vsel %vm500, %v3978, %v3979
  %v4034 = vsel %vm500, %v3982, %v3983
  %v4035 = vsel %vm500, %v3986, %v3987
  %v4036 = vsel %vm500, %v4030, %v4031
  %vm4039 = vcmask 1042432
  %v4040 = vrot.slane %v4030, 5
  %v4041 = vrot.slane %v4031, 5
  %v4042 = vsel %vm4039, %v4040, %v4041
  %vm4044 = vcmask 257024
  %v4045 = vsel %vm4044, %v4042, 0.0
  %v4046 = vrot.slane %v4045, 4
  %v4047 = vadd.f32 %v4045, %v4046
  %v4048 = vrot.slane %v4047, 2
  %v4049 = vadd.f32 %v4047, %v4048
  %v4050 = vrot.slane %v4049, 1
  %v4051 = vadd.f32 %v4049, %v4050
  %v4052 = vrcp.pop 4.0
  %v4053 = vmul.f32 %v4051, %v4052
  %vm4055 = vcmask 1041408
  %v4056 = vrot.slane %v4031, 6
  %v4057 = vrot.slane %v4032, 6
  %v4058 = vsel %vm4055, %v4056, %v4057
  %v4060 = vsel %vm4044, %v4058, 0.0
  %v4061 = vrot.slane %v4060, 4
  %v4062 = vadd.f32 %v4060, %v4061
  %v4063 = vrot.slane %v4062, 2
  %v4064 = vadd.f32 %v4062, %v4063
  %v4065 = vrot.slane %v4064, 1
  %v4066 = vadd.f32 %v4064, %v4065
  %v4067 = vmul.f32 %v4066, %v4052
  %v4068 = vsel %vm500, %v4053, %v4067
  %4070 = vrot.lane.b32.xlu0 %v4034, 32
  %v4071 = vpop.permute.xlu0 %4070
  %4074 = vrot.lane.b32.xlu0 %v4035, 64
  %v4075 = vpop.permute.xlu0 %4074
  %4078 = vrot.lane.b32.xlu0 %v4036, 96
  %v4079 = vpop.permute.xlu0 %4078
  %v4081 = vsel %vm515, %v4033, %v4071
  %vm4082 = vcmask 523264
  %v4083 = vsel %vm4082, %v4081, %v4075
  %vm4084 = vcmask 785408
  %v4085 = vsel %vm4084, %v4083, %v4079
  %v4086 = vld [vmem:[%s14] sm:$0xff]
  %v4087 = vld [vmem:[%s14 + $0x8] sm:$0xff]
  %v4088 = vld [vmem:[%s14 + $0x10] sm:$0xff]
  %v4089 = vld [vmem:[%s14 + $0x18] sm:$0xff]
  %v4090 = vld [vmem:[%s10] sm:$0xff]
  %v4091 = vld [vmem:[%s10 + $0x8] sm:$0xff]
  %v4092 = vld [vmem:[%s10 + $0x10] sm:$0xff]
  %v4093 = vld [vmem:[%s10 + $0x18] sm:$0xff]
  %v4094 = vld [vmem:[%s10 + $0x20] sm:$0xff]
  %v4095 = vld [vmem:[%s10 + $0x28] sm:$0xff]
  %v4096 = vld [vmem:[%s10 + $0x30] sm:$0xff]
  %v4097 = vld [vmem:[%s10 + $0x38] sm:$0xff]
  %v4098 = vld [vmem:[%s10 + $0x40] sm:$0xff]
  %v4099 = vld [vmem:[%s10 + $0x48] sm:$0xff]
  %v4100 = vld [vmem:[%s10 + $0x50] sm:$0xff]
  %v4101 = vld [vmem:[%s10 + $0x58] sm:$0xff]
  %v4102 = vld [vmem:[%s10 + $0x60] sm:$0xff]
  %v4103 = vld [vmem:[%s10 + $0x68] sm:$0xff]
  %v4104 = vld [vmem:[%s10 + $0x70] sm:$0xff]
  %v4105 = vld [vmem:[%s10 + $0x78] sm:$0xff]
  %v4106 = vld [vmem:[%s10 + $0x80] sm:$0xff]
  %v4107 = vld [vmem:[%s10 + $0x88] sm:$0xff]
  %v4108 = vld [vmem:[%s10 + $0x90] sm:$0xff]
  %v4109 = vld [vmem:[%s10 + $0x98] sm:$0xff]
  %v4110 = vld [vmem:[%s10 + $0xa0] sm:$0xff]
  %v4111 = vld [vmem:[%s10 + $0xa8] sm:$0xff]
  %v4112 = vld [vmem:[%s10 + $0xb0] sm:$0xff]
  %v4113 = vld [vmem:[%s10 + $0xb8] sm:$0xff]
  %v4114 = vld [vmem:[%s10 + $0xc0] sm:$0xff]
  %v4115 = vld [vmem:[%s10 + $0xc8] sm:$0xff]
  %v4116 = vld [vmem:[%s10 + $0xd0] sm:$0xff]
  %v4117 = vld [vmem:[%s10 + $0xd8] sm:$0xff]
  %v4118 = vld [vmem:[%s10 + $0xe0] sm:$0xff]
  %v4119 = vld [vmem:[%s10 + $0xe8] sm:$0xff]
  %v4120 = vld [vmem:[%s10 + $0xf0] sm:$0xff]
  %v4121 = vld [vmem:[%s10 + $0xf8] sm:$0xff]
  %v4122 = vld [vmem:[%s10 + $0x100] sm:$0xff]
  %v4123 = vld [vmem:[%s10 + $0x108] sm:$0xff]
  %v4124 = vld [vmem:[%s10 + $0x110] sm:$0xff]
  %v4125 = vld [vmem:[%s10 + $0x118] sm:$0xff]
  %v4126 = vld [vmem:[%s10 + $0x120] sm:$0xff]
  %v4127 = vld [vmem:[%s10 + $0x128] sm:$0xff]
  %v4128 = vld [vmem:[%s10 + $0x130] sm:$0xff]
  %v4129 = vld [vmem:[%s10 + $0x138] sm:$0xff]
  %v4130 = vld [vmem:[%s10 + $0x140] sm:$0xff]
  %v4131 = vld [vmem:[%s10 + $0x148] sm:$0xff]
  %v4132 = vld [vmem:[%s10 + $0x150] sm:$0xff]
  %v4133 = vld [vmem:[%s10 + $0x158] sm:$0xff]
  %v4134 = vld [vmem:[%s10 + $0x160] sm:$0xff]
  %v4135 = vld [vmem:[%s10 + $0x168] sm:$0xff]
  %v4136 = vld [vmem:[%s10 + $0x170] sm:$0xff]
  %v4137 = vld [vmem:[%s10 + $0x178] sm:$0xff]
  %v4138 = vld [vmem:[%s10 + $0x180] sm:$0xff]
  %v4139 = vld [vmem:[%s10 + $0x188] sm:$0xff]
  %v4140 = vld [vmem:[%s10 + $0x190] sm:$0xff]
  %v4141 = vld [vmem:[%s10 + $0x198] sm:$0xff]
  %v4142 = vld [vmem:[%s10 + $0x1a0] sm:$0xff]
  %v4143 = vld [vmem:[%s10 + $0x1a8] sm:$0xff]
  %v4144 = vld [vmem:[%s10 + $0x1b0] sm:$0xff]
  %v4145 = vld [vmem:[%s10 + $0x1b8] sm:$0xff]
  %v4146 = vld [vmem:[%s10 + $0x1c0] sm:$0xff]
  %v4147 = vld [vmem:[%s10 + $0x1c8] sm:$0xff]
  %v4148 = vld [vmem:[%s10 + $0x1d0] sm:$0xff]
  %v4149 = vld [vmem:[%s10 + $0x1d8] sm:$0xff]
  %v4150 = vld [vmem:[%s10 + $0x1e0] sm:$0xff]
  %v4151 = vld [vmem:[%s10 + $0x1e8] sm:$0xff]
  %v4152 = vld [vmem:[%s10 + $0x1f0] sm:$0xff]
  %v4153 = vld [vmem:[%s10 + $0x1f8] sm:$0xff]
  %v4154 = vld [vmem:[%s10 + $0x200] sm:$0xff]
  %v4155 = vld [vmem:[%s10 + $0x208] sm:$0xff]
  %v4156 = vld [vmem:[%s10 + $0x210] sm:$0xff]
  %v4157 = vld [vmem:[%s10 + $0x218] sm:$0xff]
  %v4158 = vld [vmem:[%s10 + $0x220] sm:$0xff]
  %v4159 = vld [vmem:[%s10 + $0x228] sm:$0xff]
  %v4160 = vld [vmem:[%s10 + $0x230] sm:$0xff]
  %v4161 = vld [vmem:[%s10 + $0x238] sm:$0xff]
  %v4162 = vld [vmem:[%s10 + $0x240] sm:$0xff]
  %v4163 = vld [vmem:[%s10 + $0x248] sm:$0xff]
  %v4164 = vld [vmem:[%s10 + $0x250] sm:$0xff]
  %v4165 = vld [vmem:[%s10 + $0x258] sm:$0xff]
  %v4166 = vld [vmem:[%s10 + $0x260] sm:$0xff]
  %v4167 = vld [vmem:[%s10 + $0x268] sm:$0xff]
  %v4168 = vld [vmem:[%s10 + $0x270] sm:$0xff]
  %v4169 = vld [vmem:[%s10 + $0x278] sm:$0xff]
  %v4170 = vpack.c.bf16 %v4085, %v4085
  %v4171 = vpack.c.bf16 %v4068, %v4068
  %v4176 = vlaneseq
  %v4177 = vshrl.u32 %v4176, 7
  %v4178 = vsub.s32 0, %v4177
  %v4179 = vrot.slane %v4086, %v4178
  %v4180 = vlaneseq
  %v4181 = vshrl.u32 %v4180, 7
  %v4182 = vsub.s32 4, %v4181
  %v4183 = vrot.slane %v4086, %v4182
  %v4184 = vlaneseq
  %v4185 = vshrl.u32 %v4184, 7
  %v4186 = vsub.s32 0, %v4185
  %v4187 = vrot.slane %v4087, %v4186
  %v4188 = vlaneseq
  %v4189 = vshrl.u32 %v4188, 7
  %v4190 = vsub.s32 4, %v4189
  %v4191 = vrot.slane %v4087, %v4190
  %v4192 = vlaneseq
  %v4193 = vshrl.u32 %v4192, 7
  %v4194 = vsub.s32 0, %v4193
  %v4195 = vrot.slane %v4088, %v4194
  %v4196 = vlaneseq
  %v4197 = vshrl.u32 %v4196, 7
  %v4198 = vsub.s32 4, %v4197
  %v4199 = vrot.slane %v4088, %v4198
  %v4200 = vlaneseq
  %v4201 = vshrl.u32 %v4200, 7
  %v4202 = vsub.s32 0, %v4201
  %v4203 = vrot.slane %v4089, %v4202
  %v4204 = vlaneseq
  %v4205 = vshrl.u32 %v4204, 7
  %v4206 = vsub.s32 4, %v4205
  %v4207 = vrot.slane %v4089, %v4206
  %v4216 = vlaneseq
  %v4217 = vshrl.u32 %v4216, 7
  %v4218 = vsub.s32 0, %v4217
  %v4219 = vrot.slane %v4179, %v4218
  %v4220 = vlaneseq
  %v4221 = vshrl.u32 %v4220, 7
  %v4222 = vsub.s32 0, %v4221
  %v4223 = vrot.slane %v4183, %v4222
  %v4224 = vlaneseq
  %v4225 = vshrl.u32 %v4224, 7
  %v4226 = vsub.s32 0, %v4225
  %v4227 = vrot.slane %v4187, %v4226
  %v4228 = vlaneseq
  %v4229 = vshrl.u32 %v4228, 7
  %v4230 = vsub.s32 0, %v4229
  %v4231 = vrot.slane %v4191, %v4230
  %v4232 = vlaneseq
  %v4233 = vshrl.u32 %v4232, 7
  %v4234 = vsub.s32 0, %v4233
  %v4235 = vrot.slane %v4195, %v4234
  %v4236 = vlaneseq
  %v4237 = vshrl.u32 %v4236, 7
  %v4238 = vsub.s32 0, %v4237
  %v4239 = vrot.slane %v4199, %v4238
  %v4240 = vlaneseq
  %v4241 = vshrl.u32 %v4240, 7
  %v4242 = vsub.s32 0, %v4241
  %v4243 = vrot.slane %v4203, %v4242
  %v4244 = vlaneseq
  %v4245 = vshrl.u32 %v4244, 7
  %v4246 = vsub.s32 0, %v4245
  %v4247 = vrot.slane %v4207, %v4246
  %v4328 = vunpack.c.l.b16 %v4090
  %v4329 = vunpack.c.h.b16 %v4090
  %v4330 = vunpack.c.l.b16 %v4091
  %v4331 = vunpack.c.h.b16 %v4091
  %v4332 = vunpack.c.l.b16 %v4092
  %v4333 = vunpack.c.h.b16 %v4092
  %v4334 = vunpack.c.l.b16 %v4093
  %v4335 = vunpack.c.h.b16 %v4093
  %v4336 = vunpack.c.l.b16 %v4094
  %v4337 = vunpack.c.h.b16 %v4094
  %v4338 = vunpack.c.l.b16 %v4095
  %v4339 = vunpack.c.h.b16 %v4095
  %v4340 = vunpack.c.l.b16 %v4096
  %v4341 = vunpack.c.h.b16 %v4096
  %v4342 = vunpack.c.l.b16 %v4097
  %v4343 = vunpack.c.h.b16 %v4097
  %v4344 = vunpack.c.l.b16 %v4098
  %v4345 = vunpack.c.h.b16 %v4098
  %v4346 = vunpack.c.l.b16 %v4099
  %v4347 = vunpack.c.h.b16 %v4099
  %v4348 = vunpack.c.l.b16 %v4100
  %v4349 = vunpack.c.h.b16 %v4100
  %v4350 = vunpack.c.l.b16 %v4101
  %v4351 = vunpack.c.h.b16 %v4101
  %v4352 = vunpack.c.l.b16 %v4102
  %v4353 = vunpack.c.h.b16 %v4102
  %v4354 = vunpack.c.l.b16 %v4103
  %v4355 = vunpack.c.h.b16 %v4103
  %v4356 = vunpack.c.l.b16 %v4104
  %v4357 = vunpack.c.h.b16 %v4104
  %v4358 = vunpack.c.l.b16 %v4105
  %v4359 = vunpack.c.h.b16 %v4105
  %v4360 = vunpack.c.l.b16 %v4106
  %v4361 = vunpack.c.h.b16 %v4106
  %v4362 = vunpack.c.l.b16 %v4107
  %v4363 = vunpack.c.h.b16 %v4107
  %v4364 = vunpack.c.l.b16 %v4108
  %v4365 = vunpack.c.h.b16 %v4108
  %v4366 = vunpack.c.l.b16 %v4109
  %v4367 = vunpack.c.h.b16 %v4109
  %v4368 = vunpack.c.l.b16 %v4110
  %v4369 = vunpack.c.h.b16 %v4110
  %v4370 = vunpack.c.l.b16 %v4111
  %v4371 = vunpack.c.h.b16 %v4111
  %v4372 = vunpack.c.l.b16 %v4112
  %v4373 = vunpack.c.h.b16 %v4112
  %v4374 = vunpack.c.l.b16 %v4113
  %v4375 = vunpack.c.h.b16 %v4113
  %v4376 = vunpack.c.l.b16 %v4114
  %v4377 = vunpack.c.h.b16 %v4114
  %v4378 = vunpack.c.l.b16 %v4115
  %v4379 = vunpack.c.h.b16 %v4115
  %v4380 = vunpack.c.l.b16 %v4116
  %v4381 = vunpack.c.h.b16 %v4116
  %v4382 = vunpack.c.l.b16 %v4117
  %v4383 = vunpack.c.h.b16 %v4117
  %v4384 = vunpack.c.l.b16 %v4118
  %v4385 = vunpack.c.h.b16 %v4118
  %v4386 = vunpack.c.l.b16 %v4119
  %v4387 = vunpack.c.h.b16 %v4119
  %v4388 = vunpack.c.l.b16 %v4120
  %v4389 = vunpack.c.h.b16 %v4120
  %v4390 = vunpack.c.l.b16 %v4121
  %v4391 = vunpack.c.h.b16 %v4121
  %v4392 = vunpack.c.l.b16 %v4122
  %v4393 = vunpack.c.h.b16 %v4122
  %v4394 = vunpack.c.l.b16 %v4123
  %v4395 = vunpack.c.h.b16 %v4123
  %v4396 = vunpack.c.l.b16 %v4124
  %v4397 = vunpack.c.h.b16 %v4124
  %v4398 = vunpack.c.l.b16 %v4125
  %v4399 = vunpack.c.h.b16 %v4125
  %v4400 = vunpack.c.l.b16 %v4126
  %v4401 = vunpack.c.h.b16 %v4126
  %v4402 = vunpack.c.l.b16 %v4127
  %v4403 = vunpack.c.h.b16 %v4127
  %v4404 = vunpack.c.l.b16 %v4128
  %v4405 = vunpack.c.h.b16 %v4128
  %v4406 = vunpack.c.l.b16 %v4129
  %v4407 = vunpack.c.h.b16 %v4129
  %v4408 = vunpack.c.l.b16 %v4130
  %v4409 = vunpack.c.h.b16 %v4130
  %v4410 = vunpack.c.l.b16 %v4131
  %v4411 = vunpack.c.h.b16 %v4131
  %v4412 = vunpack.c.l.b16 %v4132
  %v4413 = vunpack.c.h.b16 %v4132
  %v4414 = vunpack.c.l.b16 %v4133
  %v4415 = vunpack.c.h.b16 %v4133
  %v4416 = vunpack.c.l.b16 %v4134
  %v4417 = vunpack.c.h.b16 %v4134
  %v4418 = vunpack.c.l.b16 %v4135
  %v4419 = vunpack.c.h.b16 %v4135
  %v4420 = vunpack.c.l.b16 %v4136
  %v4421 = vunpack.c.h.b16 %v4136
  %v4422 = vunpack.c.l.b16 %v4137
  %v4423 = vunpack.c.h.b16 %v4137
  %v4424 = vunpack.c.l.b16 %v4138
  %v4425 = vunpack.c.h.b16 %v4138
  %v4426 = vunpack.c.l.b16 %v4139
  %v4427 = vunpack.c.h.b16 %v4139
  %v4428 = vunpack.c.l.b16 %v4140
  %v4429 = vunpack.c.h.b16 %v4140
  %v4430 = vunpack.c.l.b16 %v4141
  %v4431 = vunpack.c.h.b16 %v4141
  %v4432 = vunpack.c.l.b16 %v4142
  %v4433 = vunpack.c.h.b16 %v4142
  %v4434 = vunpack.c.l.b16 %v4143
  %v4435 = vunpack.c.h.b16 %v4143
  %v4436 = vunpack.c.l.b16 %v4144
  %v4437 = vunpack.c.h.b16 %v4144
  %v4438 = vunpack.c.l.b16 %v4145
  %v4439 = vunpack.c.h.b16 %v4145
  %v4440 = vunpack.c.l.b16 %v4146
  %v4441 = vunpack.c.h.b16 %v4146
  %v4442 = vunpack.c.l.b16 %v4147
  %v4443 = vunpack.c.h.b16 %v4147
  %v4444 = vunpack.c.l.b16 %v4148
  %v4445 = vunpack.c.h.b16 %v4148
  %v4446 = vunpack.c.l.b16 %v4149
  %v4447 = vunpack.c.h.b16 %v4149
  %v4448 = vunpack.c.l.b16 %v4150
  %v4449 = vunpack.c.h.b16 %v4150
  %v4450 = vunpack.c.l.b16 %v4151
  %v4451 = vunpack.c.h.b16 %v4151
  %v4452 = vunpack.c.l.b16 %v4152
  %v4453 = vunpack.c.h.b16 %v4152
  %v4454 = vunpack.c.l.b16 %v4153
  %v4455 = vunpack.c.h.b16 %v4153
  %v4456 = vunpack.c.l.b16 %v4154
  %v4457 = vunpack.c.h.b16 %v4154
  %v4458 = vunpack.c.l.b16 %v4155
  %v4459 = vunpack.c.h.b16 %v4155
  %v4460 = vunpack.c.l.b16 %v4156
  %v4461 = vunpack.c.h.b16 %v4156
  %v4462 = vunpack.c.l.b16 %v4157
  %v4463 = vunpack.c.h.b16 %v4157
  %v4464 = vunpack.c.l.b16 %v4158
  %v4465 = vunpack.c.h.b16 %v4158
  %v4466 = vunpack.c.l.b16 %v4159
  %v4467 = vunpack.c.h.b16 %v4159
  %v4468 = vunpack.c.l.b16 %v4160
  %v4469 = vunpack.c.h.b16 %v4160
  %v4470 = vunpack.c.l.b16 %v4161
  %v4471 = vunpack.c.h.b16 %v4161
  %v4472 = vunpack.c.l.b16 %v4162
  %v4473 = vunpack.c.h.b16 %v4162
  %v4474 = vunpack.c.l.b16 %v4163
  %v4475 = vunpack.c.h.b16 %v4163
  %v4476 = vunpack.c.l.b16 %v4164
  %v4477 = vunpack.c.h.b16 %v4164
  %v4478 = vunpack.c.l.b16 %v4165
  %v4479 = vunpack.c.h.b16 %v4165
  %v4480 = vunpack.c.l.b16 %v4166
  %v4481 = vunpack.c.h.b16 %v4166
  %v4482 = vunpack.c.l.b16 %v4167
  %v4483 = vunpack.c.h.b16 %v4167
  %v4484 = vunpack.c.l.b16 %v4168
  %v4485 = vunpack.c.h.b16 %v4168
  %v4486 = vunpack.c.l.b16 %v4169
  %v4487 = vunpack.c.h.b16 %v4169
  %v4488 = vpack.c.b16 %v4336, %v4328
  %v4489 = vpack.c.b16 %v4337, %v4329
  %v4490 = vpack.c.b16 %v4338, %v4330
  %v4491 = vpack.c.b16 %v4339, %v4331
  %v4492 = vpack.c.b16 %v4340, %v4332
  %v4493 = vpack.c.b16 %v4341, %v4333
  %v4494 = vpack.c.b16 %v4342, %v4334
  %v4495 = vpack.c.b16 %v4343, %v4335
  %v4496 = vpack.c.b16 %v4352, %v4344
  %v4497 = vpack.c.b16 %v4353, %v4345
  %v4498 = vpack.c.b16 %v4354, %v4346
  %v4499 = vpack.c.b16 %v4355, %v4347
  %v4500 = vpack.c.b16 %v4356, %v4348
  %v4501 = vpack.c.b16 %v4357, %v4349
  %v4502 = vpack.c.b16 %v4358, %v4350
  %v4503 = vpack.c.b16 %v4359, %v4351
  %v4504 = vpack.c.b16 %v4368, %v4360
  %v4505 = vpack.c.b16 %v4369, %v4361
  %v4506 = vpack.c.b16 %v4370, %v4362
  %v4507 = vpack.c.b16 %v4371, %v4363
  %v4508 = vpack.c.b16 %v4372, %v4364
  %v4509 = vpack.c.b16 %v4373, %v4365
  %v4510 = vpack.c.b16 %v4374, %v4366
  %v4511 = vpack.c.b16 %v4375, %v4367
  %v4512 = vpack.c.b16 %v4384, %v4376
  %v4513 = vpack.c.b16 %v4385, %v4377
  %v4514 = vpack.c.b16 %v4386, %v4378
  %v4515 = vpack.c.b16 %v4387, %v4379
  %v4516 = vpack.c.b16 %v4388, %v4380
  %v4517 = vpack.c.b16 %v4389, %v4381
  %v4518 = vpack.c.b16 %v4390, %v4382
  %v4519 = vpack.c.b16 %v4391, %v4383
  %v4520 = vpack.c.b16 %v4400, %v4392
  %v4521 = vpack.c.b16 %v4401, %v4393
  %v4522 = vpack.c.b16 %v4402, %v4394
  %v4523 = vpack.c.b16 %v4403, %v4395
  %v4524 = vpack.c.b16 %v4404, %v4396
  %v4525 = vpack.c.b16 %v4405, %v4397
  %v4526 = vpack.c.b16 %v4406, %v4398
  %v4527 = vpack.c.b16 %v4407, %v4399
  %v4528 = vpack.c.b16 %v4416, %v4408
  %v4529 = vpack.c.b16 %v4417, %v4409
  %v4530 = vpack.c.b16 %v4418, %v4410
  %v4531 = vpack.c.b16 %v4419, %v4411
  %v4532 = vpack.c.b16 %v4420, %v4412
  %v4533 = vpack.c.b16 %v4421, %v4413
  %v4534 = vpack.c.b16 %v4422, %v4414
  %v4535 = vpack.c.b16 %v4423, %v4415
  %v4536 = vpack.c.b16 %v4432, %v4424
  %v4537 = vpack.c.b16 %v4433, %v4425
  %v4538 = vpack.c.b16 %v4434, %v4426
  %v4539 = vpack.c.b16 %v4435, %v4427
  %v4540 = vpack.c.b16 %v4436, %v4428
  %v4541 = vpack.c.b16 %v4437, %v4429
  %v4542 = vpack.c.b16 %v4438, %v4430
  %v4543 = vpack.c.b16 %v4439, %v4431
  %v4544 = vpack.c.b16 %v4448, %v4440
  %v4545 = vpack.c.b16 %v4449, %v4441
  %v4546 = vpack.c.b16 %v4450, %v4442
  %v4547 = vpack.c.b16 %v4451, %v4443
  %v4548 = vpack.c.b16 %v4452, %v4444
  %v4549 = vpack.c.b16 %v4453, %v4445
  %v4550 = vpack.c.b16 %v4454, %v4446
  %v4551 = vpack.c.b16 %v4455, %v4447
  %v4552 = vpack.c.b16 %v4464, %v4456
  %v4553 = vpack.c.b16 %v4465, %v4457
  %v4554 = vpack.c.b16 %v4466, %v4458
  %v4555 = vpack.c.b16 %v4467, %v4459
  %v4556 = vpack.c.b16 %v4468, %v4460
  %v4557 = vpack.c.b16 %v4469, %v4461
  %v4558 = vpack.c.b16 %v4470, %v4462
  %v4559 = vpack.c.b16 %v4471, %v4463
  %v4560 = vpack.c.b16 %v4480, %v4472
  %v4561 = vpack.c.b16 %v4481, %v4473
  %v4562 = vpack.c.b16 %v4482, %v4474
  %v4563 = vpack.c.b16 %v4483, %v4475
  %v4564 = vpack.c.b16 %v4484, %v4476
  %v4565 = vpack.c.b16 %v4485, %v4477
  %v4566 = vpack.c.b16 %v4486, %v4478
  %v4567 = vpack.c.b16 %v4487, %v4479
  %v4649 = vsel %vm515, %v4171, 0
  %4651 = vmatprep.subr.bf16.mxu0 %v4489
  %4652 = vmatpush1.bf16.msra.mxu0 %v4488
  %4653 = vmatprep.subr.bf16.mxu0 %v4497
  %4654 = vmatpush1.bf16.msra.mxu0 %v4496
  %4655 = vmatprep.subr.bf16.mxu0 %v4505
  %4656 = vmatpush1.bf16.msra.mxu0 %v4504
  %4657 = vmatprep.subr.bf16.mxu0 %v4513
  %4658 = vmatpush1.bf16.msra.mxu0 %v4512
  %4659 = vmatprep.subr.bf16.mxu0 %v4521
  %4660 = vmatpush1.bf16.msra.mxu0 %v4520
  %4661 = vmatprep.subr.bf16.mxu0 %v4529
  %4662 = vmatpush1.bf16.msra.mxu0 %v4528
  %4663 = vmatprep.subr.bf16.mxu0 %v4537
  %4664 = vmatpush1.bf16.msra.mxu0 %v4536
  %4665 = vmatprep.subr.bf16.mxu0 %v4545
  %4666 = vmatpush1.bf16.msra.mxu0 %v4544
  %4667 = vmatprep.subr.bf16.mxu0 %v4553
  %4668 = vmatpush1.bf16.msra.mxu0 %v4552
  %4669 = vmatprep.subr.bf16.mxu0 %v4561
  %4670 = vmatpush1.bf16.msra.mxu0 %v4560
  %4671 = vmatprep.subr.bf16.mxu0 0
  %4672 = vmatpush1.bf16.msra.mxu0 0
  %4673 = vmatprep.subr.bf16.mxu0 0
  %4674 = vmatpush1.bf16.msra.mxu0 0
  %4675 = vmatprep.subr.bf16.mxu0 0
  %4676 = vmatpush1.bf16.msra.mxu0 0
  %4677 = vmatprep.subr.bf16.mxu0 0
  %4678 = vmatpush1.bf16.msra.mxu0 0
  %4679 = vmatprep.subr.bf16.mxu0 0
  %4680 = vmatpush1.bf16.msra.mxu0 0
  %4681 = vmatprep.subr.bf16.mxu0 0
  %4682 = vmatpush1.bf16.msra.mxu0 0
  %4683 = vmatprep.mubr.bf16.mxu0 %v4649
  %4684 = vmatmul.mubr.bf16.gmra.mrb[0].mxu0 %v4170
  %v4685 = vpop.f32.mrb[0].mxu0
  %v4686 = vadd.f32 %v4219, %v4685
  %v4687 = vpop.f32.mrb[0].mxu0
  %v4688 = vadd.f32 %v4223, %v4687
  %v4689 = vpop.f32.mrb[0].mxu0
  %v4690 = vpop.f32.mrb[0].mxu0
  %4691 = vdwg.mxu0
  %4692 = vmatprep.subr.bf16.mxu0 %v4491
  %4693 = vmatpush1.bf16.msra.mxu0 %v4490
  %4694 = vmatprep.subr.bf16.mxu0 %v4499
  %4695 = vmatpush1.bf16.msra.mxu0 %v4498
  %4696 = vmatprep.subr.bf16.mxu0 %v4507
  %4697 = vmatpush1.bf16.msra.mxu0 %v4506
  %4698 = vmatprep.subr.bf16.mxu0 %v4515
  %4699 = vmatpush1.bf16.msra.mxu0 %v4514
  %4700 = vmatprep.subr.bf16.mxu0 %v4523
  %4701 = vmatpush1.bf16.msra.mxu0 %v4522
  %4702 = vmatprep.subr.bf16.mxu0 %v4531
  %4703 = vmatpush1.bf16.msra.mxu0 %v4530
  %4704 = vmatprep.subr.bf16.mxu0 %v4539
  %4705 = vmatpush1.bf16.msra.mxu0 %v4538
  %4706 = vmatprep.subr.bf16.mxu0 %v4547
  %4707 = vmatpush1.bf16.msra.mxu0 %v4546
  %4708 = vmatprep.subr.bf16.mxu0 %v4555
  %4709 = vmatpush1.bf16.msra.mxu0 %v4554
  %4710 = vmatprep.subr.bf16.mxu0 %v4563
  %4711 = vmatpush1.bf16.msra.mxu0 %v4562
  %4712 = vmatprep.subr.bf16.mxu0 0
  %4713 = vmatpush1.bf16.msra.mxu0 0
  %4714 = vmatprep.subr.bf16.mxu0 0
  %4715 = vmatpush1.bf16.msra.mxu0 0
  %4716 = vmatprep.subr.bf16.mxu0 0
  %4717 = vmatpush1.bf16.msra.mxu0 0
  %4718 = vmatprep.subr.bf16.mxu0 0
  %4719 = vmatpush1.bf16.msra.mxu0 0
  %4720 = vmatprep.subr.bf16.mxu0 0
  %4721 = vmatpush1.bf16.msra.mxu0 0
  %4722 = vmatprep.subr.bf16.mxu0 0
  %4723 = vmatpush1.bf16.msra.mxu0 0
  %4724 = vmatprep.mubr.bf16.mxu0 %v4649
  %4725 = vmatmul.mubr.bf16.gmra.mrb[0].mxu0 %v4170
  %v4726 = vpop.f32.mrb[0].mxu0
  %v4727 = vadd.f32 %v4227, %v4726
  %v4728 = vpop.f32.mrb[0].mxu0
  %v4729 = vadd.f32 %v4231, %v4728
  %v4730 = vpop.f32.mrb[0].mxu0
  %v4731 = vpop.f32.mrb[0].mxu0
  %4732 = vdwg.mxu0
  %4733 = vmatprep.subr.bf16.mxu0 %v4493
  %4734 = vmatpush1.bf16.msra.mxu0 %v4492
  %4735 = vmatprep.subr.bf16.mxu0 %v4501
  %4736 = vmatpush1.bf16.msra.mxu0 %v4500
  %4737 = vmatprep.subr.bf16.mxu0 %v4509
  %4738 = vmatpush1.bf16.msra.mxu0 %v4508
  %4739 = vmatprep.subr.bf16.mxu0 %v4517
  %4740 = vmatpush1.bf16.msra.mxu0 %v4516
  %4741 = vmatprep.subr.bf16.mxu0 %v4525
  %4742 = vmatpush1.bf16.msra.mxu0 %v4524
  %4743 = vmatprep.subr.bf16.mxu0 %v4533
  %4744 = vmatpush1.bf16.msra.mxu0 %v4532
  %4745 = vmatprep.subr.bf16.mxu0 %v4541
  %4746 = vmatpush1.bf16.msra.mxu0 %v4540
  %4747 = vmatprep.subr.bf16.mxu0 %v4549
  %4748 = vmatpush1.bf16.msra.mxu0 %v4548
  %4749 = vmatprep.subr.bf16.mxu0 %v4557
  %4750 = vmatpush1.bf16.msra.mxu0 %v4556
  %4751 = vmatprep.subr.bf16.mxu0 %v4565
  %4752 = vmatpush1.bf16.msra.mxu0 %v4564
  %4753 = vmatprep.subr.bf16.mxu0 0
  %4754 = vmatpush1.bf16.msra.mxu0 0
  %4755 = vmatprep.subr.bf16.mxu0 0
  %4756 = vmatpush1.bf16.msra.mxu0 0
  %4757 = vmatprep.subr.bf16.mxu0 0
  %4758 = vmatpush1.bf16.msra.mxu0 0
  %4759 = vmatprep.subr.bf16.mxu0 0
  %4760 = vmatpush1.bf16.msra.mxu0 0
  %4761 = vmatprep.subr.bf16.mxu0 0
  %4762 = vmatpush1.bf16.msra.mxu0 0
  %4763 = vmatprep.subr.bf16.mxu0 0
  %4764 = vmatpush1.bf16.msra.mxu0 0
  %4765 = vmatprep.mubr.bf16.mxu0 %v4649
  %4766 = vmatmul.mubr.bf16.gmra.mrb[0].mxu0 %v4170
  %v4767 = vpop.f32.mrb[0].mxu0
  %v4768 = vadd.f32 %v4235, %v4767
  %v4769 = vpop.f32.mrb[0].mxu0
  %v4770 = vadd.f32 %v4239, %v4769
  %v4771 = vpop.f32.mrb[0].mxu0
  %v4772 = vpop.f32.mrb[0].mxu0
  %4773 = vdwg.mxu0
  %4774 = vmatprep.subr.bf16.mxu0 %v4495
  %4775 = vmatpush1.bf16.msra.mxu0 %v4494
  %4776 = vmatprep.subr.bf16.mxu0 %v4503
  %4777 = vmatpush1.bf16.msra.mxu0 %v4502
  %4778 = vmatprep.subr.bf16.mxu0 %v4511
  %4779 = vmatpush1.bf16.msra.mxu0 %v4510
  %4780 = vmatprep.subr.bf16.mxu0 %v4519
  %4781 = vmatpush1.bf16.msra.mxu0 %v4518
  %4782 = vmatprep.subr.bf16.mxu0 %v4527
  %4783 = vmatpush1.bf16.msra.mxu0 %v4526
  %4784 = vmatprep.subr.bf16.mxu0 %v4535
  %4785 = vmatpush1.bf16.msra.mxu0 %v4534
  %4786 = vmatprep.subr.bf16.mxu0 %v4543
  %4787 = vmatpush1.bf16.msra.mxu0 %v4542
  %4788 = vmatprep.subr.bf16.mxu0 %v4551
  %4789 = vmatpush1.bf16.msra.mxu0 %v4550
  %4790 = vmatprep.subr.bf16.mxu0 %v4559
  %4791 = vmatpush1.bf16.msra.mxu0 %v4558
  %4792 = vmatprep.subr.bf16.mxu0 %v4567
  %4793 = vmatpush1.bf16.msra.mxu0 %v4566
  %4794 = vmatprep.subr.bf16.mxu0 0
  %4795 = vmatpush1.bf16.msra.mxu0 0
  %4796 = vmatprep.subr.bf16.mxu0 0
  %4797 = vmatpush1.bf16.msra.mxu0 0
  %4798 = vmatprep.subr.bf16.mxu0 0
  %4799 = vmatpush1.bf16.msra.mxu0 0
  %4800 = vmatprep.subr.bf16.mxu0 0
  %4801 = vmatpush1.bf16.msra.mxu0 0
  %4802 = vmatprep.subr.bf16.mxu0 0
  %4803 = vmatpush1.bf16.msra.mxu0 0
  %4804 = vmatprep.subr.bf16.mxu0 0
  %4805 = vmatpush1.bf16.msra.mxu0 0
  %4806 = vmatprep.mubr.bf16.mxu0 %v4649
  %4807 = vmatmul.mubr.bf16.gmra.mrb[0].mxu0 %v4170
  %v4808 = vpop.f32.mrb[0].mxu0
  %v4809 = vadd.f32 %v4243, %v4808
  %v4810 = vpop.f32.mrb[0].mxu0
  %v4811 = vadd.f32 %v4247, %v4810
  %v4812 = vpop.f32.mrb[0].mxu0
  %v4813 = vpop.f32.mrb[0].mxu0
  %4814 = vdwg.mxu0
  %v4815 = vmax.f32 %v4686, 0.0
  %v4816 = vmax.f32 %v4688, 0.0
  %v4817 = vmax.f32 %v4727, 0.0
  %v4818 = vmax.f32 %v4729, 0.0
  %v4819 = vmax.f32 %v4768, 0.0
  %v4820 = vmax.f32 %v4770, 0.0
  %v4821 = vmax.f32 %v4809, 0.0
  %v4822 = vmax.f32 %v4811, 0.0
  %v4823 = vld [vmem:[%s11] sm:$0xff]
  %v4824 = vld [vmem:[%s11 + $0x8] sm:$0xff]
  %v4825 = vld [vmem:[%s11 + $0x10] sm:$0xff]
  %v4826 = vld [vmem:[%s11 + $0x18] sm:$0xff]
  %v4827 = vld [vmem:[%s11 + $0x20] sm:$0xff]
  %v4828 = vld [vmem:[%s11 + $0x28] sm:$0xff]
  %v4829 = vld [vmem:[%s11 + $0x30] sm:$0xff]
  %v4830 = vld [vmem:[%s11 + $0x38] sm:$0xff]
  %v4831 = vld [vmem:[%s11 + $0x40] sm:$0xff]
  %v4832 = vld [vmem:[%s11 + $0x48] sm:$0xff]
  %v4833 = vld [vmem:[%s11 + $0x50] sm:$0xff]
  %v4834 = vld [vmem:[%s11 + $0x58] sm:$0xff]
  %v4835 = vld [vmem:[%s11 + $0x60] sm:$0xff]
  %v4836 = vld [vmem:[%s11 + $0x68] sm:$0xff]
  %v4837 = vld [vmem:[%s11 + $0x70] sm:$0xff]
  %v4838 = vld [vmem:[%s11 + $0x78] sm:$0xff]
  %v4839 = vld [vmem:[%s11 + $0x80] sm:$0xff]
  %v4840 = vld [vmem:[%s11 + $0x88] sm:$0xff]
  %v4841 = vld [vmem:[%s11 + $0x90] sm:$0xff]
  %v4842 = vld [vmem:[%s11 + $0x98] sm:$0xff]
  %v4843 = vld [vmem:[%s11 + $0xa0] sm:$0xff]
  %v4844 = vld [vmem:[%s11 + $0xa8] sm:$0xff]
  %v4845 = vld [vmem:[%s11 + $0xb0] sm:$0xff]
  %v4846 = vld [vmem:[%s11 + $0xb8] sm:$0xff]
  %v4847 = vld [vmem:[%s11 + $0xc0] sm:$0xff]
  %v4848 = vld [vmem:[%s11 + $0xc8] sm:$0xff]
  %v4849 = vld [vmem:[%s11 + $0xd0] sm:$0xff]
  %v4850 = vld [vmem:[%s11 + $0xd8] sm:$0xff]
  %v4851 = vld [vmem:[%s11 + $0xe0] sm:$0xff]
  %v4852 = vld [vmem:[%s11 + $0xe8] sm:$0xff]
  %v4853 = vld [vmem:[%s11 + $0xf0] sm:$0xff]
  %v4854 = vld [vmem:[%s11 + $0xf8] sm:$0xff]
  %v4855 = vld [vmem:[%s11 + $0x100] sm:$0xff]
  %v4856 = vld [vmem:[%s11 + $0x108] sm:$0xff]
  %v4857 = vld [vmem:[%s11 + $0x110] sm:$0xff]
  %v4858 = vld [vmem:[%s11 + $0x118] sm:$0xff]
  %v4859 = vld [vmem:[%s11 + $0x120] sm:$0xff]
  %v4860 = vld [vmem:[%s11 + $0x128] sm:$0xff]
  %v4861 = vld [vmem:[%s11 + $0x130] sm:$0xff]
  %v4862 = vld [vmem:[%s11 + $0x138] sm:$0xff]
  %v4863 = vld [vmem:[%s11 + $0x140] sm:$0xff]
  %v4864 = vld [vmem:[%s11 + $0x148] sm:$0xff]
  %v4865 = vld [vmem:[%s11 + $0x150] sm:$0xff]
  %v4866 = vld [vmem:[%s11 + $0x158] sm:$0xff]
  %v4867 = vld [vmem:[%s11 + $0x160] sm:$0xff]
  %v4868 = vld [vmem:[%s11 + $0x168] sm:$0xff]
  %v4869 = vld [vmem:[%s11 + $0x170] sm:$0xff]
  %v4870 = vld [vmem:[%s11 + $0x178] sm:$0xff]
  %v4871 = vld [vmem:[%s11 + $0x180] sm:$0xff]
  %v4872 = vld [vmem:[%s11 + $0x188] sm:$0xff]
  %v4873 = vld [vmem:[%s11 + $0x190] sm:$0xff]
  %v4874 = vld [vmem:[%s11 + $0x198] sm:$0xff]
  %v4875 = vld [vmem:[%s11 + $0x1a0] sm:$0xff]
  %v4876 = vld [vmem:[%s11 + $0x1a8] sm:$0xff]
  %v4877 = vld [vmem:[%s11 + $0x1b0] sm:$0xff]
  %v4878 = vld [vmem:[%s11 + $0x1b8] sm:$0xff]
  %v4879 = vld [vmem:[%s11 + $0x1c0] sm:$0xff]
  %v4880 = vld [vmem:[%s11 + $0x1c8] sm:$0xff]
  %v4881 = vld [vmem:[%s11 + $0x1d0] sm:$0xff]
  %v4882 = vld [vmem:[%s11 + $0x1d8] sm:$0xff]
  %v4883 = vld [vmem:[%s11 + $0x1e0] sm:$0xff]
  %v4884 = vld [vmem:[%s11 + $0x1e8] sm:$0xff]
  %v4885 = vld [vmem:[%s11 + $0x1f0] sm:$0xff]
  %v4886 = vld [vmem:[%s11 + $0x1f8] sm:$0xff]
  %v4887 = vld [vmem:[%s11 + $0x200] sm:$0xff]
  %v4888 = vld [vmem:[%s11 + $0x208] sm:$0xff]
  %v4889 = vld [vmem:[%s11 + $0x210] sm:$0xff]
  %v4890 = vld [vmem:[%s11 + $0x218] sm:$0xff]
  %v4891 = vld [vmem:[%s11 + $0x220] sm:$0xff]
  %v4892 = vld [vmem:[%s11 + $0x228] sm:$0xff]
  %v4893 = vld [vmem:[%s11 + $0x230] sm:$0xff]
  %v4894 = vld [vmem:[%s11 + $0x238] sm:$0xff]
  %v4895 = vld [vmem:[%s11 + $0x240] sm:$0xff]
  %v4896 = vld [vmem:[%s11 + $0x248] sm:$0xff]
  %v4897 = vld [vmem:[%s11 + $0x250] sm:$0xff]
  %v4898 = vld [vmem:[%s11 + $0x258] sm:$0xff]
  %v4899 = vld [vmem:[%s11 + $0x260] sm:$0xff]
  %v4900 = vld [vmem:[%s11 + $0x268] sm:$0xff]
  %v4901 = vld [vmem:[%s11 + $0x270] sm:$0xff]
  %v4902 = vld [vmem:[%s11 + $0x278] sm:$0xff]
  %v4903 = vld [vmem:[%s11 + $0x280] sm:$0xff]
  %v4904 = vld [vmem:[%s11 + $0x288] sm:$0xff]
  %v4905 = vld [vmem:[%s11 + $0x290] sm:$0xff]
  %v4906 = vld [vmem:[%s11 + $0x298] sm:$0xff]
  %v4907 = vld [vmem:[%s11 + $0x2a0] sm:$0xff]
  %v4908 = vld [vmem:[%s11 + $0x2a8] sm:$0xff]
  %v4909 = vld [vmem:[%s11 + $0x2b0] sm:$0xff]
  %v4910 = vld [vmem:[%s11 + $0x2b8] sm:$0xff]
  %v4911 = vld [vmem:[%s11 + $0x2c0] sm:$0xff]
  %v4912 = vld [vmem:[%s11 + $0x2c8] sm:$0xff]
  %v4913 = vld [vmem:[%s11 + $0x2d0] sm:$0xff]
  %v4914 = vld [vmem:[%s11 + $0x2d8] sm:$0xff]
  %v4915 = vld [vmem:[%s11 + $0x2e0] sm:$0xff]
  %v4916 = vld [vmem:[%s11 + $0x2e8] sm:$0xff]
  %v4917 = vld [vmem:[%s11 + $0x2f0] sm:$0xff]
  %v4918 = vld [vmem:[%s11 + $0x2f8] sm:$0xff]
  %v4919 = vld [vmem:[%s11 + $0x300] sm:$0xff]
  %v4920 = vld [vmem:[%s11 + $0x308] sm:$0xff]
  %v4921 = vld [vmem:[%s11 + $0x310] sm:$0xff]
  %v4922 = vld [vmem:[%s11 + $0x318] sm:$0xff]
  %v4923 = vld [vmem:[%s11 + $0x320] sm:$0xff]
  %v4924 = vld [vmem:[%s11 + $0x328] sm:$0xff]
  %v4925 = vld [vmem:[%s11 + $0x330] sm:$0xff]
  %v4926 = vld [vmem:[%s11 + $0x338] sm:$0xff]
  %v4927 = vld [vmem:[%s11 + $0x340] sm:$0xff]
  %v4928 = vld [vmem:[%s11 + $0x348] sm:$0xff]
  %v4929 = vld [vmem:[%s11 + $0x350] sm:$0xff]
  %v4930 = vld [vmem:[%s11 + $0x358] sm:$0xff]
  %v4931 = vld [vmem:[%s11 + $0x360] sm:$0xff]
  %v4932 = vld [vmem:[%s11 + $0x368] sm:$0xff]
  %v4933 = vld [vmem:[%s11 + $0x370] sm:$0xff]
  %v4934 = vld [vmem:[%s11 + $0x378] sm:$0xff]
  %v4935 = vld [vmem:[%s11 + $0x380] sm:$0xff]
  %v4936 = vld [vmem:[%s11 + $0x388] sm:$0xff]
  %v4937 = vld [vmem:[%s11 + $0x390] sm:$0xff]
  %v4938 = vld [vmem:[%s11 + $0x398] sm:$0xff]
  %v4939 = vld [vmem:[%s11 + $0x3a0] sm:$0xff]
  %v4940 = vld [vmem:[%s11 + $0x3a8] sm:$0xff]
  %v4941 = vld [vmem:[%s11 + $0x3b0] sm:$0xff]
  %v4942 = vld [vmem:[%s11 + $0x3b8] sm:$0xff]
  %v4943 = vld [vmem:[%s11 + $0x3c0] sm:$0xff]
  %v4944 = vld [vmem:[%s11 + $0x3c8] sm:$0xff]
  %v4945 = vld [vmem:[%s11 + $0x3d0] sm:$0xff]
  %v4946 = vld [vmem:[%s11 + $0x3d8] sm:$0xff]
  %v4947 = vld [vmem:[%s11 + $0x3e0] sm:$0xff]
  %v4948 = vld [vmem:[%s11 + $0x3e8] sm:$0xff]
  %v4949 = vld [vmem:[%s11 + $0x3f0] sm:$0xff]
  %v4950 = vld [vmem:[%s11 + $0x3f8] sm:$0xff]
  %v4951 = vpack.c.bf16 %v4815, %v4815
  %v4952 = vpack.c.bf16 %v4816, %v4816
  %v4953 = vpack.c.bf16 %v4817, %v4817
  %v4954 = vpack.c.bf16 %v4818, %v4818
  %v4955 = vpack.c.bf16 %v4819, %v4819
  %v4956 = vpack.c.bf16 %v4820, %v4820
  %v4957 = vpack.c.bf16 %v4821, %v4821
  %v4958 = vpack.c.bf16 %v4822, %v4822
  %v4959 = vlaneseq
  %v4960 = vshrl.u32 %v4959, 7
  %v4961 = vsub.s32 1, %v4960
  %v4962 = vrot.slane %v4086, %v4961
  %v4963 = vlaneseq
  %v4964 = vshrl.u32 %v4963, 7
  %v4965 = vsub.s32 5, %v4964
  %v4966 = vrot.slane %v4086, %v4965
  %v4969 = vlaneseq
  %v4970 = vshrl.u32 %v4969, 7
  %v4971 = vsub.s32 1, %v4970
  %v4972 = vrot.slane %v4962, %v4971
  %v4973 = vlaneseq
  %v4974 = vshrl.u32 %v4973, 7
  %v4975 = vsub.s32 1, %v4974
  %v4976 = vrot.slane %v4966, %v4975
  %v5105 = vunpack.c.l.b16 %v4823
  %v5106 = vunpack.c.h.b16 %v4823
  %v5107 = vunpack.c.l.b16 %v4824
  %v5108 = vunpack.c.h.b16 %v4824
  %v5109 = vunpack.c.l.b16 %v4825
  %v5110 = vunpack.c.h.b16 %v4825
  %v5111 = vunpack.c.l.b16 %v4826
  %v5112 = vunpack.c.h.b16 %v4826
  %v5113 = vunpack.c.l.b16 %v4827
  %v5114 = vunpack.c.h.b16 %v4827
  %v5115 = vunpack.c.l.b16 %v4828
  %v5116 = vunpack.c.h.b16 %v4828
  %v5117 = vunpack.c.l.b16 %v4829
  %v5118 = vunpack.c.h.b16 %v4829
  %v5119 = vunpack.c.l.b16 %v4830
  %v5120 = vunpack.c.h.b16 %v4830
  %v5121 = vunpack.c.l.b16 %v4831
  %v5122 = vunpack.c.h.b16 %v4831
  %v5123 = vunpack.c.l.b16 %v4832
  %v5124 = vunpack.c.h.b16 %v4832
  %v5125 = vunpack.c.l.b16 %v4833
  %v5126 = vunpack.c.h.b16 %v4833
  %v5127 = vunpack.c.l.b16 %v4834
  %v5128 = vunpack.c.h.b16 %v4834
  %v5129 = vunpack.c.l.b16 %v4835
  %v5130 = vunpack.c.h.b16 %v4835
  %v5131 = vunpack.c.l.b16 %v4836
  %v5132 = vunpack.c.h.b16 %v4836
  %v5133 = vunpack.c.l.b16 %v4837
  %v5134 = vunpack.c.h.b16 %v4837
  %v5135 = vunpack.c.l.b16 %v4838
  %v5136 = vunpack.c.h.b16 %v4838
  %v5137 = vunpack.c.l.b16 %v4839
  %v5138 = vunpack.c.h.b16 %v4839
  %v5139 = vunpack.c.l.b16 %v4840
  %v5140 = vunpack.c.h.b16 %v4840
  %v5141 = vunpack.c.l.b16 %v4841
  %v5142 = vunpack.c.h.b16 %v4841
  %v5143 = vunpack.c.l.b16 %v4842
  %v5144 = vunpack.c.h.b16 %v4842
  %v5145 = vunpack.c.l.b16 %v4843
  %v5146 = vunpack.c.h.b16 %v4843
  %v5147 = vunpack.c.l.b16 %v4844
  %v5148 = vunpack.c.h.b16 %v4844
  %v5149 = vunpack.c.l.b16 %v4845
  %v5150 = vunpack.c.h.b16 %v4845
  %v5151 = vunpack.c.l.b16 %v4846
  %v5152 = vunpack.c.h.b16 %v4846
  %v5153 = vunpack.c.l.b16 %v4847
  %v5154 = vunpack.c.h.b16 %v4847
  %v5155 = vunpack.c.l.b16 %v4848
  %v5156 = vunpack.c.h.b16 %v4848
  %v5157 = vunpack.c.l.b16 %v4849
  %v5158 = vunpack.c.h.b16 %v4849
  %v5159 = vunpack.c.l.b16 %v4850
  %v5160 = vunpack.c.h.b16 %v4850
  %v5161 = vunpack.c.l.b16 %v4851
  %v5162 = vunpack.c.h.b16 %v4851
  %v5163 = vunpack.c.l.b16 %v4852
  %v5164 = vunpack.c.h.b16 %v4852
  %v5165 = vunpack.c.l.b16 %v4853
  %v5166 = vunpack.c.h.b16 %v4853
  %v5167 = vunpack.c.l.b16 %v4854
  %v5168 = vunpack.c.h.b16 %v4854
  %v5169 = vunpack.c.l.b16 %v4855
  %v5170 = vunpack.c.h.b16 %v4855
  %v5171 = vunpack.c.l.b16 %v4856
  %v5172 = vunpack.c.h.b16 %v4856
  %v5173 = vunpack.c.l.b16 %v4857
  %v5174 = vunpack.c.h.b16 %v4857
  %v5175 = vunpack.c.l.b16 %v4858
  %v5176 = vunpack.c.h.b16 %v4858
  %v5177 = vunpack.c.l.b16 %v4859
  %v5178 = vunpack.c.h.b16 %v4859
  %v5179 = vunpack.c.l.b16 %v4860
  %v5180 = vunpack.c.h.b16 %v4860
  %v5181 = vunpack.c.l.b16 %v4861
  %v5182 = vunpack.c.h.b16 %v4861
  %v5183 = vunpack.c.l.b16 %v4862
  %v5184 = vunpack.c.h.b16 %v4862
  %v5185 = vunpack.c.l.b16 %v4863
  %v5186 = vunpack.c.h.b16 %v4863
  %v5187 = vunpack.c.l.b16 %v4864
  %v5188 = vunpack.c.h.b16 %v4864
  %v5189 = vunpack.c.l.b16 %v4865
  %v5190 = vunpack.c.h.b16 %v4865
  %v5191 = vunpack.c.l.b16 %v4866
  %v5192 = vunpack.c.h.b16 %v4866
  %v5193 = vunpack.c.l.b16 %v4867
  %v5194 = vunpack.c.h.b16 %v4867
  %v5195 = vunpack.c.l.b16 %v4868
  %v5196 = vunpack.c.h.b16 %v4868
  %v5197 = vunpack.c.l.b16 %v4869
  %v5198 = vunpack.c.h.b16 %v4869
  %v5199 = vunpack.c.l.b16 %v4870
  %v5200 = vunpack.c.h.b16 %v4870
  %v5201 = vunpack.c.l.b16 %v4871
  %v5202 = vunpack.c.h.b16 %v4871
  %v5203 = vunpack.c.l.b16 %v4872
  %v5204 = vunpack.c.h.b16 %v4872
  %v5205 = vunpack.c.l.b16 %v4873
  %v5206 = vunpack.c.h.b16 %v4873
  %v5207 = vunpack.c.l.b16 %v4874
  %v5208 = vunpack.c.h.b16 %v4874
  %v5209 = vunpack.c.l.b16 %v4875
  %v5210 = vunpack.c.h.b16 %v4875
  %v5211 = vunpack.c.l.b16 %v4876
  %v5212 = vunpack.c.h.b16 %v4876
  %v5213 = vunpack.c.l.b16 %v4877
  %v5214 = vunpack.c.h.b16 %v4877
  %v5215 = vunpack.c.l.b16 %v4878
  %v5216 = vunpack.c.h.b16 %v4878
  %v5217 = vunpack.c.l.b16 %v4879
  %v5218 = vunpack.c.h.b16 %v4879
  %v5219 = vunpack.c.l.b16 %v4880
  %v5220 = vunpack.c.h.b16 %v4880
  %v5221 = vunpack.c.l.b16 %v4881
  %v5222 = vunpack.c.h.b16 %v4881
  %v5223 = vunpack.c.l.b16 %v4882
  %v5224 = vunpack.c.h.b16 %v4882
  %v5225 = vunpack.c.l.b16 %v4883
  %v5226 = vunpack.c.h.b16 %v4883
  %v5227 = vunpack.c.l.b16 %v4884
  %v5228 = vunpack.c.h.b16 %v4884
  %v5229 = vunpack.c.l.b16 %v4885
  %v5230 = vunpack.c.h.b16 %v4885
  %v5231 = vunpack.c.l.b16 %v4886
  %v5232 = vunpack.c.h.b16 %v4886
  %v5233 = vunpack.c.l.b16 %v4887
  %v5234 = vunpack.c.h.b16 %v4887
  %v5235 = vunpack.c.l.b16 %v4888
  %v5236 = vunpack.c.h.b16 %v4888
  %v5237 = vunpack.c.l.b16 %v4889
  %v5238 = vunpack.c.h.b16 %v4889
  %v5239 = vunpack.c.l.b16 %v4890
  %v5240 = vunpack.c.h.b16 %v4890
  %v5241 = vunpack.c.l.b16 %v4891
  %v5242 = vunpack.c.h.b16 %v4891
  %v5243 = vunpack.c.l.b16 %v4892
  %v5244 = vunpack.c.h.b16 %v4892
  %v5245 = vunpack.c.l.b16 %v4893
  %v5246 = vunpack.c.h.b16 %v4893
  %v5247 = vunpack.c.l.b16 %v4894
  %v5248 = vunpack.c.h.b16 %v4894
  %v5249 = vunpack.c.l.b16 %v4895
  %v5250 = vunpack.c.h.b16 %v4895
  %v5251 = vunpack.c.l.b16 %v4896
  %v5252 = vunpack.c.h.b16 %v4896
  %v5253 = vunpack.c.l.b16 %v4897
  %v5254 = vunpack.c.h.b16 %v4897
  %v5255 = vunpack.c.l.b16 %v4898
  %v5256 = vunpack.c.h.b16 %v4898
  %v5257 = vunpack.c.l.b16 %v4899
  %v5258 = vunpack.c.h.b16 %v4899
  %v5259 = vunpack.c.l.b16 %v4900
  %v5260 = vunpack.c.h.b16 %v4900
  %v5261 = vunpack.c.l.b16 %v4901
  %v5262 = vunpack.c.h.b16 %v4901
  %v5263 = vunpack.c.l.b16 %v4902
  %v5264 = vunpack.c.h.b16 %v4902
  %v5265 = vunpack.c.l.b16 %v4903
  %v5266 = vunpack.c.h.b16 %v4903
  %v5267 = vunpack.c.l.b16 %v4904
  %v5268 = vunpack.c.h.b16 %v4904
  %v5269 = vunpack.c.l.b16 %v4905
  %v5270 = vunpack.c.h.b16 %v4905
  %v5271 = vunpack.c.l.b16 %v4906
  %v5272 = vunpack.c.h.b16 %v4906
  %v5273 = vunpack.c.l.b16 %v4907
  %v5274 = vunpack.c.h.b16 %v4907
  %v5275 = vunpack.c.l.b16 %v4908
  %v5276 = vunpack.c.h.b16 %v4908
  %v5277 = vunpack.c.l.b16 %v4909
  %v5278 = vunpack.c.h.b16 %v4909
  %v5279 = vunpack.c.l.b16 %v4910
  %v5280 = vunpack.c.h.b16 %v4910
  %v5281 = vunpack.c.l.b16 %v4911
  %v5282 = vunpack.c.h.b16 %v4911
  %v5283 = vunpack.c.l.b16 %v4912
  %v5284 = vunpack.c.h.b16 %v4912
  %v5285 = vunpack.c.l.b16 %v4913
  %v5286 = vunpack.c.h.b16 %v4913
  %v5287 = vunpack.c.l.b16 %v4914
  %v5288 = vunpack.c.h.b16 %v4914
  %v5289 = vunpack.c.l.b16 %v4915
  %v5290 = vunpack.c.h.b16 %v4915
  %v5291 = vunpack.c.l.b16 %v4916
  %v5292 = vunpack.c.h.b16 %v4916
  %v5293 = vunpack.c.l.b16 %v4917
  %v5294 = vunpack.c.h.b16 %v4917
  %v5295 = vunpack.c.l.b16 %v4918
  %v5296 = vunpack.c.h.b16 %v4918
  %v5297 = vunpack.c.l.b16 %v4919
  %v5298 = vunpack.c.h.b16 %v4919
  %v5299 = vunpack.c.l.b16 %v4920
  %v5300 = vunpack.c.h.b16 %v4920
  %v5301 = vunpack.c.l.b16 %v4921
  %v5302 = vunpack.c.h.b16 %v4921
  %v5303 = vunpack.c.l.b16 %v4922
  %v5304 = vunpack.c.h.b16 %v4922
  %v5305 = vunpack.c.l.b16 %v4923
  %v5306 = vunpack.c.h.b16 %v4923
  %v5307 = vunpack.c.l.b16 %v4924
  %v5308 = vunpack.c.h.b16 %v4924
  %v5309 = vunpack.c.l.b16 %v4925
  %v5310 = vunpack.c.h.b16 %v4925
  %v5311 = vunpack.c.l.b16 %v4926
  %v5312 = vunpack.c.h.b16 %v4926
  %v5313 = vunpack.c.l.b16 %v4927
  %v5314 = vunpack.c.h.b16 %v4927
  %v5315 = vunpack.c.l.b16 %v4928
  %v5316 = vunpack.c.h.b16 %v4928
  %v5317 = vunpack.c.l.b16 %v4929
  %v5318 = vunpack.c.h.b16 %v4929
  %v5319 = vunpack.c.l.b16 %v4930
  %v5320 = vunpack.c.h.b16 %v4930
  %v5321 = vunpack.c.l.b16 %v4931
  %v5322 = vunpack.c.h.b16 %v4931
  %v5323 = vunpack.c.l.b16 %v4932
  %v5324 = vunpack.c.h.b16 %v4932
  %v5325 = vunpack.c.l.b16 %v4933
  %v5326 = vunpack.c.h.b16 %v4933
  %v5327 = vunpack.c.l.b16 %v4934
  %v5328 = vunpack.c.h.b16 %v4934
  %v5329 = vunpack.c.l.b16 %v4935
  %v5330 = vunpack.c.h.b16 %v4935
  %v5331 = vunpack.c.l.b16 %v4936
  %v5332 = vunpack.c.h.b16 %v4936
  %v5333 = vunpack.c.l.b16 %v4937
  %v5334 = vunpack.c.h.b16 %v4937
  %v5335 = vunpack.c.l.b16 %v4938
  %v5336 = vunpack.c.h.b16 %v4938
  %v5337 = vunpack.c.l.b16 %v4939
  %v5338 = vunpack.c.h.b16 %v4939
  %v5339 = vunpack.c.l.b16 %v4940
  %v5340 = vunpack.c.h.b16 %v4940
  %v5341 = vunpack.c.l.b16 %v4941
  %v5342 = vunpack.c.h.b16 %v4941
  %v5343 = vunpack.c.l.b16 %v4942
  %v5344 = vunpack.c.h.b16 %v4942
  %v5345 = vunpack.c.l.b16 %v4943
  %v5346 = vunpack.c.h.b16 %v4943
  %v5347 = vunpack.c.l.b16 %v4944
  %v5348 = vunpack.c.h.b16 %v4944
  %v5349 = vunpack.c.l.b16 %v4945
  %v5350 = vunpack.c.h.b16 %v4945
  %v5351 = vunpack.c.l.b16 %v4946
  %v5352 = vunpack.c.h.b16 %v4946
  %v5353 = vunpack.c.l.b16 %v4947
  %v5354 = vunpack.c.h.b16 %v4947
  %v5355 = vunpack.c.l.b16 %v4948
  %v5356 = vunpack.c.h.b16 %v4948
  %v5357 = vunpack.c.l.b16 %v4949
  %v5358 = vunpack.c.h.b16 %v4949
  %v5359 = vunpack.c.l.b16 %v4950
  %v5360 = vunpack.c.h.b16 %v4950
  %v5361 = vpack.c.b16 %v5107, %v5105
  %v5362 = vpack.c.b16 %v5108, %v5106
  %v5363 = vpack.c.b16 %v5111, %v5109
  %v5364 = vpack.c.b16 %v5112, %v5110
  %v5365 = vpack.c.b16 %v5115, %v5113
  %v5366 = vpack.c.b16 %v5116, %v5114
  %v5367 = vpack.c.b16 %v5119, %v5117
  %v5368 = vpack.c.b16 %v5120, %v5118
  %v5369 = vpack.c.b16 %v5123, %v5121
  %v5370 = vpack.c.b16 %v5124, %v5122
  %v5371 = vpack.c.b16 %v5127, %v5125
  %v5372 = vpack.c.b16 %v5128, %v5126
  %v5373 = vpack.c.b16 %v5131, %v5129
  %v5374 = vpack.c.b16 %v5132, %v5130
  %v5375 = vpack.c.b16 %v5135, %v5133
  %v5376 = vpack.c.b16 %v5136, %v5134
  %v5377 = vpack.c.b16 %v5139, %v5137
  %v5378 = vpack.c.b16 %v5140, %v5138
  %v5379 = vpack.c.b16 %v5143, %v5141
  %v5380 = vpack.c.b16 %v5144, %v5142
  %v5381 = vpack.c.b16 %v5147, %v5145
  %v5382 = vpack.c.b16 %v5148, %v5146
  %v5383 = vpack.c.b16 %v5151, %v5149
  %v5384 = vpack.c.b16 %v5152, %v5150
  %v5385 = vpack.c.b16 %v5155, %v5153
  %v5386 = vpack.c.b16 %v5156, %v5154
  %v5387 = vpack.c.b16 %v5159, %v5157
  %v5388 = vpack.c.b16 %v5160, %v5158
  %v5389 = vpack.c.b16 %v5163, %v5161
  %v5390 = vpack.c.b16 %v5164, %v5162
  %v5391 = vpack.c.b16 %v5167, %v5165
  %v5392 = vpack.c.b16 %v5168, %v5166
  %v5393 = vpack.c.b16 %v5171, %v5169
  %v5394 = vpack.c.b16 %v5172, %v5170
  %v5395 = vpack.c.b16 %v5175, %v5173
  %v5396 = vpack.c.b16 %v5176, %v5174
  %v5397 = vpack.c.b16 %v5179, %v5177
  %v5398 = vpack.c.b16 %v5180, %v5178
  %v5399 = vpack.c.b16 %v5183, %v5181
  %v5400 = vpack.c.b16 %v5184, %v5182
  %v5401 = vpack.c.b16 %v5187, %v5185
  %v5402 = vpack.c.b16 %v5188, %v5186
  %v5403 = vpack.c.b16 %v5191, %v5189
  %v5404 = vpack.c.b16 %v5192, %v5190
  %v5405 = vpack.c.b16 %v5195, %v5193
  %v5406 = vpack.c.b16 %v5196, %v5194
  %v5407 = vpack.c.b16 %v5199, %v5197
  %v5408 = vpack.c.b16 %v5200, %v5198
  %v5409 = vpack.c.b16 %v5203, %v5201
  %v5410 = vpack.c.b16 %v5204, %v5202
  %v5411 = vpack.c.b16 %v5207, %v5205
  %v5412 = vpack.c.b16 %v5208, %v5206
  %v5413 = vpack.c.b16 %v5211, %v5209
  %v5414 = vpack.c.b16 %v5212, %v5210
  %v5415 = vpack.c.b16 %v5215, %v5213
  %v5416 = vpack.c.b16 %v5216, %v5214
  %v5417 = vpack.c.b16 %v5219, %v5217
  %v5418 = vpack.c.b16 %v5220, %v5218
  %v5419 = vpack.c.b16 %v5223, %v5221
  %v5420 = vpack.c.b16 %v5224, %v5222
  %v5421 = vpack.c.b16 %v5227, %v5225
  %v5422 = vpack.c.b16 %v5228, %v5226
  %v5423 = vpack.c.b16 %v5231, %v5229
  %v5424 = vpack.c.b16 %v5232, %v5230
  %v5425 = vpack.c.b16 %v5235, %v5233
  %v5426 = vpack.c.b16 %v5236, %v5234
  %v5427 = vpack.c.b16 %v5239, %v5237
  %v5428 = vpack.c.b16 %v5240, %v5238
  %v5429 = vpack.c.b16 %v5243, %v5241
  %v5430 = vpack.c.b16 %v5244, %v5242
  %v5431 = vpack.c.b16 %v5247, %v5245
  %v5432 = vpack.c.b16 %v5248, %v5246
  %v5433 = vpack.c.b16 %v5251, %v5249
  %v5434 = vpack.c.b16 %v5252, %v5250
  %v5435 = vpack.c.b16 %v5255, %v5253
  %v5436 = vpack.c.b16 %v5256, %v5254
  %v5437 = vpack.c.b16 %v5259, %v5257
  %v5438 = vpack.c.b16 %v5260, %v5258
  %v5439 = vpack.c.b16 %v5263, %v5261
  %v5440 = vpack.c.b16 %v5264, %v5262
  %v5441 = vpack.c.b16 %v5267, %v5265
  %v5442 = vpack.c.b16 %v5268, %v5266
  %v5443 = vpack.c.b16 %v5271, %v5269
  %v5444 = vpack.c.b16 %v5272, %v5270
  %v5445 = vpack.c.b16 %v5275, %v5273
  %v5446 = vpack.c.b16 %v5276, %v5274
  %v5447 = vpack.c.b16 %v5279, %v5277
  %v5448 = vpack.c.b16 %v5280, %v5278
  %v5449 = vpack.c.b16 %v5283, %v5281
  %v5450 = vpack.c.b16 %v5284, %v5282
  %v5451 = vpack.c.b16 %v5287, %v5285
  %v5452 = vpack.c.b16 %v5288, %v5286
  %v5453 = vpack.c.b16 %v5291, %v5289
  %v5454 = vpack.c.b16 %v5292, %v5290
  %v5455 = vpack.c.b16 %v5295, %v5293
  %v5456 = vpack.c.b16 %v5296, %v5294
  %v5457 = vpack.c.b16 %v5299, %v5297
  %v5458 = vpack.c.b16 %v5300, %v5298
  %v5459 = vpack.c.b16 %v5303, %v5301
  %v5460 = vpack.c.b16 %v5304, %v5302
  %v5461 = vpack.c.b16 %v5307, %v5305
  %v5462 = vpack.c.b16 %v5308, %v5306
  %v5463 = vpack.c.b16 %v5311, %v5309
  %v5464 = vpack.c.b16 %v5312, %v5310
  %v5465 = vpack.c.b16 %v5315, %v5313
  %v5466 = vpack.c.b16 %v5316, %v5314
  %v5467 = vpack.c.b16 %v5319, %v5317
  %v5468 = vpack.c.b16 %v5320, %v5318
  %v5469 = vpack.c.b16 %v5323, %v5321
  %v5470 = vpack.c.b16 %v5324, %v5322
  %v5471 = vpack.c.b16 %v5327, %v5325
  %v5472 = vpack.c.b16 %v5328, %v5326
  %v5473 = vpack.c.b16 %v5331, %v5329
  %v5474 = vpack.c.b16 %v5332, %v5330
  %v5475 = vpack.c.b16 %v5335, %v5333
  %v5476 = vpack.c.b16 %v5336, %v5334
  %v5477 = vpack.c.b16 %v5339, %v5337
  %v5478 = vpack.c.b16 %v5340, %v5338
  %v5479 = vpack.c.b16 %v5343, %v5341
  %v5480 = vpack.c.b16 %v5344, %v5342
  %v5481 = vpack.c.b16 %v5347, %v5345
  %v5482 = vpack.c.b16 %v5348, %v5346
  %v5483 = vpack.c.b16 %v5351, %v5349
  %v5484 = vpack.c.b16 %v5352, %v5350
  %v5485 = vpack.c.b16 %v5355, %v5353
  %v5486 = vpack.c.b16 %v5356, %v5354
  %v5487 = vpack.c.b16 %v5359, %v5357
  %v5488 = vpack.c.b16 %v5360, %v5358
  %5617 = vmatprep.subr.bf16.mxu0 %v5362
  %5618 = vmatpush1.bf16.msra.mxu0 %v5361
  %5619 = vmatprep.subr.bf16.mxu0 %v5364
  %5620 = vmatpush1.bf16.msra.mxu0 %v5363
  %5621 = vmatprep.subr.bf16.mxu0 %v5366
  %5622 = vmatpush1.bf16.msra.mxu0 %v5365
  %5623 = vmatprep.subr.bf16.mxu0 %v5368
  %5624 = vmatpush1.bf16.msra.mxu0 %v5367
  %5625 = vmatprep.subr.bf16.mxu0 %v5370
  %5626 = vmatpush1.bf16.msra.mxu0 %v5369
  %5627 = vmatprep.subr.bf16.mxu0 %v5372
  %5628 = vmatpush1.bf16.msra.mxu0 %v5371
  %5629 = vmatprep.subr.bf16.mxu0 %v5374
  %5630 = vmatpush1.bf16.msra.mxu0 %v5373
  %5631 = vmatprep.subr.bf16.mxu0 %v5376
  %5632 = vmatpush1.bf16.msra.mxu0 %v5375
  %5633 = vmatprep.subr.bf16.mxu0 %v5378
  %5634 = vmatpush1.bf16.msra.mxu0 %v5377
  %5635 = vmatprep.subr.bf16.mxu0 %v5380
  %5636 = vmatpush1.bf16.msra.mxu0 %v5379
  %5637 = vmatprep.subr.bf16.mxu0 %v5382
  %5638 = vmatpush1.bf16.msra.mxu0 %v5381
  %5639 = vmatprep.subr.bf16.mxu0 %v5384
  %5640 = vmatpush1.bf16.msra.mxu0 %v5383
  %5641 = vmatprep.subr.bf16.mxu0 %v5386
  %5642 = vmatpush1.bf16.msra.mxu0 %v5385
  %5643 = vmatprep.subr.bf16.mxu0 %v5388
  %5644 = vmatpush1.bf16.msra.mxu0 %v5387
  %5645 = vmatprep.subr.bf16.mxu0 %v5390
  %5646 = vmatpush1.bf16.msra.mxu0 %v5389
  %5647 = vmatprep.subr.bf16.mxu0 %v5392
  %5648 = vmatpush1.bf16.msra.mxu0 %v5391
  %5649 = vmatprep.mubr.bf16.mxu0 %v4952
  %5650 = vmatmul.mubr.bf16.gmra.mrb[0].mxu0 %v4951
  %v5651 = vpop.f32.mrb[0].mxu0
  %v5652 = vadd.f32 %v4972, %v5651
  %v5653 = vpop.f32.mrb[0].mxu0
  %v5654 = vadd.f32 %v4976, %v5653
  %v5655 = vpop.f32.mrb[0].mxu0
  %v5656 = vpop.f32.mrb[0].mxu0
  %5657 = vdwg.mxu0
  %5658 = vmatprep.subr.bf16.mxu0 %v5394
  %5659 = vmatpush1.bf16.msra.mxu0 %v5393
  %5660 = vmatprep.subr.bf16.mxu0 %v5396
  %5661 = vmatpush1.bf16.msra.mxu0 %v5395
  %5662 = vmatprep.subr.bf16.mxu0 %v5398
  %5663 = vmatpush1.bf16.msra.mxu0 %v5397
  %5664 = vmatprep.subr.bf16.mxu0 %v5400
  %5665 = vmatpush1.bf16.msra.mxu0 %v5399
  %5666 = vmatprep.subr.bf16.mxu0 %v5402
  %5667 = vmatpush1.bf16.msra.mxu0 %v5401
  %5668 = vmatprep.subr.bf16.mxu0 %v5404
  %5669 = vmatpush1.bf16.msra.mxu0 %v5403
  %5670 = vmatprep.subr.bf16.mxu0 %v5406
  %5671 = vmatpush1.bf16.msra.mxu0 %v5405
  %5672 = vmatprep.subr.bf16.mxu0 %v5408
  %5673 = vmatpush1.bf16.msra.mxu0 %v5407
  %5674 = vmatprep.subr.bf16.mxu0 %v5410
  %5675 = vmatpush1.bf16.msra.mxu0 %v5409
  %5676 = vmatprep.subr.bf16.mxu0 %v5412
  %5677 = vmatpush1.bf16.msra.mxu0 %v5411
  %5678 = vmatprep.subr.bf16.mxu0 %v5414
  %5679 = vmatpush1.bf16.msra.mxu0 %v5413
  %5680 = vmatprep.subr.bf16.mxu0 %v5416
  %5681 = vmatpush1.bf16.msra.mxu0 %v5415
  %5682 = vmatprep.subr.bf16.mxu0 %v5418
  %5683 = vmatpush1.bf16.msra.mxu0 %v5417
  %5684 = vmatprep.subr.bf16.mxu0 %v5420
  %5685 = vmatpush1.bf16.msra.mxu0 %v5419
  %5686 = vmatprep.subr.bf16.mxu0 %v5422
  %5687 = vmatpush1.bf16.msra.mxu0 %v5421
  %5688 = vmatprep.subr.bf16.mxu0 %v5424
  %5689 = vmatpush1.bf16.msra.mxu0 %v5423
  %5690 = vmatprep.mubr.bf16.mxu0 %v4954
  %5691 = vmatmul.mubr.bf16.gmra.mrb[0].mxu0 %v4953
  %v5692 = vpop.f32.mrb[0].mxu0
  %v5693 = vadd.f32 %v5652, %v5692
  %v5694 = vpop.f32.mrb[0].mxu0
  %v5695 = vadd.f32 %v5654, %v5694
  %v5696 = vpop.f32.mrb[0].mxu0
  %v5697 = vpop.f32.mrb[0].mxu0
  %5698 = vdwg.mxu0
  %5699 = vmatprep.subr.bf16.mxu0 %v5426
  %5700 = vmatpush1.bf16.msra.mxu0 %v5425
  %5701 = vmatprep.subr.bf16.mxu0 %v5428
  %5702 = vmatpush1.bf16.msra.mxu0 %v5427
  %5703 = vmatprep.subr.bf16.mxu0 %v5430
  %5704 = vmatpush1.bf16.msra.mxu0 %v5429
  %5705 = vmatprep.subr.bf16.mxu0 %v5432
  %5706 = vmatpush1.bf16.msra.mxu0 %v5431
  %5707 = vmatprep.subr.bf16.mxu0 %v5434
  %5708 = vmatpush1.bf16.msra.mxu0 %v5433
  %5709 = vmatprep.subr.bf16.mxu0 %v5436
  %5710 = vmatpush1.bf16.msra.mxu0 %v5435
  %5711 = vmatprep.subr.bf16.mxu0 %v5438
  %5712 = vmatpush1.bf16.msra.mxu0 %v5437
  %5713 = vmatprep.subr.bf16.mxu0 %v5440
  %5714 = vmatpush1.bf16.msra.mxu0 %v5439
  %5715 = vmatprep.subr.bf16.mxu0 %v5442
  %5716 = vmatpush1.bf16.msra.mxu0 %v5441
  %5717 = vmatprep.subr.bf16.mxu0 %v5444
  %5718 = vmatpush1.bf16.msra.mxu0 %v5443
  %5719 = vmatprep.subr.bf16.mxu0 %v5446
  %5720 = vmatpush1.bf16.msra.mxu0 %v5445
  %5721 = vmatprep.subr.bf16.mxu0 %v5448
  %5722 = vmatpush1.bf16.msra.mxu0 %v5447
  %5723 = vmatprep.subr.bf16.mxu0 %v5450
  %5724 = vmatpush1.bf16.msra.mxu0 %v5449
  %5725 = vmatprep.subr.bf16.mxu0 %v5452
  %5726 = vmatpush1.bf16.msra.mxu0 %v5451
  %5727 = vmatprep.subr.bf16.mxu0 %v5454
  %5728 = vmatpush1.bf16.msra.mxu0 %v5453
  %5729 = vmatprep.subr.bf16.mxu0 %v5456
  %5730 = vmatpush1.bf16.msra.mxu0 %v5455
  %5731 = vmatprep.mubr.bf16.mxu0 %v4956
  %5732 = vmatmul.mubr.bf16.gmra.mrb[0].mxu0 %v4955
  %v5733 = vpop.f32.mrb[0].mxu0
  %v5734 = vadd.f32 %v5693, %v5733
  %v5735 = vpop.f32.mrb[0].mxu0
  %v5736 = vadd.f32 %v5695, %v5735
  %v5737 = vpop.f32.mrb[0].mxu0
  %v5738 = vpop.f32.mrb[0].mxu0
  %5739 = vdwg.mxu0
  %5740 = vmatprep.subr.bf16.mxu0 %v5458
  %5741 = vmatpush1.bf16.msra.mxu0 %v5457
  %5742 = vmatprep.subr.bf16.mxu0 %v5460
  %5743 = vmatpush1.bf16.msra.mxu0 %v5459
  %5744 = vmatprep.subr.bf16.mxu0 %v5462
  %5745 = vmatpush1.bf16.msra.mxu0 %v5461
  %5746 = vmatprep.subr.bf16.mxu0 %v5464
  %5747 = vmatpush1.bf16.msra.mxu0 %v5463
  %5748 = vmatprep.subr.bf16.mxu0 %v5466
  %5749 = vmatpush1.bf16.msra.mxu0 %v5465
  %5750 = vmatprep.subr.bf16.mxu0 %v5468
  %5751 = vmatpush1.bf16.msra.mxu0 %v5467
  %5752 = vmatprep.subr.bf16.mxu0 %v5470
  %5753 = vmatpush1.bf16.msra.mxu0 %v5469
  %5754 = vmatprep.subr.bf16.mxu0 %v5472
  %5755 = vmatpush1.bf16.msra.mxu0 %v5471
  %5756 = vmatprep.subr.bf16.mxu0 %v5474
  %5757 = vmatpush1.bf16.msra.mxu0 %v5473
  %5758 = vmatprep.subr.bf16.mxu0 %v5476
  %5759 = vmatpush1.bf16.msra.mxu0 %v5475
  %5760 = vmatprep.subr.bf16.mxu0 %v5478
  %5761 = vmatpush1.bf16.msra.mxu0 %v5477
  %5762 = vmatprep.subr.bf16.mxu0 %v5480
  %5763 = vmatpush1.bf16.msra.mxu0 %v5479
  %5764 = vmatprep.subr.bf16.mxu0 %v5482
  %5765 = vmatpush1.bf16.msra.mxu0 %v5481
  %5766 = vmatprep.subr.bf16.mxu0 %v5484
  %5767 = vmatpush1.bf16.msra.mxu0 %v5483
  %5768 = vmatprep.subr.bf16.mxu0 %v5486
  %5769 = vmatpush1.bf16.msra.mxu0 %v5485
  %5770 = vmatprep.subr.bf16.mxu0 %v5488
  %5771 = vmatpush1.bf16.msra.mxu0 %v5487
  %5772 = vmatprep.mubr.bf16.mxu0 %v4958
  %5773 = vmatmul.mubr.bf16.gmra.mrb[0].mxu0 %v4957
  %v5774 = vpop.f32.mrb[0].mxu0
  %v5775 = vadd.f32 %v5734, %v5774
  %v5776 = vpop.f32.mrb[0].mxu0
  %v5777 = vadd.f32 %v5736, %v5776
  %v5778 = vpop.f32.mrb[0].mxu0
  %v5779 = vpop.f32.mrb[0].mxu0
  %5780 = vdwg.mxu0
  %v5781 = vmax.f32 %v5775, 0.0
  %v5782 = vmax.f32 %v5777, 0.0
  %v5783 = vld [vmem:[%s12] sm:$0xf]
  %v5784 = vld [vmem:[%s12 + $0x4] sm:$0xf]
  %v5785 = vld [vmem:[%s12 + $0x8] sm:$0xf]
  %v5786 = vld [vmem:[%s12 + $0xc] sm:$0xf]
  %v5787 = vld [vmem:[%s12 + $0x10] sm:$0xf]
  %v5788 = vld [vmem:[%s12 + $0x14] sm:$0xf]
  %v5789 = vld [vmem:[%s12 + $0x18] sm:$0xf]
  %v5790 = vld [vmem:[%s12 + $0x1c] sm:$0xf]
  %v5791 = vld [vmem:[%s12 + $0x20] sm:$0xf]
  %v5792 = vld [vmem:[%s12 + $0x24] sm:$0xf]
  %v5793 = vld [vmem:[%s12 + $0x28] sm:$0xf]
  %v5794 = vld [vmem:[%s12 + $0x2c] sm:$0xf]
  %v5795 = vld [vmem:[%s12 + $0x30] sm:$0xf]
  %v5796 = vld [vmem:[%s12 + $0x34] sm:$0xf]
  %v5797 = vld [vmem:[%s12 + $0x38] sm:$0xf]
  %v5798 = vld [vmem:[%s12 + $0x3c] sm:$0xf]
  %v5799 = vld [vmem:[%s12 + $0x40] sm:$0xf]
  %v5800 = vld [vmem:[%s12 + $0x44] sm:$0xf]
  %v5801 = vld [vmem:[%s12 + $0x48] sm:$0xf]
  %v5802 = vld [vmem:[%s12 + $0x4c] sm:$0xf]
  %v5803 = vld [vmem:[%s12 + $0x50] sm:$0xf]
  %v5804 = vld [vmem:[%s12 + $0x54] sm:$0xf]
  %v5805 = vld [vmem:[%s12 + $0x58] sm:$0xf]
  %v5806 = vld [vmem:[%s12 + $0x5c] sm:$0xf]
  %v5807 = vld [vmem:[%s12 + $0x60] sm:$0xf]
  %v5808 = vld [vmem:[%s12 + $0x64] sm:$0xf]
  %v5809 = vld [vmem:[%s12 + $0x68] sm:$0xf]
  %v5810 = vld [vmem:[%s12 + $0x6c] sm:$0xf]
  %v5811 = vld [vmem:[%s12 + $0x70] sm:$0xf]
  %v5812 = vld [vmem:[%s12 + $0x74] sm:$0xf]
  %v5813 = vld [vmem:[%s12 + $0x78] sm:$0xf]
  %v5814 = vld [vmem:[%s12 + $0x7c] sm:$0xf]
  %v5815 = vpack.c.bf16 %v5781, %v5781
  %v5816 = vpack.c.bf16 %v5782, %v5782
  %v5817 = vlaneseq
  %v5818 = vshrl.u32 %v5817, 7
  %v5819 = vsub.s32 2, %v5818
  %v5820 = vrot.slane %v4086, %v5819
  %v5853 = vunpack.c.l.b16 %v5783
  %v5854 = vunpack.c.l.b16 %v5784
  %v5855 = vunpack.c.l.b16 %v5785
  %v5856 = vunpack.c.l.b16 %v5786
  %v5857 = vunpack.c.l.b16 %v5787
  %v5858 = vunpack.c.l.b16 %v5788
  %v5859 = vunpack.c.l.b16 %v5789
  %v5860 = vunpack.c.l.b16 %v5790
  %v5861 = vunpack.c.l.b16 %v5791
  %v5862 = vunpack.c.l.b16 %v5792
  %v5863 = vunpack.c.l.b16 %v5793
  %v5864 = vunpack.c.l.b16 %v5794
  %v5865 = vunpack.c.l.b16 %v5795
  %v5866 = vunpack.c.l.b16 %v5796
  %v5867 = vunpack.c.l.b16 %v5797
  %v5868 = vunpack.c.l.b16 %v5798
  %v5869 = vunpack.c.l.b16 %v5799
  %v5870 = vunpack.c.l.b16 %v5800
  %v5871 = vunpack.c.l.b16 %v5801
  %v5872 = vunpack.c.l.b16 %v5802
  %v5873 = vunpack.c.l.b16 %v5803
  %v5874 = vunpack.c.l.b16 %v5804
  %v5875 = vunpack.c.l.b16 %v5805
  %v5876 = vunpack.c.l.b16 %v5806
  %v5877 = vunpack.c.l.b16 %v5807
  %v5878 = vunpack.c.l.b16 %v5808
  %v5879 = vunpack.c.l.b16 %v5809
  %v5880 = vunpack.c.l.b16 %v5810
  %v5881 = vunpack.c.l.b16 %v5811
  %v5882 = vunpack.c.l.b16 %v5812
  %v5883 = vunpack.c.l.b16 %v5813
  %v5884 = vunpack.c.l.b16 %v5814
  %v5885 = vpack.c.b16 %v5854, %v5853
  %v5886 = vpack.c.b16 %v5856, %v5855
  %v5887 = vpack.c.b16 %v5858, %v5857
  %v5888 = vpack.c.b16 %v5860, %v5859
  %v5889 = vpack.c.b16 %v5862, %v5861
  %v5890 = vpack.c.b16 %v5864, %v5863
  %v5891 = vpack.c.b16 %v5866, %v5865
  %v5892 = vpack.c.b16 %v5868, %v5867
  %v5893 = vpack.c.b16 %v5870, %v5869
  %v5894 = vpack.c.b16 %v5872, %v5871
  %v5895 = vpack.c.b16 %v5874, %v5873
  %v5896 = vpack.c.b16 %v5876, %v5875
  %v5897 = vpack.c.b16 %v5878, %v5877
  %v5898 = vpack.c.b16 %v5880, %v5879
  %v5899 = vpack.c.b16 %v5882, %v5881
  %v5900 = vpack.c.b16 %v5884, %v5883
  %5917 = vmatprep.subr.bf16.mxu0 0
  %5918 = vmatpush1.bf16.msra.mxu0 %v5885
  %5919 = vmatprep.subr.bf16.mxu0 0
  %5920 = vmatpush1.bf16.msra.mxu0 %v5886
  %5921 = vmatprep.subr.bf16.mxu0 0
  %5922 = vmatpush1.bf16.msra.mxu0 %v5887
  %5923 = vmatprep.subr.bf16.mxu0 0
  %5924 = vmatpush1.bf16.msra.mxu0 %v5888
  %5925 = vmatprep.subr.bf16.mxu0 0
  %5926 = vmatpush1.bf16.msra.mxu0 %v5889
  %5927 = vmatprep.subr.bf16.mxu0 0
  %5928 = vmatpush1.bf16.msra.mxu0 %v5890
  %5929 = vmatprep.subr.bf16.mxu0 0
  %5930 = vmatpush1.bf16.msra.mxu0 %v5891
  %5931 = vmatprep.subr.bf16.mxu0 0
  %5932 = vmatpush1.bf16.msra.mxu0 %v5892
  %5933 = vmatprep.subr.bf16.mxu0 0
  %5934 = vmatpush1.bf16.msra.mxu0 %v5893
  %5935 = vmatprep.subr.bf16.mxu0 0
  %5936 = vmatpush1.bf16.msra.mxu0 %v5894
  %5937 = vmatprep.subr.bf16.mxu0 0
  %5938 = vmatpush1.bf16.msra.mxu0 %v5895
  %5939 = vmatprep.subr.bf16.mxu0 0
  %5940 = vmatpush1.bf16.msra.mxu0 %v5896
  %5941 = vmatprep.subr.bf16.mxu0 0
  %5942 = vmatpush1.bf16.msra.mxu0 %v5897
  %5943 = vmatprep.subr.bf16.mxu0 0
  %5944 = vmatpush1.bf16.msra.mxu0 %v5898
  %5945 = vmatprep.subr.bf16.mxu0 0
  %5946 = vmatpush1.bf16.msra.mxu0 %v5899
  %5947 = vmatprep.subr.bf16.mxu0 0
  %5948 = vmatpush1.bf16.msra.mxu0 %v5900
  %5949 = vmatprep.mubr.bf16.mxu0 %v5816
  %5950 = vmatmul.mubr.bf16.gmra.mrb[0].mxu0 %v5815
  %v5951 = vpop.f32.mrb[0].mxu0
  %v5952 = vadd.f32 %v5820, %v5951
  %v5953 = vpop.f32.mrb[0].mxu0
  %v5954 = vpop.f32.mrb[0].mxu0
  %v5955 = vpop.f32.mrb[0].mxu0
  %5956 = vdwg.mxu0
  %v5957 = vmax.f32 %v5952, 0.0
  %v5958 = vld [vmem:[%s13] sm:$0xf]
  %v5959 = vld [vmem:[%s13 + $0x4] sm:$0xf]
  %v5960 = vld [vmem:[%s13 + $0x8] sm:$0xf]
  %v5961 = vld [vmem:[%s13 + $0xc] sm:$0xf]
  %v5962 = vld [vmem:[%s13 + $0x10] sm:$0xf]
  %v5963 = vld [vmem:[%s13 + $0x14] sm:$0xf]
  %v5964 = vld [vmem:[%s13 + $0x18] sm:$0xf]
  %v5965 = vld [vmem:[%s13 + $0x1c] sm:$0xf]
  %v5966 = vpack.c.bf16 %v5957, %v5957
  %v5967 = vlaneseq
  %v5968 = vshrl.u32 %v5967, 7
  %v5969 = vsub.s32 3, %v5968
  %v5970 = vrot.slane %v4086, %v5969
  %v5979 = vunpack.c.l.b16 %v5958
  %v5980 = vunpack.c.l.b16 %v5959
  %v5981 = vunpack.c.l.b16 %v5960
  %v5982 = vunpack.c.l.b16 %v5961
  %v5983 = vunpack.c.l.b16 %v5962
  %v5984 = vunpack.c.l.b16 %v5963
  %v5985 = vunpack.c.l.b16 %v5964
  %v5986 = vunpack.c.l.b16 %v5965
  %v5987 = vpack.c.b16 %v5980, %v5979
  %v5988 = vpack.c.b16 %v5982, %v5981
  %v5989 = vpack.c.b16 %v5984, %v5983
  %v5990 = vpack.c.b16 %v5986, %v5985
  %v5996 = vsel %vm4082, %v5966, 0
  %5998 = vmatprep.subr.bf16.mxu0 0
  %5999 = vmatpush1.bf16.msra.mxu0 %v5987
  %6000 = vmatprep.subr.bf16.mxu0 0
  %6001 = vmatpush1.bf16.msra.mxu0 %v5988
  %6002 = vmatprep.subr.bf16.mxu0 0
  %6003 = vmatpush1.bf16.msra.mxu0 %v5989
  %6004 = vmatprep.subr.bf16.mxu0 0
  %6005 = vmatpush1.bf16.msra.mxu0 %v5990
  %6006 = vmatprep.subr.bf16.mxu0 0
  %6007 = vmatpush1.bf16.msra.mxu0 0
  %6008 = vmatprep.subr.bf16.mxu0 0
  %6009 = vmatpush1.bf16.msra.mxu0 0
  %6010 = vmatprep.subr.bf16.mxu0 0
  %6011 = vmatpush1.bf16.msra.mxu0 0
  %6012 = vmatprep.subr.bf16.mxu0 0
  %6013 = vmatpush1.bf16.msra.mxu0 0
  %6014 = vmatprep.subr.bf16.mxu0 0
  %6015 = vmatpush1.bf16.msra.mxu0 0
  %6016 = vmatprep.subr.bf16.mxu0 0
  %6017 = vmatpush1.bf16.msra.mxu0 0
  %6018 = vmatprep.subr.bf16.mxu0 0
  %6019 = vmatpush1.bf16.msra.mxu0 0
  %6020 = vmatprep.subr.bf16.mxu0 0
  %6021 = vmatpush1.bf16.msra.mxu0 0
  %6022 = vmatprep.subr.bf16.mxu0 0
  %6023 = vmatpush1.bf16.msra.mxu0 0
  %6024 = vmatprep.subr.bf16.mxu0 0
  %6025 = vmatpush1.bf16.msra.mxu0 0
  %6026 = vmatprep.subr.bf16.mxu0 0
  %6027 = vmatpush1.bf16.msra.mxu0 0
  %6028 = vmatprep.subr.bf16.mxu0 0
  %6029 = vmatpush1.bf16.msra.mxu0 0
  %6030 = vmatprep.mubr.bf16.mxu0 0
  %6031 = vmatmul.mubr.bf16.gmra.mrb[0].mxu0 %v5996
  %v6032 = vpop.f32.mrb[0].mxu0
  %v6033 = vadd.f32 %v5970, %v6032
  %v6034 = vpop.f32.mrb[0].mxu0
  %v6035 = vpop.f32.mrb[0].mxu0
  %v6036 = vpop.f32.mrb[0].mxu0
  %6037 = vdwg.mxu0
  %6038 = vst [vmem:[%s15] sm:$0x3] %v6033
  // Predicated region
  $region62: #{dinov2_classifier_forward.1} parent=0 // pred_check
    _
  $region63: #{dinov2_classifier_forward.1} parent=0 // pred_check_branch
    %6040 = sbr.rel (0) target = $region65
  $region64: #{dinov2_classifier_forward.1} parent=0 // pred_region
    _
  $region65: #{dinov2_classifier_forward.1} parent=0 // pred_fallthru
    _
  // Predicated region
  $region66: #{dinov2_classifier_forward.1} parent=0 // pred_check
    _
  $region67: #{dinov2_classifier_forward.1} parent=0 // pred_check_branch
    %6042 = sbr.rel (0) target = $region69
  $region68: #{dinov2_classifier_forward.1} parent=0 // pred_region
    _
  $region69: #{dinov2_classifier_forward.1} parent=0 // pred_fallthru
    _

</llo_original>
